<compile_context>
chip_gen: v6e
topology: v6e:2x2x1
jax: 0.10.0
libtpu: 0.0.40
codegen_flags: <defaults>
</compile_context>

<pallas_src>
from collections import OrderedDict

import numpy as np
import jax
import jax.numpy as jnp
from jax.experimental import pallas as pl
from jax.experimental.pallas import tpu as pltpu

C = 1024            # feature dimension fixed by the module
EPS = 1e-5          # PyTorch BatchNorm1d default eps
NEG_SLOPE = 0.2     # LeakyReLU(0.2)
LANE = 128          # fused classifier output padded to a lane-dense multiple of 128
SMALL_MAX = 128     # N <= SMALL_MAX -> single-tile latency path with manual DMA overlap
TM_CHOICES = (512, 256, 128)
VMEM_LIMIT = 48 * 1024 * 1024


def _round_up(x, m):
    return (x + m - 1) // m * m


def _leaky(h):
    return jnp.where(h >= 0, h, NEG_SLOPE * h)


# ---------------------------------------------------------------------------
# Kernels
# ---------------------------------------------------------------------------
def kernel_tiled(x_ref, w1_ref, b1_ref, w2_ref, b2_ref, wc_ref, bc_ref, out_ref):
    """One batch tile through the BN-folded projector + fused classifier heads."""
    h = jnp.dot(x_ref[...], w1_ref[...],
                preferred_element_type=jnp.float32) + b1_ref[...]
    h = _leaky(h)
    h = jnp.dot(h.astype(jnp.bfloat16), w2_ref[...],
                preferred_element_type=jnp.float32) + b2_ref[...]
    h = _leaky(h)
    out_ref[...] = (jnp.dot(h.astype(jnp.bfloat16), wc_ref[...],
                            preferred_element_type=jnp.float32) + bc_ref[...])


def kernel_small(x_ref, w1_ref, b1_ref, b2_ref, bc_ref, w2_hbm, wc_hbm,
                 out_ref, w2_vmem, wc_vmem, sem):
    """Single-tile latency kernel: stage-2 / classifier weights are streamed from
    HBM while the stage-1 matmul runs on the MXU."""
    cp_w2 = pltpu.make_async_copy(w2_hbm, w2_vmem, sem.at[0])
    cp_wc = pltpu.make_async_copy(wc_hbm, wc_vmem, sem.at[1])
    cp_w2.start()
    cp_wc.start()

    h = jnp.dot(x_ref[...], w1_ref[...],
                preferred_element_type=jnp.float32) + b1_ref[...]
    h = _leaky(h)

    cp_w2.wait()
    h = jnp.dot(h.astype(jnp.bfloat16), w2_vmem[...],
                preferred_element_type=jnp.float32) + b2_ref[...]
    h = _leaky(h)

    cp_wc.wait()
    out_ref[...] = (jnp.dot(h.astype(jnp.bfloat16), wc_vmem[...],
                            preferred_element_type=jnp.float32) + bc_ref[...])


# ---------------------------------------------------------------------------
# pallas_call wrappers
# ---------------------------------------------------------------------------
def _call_small(x2d, w1, b1, w2, b2, wc, bc, out_pad):
    tm = x2d.shape[0]
    const = lambda i: (0, 0)
    return pl.pallas_call(
        kernel_small,
        out_shape=jax.ShapeDtypeStruct((tm, out_pad), jnp.float32),
        grid=(1,),
        in_specs=[
            pl.BlockSpec((tm, C), const),           # x (single tile)
            pl.BlockSpec((C, C), const),            # w1 (needed before stage 1)
            pl.BlockSpec((1, C), const),            # b1
            pl.BlockSpec((1, C), const),            # b2
            pl.BlockSpec((1, out_pad), const),      # fused classifier bias
            pl.BlockSpec(memory_space=pl.ANY),      # w2: streamed manually
            pl.BlockSpec(memory_space=pl.ANY),      # wc: streamed manually
        ],
        out_specs=pl.BlockSpec((tm, out_pad), const),
        scratch_shapes=[
            pltpu.VMEM((C, C), jnp.bfloat16),       # w2 landing buffer
            pltpu.VMEM((C, out_pad), jnp.bfloat16), # wc landing buffer
            pltpu.SemaphoreType.DMA((2,)),
        ],
        compiler_params=pltpu.CompilerParams(
            dimension_semantics=("arbitrary",),
            vmem_limit_bytes=VMEM_LIMIT,
        ),
    )(x2d, w1, b1, b2, bc, w2, wc)


def _call_tiled(x2d, w1, b1, w2, b2, wc, bc, out_pad, tm):
    n_pad = x2d.shape[0]
    const = lambda i: (0, 0)   # constant index_map -> weights DMA'd once, stay resident
    return pl.pallas_call(
        kernel_tiled,
        out_shape=jax.ShapeDtypeStruct((n_pad, out_pad), jnp.float32),
        grid=(n_pad // tm,),
        in_specs=[
            pl.BlockSpec((tm, C), lambda i: (i, 0)),   # x batch tile (pipelined)
            pl.BlockSpec((C, C), const),               # w1 (BN-folded, bf16)
            pl.BlockSpec((1, C), const),               # b1 (folded, f32)
            pl.BlockSpec((C, C), const),               # w2
            pl.BlockSpec((1, C), const),               # b2
            pl.BlockSpec((C, out_pad), const),         # fused classifier weights
            pl.BlockSpec((1, out_pad), const),         # fused classifier biases
        ],
        out_specs=pl.BlockSpec((tm, out_pad), lambda i: (i, 0)),
        compiler_params=pltpu.CompilerParams(
            dimension_semantics=("parallel",),         # batch tiles independent (megacore)
            vmem_limit_bytes=VMEM_LIMIT,               # headroom for TM=512 on v5e
        ),
    )(x2d, w1, b1, w2, b2, wc, bc)


def _select_tm(n):
    """Largest 128-multiple batch tile that still yields >= 2 grid steps, so both
    v7x TensorCores get work while per-step overhead (~0.35us) is amortized."""
    for tm in TM_CHOICES:
        if _round_up(n, tm) // tm >= 2:
            return tm
    return TM_CHOICES[-1]


def _forward_impl(x_nchw, packed, out_pad):
    w1, b1, w2, b2, wc, bc = packed
    n = x_nchw.shape[0]
    x2d = x_nchw.reshape(n, C).astype(jnp.bfloat16)
    if n <= SMALL_MAX:
        tm = _round_up(max(n, 16), 16)
        if tm != n:
            x2d = jnp.pad(x2d, ((0, tm - n), (0, 0)))
        return _call_small(x2d, w1, b1, w2, b2, wc, bc, out_pad)
    tm = _select_tm(n)
    n_pad = _round_up(n, tm)
    if n_pad != n:
        x2d = jnp.pad(x2d, ((0, n_pad - n), (0, 0)))
    return _call_tiled(x2d, w1, b1, w2, b2, wc, bc, out_pad, tm)


# ---------------------------------------------------------------------------
# One-time parameter preparation (model-load time): fold BN, fuse heads, bf16
# ---------------------------------------------------------------------------
def _fold_bn(w_oi, b_o, gamma, beta, mean, var):
    """Fold BatchNorm1d (running stats) into a 1x1 conv.

    w_oi: (out, in) PyTorch layout.  Returns (in, out) weight and (1, out) bias:
        y = (x @ W^T + b - mean) * gamma/sqrt(var+eps) + beta
          = x @ (W * scale).T + ((b - mean) * scale + beta)
    """
    scale = gamma * jax.lax.rsqrt(var + EPS)        # (out,)
    w_io = (w_oi * scale[:, None]).T                # (in, out)
    b = (b_o - mean) * scale + beta                 # (out,)
    return w_io, b[None, :]


def prepare_params(proj_params, cls_params, attri_dims):
    """Run ONCE at model-load time (not per forward):
       * fold BN running stats into the conv weights/biases (exact, f32),
       * transpose PyTorch (out, in) weights to (in, out) for x @ W,
       * fuse all Linear heads into one lane-dense (C, 128k) matmul,
       * cast weights to bf16 (f32 MXU accumulation)."""
    (w1, b1, g1, be1, m1, v1, w2, b2, g2, be2, m2, v2) = proj_params
    w1f, b1f = _fold_bn(w1, b1, g1, be1, m1, v1)
    w2f, b2f = _fold_bn(w2, b2, g2, be2, m2, v2)

    dims = list(attri_dims.values())
    total = sum(dims)
    out_pad = _round_up(total, LANE)
    wc = jnp.concatenate([w.T for (w, _) in cls_params], axis=1)        # (C, total)
    bc = jnp.concatenate([b for (_, b) in cls_params], axis=0)[None, :] # (1, total)
    wc = jnp.pad(wc, ((0, 0), (0, out_pad - total)))
    bc = jnp.pad(bc, ((0, 0), (0, out_pad - total)))

    packed = (w1f.astype(jnp.bfloat16), b1f.astype(jnp.float32),
              w2f.astype(jnp.bfloat16), b2f.astype(jnp.float32),
              wc.astype(jnp.bfloat16), bc.astype(jnp.float32))
    return packed, out_pad


def make_discriminator(packed, out_pad, attri_dims):
    """Returns a jitted forward: x (N, 1024, 1, 1) f32 -> OrderedDict of logits."""
    dims = tuple(attri_dims.items())

    @jax.jit
    def _fwd(x_nchw, params):
        out = _forward_impl(x_nchw, params, out_pad)
        n = x_nchw.shape[0]
        ys = OrderedDict()
        off = 0
        for k, d in dims:
            ys[k] = out[:n, off:off + d]
            off += d
        return ys

    def forward(x_nchw):
        return _fwd(x_nchw, packed)

    return forward


# ---------------------------------------------------------------------------
# Synthetic parameters (PyTorch layout) + references
# ---------------------------------------------------------------------------
def init_params(key, attri_dims):
    """Synthetic parameters in PyTorch layout: Conv2d/Linear weights are (out, in)
    (1x1 spatial squeezed), biases / BN stats are 1-D (C,)."""
    def nrm(k, shape, scale=1.0):
        return (scale * jax.random.normal(k, shape)).astype(jnp.float32)

    keys = iter(jax.random.split(key, 12 + 2 * len(attri_dims)))
    proj = []
    for _ in range(2):  # two Conv2d(1024,1024,1) + BatchNorm1d blocks
        w = nrm(next(keys), (C, C), 1.0 / np.sqrt(C))        # conv weight (out, in)
        b = nrm(next(keys), (C,), 0.01)                      # conv bias
        gamma = 1.0 + nrm(next(keys), (C,), 0.1)             # BN weight
        beta = nrm(next(keys), (C,), 0.1)                    # BN bias
        rmean = nrm(next(keys), (C,), 0.1)                   # BN running_mean
        rvar = 0.5 + jnp.abs(nrm(next(keys), (C,), 0.5))     # BN running_var (>0)
        proj += [w, b, gamma, beta, rmean, rvar]

    cls = []
    for d in attri_dims.values():
        wc = nrm(next(keys), (d, C), 1.0 / np.sqrt(C))       # Linear weight (out, in)
        bc = nrm(next(keys), (d,), 0.01)                     # Linear bias
        cls.append((wc, bc))
    return proj, cls


def reference_forward_f32(x_nchw, proj_params, cls_params, attri_dims):
    """Pure-f32 numpy mirror of the PyTorch module in eval mode."""
    p = [np.asarray(a, dtype=np.float64) for a in proj_params]
    (w1, b1, g1, be1, m1, v1, w2, b2, g2, be2, m2, v2) = p
    n = x_nchw.shape[0]
    h = np.asarray(x_nchw, dtype=np.float64).reshape(n, C)
    h = h @ w1.T + b1
    h = (h - m1) * (g1 / np.sqrt(v1 + EPS)) + be1
    h = np.where(h >= 0, h, NEG_SLOPE * h)
    h = h @ w2.T + b2
    h = (h - m2) * (g2 / np.sqrt(v2 + EPS)) + be2
    h = np.where(h >= 0, h, NEG_SLOPE * h)
    ys = OrderedDict()
    for k, (wk, bk) in zip(attri_dims, cls_params):
        ys[k] = h @ np.asarray(wk, dtype=np.float64).T + np.asarray(bk, dtype=np.float64)
    return ys


def reference_forward_folded(x_nchw, packed, out_pad, attri_dims):
    """Pure-JAX reference using the same folded/fused bf16 parameters as the kernel."""
    w1, b1, w2, b2, wc, bc = packed
    n = x_nchw.shape[0]
    h = x_nchw.reshape(n, C).astype(jnp.bfloat16)
    h = jnp.dot(h, w1, preferred_element_type=jnp.float32) + b1
    h = jnp.where(h >= 0, h, NEG_SLOPE * h)
    h = jnp.dot(h.astype(jnp.bfloat16), w2, preferred_element_type=jnp.float32) + b2
    h = jnp.where(h >= 0, h, NEG_SLOPE * h)
    o = jnp.dot(h.astype(jnp.bfloat16), wc, preferred_element_type=jnp.float32) + bc
    ys = OrderedDict()
    off = 0
    for k, d in attri_dims.items():
        ys[k] = o[:, off:off + d]
        off += d
    return ys


if __name__ == "__main__":
    attri_dims = OrderedDict([("gender", 2), ("age", 10), ("race", 5)])

    key = jax.random.PRNGKey(0)
    kx, kp = jax.random.split(key)
    proj_params, cls_params = init_params(kp, attri_dims)

    # One-time prep (model-load time), then a jitted steady-state forward.
    packed, out_pad = prepare_params(proj_params, cls_params, attri_dims)
    forward = make_discriminator(packed, out_pad, attri_dims)

    # Exercise both code paths: single-tile latency path (N <= 128) and the
    # multi-tile pipelined path (N > 128, >= 2 grid steps).
    for n in (4, 260):
        x = jax.random.normal(jax.random.fold_in(kx, n), (n, C, 1, 1),
                              dtype=jnp.float32)
        ys = forward(x)
        ys = jax.tree_util.tree_map(jax.block_until_ready, ys)

        ref_tight = reference_forward_folded(x, packed, out_pad, attri_dims)
        ref_f32 = reference_forward_f32(x, proj_params, cls_params, attri_dims)
        for k in attri_dims:
            # Exact-path check (same folded bf16 params as the kernel).
            np.testing.assert_allclose(np.asarray(ys[k]), np.asarray(ref_tight[k]),
                                       rtol=1e-2, atol=1e-2)
            # Against the true f32 PyTorch-style forward (bf16 weights -> loose tol).
            np.testing.assert_allclose(np.asarray(ys[k]), np.asarray(ref_f32[k]),
                                       rtol=1e-1, atol=2e-1)

    print("KERNEL_OK")
</pallas_src>

<mosaic_0001>
module attributes {stable_mosaic.version = 11 : i64} {
  func.func @kernel_small(%arg0: i32, %arg1: memref<16x1024xbf16, #tpu.memory_space<vmem>>, %arg2: memref<1024x1024xbf16, #tpu.memory_space<vmem>>, %arg3: memref<1x1024xf32, #tpu.memory_space<vmem>>, %arg4: memref<1x1024xf32, #tpu.memory_space<vmem>>, %arg5: memref<1x128xf32, #tpu.memory_space<vmem>>, %arg6: memref<1024x1024xbf16, #tpu.memory_space<any>>, %arg7: memref<1024x128xbf16, #tpu.memory_space<any>>, %arg8: memref<16x128xf32, #tpu.memory_space<vmem>>, %arg9: memref<1024x1024xbf16, #tpu.memory_space<vmem>>, %arg10: memref<1024x128xbf16, #tpu.memory_space<vmem>>, %arg11: memref<2x!tpu.dma_semaphore, #tpu.memory_space<semaphore_mem>>) attributes {dimension_semantics = [#tpu.dimension_semantics<arbitrary>], iteration_bounds = array<i64: 1>, scalar_prefetch = 0 : i64, scratch_operands = 3 : i64, tpu.core_type = #tpu.core_type<tc>, window_params = [{pipeline_mode = #tpu.pipeline_mode<synchronous>, transform_indices = @transform_0, window_bounds = array<i64: 16, 1024>}, {pipeline_mode = #tpu.pipeline_mode<synchronous>, transform_indices = @transform_1, window_bounds = array<i64: 1024, 1024>}, {pipeline_mode = #tpu.pipeline_mode<synchronous>, transform_indices = @transform_2, window_bounds = array<i64: 1, 1024>}, {pipeline_mode = #tpu.pipeline_mode<synchronous>, transform_indices = @transform_3, window_bounds = array<i64: 1, 1024>}, {pipeline_mode = #tpu.pipeline_mode<synchronous>, transform_indices = @transform_4, window_bounds = array<i64: 1, 128>}, {}, {}, {pipeline_mode = #tpu.pipeline_mode<synchronous>, transform_indices = @transform_7, window_bounds = array<i64: 16, 128>}]} {
    %c0_i32 = arith.constant 0 : i32
    %0 = tpu.memref_slice %arg11[%c0_i32] : memref<2x!tpu.dma_semaphore, #tpu.memory_space<semaphore_mem>> -> memref<1x!tpu.dma_semaphore, #tpu.memory_space<semaphore_mem>>
    %1 = tpu.memref_squeeze %0 : memref<1x!tpu.dma_semaphore, #tpu.memory_space<semaphore_mem>> -> memref<!tpu.dma_semaphore, #tpu.memory_space<semaphore_mem>>
    tpu.enqueue_dma source(%arg6 : memref<1024x1024xbf16, #tpu.memory_space<any>>) target(%arg9 : memref<1024x1024xbf16, #tpu.memory_space<vmem>>) target_semaphore(%1 : memref<!tpu.dma_semaphore, #tpu.memory_space<semaphore_mem>>)
    %c1_i32 = arith.constant 1 : i32
    %2 = tpu.memref_slice %arg11[%c1_i32] : memref<2x!tpu.dma_semaphore, #tpu.memory_space<semaphore_mem>> -> memref<1x!tpu.dma_semaphore, #tpu.memory_space<semaphore_mem>>
    %3 = tpu.memref_squeeze %2 : memref<1x!tpu.dma_semaphore, #tpu.memory_space<semaphore_mem>> -> memref<!tpu.dma_semaphore, #tpu.memory_space<semaphore_mem>>
    tpu.enqueue_dma source(%arg7 : memref<1024x128xbf16, #tpu.memory_space<any>>) target(%arg10 : memref<1024x128xbf16, #tpu.memory_space<vmem>>) target_semaphore(%3 : memref<!tpu.dma_semaphore, #tpu.memory_space<semaphore_mem>>)
    %c0 = arith.constant 0 : index
    %c0_0 = arith.constant 0 : index
    %4 = vector.load %arg1[%c0, %c0_0] : memref<16x1024xbf16, #tpu.memory_space<vmem>>, vector<16x1024xbf16>
    %c0_1 = arith.constant 0 : index
    %c0_2 = arith.constant 0 : index
    %5 = vector.load %arg2[%c0_1, %c0_2] : memref<1024x1024xbf16, #tpu.memory_space<vmem>>, vector<1024x1024xbf16>
    %cst = arith.constant dense<0.000000e+00> : vector<16x1024xf32>
    %6 = tpu.matmul %4, %5, %cst {dimension_numbers = #tpu.dot_dimension_numbers<[1], [0], [0], [1], [0, 0, 1, 1], [], []>} : vector<16x1024xbf16>, vector<1024x1024xbf16>, vector<16x1024xf32> -> vector<16x1024xf32>
    %c0_3 = arith.constant 0 : index
    %c0_4 = arith.constant 0 : index
    %7 = vector.load %arg3[%c0_3, %c0_4] : memref<1x1024xf32, #tpu.memory_space<vmem>>, vector<1x1024xf32>
    %8 = vector.broadcast %7 : vector<1x1024xf32> to vector<16x1024xf32>
    %9 = arith.addf %6, %8 : vector<16x1024xf32>
    %cst_5 = arith.constant 0.000000e+00 : f32
    %10 = vector.broadcast %cst_5 : f32 to vector<16x1024xf32>
    %11 = arith.cmpf oge, %9, %10 : vector<16x1024xf32>
    %cst_6 = arith.constant 2.000000e-01 : f32
    %12 = vector.broadcast %cst_6 : f32 to vector<16x1024xf32>
    %13 = arith.mulf %12, %9 : vector<16x1024xf32>
    %14 = arith.select %11, %9, %13 : vector<16x1024xi1>, vector<16x1024xf32>
    %c0_i32_7 = arith.constant 0 : i32
    %15 = tpu.memref_slice %arg11[%c0_i32_7] : memref<2x!tpu.dma_semaphore, #tpu.memory_space<semaphore_mem>> -> memref<1x!tpu.dma_semaphore, #tpu.memory_space<semaphore_mem>>
    %16 = tpu.memref_squeeze %15 : memref<1x!tpu.dma_semaphore, #tpu.memory_space<semaphore_mem>> -> memref<!tpu.dma_semaphore, #tpu.memory_space<semaphore_mem>>
    tpu.wait_dma2 semaphore(%16 : memref<!tpu.dma_semaphore, #tpu.memory_space<semaphore_mem>>) src(%arg6 : memref<1024x1024xbf16, #tpu.memory_space<any>>) dst(%arg9 : memref<1024x1024xbf16, #tpu.memory_space<vmem>>)
    %17 = arith.truncf %14 : vector<16x1024xf32> to vector<16x1024xbf16>
    %c0_8 = arith.constant 0 : index
    %c0_9 = arith.constant 0 : index
    %18 = vector.load %arg9[%c0_8, %c0_9] : memref<1024x1024xbf16, #tpu.memory_space<vmem>>, vector<1024x1024xbf16>
    %cst_10 = arith.constant dense<0.000000e+00> : vector<16x1024xf32>
    %19 = tpu.matmul %17, %18, %cst_10 {dimension_numbers = #tpu.dot_dimension_numbers<[1], [0], [0], [1], [0, 0, 1, 1], [], []>} : vector<16x1024xbf16>, vector<1024x1024xbf16>, vector<16x1024xf32> -> vector<16x1024xf32>
    %c0_11 = arith.constant 0 : index
    %c0_12 = arith.constant 0 : index
    %20 = vector.load %arg4[%c0_11, %c0_12] : memref<1x1024xf32, #tpu.memory_space<vmem>>, vector<1x1024xf32>
    %21 = vector.broadcast %20 : vector<1x1024xf32> to vector<16x1024xf32>
    %22 = arith.addf %19, %21 : vector<16x1024xf32>
    %cst_13 = arith.constant 0.000000e+00 : f32
    %23 = vector.broadcast %cst_13 : f32 to vector<16x1024xf32>
    %24 = arith.cmpf oge, %22, %23 : vector<16x1024xf32>
    %cst_14 = arith.constant 2.000000e-01 : f32
    %25 = vector.broadcast %cst_14 : f32 to vector<16x1024xf32>
    %26 = arith.mulf %25, %22 : vector<16x1024xf32>
    %27 = arith.select %24, %22, %26 : vector<16x1024xi1>, vector<16x1024xf32>
    %c1_i32_15 = arith.constant 1 : i32
    %28 = tpu.memref_slice %arg11[%c1_i32_15] : memref<2x!tpu.dma_semaphore, #tpu.memory_space<semaphore_mem>> -> memref<1x!tpu.dma_semaphore, #tpu.memory_space<semaphore_mem>>
    %29 = tpu.memref_squeeze %28 : memref<1x!tpu.dma_semaphore, #tpu.memory_space<semaphore_mem>> -> memref<!tpu.dma_semaphore, #tpu.memory_space<semaphore_mem>>
    tpu.wait_dma2 semaphore(%29 : memref<!tpu.dma_semaphore, #tpu.memory_space<semaphore_mem>>) src(%arg7 : memref<1024x128xbf16, #tpu.memory_space<any>>) dst(%arg10 : memref<1024x128xbf16, #tpu.memory_space<vmem>>)
    %30 = arith.truncf %27 : vector<16x1024xf32> to vector<16x1024xbf16>
    %c0_16 = arith.constant 0 : index
    %c0_17 = arith.constant 0 : index
    %31 = vector.load %arg10[%c0_16, %c0_17] : memref<1024x128xbf16, #tpu.memory_space<vmem>>, vector<1024x128xbf16>
    %cst_18 = arith.constant dense<0.000000e+00> : vector<16x128xf32>
    %32 = tpu.matmul %30, %31, %cst_18 {dimension_numbers = #tpu.dot_dimension_numbers<[1], [0], [0], [1], [0, 0, 1, 1], [], []>} : vector<16x1024xbf16>, vector<1024x128xbf16>, vector<16x128xf32> -> vector<16x128xf32>
    %c0_19 = arith.constant 0 : index
    %c0_20 = arith.constant 0 : index
    %33 = vector.load %arg5[%c0_19, %c0_20] : memref<1x128xf32, #tpu.memory_space<vmem>>, vector<1x128xf32>
    %34 = vector.broadcast %33 : vector<1x128xf32> to vector<16x128xf32>
    %35 = arith.addf %32, %34 : vector<16x128xf32>
    %c0_21 = arith.constant 0 : index
    %c0_22 = arith.constant 0 : index
    %36 = vector.load %arg8[%c0_21, %c0_22] : memref<16x128xf32, #tpu.memory_space<vmem>>, vector<16x128xf32>
    tpu.vector_store %arg8[%c0_21, %c0_22], %35 {strides = array<i32>} : memref<16x128xf32, #tpu.memory_space<vmem>>, vector<16x128xf32>,
    return
  }
  func.func @transform_0(%arg0: i32) -> (i32, i32) {
    %c0_i32 = arith.constant 0 : i32
    %c0_i32_0 = arith.constant 0 : i32
    %c0_i32_1 = arith.constant 0 : i32
    return %c0_i32, %c0_i32_0 : i32, i32
  }
  func.func @transform_1(%arg0: i32) -> (i32, i32) {
    %c0_i32 = arith.constant 0 : i32
    %c0_i32_0 = arith.constant 0 : i32
    %c0_i32_1 = arith.constant 0 : i32
    return %c0_i32, %c0_i32_0 : i32, i32
  }
  func.func @transform_2(%arg0: i32) -> (i32, i32) {
    %c0_i32 = arith.constant 0 : i32
    %c0_i32_0 = arith.constant 0 : i32
    %c0_i32_1 = arith.constant 0 : i32
    return %c0_i32, %c0_i32_0 : i32, i32
  }
  func.func @transform_3(%arg0: i32) -> (i32, i32) {
    %c0_i32 = arith.constant 0 : i32
    %c0_i32_0 = arith.constant 0 : i32
    %c0_i32_1 = arith.constant 0 : i32
    return %c0_i32, %c0_i32_0 : i32, i32
  }
  func.func @transform_4(%arg0: i32) -> (i32, i32) {
    %c0_i32 = arith.constant 0 : i32
    %c0_i32_0 = arith.constant 0 : i32
    %c0_i32_1 = arith.constant 0 : i32
    return %c0_i32, %c0_i32_0 : i32, i32
  }
  func.func @transform_7(%arg0: i32) -> (i32, i32) {
    %c0_i32 = arith.constant 0 : i32
    %c0_i32_0 = arith.constant 0 : i32
    %c0_i32_1 = arith.constant 0 : i32
    return %c0_i32, %c0_i32_0 : i32, i32
  }
}

</mosaic_0001>

<llo_original>
// kernel: _fwd.1
$region0: #{_fwd.1}
  #allocation0 [shape = 'u32[]', space=smem, size = 0x4, offset = 0x4, fixed_abs, tag = 'smem constant byte address 0x4 - core index']
  #allocation1 [shape = 'u32[144,128]{1,0:T(1,128)}', space=vmem, size = 0x12000, scoped, tag = 'internal scratch']
  #allocation2 [shape = 'bf16[1024,1024]{1,0:T(8,128)(2,1)}', space=vmem, size = 0x200000, scoped, tag = 'scratch operand']
  #allocation3 [shape = 'bf16[1024,128]{1,0:T(8,128)(2,1)}', space=vmem, size = 0x40000, scoped, tag = 'scratch operand']
  #allocation4 [shape = 's32[2]{0}', space=sflag, size = 0x8, scoped, tag = 'scratch operand']
  #allocation12 [shape = 's32[]', space=sflag, size = 0x4, offset = 0, fixed_abs, tag = 'sflag constant byte address 0x0 - dummy sync flag']
  #allocation13 [shape = 's32[]', space=sflag, size = 0x4, offset = 0, fixed_abs, tag = 'sflag constant byte address 0x0 - dummy sync flag']
  #allocation14 [shape = 'u32[]', space=smem, size = 0x4, offset = 0x44, fixed_abs, tag = 'smem constant byte address 0x44 - assertion arg 0']
  #allocation15 [shape = 'u32[]', space=smem, size = 0x4, offset = 0x48, fixed_abs, tag = 'smem constant byte address 0x48 - assertion arg 1']
  #allocation16 [shape = 's32[]', space=sflag, size = 0x4, offset = 0, fixed_abs, tag = 'sflag constant byte address 0x0 - dummy sync flag']
  #allocation17 [shape = 's32[]', space=sflag, size = 0x4, offset = 0, fixed_abs, tag = 'sflag constant byte address 0x0 - dummy sync flag']
  %s0 = inlined_call_operand.vmem [shape: bf16[16,1024], index: 0, kind: input, shape index: {}]
  %s1 = inlined_call_operand.hbm [shape: bf16[1024,1024], index: 1, kind: input, shape index: {}]
  %s2 = inlined_call_operand.hbm [shape: f32[1,1024], index: 2, kind: input, shape index: {}]
  %s3 = inlined_call_operand.hbm [shape: f32[1,1024], index: 3, kind: input, shape index: {}]
  %s4 = inlined_call_operand.hbm [shape: f32[1,128], index: 4, kind: input, shape index: {}]
  %s5 = inlined_call_operand.hbm [shape: bf16[1024,1024], index: 5, kind: input, shape index: {}]
  %s6 = inlined_call_operand.hbm [shape: bf16[1024,128], index: 6, kind: input, shape index: {}]
  %s7 = inlined_call_operand.vmem [shape: f32[16,128], index: 7, kind: output, shape index: {}]
  %s8 = sld [smem:[#allocation0]]
  $region54: #{_fwd.1} parent=0
    _
  %s10 = ssub.s32 1, %s8
  %s11 = scalar_select 0, %s10, %s8
  $region1: #{_fwd.1} parent=0
    #allocation5 [shape = 'u8[2097152]{0}', space=vmem, size = 0x200000, scoped, tag = 'input window, operand 1, single buffered']
    #allocation6 [shape = 's32[1]{0}', space=sflag, size = 0x4, scoped, tag = 'scoped memory for _fwd.1']
    #allocation7 [shape = 'u8[4096]{0}', space=vmem, size = 0x1000, scoped, tag = 'input window, operand 2, single buffered']
    #allocation8 [shape = 's32[1]{0}', space=sflag, size = 0x4, scoped, tag = 'scoped memory for _fwd.1']
    #allocation9 [shape = 'u8[4096]{0}', space=vmem, size = 0x1000, scoped, tag = 'input window, operand 3, single buffered']
    #allocation10 [shape = 'u8[512]{0}', space=vmem, size = 0x400, scoped, tag = 'input window, operand 4, single buffered']
    #allocation11 [shape = 's32[1]{0}', space=sflag, size = 0x4, scoped, tag = 'scoped memory for _fwd.1']
    %12 = vsyncpa [#allocation6], 0
    %13 = vsyncpa [#allocation8], 0
    %14 = vsyncpa [#allocation11], 0
    // Predicated region
    $region2: #{_fwd.1} parent=1 // pred_check
      _
    $region3: #{_fwd.1} parent=1 // pred_check_branch
      %16 = sbr.rel (0) target = $region5
    $region4: #{_fwd.1} parent=1 // pred_region
      _
    $region5: #{_fwd.1} parent=1 // pred_fallthru
      _
    // Predicated region
    $region6: #{_fwd.1} parent=1 // pred_check
      _
    $region7: #{_fwd.1} parent=1 // pred_check_branch
      %18 = sbr.rel (0) target = $region9
    $region8: #{_fwd.1} parent=1 // pred_region
      %s20 = ssub.s32 65536, 65536
      %21 = vsyncadd [#allocation6], %s20
      %s22 = sshll.u32 [#allocation5], 4
      %s23 = int_to_ptr.vmem [resolvable:$true] %s22
      %28 = dma.hbm_to_vmem [thread:$0]  %s1, 65536, %s23, [#allocation6], 512, 512, 32
    $region9: #{_fwd.1} parent=1 // pred_fallthru
      _
    // Predicated region
    $region10: #{_fwd.1} parent=1 // pred_check
      _
    $region11: #{_fwd.1} parent=1 // pred_check_branch
      %30 = sbr.rel (0) target = $region13
    $region12: #{_fwd.1} parent=1 // pred_region
      %s32 = ssub.s32 128, 128
      %33 = vsyncadd [#allocation8], %s32
      %s35 = sshll.u32 [#allocation7], 4
      %s36 = int_to_ptr.vmem [resolvable:$true] %s35
      %38 = dma.hbm_to_vmem [thread:$0]  %s2, 128, %s36, [#allocation8]
    $region13: #{_fwd.1} parent=1 // pred_fallthru
      _
    // Predicated region
    $region14: #{_fwd.1} parent=1 // pred_check
      _
    $region15: #{_fwd.1} parent=1 // pred_check_branch
      %40 = sbr.rel (0) target = $region17
    $region16: #{_fwd.1} parent=1 // pred_region
      %s42 = ssub.s32 128, 128
      %43 = vsyncadd [#allocation8], %s42
      %s45 = sshll.u32 [#allocation9], 4
      %s46 = int_to_ptr.vmem [resolvable:$true] %s45
      %48 = dma.hbm_to_vmem [thread:$0]  %s3, 128, %s46, [#allocation8]
    $region17: #{_fwd.1} parent=1 // pred_fallthru
      _
    // Predicated region
    $region18: #{_fwd.1} parent=1 // pred_check
      _
    $region19: #{_fwd.1} parent=1 // pred_check_branch
      %50 = sbr.rel (0) target = $region21
    $region20: #{_fwd.1} parent=1 // pred_region
      %s52 = ssub.s32 16, 16
      %53 = vsyncadd [#allocation11], %s52
      %s55 = sshll.u32 [#allocation10], 4
      %s56 = int_to_ptr.vmem [resolvable:$true] %s55
      %58 = dma.hbm_to_vmem [thread:$0]  %s4, 16, %s56, [#allocation11]
    $region21: #{_fwd.1} parent=1 // pred_fallthru
      _
    // Predicated region
    $region22: #{_fwd.1} parent=1 // pred_check
      _
    $region23: #{_fwd.1} parent=1 // pred_check_branch
      %60 = sbr.rel (0) target = $region25
    $region24: #{_fwd.1} parent=1 // pred_region
      %61 = dma.done [#allocation6], 65536
    $region25: #{_fwd.1} parent=1 // pred_fallthru
      _
    // Predicated region
    $region26: #{_fwd.1} parent=1 // pred_check
      _
    $region27: #{_fwd.1} parent=1 // pred_check_branch
      %63 = sbr.rel (0) target = $region29
    $region28: #{_fwd.1} parent=1 // pred_region
      %64 = dma.done [#allocation8], 128
    $region29: #{_fwd.1} parent=1 // pred_fallthru
      _
    // Predicated region
    $region30: #{_fwd.1} parent=1 // pred_check
      _
    $region31: #{_fwd.1} parent=1 // pred_check_branch
      %66 = sbr.rel (0) target = $region33
    $region32: #{_fwd.1} parent=1 // pred_region
      %67 = dma.done [#allocation8], 128
    $region33: #{_fwd.1} parent=1 // pred_fallthru
      _
    // Predicated region
    $region34: #{_fwd.1} parent=1 // pred_check
      _
    $region35: #{_fwd.1} parent=1 // pred_check_branch
      %69 = sbr.rel (0) target = $region37
    $region36: #{_fwd.1} parent=1 // pred_region
      %70 = dma.done [#allocation11], 16
    $region37: #{_fwd.1} parent=1 // pred_fallthru
      _
    // Predicated region
    $region38: #{_fwd.1} parent=1 // pred_check
      _
    $region39: #{_fwd.1} parent=1 // pred_check_branch
      %73 = sbr.rel target = $region41
    $region40: #{_fwd.1} parent=1 // pred_region
      %74 = sst [smem:[#allocation14]] [#allocation13]
      %75 = sst [smem:[#allocation15]] [#allocation12]
    $region41: #{_fwd.1} parent=1 // pred_fallthru
      _
    %77 = shalt.err (0)
    %s79 = sshll.u32 [#allocation2], 4
    %s80 = int_to_ptr.vmem [resolvable:$true] %s79
    %82 = dma.hbm_to_vmem [thread:$0]  %s5, 65536, %s80, [#allocation4]
    %s83 = scalar_lea.sflag [#allocation4], 1
    // Predicated region
    $region42: #{_fwd.1} parent=1 // pred_check
      _
    $region43: #{_fwd.1} parent=1 // pred_check_branch
      %85 = sbr.rel target = $region45
    $region44: #{_fwd.1} parent=1 // pred_region
      %86 = sst [smem:[#allocation14]] [#allocation17]
      %87 = sst [smem:[#allocation15]] [#allocation16]
    $region45: #{_fwd.1} parent=1 // pred_fallthru
      _
    %89 = shalt.err (0)
    %s91 = sshll.u32 [#allocation3], 4
    %s92 = int_to_ptr.vmem [resolvable:$true] %s91
    %94 = dma.hbm_to_vmem [thread:$0]  %s6, 8192, %s92, %s83
    %v95 = vld [vmem:[%s0] sm:$0xff]
    %v96 = vld [vmem:[%s0 + $0x8] sm:$0xff]
    %v97 = vld [vmem:[%s0 + $0x10] sm:$0xff]
    %v98 = vld [vmem:[%s0 + $0x18] sm:$0xff]
    %v99 = vld [vmem:[%s0 + $0x20] sm:$0xff]
    %v100 = vld [vmem:[%s0 + $0x28] sm:$0xff]
    %v101 = vld [vmem:[%s0 + $0x30] sm:$0xff]
    %v102 = vld [vmem:[%s0 + $0x38] sm:$0xff]
    %v103 = vld [vmem:[#allocation5] sm:$0xff]
    %v104 = vld [vmem:[#allocation5 + $0x8] sm:$0xff]
    %v105 = vld [vmem:[#allocation5 + $0x10] sm:$0xff]
    %v106 = vld [vmem:[#allocation5 + $0x18] sm:$0xff]
    %v107 = vld [vmem:[#allocation5 + $0x20] sm:$0xff]
    %v108 = vld [vmem:[#allocation5 + $0x28] sm:$0xff]
    %v109 = vld [vmem:[#allocation5 + $0x30] sm:$0xff]
    %v110 = vld [vmem:[#allocation5 + $0x38] sm:$0xff]
    %v111 = vld [vmem:[#allocation5 + $0x40] sm:$0xff]
    %v112 = vld [vmem:[#allocation5 + $0x48] sm:$0xff]
    %v113 = vld [vmem:[#allocation5 + $0x50] sm:$0xff]
    %v114 = vld [vmem:[#allocation5 + $0x58] sm:$0xff]
    %v115 = vld [vmem:[#allocation5 + $0x60] sm:$0xff]
    %v116 = vld [vmem:[#allocation5 + $0x68] sm:$0xff]
    %v117 = vld [vmem:[#allocation5 + $0x70] sm:$0xff]
    %v118 = vld [vmem:[#allocation5 + $0x78] sm:$0xff]
    %v119 = vld [vmem:[#allocation5 + $0x80] sm:$0xff]
    %v120 = vld [vmem:[#allocation5 + $0x88] sm:$0xff]
    %v121 = vld [vmem:[#allocation5 + $0x90] sm:$0xff]
    %v122 = vld [vmem:[#allocation5 + $0x98] sm:$0xff]
    %v123 = vld [vmem:[#allocation5 + $0xa0] sm:$0xff]
    %v124 = vld [vmem:[#allocation5 + $0xa8] sm:$0xff]
    %v125 = vld [vmem:[#allocation5 + $0xb0] sm:$0xff]
    %v126 = vld [vmem:[#allocation5 + $0xb8] sm:$0xff]
    %v127 = vld [vmem:[#allocation5 + $0xc0] sm:$0xff]
    %v128 = vld [vmem:[#allocation5 + $0xc8] sm:$0xff]
    %v129 = vld [vmem:[#allocation5 + $0xd0] sm:$0xff]
    %v130 = vld [vmem:[#allocation5 + $0xd8] sm:$0xff]
    %v131 = vld [vmem:[#allocation5 + $0xe0] sm:$0xff]
    %v132 = vld [vmem:[#allocation5 + $0xe8] sm:$0xff]
    %v133 = vld [vmem:[#allocation5 + $0xf0] sm:$0xff]
    %v134 = vld [vmem:[#allocation5 + $0xf8] sm:$0xff]
    %v135 = vld [vmem:[#allocation5 + $0x100] sm:$0xff]
    %v136 = vld [vmem:[#allocation5 + $0x108] sm:$0xff]
    %v137 = vld [vmem:[#allocation5 + $0x110] sm:$0xff]
    %v138 = vld [vmem:[#allocation5 + $0x118] sm:$0xff]
    %v139 = vld [vmem:[#allocation5 + $0x120] sm:$0xff]
    %v140 = vld [vmem:[#allocation5 + $0x128] sm:$0xff]
    %v141 = vld [vmem:[#allocation5 + $0x130] sm:$0xff]
    %v142 = vld [vmem:[#allocation5 + $0x138] sm:$0xff]
    %v143 = vld [vmem:[#allocation5 + $0x140] sm:$0xff]
    %v144 = vld [vmem:[#allocation5 + $0x148] sm:$0xff]
    %v145 = vld [vmem:[#allocation5 + $0x150] sm:$0xff]
    %v146 = vld [vmem:[#allocation5 + $0x158] sm:$0xff]
    %v147 = vld [vmem:[#allocation5 + $0x160] sm:$0xff]
    %v148 = vld [vmem:[#allocation5 + $0x168] sm:$0xff]
    %v149 = vld [vmem:[#allocation5 + $0x170] sm:$0xff]
    %v150 = vld [vmem:[#allocation5 + $0x178] sm:$0xff]
    %v151 = vld [vmem:[#allocation5 + $0x180] sm:$0xff]
    %v152 = vld [vmem:[#allocation5 + $0x188] sm:$0xff]
    %v153 = vld [vmem:[#allocation5 + $0x190] sm:$0xff]
    %v154 = vld [vmem:[#allocation5 + $0x198] sm:$0xff]
    %v155 = vld [vmem:[#allocation5 + $0x1a0] sm:$0xff]
    %v156 = vld [vmem:[#allocation5 + $0x1a8] sm:$0xff]
    %v157 = vld [vmem:[#allocation5 + $0x1b0] sm:$0xff]
    %v158 = vld [vmem:[#allocation5 + $0x1b8] sm:$0xff]
    %v159 = vld [vmem:[#allocation5 + $0x1c0] sm:$0xff]
    %v160 = vld [vmem:[#allocation5 + $0x1c8] sm:$0xff]
    %v161 = vld [vmem:[#allocation5 + $0x1d0] sm:$0xff]
    %v162 = vld [vmem:[#allocation5 + $0x1d8] sm:$0xff]
    %v163 = vld [vmem:[#allocation5 + $0x1e0] sm:$0xff]
    %v164 = vld [vmem:[#allocation5 + $0x1e8] sm:$0xff]
    %v165 = vld [vmem:[#allocation5 + $0x1f0] sm:$0xff]
    %v166 = vld [vmem:[#allocation5 + $0x1f8] sm:$0xff]
    %v167 = vld [vmem:[#allocation5 + $0x200] sm:$0xff]
    %v168 = vld [vmem:[#allocation5 + $0x208] sm:$0xff]
    %v169 = vld [vmem:[#allocation5 + $0x210] sm:$0xff]
    %v170 = vld [vmem:[#allocation5 + $0x218] sm:$0xff]
    %v171 = vld [vmem:[#allocation5 + $0x220] sm:$0xff]
    %v172 = vld [vmem:[#allocation5 + $0x228] sm:$0xff]
    %v173 = vld [vmem:[#allocation5 + $0x230] sm:$0xff]
    %v174 = vld [vmem:[#allocation5 + $0x238] sm:$0xff]
    %v175 = vld [vmem:[#allocation5 + $0x240] sm:$0xff]
    %v176 = vld [vmem:[#allocation5 + $0x248] sm:$0xff]
    %v177 = vld [vmem:[#allocation5 + $0x250] sm:$0xff]
    %v178 = vld [vmem:[#allocation5 + $0x258] sm:$0xff]
    %v179 = vld [vmem:[#allocation5 + $0x260] sm:$0xff]
    %v180 = vld [vmem:[#allocation5 + $0x268] sm:$0xff]
    %v181 = vld [vmem:[#allocation5 + $0x270] sm:$0xff]
    %v182 = vld [vmem:[#allocation5 + $0x278] sm:$0xff]
    %v183 = vld [vmem:[#allocation5 + $0x280] sm:$0xff]
    %v184 = vld [vmem:[#allocation5 + $0x288] sm:$0xff]
    %v185 = vld [vmem:[#allocation5 + $0x290] sm:$0xff]
    %v186 = vld [vmem:[#allocation5 + $0x298] sm:$0xff]
    %v187 = vld [vmem:[#allocation5 + $0x2a0] sm:$0xff]
    %v188 = vld [vmem:[#allocation5 + $0x2a8] sm:$0xff]
    %v189 = vld [vmem:[#allocation5 + $0x2b0] sm:$0xff]
    %v190 = vld [vmem:[#allocation5 + $0x2b8] sm:$0xff]
    %v191 = vld [vmem:[#allocation5 + $0x2c0] sm:$0xff]
    %v192 = vld [vmem:[#allocation5 + $0x2c8] sm:$0xff]
    %v193 = vld [vmem:[#allocation5 + $0x2d0] sm:$0xff]
    %v194 = vld [vmem:[#allocation5 + $0x2d8] sm:$0xff]
    %v195 = vld [vmem:[#allocation5 + $0x2e0] sm:$0xff]
    %v196 = vld [vmem:[#allocation5 + $0x2e8] sm:$0xff]
    %v197 = vld [vmem:[#allocation5 + $0x2f0] sm:$0xff]
    %v198 = vld [vmem:[#allocation5 + $0x2f8] sm:$0xff]
    %v199 = vld [vmem:[#allocation5 + $0x300] sm:$0xff]
    %v200 = vld [vmem:[#allocation5 + $0x308] sm:$0xff]
    %v201 = vld [vmem:[#allocation5 + $0x310] sm:$0xff]
    %v202 = vld [vmem:[#allocation5 + $0x318] sm:$0xff]
    %v203 = vld [vmem:[#allocation5 + $0x320] sm:$0xff]
    %v204 = vld [vmem:[#allocation5 + $0x328] sm:$0xff]
    %v205 = vld [vmem:[#allocation5 + $0x330] sm:$0xff]
    %v206 = vld [vmem:[#allocation5 + $0x338] sm:$0xff]
    %v207 = vld [vmem:[#allocation5 + $0x340] sm:$0xff]
    %v208 = vld [vmem:[#allocation5 + $0x348] sm:$0xff]
    %v209 = vld [vmem:[#allocation5 + $0x350] sm:$0xff]
    %v210 = vld [vmem:[#allocation5 + $0x358] sm:$0xff]
    %v211 = vld [vmem:[#allocation5 + $0x360] sm:$0xff]
    %v212 = vld [vmem:[#allocation5 + $0x368] sm:$0xff]
    %v213 = vld [vmem:[#allocation5 + $0x370] sm:$0xff]
    %v214 = vld [vmem:[#allocation5 + $0x378] sm:$0xff]
    %v215 = vld [vmem:[#allocation5 + $0x380] sm:$0xff]
    %v216 = vld [vmem:[#allocation5 + $0x388] sm:$0xff]
    %v217 = vld [vmem:[#allocation5 + $0x390] sm:$0xff]
    %v218 = vld [vmem:[#allocation5 + $0x398] sm:$0xff]
    %v219 = vld [vmem:[#allocation5 + $0x3a0] sm:$0xff]
    %v220 = vld [vmem:[#allocation5 + $0x3a8] sm:$0xff]
    %v221 = vld [vmem:[#allocation5 + $0x3b0] sm:$0xff]
    %v222 = vld [vmem:[#allocation5 + $0x3b8] sm:$0xff]
    %v223 = vld [vmem:[#allocation5 + $0x3c0] sm:$0xff]
    %v224 = vld [vmem:[#allocation5 + $0x3c8] sm:$0xff]
    %v225 = vld [vmem:[#allocation5 + $0x3d0] sm:$0xff]
    %v226 = vld [vmem:[#allocation5 + $0x3d8] sm:$0xff]
    %v227 = vld [vmem:[#allocation5 + $0x3e0] sm:$0xff]
    %v228 = vld [vmem:[#allocation5 + $0x3e8] sm:$0xff]
    %v229 = vld [vmem:[#allocation5 + $0x3f0] sm:$0xff]
    %v230 = vld [vmem:[#allocation5 + $0x3f8] sm:$0xff]
    %v231 = vld [vmem:[#allocation5 + $0x400] sm:$0xff]
    %v232 = vld [vmem:[#allocation5 + $0x408] sm:$0xff]
    %v233 = vld [vmem:[#allocation5 + $0x410] sm:$0xff]
    %v234 = vld [vmem:[#allocation5 + $0x418] sm:$0xff]
    %v235 = vld [vmem:[#allocation5 + $0x420] sm:$0xff]
    %v236 = vld [vmem:[#allocation5 + $0x428] sm:$0xff]
    %v237 = vld [vmem:[#allocation5 + $0x430] sm:$0xff]
    %v238 = vld [vmem:[#allocation5 + $0x438] sm:$0xff]
    %v239 = vld [vmem:[#allocation5 + $0x440] sm:$0xff]
    %v240 = vld [vmem:[#allocation5 + $0x448] sm:$0xff]
    %v241 = vld [vmem:[#allocation5 + $0x450] sm:$0xff]
    %v242 = vld [vmem:[#allocation5 + $0x458] sm:$0xff]
    %v243 = vld [vmem:[#allocation5 + $0x460] sm:$0xff]
    %v244 = vld [vmem:[#allocation5 + $0x468] sm:$0xff]
    %v245 = vld [vmem:[#allocation5 + $0x470] sm:$0xff]
    %v246 = vld [vmem:[#allocation5 + $0x478] sm:$0xff]
    %v247 = vld [vmem:[#allocation5 + $0x480] sm:$0xff]
    %v248 = vld [vmem:[#allocation5 + $0x488] sm:$0xff]
    %v249 = vld [vmem:[#allocation5 + $0x490] sm:$0xff]
    %v250 = vld [vmem:[#allocation5 + $0x498] sm:$0xff]
    %v251 = vld [vmem:[#allocation5 + $0x4a0] sm:$0xff]
    %v252 = vld [vmem:[#allocation5 + $0x4a8] sm:$0xff]
    %v253 = vld [vmem:[#allocation5 + $0x4b0] sm:$0xff]
    %v254 = vld [vmem:[#allocation5 + $0x4b8] sm:$0xff]
    %v255 = vld [vmem:[#allocation5 + $0x4c0] sm:$0xff]
    %v256 = vld [vmem:[#allocation5 + $0x4c8] sm:$0xff]
    %v257 = vld [vmem:[#allocation5 + $0x4d0] sm:$0xff]
    %v258 = vld [vmem:[#allocation5 + $0x4d8] sm:$0xff]
    %v259 = vld [vmem:[#allocation5 + $0x4e0] sm:$0xff]
    %v260 = vld [vmem:[#allocation5 + $0x4e8] sm:$0xff]
    %v261 = vld [vmem:[#allocation5 + $0x4f0] sm:$0xff]
    %v262 = vld [vmem:[#allocation5 + $0x4f8] sm:$0xff]
    %v263 = vld [vmem:[#allocation5 + $0x500] sm:$0xff]
    %v264 = vld [vmem:[#allocation5 + $0x508] sm:$0xff]
    %v265 = vld [vmem:[#allocation5 + $0x510] sm:$0xff]
    %v266 = vld [vmem:[#allocation5 + $0x518] sm:$0xff]
    %v267 = vld [vmem:[#allocation5 + $0x520] sm:$0xff]
    %v268 = vld [vmem:[#allocation5 + $0x528] sm:$0xff]
    %v269 = vld [vmem:[#allocation5 + $0x530] sm:$0xff]
    %v270 = vld [vmem:[#allocation5 + $0x538] sm:$0xff]
    %v271 = vld [vmem:[#allocation5 + $0x540] sm:$0xff]
    %v272 = vld [vmem:[#allocation5 + $0x548] sm:$0xff]
    %v273 = vld [vmem:[#allocation5 + $0x550] sm:$0xff]
    %v274 = vld [vmem:[#allocation5 + $0x558] sm:$0xff]
    %v275 = vld [vmem:[#allocation5 + $0x560] sm:$0xff]
    %v276 = vld [vmem:[#allocation5 + $0x568] sm:$0xff]
    %v277 = vld [vmem:[#allocation5 + $0x570] sm:$0xff]
    %v278 = vld [vmem:[#allocation5 + $0x578] sm:$0xff]
    %v279 = vld [vmem:[#allocation5 + $0x580] sm:$0xff]
    %v280 = vld [vmem:[#allocation5 + $0x588] sm:$0xff]
    %v281 = vld [vmem:[#allocation5 + $0x590] sm:$0xff]
    %v282 = vld [vmem:[#allocation5 + $0x598] sm:$0xff]
    %v283 = vld [vmem:[#allocation5 + $0x5a0] sm:$0xff]
    %v284 = vld [vmem:[#allocation5 + $0x5a8] sm:$0xff]
    %v285 = vld [vmem:[#allocation5 + $0x5b0] sm:$0xff]
    %v286 = vld [vmem:[#allocation5 + $0x5b8] sm:$0xff]
    %v287 = vld [vmem:[#allocation5 + $0x5c0] sm:$0xff]
    %v288 = vld [vmem:[#allocation5 + $0x5c8] sm:$0xff]
    %v289 = vld [vmem:[#allocation5 + $0x5d0] sm:$0xff]
    %v290 = vld [vmem:[#allocation5 + $0x5d8] sm:$0xff]
    %v291 = vld [vmem:[#allocation5 + $0x5e0] sm:$0xff]
    %v292 = vld [vmem:[#allocation5 + $0x5e8] sm:$0xff]
    %v293 = vld [vmem:[#allocation5 + $0x5f0] sm:$0xff]
    %v294 = vld [vmem:[#allocation5 + $0x5f8] sm:$0xff]
    %v295 = vld [vmem:[#allocation5 + $0x600] sm:$0xff]
    %v296 = vld [vmem:[#allocation5 + $0x608] sm:$0xff]
    %v297 = vld [vmem:[#allocation5 + $0x610] sm:$0xff]
    %v298 = vld [vmem:[#allocation5 + $0x618] sm:$0xff]
    %v299 = vld [vmem:[#allocation5 + $0x620] sm:$0xff]
    %v300 = vld [vmem:[#allocation5 + $0x628] sm:$0xff]
    %v301 = vld [vmem:[#allocation5 + $0x630] sm:$0xff]
    %v302 = vld [vmem:[#allocation5 + $0x638] sm:$0xff]
    %v303 = vld [vmem:[#allocation5 + $0x640] sm:$0xff]
    %v304 = vld [vmem:[#allocation5 + $0x648] sm:$0xff]
    %v305 = vld [vmem:[#allocation5 + $0x650] sm:$0xff]
    %v306 = vld [vmem:[#allocation5 + $0x658] sm:$0xff]
    %v307 = vld [vmem:[#allocation5 + $0x660] sm:$0xff]
    %v308 = vld [vmem:[#allocation5 + $0x668] sm:$0xff]
    %v309 = vld [vmem:[#allocation5 + $0x670] sm:$0xff]
    %v310 = vld [vmem:[#allocation5 + $0x678] sm:$0xff]
    %v311 = vld [vmem:[#allocation5 + $0x680] sm:$0xff]
    %v312 = vld [vmem:[#allocation5 + $0x688] sm:$0xff]
    %v313 = vld [vmem:[#allocation5 + $0x690] sm:$0xff]
    %v314 = vld [vmem:[#allocation5 + $0x698] sm:$0xff]
    %v315 = vld [vmem:[#allocation5 + $0x6a0] sm:$0xff]
    %v316 = vld [vmem:[#allocation5 + $0x6a8] sm:$0xff]
    %v317 = vld [vmem:[#allocation5 + $0x6b0] sm:$0xff]
    %v318 = vld [vmem:[#allocation5 + $0x6b8] sm:$0xff]
    %v319 = vld [vmem:[#allocation5 + $0x6c0] sm:$0xff]
    %v320 = vld [vmem:[#allocation5 + $0x6c8] sm:$0xff]
    %v321 = vld [vmem:[#allocation5 + $0x6d0] sm:$0xff]
    %v322 = vld [vmem:[#allocation5 + $0x6d8] sm:$0xff]
    %v323 = vld [vmem:[#allocation5 + $0x6e0] sm:$0xff]
    %v324 = vld [vmem:[#allocation5 + $0x6e8] sm:$0xff]
    %v325 = vld [vmem:[#allocation5 + $0x6f0] sm:$0xff]
    %v326 = vld [vmem:[#allocation5 + $0x6f8] sm:$0xff]
    %v327 = vld [vmem:[#allocation5 + $0x700] sm:$0xff]
    %v328 = vld [vmem:[#allocation5 + $0x708] sm:$0xff]
    %v329 = vld [vmem:[#allocation5 + $0x710] sm:$0xff]
    %v330 = vld [vmem:[#allocation5 + $0x718] sm:$0xff]
    %v331 = vld [vmem:[#allocation5 + $0x720] sm:$0xff]
    %v332 = vld [vmem:[#allocation5 + $0x728] sm:$0xff]
    %v333 = vld [vmem:[#allocation5 + $0x730] sm:$0xff]
    %v334 = vld [vmem:[#allocation5 + $0x738] sm:$0xff]
    %v335 = vld [vmem:[#allocation5 + $0x740] sm:$0xff]
    %v336 = vld [vmem:[#allocation5 + $0x748] sm:$0xff]
    %v337 = vld [vmem:[#allocation5 + $0x750] sm:$0xff]
    %v338 = vld [vmem:[#allocation5 + $0x758] sm:$0xff]
    %v339 = vld [vmem:[#allocation5 + $0x760] sm:$0xff]
    %v340 = vld [vmem:[#allocation5 + $0x768] sm:$0xff]
    %v341 = vld [vmem:[#allocation5 + $0x770] sm:$0xff]
    %v342 = vld [vmem:[#allocation5 + $0x778] sm:$0xff]
    %v343 = vld [vmem:[#allocation5 + $0x780] sm:$0xff]
    %v344 = vld [vmem:[#allocation5 + $0x788] sm:$0xff]
    %v345 = vld [vmem:[#allocation5 + $0x790] sm:$0xff]
    %v346 = vld [vmem:[#allocation5 + $0x798] sm:$0xff]
    %v347 = vld [vmem:[#allocation5 + $0x7a0] sm:$0xff]
    %v348 = vld [vmem:[#allocation5 + $0x7a8] sm:$0xff]
    %v349 = vld [vmem:[#allocation5 + $0x7b0] sm:$0xff]
    %v350 = vld [vmem:[#allocation5 + $0x7b8] sm:$0xff]
    %v351 = vld [vmem:[#allocation5 + $0x7c0] sm:$0xff]
    %v352 = vld [vmem:[#allocation5 + $0x7c8] sm:$0xff]
    %v353 = vld [vmem:[#allocation5 + $0x7d0] sm:$0xff]
    %v354 = vld [vmem:[#allocation5 + $0x7d8] sm:$0xff]
    %v355 = vld [vmem:[#allocation5 + $0x7e0] sm:$0xff]
    %v356 = vld [vmem:[#allocation5 + $0x7e8] sm:$0xff]
    %v357 = vld [vmem:[#allocation5 + $0x7f0] sm:$0xff]
    %v358 = vld [vmem:[#allocation5 + $0x7f8] sm:$0xff]
    %v359 = vld [vmem:[#allocation5 + $0x800] sm:$0xff]
    %v360 = vld [vmem:[#allocation5 + $0x808] sm:$0xff]
    %v361 = vld [vmem:[#allocation5 + $0x810] sm:$0xff]
    %v362 = vld [vmem:[#allocation5 + $0x818] sm:$0xff]
    %v363 = vld [vmem:[#allocation5 + $0x820] sm:$0xff]
    %v364 = vld [vmem:[#allocation5 + $0x828] sm:$0xff]
    %v365 = vld [vmem:[#allocation5 + $0x830] sm:$0xff]
    %v366 = vld [vmem:[#allocation5 + $0x838] sm:$0xff]
    %v367 = vld [vmem:[#allocation5 + $0x840] sm:$0xff]
    %v368 = vld [vmem:[#allocation5 + $0x848] sm:$0xff]
    %v369 = vld [vmem:[#allocation5 + $0x850] sm:$0xff]
    %v370 = vld [vmem:[#allocation5 + $0x858] sm:$0xff]
    %v371 = vld [vmem:[#allocation5 + $0x860] sm:$0xff]
    %v372 = vld [vmem:[#allocation5 + $0x868] sm:$0xff]
    %v373 = vld [vmem:[#allocation5 + $0x870] sm:$0xff]
    %v374 = vld [vmem:[#allocation5 + $0x878] sm:$0xff]
    %v375 = vld [vmem:[#allocation5 + $0x880] sm:$0xff]
    %v376 = vld [vmem:[#allocation5 + $0x888] sm:$0xff]
    %v377 = vld [vmem:[#allocation5 + $0x890] sm:$0xff]
    %v378 = vld [vmem:[#allocation5 + $0x898] sm:$0xff]
    %v379 = vld [vmem:[#allocation5 + $0x8a0] sm:$0xff]
    %v380 = vld [vmem:[#allocation5 + $0x8a8] sm:$0xff]
    %v381 = vld [vmem:[#allocation5 + $0x8b0] sm:$0xff]
    %v382 = vld [vmem:[#allocation5 + $0x8b8] sm:$0xff]
    %v383 = vld [vmem:[#allocation5 + $0x8c0] sm:$0xff]
    %v384 = vld [vmem:[#allocation5 + $0x8c8] sm:$0xff]
    %v385 = vld [vmem:[#allocation5 + $0x8d0] sm:$0xff]
    %v386 = vld [vmem:[#allocation5 + $0x8d8] sm:$0xff]
    %v387 = vld [vmem:[#allocation5 + $0x8e0] sm:$0xff]
    %v388 = vld [vmem:[#allocation5 + $0x8e8] sm:$0xff]
    %v389 = vld [vmem:[#allocation5 + $0x8f0] sm:$0xff]
    %v390 = vld [vmem:[#allocation5 + $0x8f8] sm:$0xff]
    %v391 = vld [vmem:[#allocation5 + $0x900] sm:$0xff]
    %v392 = vld [vmem:[#allocation5 + $0x908] sm:$0xff]
    %v393 = vld [vmem:[#allocation5 + $0x910] sm:$0xff]
    %v394 = vld [vmem:[#allocation5 + $0x918] sm:$0xff]
    %v395 = vld [vmem:[#allocation5 + $0x920] sm:$0xff]
    %v396 = vld [vmem:[#allocation5 + $0x928] sm:$0xff]
    %v397 = vld [vmem:[#allocation5 + $0x930] sm:$0xff]
    %v398 = vld [vmem:[#allocation5 + $0x938] sm:$0xff]
    %v399 = vld [vmem:[#allocation5 + $0x940] sm:$0xff]
    %v400 = vld [vmem:[#allocation5 + $0x948] sm:$0xff]
    %v401 = vld [vmem:[#allocation5 + $0x950] sm:$0xff]
    %v402 = vld [vmem:[#allocation5 + $0x958] sm:$0xff]
    %v403 = vld [vmem:[#allocation5 + $0x960] sm:$0xff]
    %v404 = vld [vmem:[#allocation5 + $0x968] sm:$0xff]
    %v405 = vld [vmem:[#allocation5 + $0x970] sm:$0xff]
    %v406 = vld [vmem:[#allocation5 + $0x978] sm:$0xff]
    %v407 = vld [vmem:[#allocation5 + $0x980] sm:$0xff]
    %v408 = vld [vmem:[#allocation5 + $0x988] sm:$0xff]
    %v409 = vld [vmem:[#allocation5 + $0x990] sm:$0xff]
    %v410 = vld [vmem:[#allocation5 + $0x998] sm:$0xff]
    %v411 = vld [vmem:[#allocation5 + $0x9a0] sm:$0xff]
    %v412 = vld [vmem:[#allocation5 + $0x9a8] sm:$0xff]
    %v413 = vld [vmem:[#allocation5 + $0x9b0] sm:$0xff]
    %v414 = vld [vmem:[#allocation5 + $0x9b8] sm:$0xff]
    %v415 = vld [vmem:[#allocation5 + $0x9c0] sm:$0xff]
    %v416 = vld [vmem:[#allocation5 + $0x9c8] sm:$0xff]
    %v417 = vld [vmem:[#allocation5 + $0x9d0] sm:$0xff]
    %v418 = vld [vmem:[#allocation5 + $0x9d8] sm:$0xff]
    %v419 = vld [vmem:[#allocation5 + $0x9e0] sm:$0xff]
    %v420 = vld [vmem:[#allocation5 + $0x9e8] sm:$0xff]
    %v421 = vld [vmem:[#allocation5 + $0x9f0] sm:$0xff]
    %v422 = vld [vmem:[#allocation5 + $0x9f8] sm:$0xff]
    %v423 = vld [vmem:[#allocation5 + $0xa00] sm:$0xff]
    %v424 = vld [vmem:[#allocation5 + $0xa08] sm:$0xff]
    %v425 = vld [vmem:[#allocation5 + $0xa10] sm:$0xff]
    %v426 = vld [vmem:[#allocation5 + $0xa18] sm:$0xff]
    %v427 = vld [vmem:[#allocation5 + $0xa20] sm:$0xff]
    %v428 = vld [vmem:[#allocation5 + $0xa28] sm:$0xff]
    %v429 = vld [vmem:[#allocation5 + $0xa30] sm:$0xff]
    %v430 = vld [vmem:[#allocation5 + $0xa38] sm:$0xff]
    %v431 = vld [vmem:[#allocation5 + $0xa40] sm:$0xff]
    %v432 = vld [vmem:[#allocation5 + $0xa48] sm:$0xff]
    %v433 = vld [vmem:[#allocation5 + $0xa50] sm:$0xff]
    %v434 = vld [vmem:[#allocation5 + $0xa58] sm:$0xff]
    %v435 = vld [vmem:[#allocation5 + $0xa60] sm:$0xff]
    %v436 = vld [vmem:[#allocation5 + $0xa68] sm:$0xff]
    %v437 = vld [vmem:[#allocation5 + $0xa70] sm:$0xff]
    %v438 = vld [vmem:[#allocation5 + $0xa78] sm:$0xff]
    %v439 = vld [vmem:[#allocation5 + $0xa80] sm:$0xff]
    %v440 = vld [vmem:[#allocation5 + $0xa88] sm:$0xff]
    %v441 = vld [vmem:[#allocation5 + $0xa90] sm:$0xff]
    %v442 = vld [vmem:[#allocation5 + $0xa98] sm:$0xff]
    %v443 = vld [vmem:[#allocation5 + $0xaa0] sm:$0xff]
    %v444 = vld [vmem:[#allocation5 + $0xaa8] sm:$0xff]
    %v445 = vld [vmem:[#allocation5 + $0xab0] sm:$0xff]
    %v446 = vld [vmem:[#allocation5 + $0xab8] sm:$0xff]
    %v447 = vld [vmem:[#allocation5 + $0xac0] sm:$0xff]
    %v448 = vld [vmem:[#allocation5 + $0xac8] sm:$0xff]
    %v449 = vld [vmem:[#allocation5 + $0xad0] sm:$0xff]
    %v450 = vld [vmem:[#allocation5 + $0xad8] sm:$0xff]
    %v451 = vld [vmem:[#allocation5 + $0xae0] sm:$0xff]
    %v452 = vld [vmem:[#allocation5 + $0xae8] sm:$0xff]
    %v453 = vld [vmem:[#allocation5 + $0xaf0] sm:$0xff]
    %v454 = vld [vmem:[#allocation5 + $0xaf8] sm:$0xff]
    %v455 = vld [vmem:[#allocation5 + $0xb00] sm:$0xff]
    %v456 = vld [vmem:[#allocation5 + $0xb08] sm:$0xff]
    %v457 = vld [vmem:[#allocation5 + $0xb10] sm:$0xff]
    %v458 = vld [vmem:[#allocation5 + $0xb18] sm:$0xff]
    %v459 = vld [vmem:[#allocation5 + $0xb20] sm:$0xff]
    %v460 = vld [vmem:[#allocation5 + $0xb28] sm:$0xff]
    %v461 = vld [vmem:[#allocation5 + $0xb30] sm:$0xff]
    %v462 = vld [vmem:[#allocation5 + $0xb38] sm:$0xff]
    %v463 = vld [vmem:[#allocation5 + $0xb40] sm:$0xff]
    %v464 = vld [vmem:[#allocation5 + $0xb48] sm:$0xff]
    %v465 = vld [vmem:[#allocation5 + $0xb50] sm:$0xff]
    %v466 = vld [vmem:[#allocation5 + $0xb58] sm:$0xff]
    %v467 = vld [vmem:[#allocation5 + $0xb60] sm:$0xff]
    %v468 = vld [vmem:[#allocation5 + $0xb68] sm:$0xff]
    %v469 = vld [vmem:[#allocation5 + $0xb70] sm:$0xff]
    %v470 = vld [vmem:[#allocation5 + $0xb78] sm:$0xff]
    %v471 = vld [vmem:[#allocation5 + $0xb80] sm:$0xff]
    %v472 = vld [vmem:[#allocation5 + $0xb88] sm:$0xff]
    %v473 = vld [vmem:[#allocation5 + $0xb90] sm:$0xff]
    %v474 = vld [vmem:[#allocation5 + $0xb98] sm:$0xff]
    %v475 = vld [vmem:[#allocation5 + $0xba0] sm:$0xff]
    %v476 = vld [vmem:[#allocation5 + $0xba8] sm:$0xff]
    %v477 = vld [vmem:[#allocation5 + $0xbb0] sm:$0xff]
    %v478 = vld [vmem:[#allocation5 + $0xbb8] sm:$0xff]
    %v479 = vld [vmem:[#allocation5 + $0xbc0] sm:$0xff]
    %v480 = vld [vmem:[#allocation5 + $0xbc8] sm:$0xff]
    %v481 = vld [vmem:[#allocation5 + $0xbd0] sm:$0xff]
    %v482 = vld [vmem:[#allocation5 + $0xbd8] sm:$0xff]
    %v483 = vld [vmem:[#allocation5 + $0xbe0] sm:$0xff]
    %v484 = vld [vmem:[#allocation5 + $0xbe8] sm:$0xff]
    %v485 = vld [vmem:[#allocation5 + $0xbf0] sm:$0xff]
    %v486 = vld [vmem:[#allocation5 + $0xbf8] sm:$0xff]
    %v487 = vld [vmem:[#allocation5 + $0xc00] sm:$0xff]
    %v488 = vld [vmem:[#allocation5 + $0xc08] sm:$0xff]
    %v489 = vld [vmem:[#allocation5 + $0xc10] sm:$0xff]
    %v490 = vld [vmem:[#allocation5 + $0xc18] sm:$0xff]
    %v491 = vld [vmem:[#allocation5 + $0xc20] sm:$0xff]
    %v492 = vld [vmem:[#allocation5 + $0xc28] sm:$0xff]
    %v493 = vld [vmem:[#allocation5 + $0xc30] sm:$0xff]
    %v494 = vld [vmem:[#allocation5 + $0xc38] sm:$0xff]
    %v495 = vld [vmem:[#allocation5 + $0xc40] sm:$0xff]
    %v496 = vld [vmem:[#allocation5 + $0xc48] sm:$0xff]
    %v497 = vld [vmem:[#allocation5 + $0xc50] sm:$0xff]
    %v498 = vld [vmem:[#allocation5 + $0xc58] sm:$0xff]
    %v499 = vld [vmem:[#allocation5 + $0xc60] sm:$0xff]
    %v500 = vld [vmem:[#allocation5 + $0xc68] sm:$0xff]
    %v501 = vld [vmem:[#allocation5 + $0xc70] sm:$0xff]
    %v502 = vld [vmem:[#allocation5 + $0xc78] sm:$0xff]
    %v503 = vld [vmem:[#allocation5 + $0xc80] sm:$0xff]
    %v504 = vld [vmem:[#allocation5 + $0xc88] sm:$0xff]
    %v505 = vld [vmem:[#allocation5 + $0xc90] sm:$0xff]
    %v506 = vld [vmem:[#allocation5 + $0xc98] sm:$0xff]
    %v507 = vld [vmem:[#allocation5 + $0xca0] sm:$0xff]
    %v508 = vld [vmem:[#allocation5 + $0xca8] sm:$0xff]
    %v509 = vld [vmem:[#allocation5 + $0xcb0] sm:$0xff]
    %v510 = vld [vmem:[#allocation5 + $0xcb8] sm:$0xff]
    %v511 = vld [vmem:[#allocation5 + $0xcc0] sm:$0xff]
    %v512 = vld [vmem:[#allocation5 + $0xcc8] sm:$0xff]
    %v513 = vld [vmem:[#allocation5 + $0xcd0] sm:$0xff]
    %v514 = vld [vmem:[#allocation5 + $0xcd8] sm:$0xff]
    %v515 = vld [vmem:[#allocation5 + $0xce0] sm:$0xff]
    %v516 = vld [vmem:[#allocation5 + $0xce8] sm:$0xff]
    %v517 = vld [vmem:[#allocation5 + $0xcf0] sm:$0xff]
    %v518 = vld [vmem:[#allocation5 + $0xcf8] sm:$0xff]
    %v519 = vld [vmem:[#allocation5 + $0xd00] sm:$0xff]
    %v520 = vld [vmem:[#allocation5 + $0xd08] sm:$0xff]
    %v521 = vld [vmem:[#allocation5 + $0xd10] sm:$0xff]
    %v522 = vld [vmem:[#allocation5 + $0xd18] sm:$0xff]
    %v523 = vld [vmem:[#allocation5 + $0xd20] sm:$0xff]
    %v524 = vld [vmem:[#allocation5 + $0xd28] sm:$0xff]
    %v525 = vld [vmem:[#allocation5 + $0xd30] sm:$0xff]
    %v526 = vld [vmem:[#allocation5 + $0xd38] sm:$0xff]
    %v527 = vld [vmem:[#allocation5 + $0xd40] sm:$0xff]
    %v528 = vld [vmem:[#allocation5 + $0xd48] sm:$0xff]
    %v529 = vld [vmem:[#allocation5 + $0xd50] sm:$0xff]
    %v530 = vld [vmem:[#allocation5 + $0xd58] sm:$0xff]
    %v531 = vld [vmem:[#allocation5 + $0xd60] sm:$0xff]
    %v532 = vld [vmem:[#allocation5 + $0xd68] sm:$0xff]
    %v533 = vld [vmem:[#allocation5 + $0xd70] sm:$0xff]
    %v534 = vld [vmem:[#allocation5 + $0xd78] sm:$0xff]
    %v535 = vld [vmem:[#allocation5 + $0xd80] sm:$0xff]
    %v536 = vld [vmem:[#allocation5 + $0xd88] sm:$0xff]
    %v537 = vld [vmem:[#allocation5 + $0xd90] sm:$0xff]
    %v538 = vld [vmem:[#allocation5 + $0xd98] sm:$0xff]
    %v539 = vld [vmem:[#allocation5 + $0xda0] sm:$0xff]
    %v540 = vld [vmem:[#allocation5 + $0xda8] sm:$0xff]
    %v541 = vld [vmem:[#allocation5 + $0xdb0] sm:$0xff]
    %v542 = vld [vmem:[#allocation5 + $0xdb8] sm:$0xff]
    %v543 = vld [vmem:[#allocation5 + $0xdc0] sm:$0xff]
    %v544 = vld [vmem:[#allocation5 + $0xdc8] sm:$0xff]
    %v545 = vld [vmem:[#allocation5 + $0xdd0] sm:$0xff]
    %v546 = vld [vmem:[#allocation5 + $0xdd8] sm:$0xff]
    %v547 = vld [vmem:[#allocation5 + $0xde0] sm:$0xff]
    %v548 = vld [vmem:[#allocation5 + $0xde8] sm:$0xff]
    %v549 = vld [vmem:[#allocation5 + $0xdf0] sm:$0xff]
    %v550 = vld [vmem:[#allocation5 + $0xdf8] sm:$0xff]
    %v551 = vld [vmem:[#allocation5 + $0xe00] sm:$0xff]
    %v552 = vld [vmem:[#allocation5 + $0xe08] sm:$0xff]
    %v553 = vld [vmem:[#allocation5 + $0xe10] sm:$0xff]
    %v554 = vld [vmem:[#allocation5 + $0xe18] sm:$0xff]
    %v555 = vld [vmem:[#allocation5 + $0xe20] sm:$0xff]
    %v556 = vld [vmem:[#allocation5 + $0xe28] sm:$0xff]
    %v557 = vld [vmem:[#allocation5 + $0xe30] sm:$0xff]
    %v558 = vld [vmem:[#allocation5 + $0xe38] sm:$0xff]
    %v559 = vld [vmem:[#allocation5 + $0xe40] sm:$0xff]
    %v560 = vld [vmem:[#allocation5 + $0xe48] sm:$0xff]
    %v561 = vld [vmem:[#allocation5 + $0xe50] sm:$0xff]
    %v562 = vld [vmem:[#allocation5 + $0xe58] sm:$0xff]
    %v563 = vld [vmem:[#allocation5 + $0xe60] sm:$0xff]
    %v564 = vld [vmem:[#allocation5 + $0xe68] sm:$0xff]
    %v565 = vld [vmem:[#allocation5 + $0xe70] sm:$0xff]
    %v566 = vld [vmem:[#allocation5 + $0xe78] sm:$0xff]
    %v567 = vld [vmem:[#allocation5 + $0xe80] sm:$0xff]
    %v568 = vld [vmem:[#allocation5 + $0xe88] sm:$0xff]
    %v569 = vld [vmem:[#allocation5 + $0xe90] sm:$0xff]
    %v570 = vld [vmem:[#allocation5 + $0xe98] sm:$0xff]
    %v571 = vld [vmem:[#allocation5 + $0xea0] sm:$0xff]
    %v572 = vld [vmem:[#allocation5 + $0xea8] sm:$0xff]
    %v573 = vld [vmem:[#allocation5 + $0xeb0] sm:$0xff]
    %v574 = vld [vmem:[#allocation5 + $0xeb8] sm:$0xff]
    %v575 = vld [vmem:[#allocation5 + $0xec0] sm:$0xff]
    %v576 = vld [vmem:[#allocation5 + $0xec8] sm:$0xff]
    %v577 = vld [vmem:[#allocation5 + $0xed0] sm:$0xff]
    %v578 = vld [vmem:[#allocation5 + $0xed8] sm:$0xff]
    %v579 = vld [vmem:[#allocation5 + $0xee0] sm:$0xff]
    %v580 = vld [vmem:[#allocation5 + $0xee8] sm:$0xff]
    %v581 = vld [vmem:[#allocation5 + $0xef0] sm:$0xff]
    %v582 = vld [vmem:[#allocation5 + $0xef8] sm:$0xff]
    %v583 = vld [vmem:[#allocation5 + $0xf00] sm:$0xff]
    %v584 = vld [vmem:[#allocation5 + $0xf08] sm:$0xff]
    %v585 = vld [vmem:[#allocation5 + $0xf10] sm:$0xff]
    %v586 = vld [vmem:[#allocation5 + $0xf18] sm:$0xff]
    %v587 = vld [vmem:[#allocation5 + $0xf20] sm:$0xff]
    %v588 = vld [vmem:[#allocation5 + $0xf28] sm:$0xff]
    %v589 = vld [vmem:[#allocation5 + $0xf30] sm:$0xff]
    %v590 = vld [vmem:[#allocation5 + $0xf38] sm:$0xff]
    %v591 = vld [vmem:[#allocation5 + $0xf40] sm:$0xff]
    %v592 = vld [vmem:[#allocation5 + $0xf48] sm:$0xff]
    %v593 = vld [vmem:[#allocation5 + $0xf50] sm:$0xff]
    %v594 = vld [vmem:[#allocation5 + $0xf58] sm:$0xff]
    %v595 = vld [vmem:[#allocation5 + $0xf60] sm:$0xff]
    %v596 = vld [vmem:[#allocation5 + $0xf68] sm:$0xff]
    %v597 = vld [vmem:[#allocation5 + $0xf70] sm:$0xff]
    %v598 = vld [vmem:[#allocation5 + $0xf78] sm:$0xff]
    %v599 = vld [vmem:[#allocation5 + $0xf80] sm:$0xff]
    %v600 = vld [vmem:[#allocation5 + $0xf88] sm:$0xff]
    %v601 = vld [vmem:[#allocation5 + $0xf90] sm:$0xff]
    %v602 = vld [vmem:[#allocation5 + $0xf98] sm:$0xff]
    %v603 = vld [vmem:[#allocation5 + $0xfa0] sm:$0xff]
    %v604 = vld [vmem:[#allocation5 + $0xfa8] sm:$0xff]
    %v605 = vld [vmem:[#allocation5 + $0xfb0] sm:$0xff]
    %v606 = vld [vmem:[#allocation5 + $0xfb8] sm:$0xff]
    %v607 = vld [vmem:[#allocation5 + $0xfc0] sm:$0xff]
    %v608 = vld [vmem:[#allocation5 + $0xfc8] sm:$0xff]
    %v609 = vld [vmem:[#allocation5 + $0xfd0] sm:$0xff]
    %v610 = vld [vmem:[#allocation5 + $0xfd8] sm:$0xff]
    %v611 = vld [vmem:[#allocation5 + $0xfe0] sm:$0xff]
    %v612 = vld [vmem:[#allocation5 + $0xfe8] sm:$0xff]
    %v613 = vld [vmem:[#allocation5 + $0xff0] sm:$0xff]
    %v614 = vld [vmem:[#allocation5 + $0xff8] sm:$0xff]
    %v615 = vld [vmem:[#allocation7] sm:$0xff]
    %v617 = vlaneseq
    %v618 = vshrl.u32 %v617, 7
    %v619 = vsub.s32 0, %v618
    %v620 = vrot.slane %v615, %v619
    %v621 = vlaneseq
    %v622 = vshrl.u32 %v621, 7
    %v623 = vsub.s32 1, %v622
    %v624 = vrot.slane %v615, %v623
    %v625 = vlaneseq
    %v626 = vshrl.u32 %v625, 7
    %v627 = vsub.s32 2, %v626
    %v628 = vrot.slane %v615, %v627
    %v629 = vlaneseq
    %v630 = vshrl.u32 %v629, 7
    %v631 = vsub.s32 3, %v630
    %v632 = vrot.slane %v615, %v631
    %v633 = vlaneseq
    %v634 = vshrl.u32 %v633, 7
    %v635 = vsub.s32 4, %v634
    %v636 = vrot.slane %v615, %v635
    %v637 = vlaneseq
    %v638 = vshrl.u32 %v637, 7
    %v639 = vsub.s32 5, %v638
    %v640 = vrot.slane %v615, %v639
    %v641 = vlaneseq
    %v642 = vshrl.u32 %v641, 7
    %v643 = vsub.s32 6, %v642
    %v644 = vrot.slane %v615, %v643
    %v645 = vlaneseq
    %v646 = vshrl.u32 %v645, 7
    %v647 = vsub.s32 7, %v646
    %v648 = vrot.slane %v615, %v647
    %v665 = vunpack.c.l.b16 %v95
    %v666 = vunpack.c.h.b16 %v95
    %v667 = vunpack.c.l.b16 %v96
    %v668 = vunpack.c.h.b16 %v96
    %v669 = vunpack.c.l.b16 %v97
    %v670 = vunpack.c.h.b16 %v97
    %v671 = vunpack.c.l.b16 %v98
    %v672 = vunpack.c.h.b16 %v98
    %v673 = vunpack.c.l.b16 %v99
    %v674 = vunpack.c.h.b16 %v99
    %v675 = vunpack.c.l.b16 %v100
    %v676 = vunpack.c.h.b16 %v100
    %v677 = vunpack.c.l.b16 %v101
    %v678 = vunpack.c.h.b16 %v101
    %v679 = vunpack.c.l.b16 %v102
    %v680 = vunpack.c.h.b16 %v102
    %v681 = vpack.c.b16 %v673, %v665
    %v682 = vpack.c.b16 %v674, %v666
    %v683 = vpack.c.b16 %v675, %v667
    %v684 = vpack.c.b16 %v676, %v668
    %v685 = vpack.c.b16 %v677, %v669
    %v686 = vpack.c.b16 %v678, %v670
    %v687 = vpack.c.b16 %v679, %v671
    %v688 = vpack.c.b16 %v680, %v672
    %v1209 = vunpack.c.l.b16 %v103
    %v1210 = vunpack.c.h.b16 %v103
    %v1211 = vunpack.c.l.b16 %v104
    %v1212 = vunpack.c.h.b16 %v104
    %v1213 = vunpack.c.l.b16 %v105
    %v1214 = vunpack.c.h.b16 %v105
    %v1215 = vunpack.c.l.b16 %v106
    %v1216 = vunpack.c.h.b16 %v106
    %v1217 = vunpack.c.l.b16 %v107
    %v1218 = vunpack.c.h.b16 %v107
    %v1219 = vunpack.c.l.b16 %v108
    %v1220 = vunpack.c.h.b16 %v108
    %v1221 = vunpack.c.l.b16 %v109
    %v1222 = vunpack.c.h.b16 %v109
    %v1223 = vunpack.c.l.b16 %v110
    %v1224 = vunpack.c.h.b16 %v110
    %v1225 = vunpack.c.l.b16 %v111
    %v1226 = vunpack.c.h.b16 %v111
    %v1227 = vunpack.c.l.b16 %v112
    %v1228 = vunpack.c.h.b16 %v112
    %v1229 = vunpack.c.l.b16 %v113
    %v1230 = vunpack.c.h.b16 %v113
    %v1231 = vunpack.c.l.b16 %v114
    %v1232 = vunpack.c.h.b16 %v114
    %v1233 = vunpack.c.l.b16 %v115
    %v1234 = vunpack.c.h.b16 %v115
    %v1235 = vunpack.c.l.b16 %v116
    %v1236 = vunpack.c.h.b16 %v116
    %v1237 = vunpack.c.l.b16 %v117
    %v1238 = vunpack.c.h.b16 %v117
    %v1239 = vunpack.c.l.b16 %v118
    %v1240 = vunpack.c.h.b16 %v118
    %v1241 = vunpack.c.l.b16 %v119
    %v1242 = vunpack.c.h.b16 %v119
    %v1243 = vunpack.c.l.b16 %v120
    %v1244 = vunpack.c.h.b16 %v120
    %v1245 = vunpack.c.l.b16 %v121
    %v1246 = vunpack.c.h.b16 %v121
    %v1247 = vunpack.c.l.b16 %v122
    %v1248 = vunpack.c.h.b16 %v122
    %v1249 = vunpack.c.l.b16 %v123
    %v1250 = vunpack.c.h.b16 %v123
    %v1251 = vunpack.c.l.b16 %v124
    %v1252 = vunpack.c.h.b16 %v124
    %v1253 = vunpack.c.l.b16 %v125
    %v1254 = vunpack.c.h.b16 %v125
    %v1255 = vunpack.c.l.b16 %v126
    %v1256 = vunpack.c.h.b16 %v126
    %v1257 = vunpack.c.l.b16 %v127
    %v1258 = vunpack.c.h.b16 %v127
    %v1259 = vunpack.c.l.b16 %v128
    %v1260 = vunpack.c.h.b16 %v128
    %v1261 = vunpack.c.l.b16 %v129
    %v1262 = vunpack.c.h.b16 %v129
    %v1263 = vunpack.c.l.b16 %v130
    %v1264 = vunpack.c.h.b16 %v130
    %v1265 = vunpack.c.l.b16 %v131
    %v1266 = vunpack.c.h.b16 %v131
    %v1267 = vunpack.c.l.b16 %v132
    %v1268 = vunpack.c.h.b16 %v132
    %v1269 = vunpack.c.l.b16 %v133
    %v1270 = vunpack.c.h.b16 %v133
    %v1271 = vunpack.c.l.b16 %v134
    %v1272 = vunpack.c.h.b16 %v134
    %v1273 = vunpack.c.l.b16 %v135
    %v1274 = vunpack.c.h.b16 %v135
    %v1275 = vunpack.c.l.b16 %v136
    %v1276 = vunpack.c.h.b16 %v136
    %v1277 = vunpack.c.l.b16 %v137
    %v1278 = vunpack.c.h.b16 %v137
    %v1279 = vunpack.c.l.b16 %v138
    %v1280 = vunpack.c.h.b16 %v138
    %v1281 = vunpack.c.l.b16 %v139
    %v1282 = vunpack.c.h.b16 %v139
    %v1283 = vunpack.c.l.b16 %v140
    %v1284 = vunpack.c.h.b16 %v140
    %v1285 = vunpack.c.l.b16 %v141
    %v1286 = vunpack.c.h.b16 %v141
    %v1287 = vunpack.c.l.b16 %v142
    %v1288 = vunpack.c.h.b16 %v142
    %v1289 = vunpack.c.l.b16 %v143
    %v1290 = vunpack.c.h.b16 %v143
    %v1291 = vunpack.c.l.b16 %v144
    %v1292 = vunpack.c.h.b16 %v144
    %v1293 = vunpack.c.l.b16 %v145
    %v1294 = vunpack.c.h.b16 %v145
    %v1295 = vunpack.c.l.b16 %v146
    %v1296 = vunpack.c.h.b16 %v146
    %v1297 = vunpack.c.l.b16 %v147
    %v1298 = vunpack.c.h.b16 %v147
    %v1299 = vunpack.c.l.b16 %v148
    %v1300 = vunpack.c.h.b16 %v148
    %v1301 = vunpack.c.l.b16 %v149
    %v1302 = vunpack.c.h.b16 %v149
    %v1303 = vunpack.c.l.b16 %v150
    %v1304 = vunpack.c.h.b16 %v150
    %v1305 = vunpack.c.l.b16 %v151
    %v1306 = vunpack.c.h.b16 %v151
    %v1307 = vunpack.c.l.b16 %v152
    %v1308 = vunpack.c.h.b16 %v152
    %v1309 = vunpack.c.l.b16 %v153
    %v1310 = vunpack.c.h.b16 %v153
    %v1311 = vunpack.c.l.b16 %v154
    %v1312 = vunpack.c.h.b16 %v154
    %v1313 = vunpack.c.l.b16 %v155
    %v1314 = vunpack.c.h.b16 %v155
    %v1315 = vunpack.c.l.b16 %v156
    %v1316 = vunpack.c.h.b16 %v156
    %v1317 = vunpack.c.l.b16 %v157
    %v1318 = vunpack.c.h.b16 %v157
    %v1319 = vunpack.c.l.b16 %v158
    %v1320 = vunpack.c.h.b16 %v158
    %v1321 = vunpack.c.l.b16 %v159
    %v1322 = vunpack.c.h.b16 %v159
    %v1323 = vunpack.c.l.b16 %v160
    %v1324 = vunpack.c.h.b16 %v160
    %v1325 = vunpack.c.l.b16 %v161
    %v1326 = vunpack.c.h.b16 %v161
    %v1327 = vunpack.c.l.b16 %v162
    %v1328 = vunpack.c.h.b16 %v162
    %v1329 = vunpack.c.l.b16 %v163
    %v1330 = vunpack.c.h.b16 %v163
    %v1331 = vunpack.c.l.b16 %v164
    %v1332 = vunpack.c.h.b16 %v164
    %v1333 = vunpack.c.l.b16 %v165
    %v1334 = vunpack.c.h.b16 %v165
    %v1335 = vunpack.c.l.b16 %v166
    %v1336 = vunpack.c.h.b16 %v166
    %v1337 = vunpack.c.l.b16 %v167
    %v1338 = vunpack.c.h.b16 %v167
    %v1339 = vunpack.c.l.b16 %v168
    %v1340 = vunpack.c.h.b16 %v168
    %v1341 = vunpack.c.l.b16 %v169
    %v1342 = vunpack.c.h.b16 %v169
    %v1343 = vunpack.c.l.b16 %v170
    %v1344 = vunpack.c.h.b16 %v170
    %v1345 = vunpack.c.l.b16 %v171
    %v1346 = vunpack.c.h.b16 %v171
    %v1347 = vunpack.c.l.b16 %v172
    %v1348 = vunpack.c.h.b16 %v172
    %v1349 = vunpack.c.l.b16 %v173
    %v1350 = vunpack.c.h.b16 %v173
    %v1351 = vunpack.c.l.b16 %v174
    %v1352 = vunpack.c.h.b16 %v174
    %v1353 = vunpack.c.l.b16 %v175
    %v1354 = vunpack.c.h.b16 %v175
    %v1355 = vunpack.c.l.b16 %v176
    %v1356 = vunpack.c.h.b16 %v176
    %v1357 = vunpack.c.l.b16 %v177
    %v1358 = vunpack.c.h.b16 %v177
    %v1359 = vunpack.c.l.b16 %v178
    %v1360 = vunpack.c.h.b16 %v178
    %v1361 = vunpack.c.l.b16 %v179
    %v1362 = vunpack.c.h.b16 %v179
    %v1363 = vunpack.c.l.b16 %v180
    %v1364 = vunpack.c.h.b16 %v180
    %v1365 = vunpack.c.l.b16 %v181
    %v1366 = vunpack.c.h.b16 %v181
    %v1367 = vunpack.c.l.b16 %v182
    %v1368 = vunpack.c.h.b16 %v182
    %v1369 = vunpack.c.l.b16 %v183
    %v1370 = vunpack.c.h.b16 %v183
    %v1371 = vunpack.c.l.b16 %v184
    %v1372 = vunpack.c.h.b16 %v184
    %v1373 = vunpack.c.l.b16 %v185
    %v1374 = vunpack.c.h.b16 %v185
    %v1375 = vunpack.c.l.b16 %v186
    %v1376 = vunpack.c.h.b16 %v186
    %v1377 = vunpack.c.l.b16 %v187
    %v1378 = vunpack.c.h.b16 %v187
    %v1379 = vunpack.c.l.b16 %v188
    %v1380 = vunpack.c.h.b16 %v188
    %v1381 = vunpack.c.l.b16 %v189
    %v1382 = vunpack.c.h.b16 %v189
    %v1383 = vunpack.c.l.b16 %v190
    %v1384 = vunpack.c.h.b16 %v190
    %v1385 = vunpack.c.l.b16 %v191
    %v1386 = vunpack.c.h.b16 %v191
    %v1387 = vunpack.c.l.b16 %v192
    %v1388 = vunpack.c.h.b16 %v192
    %v1389 = vunpack.c.l.b16 %v193
    %v1390 = vunpack.c.h.b16 %v193
    %v1391 = vunpack.c.l.b16 %v194
    %v1392 = vunpack.c.h.b16 %v194
    %v1393 = vunpack.c.l.b16 %v195
    %v1394 = vunpack.c.h.b16 %v195
    %v1395 = vunpack.c.l.b16 %v196
    %v1396 = vunpack.c.h.b16 %v196
    %v1397 = vunpack.c.l.b16 %v197
    %v1398 = vunpack.c.h.b16 %v197
    %v1399 = vunpack.c.l.b16 %v198
    %v1400 = vunpack.c.h.b16 %v198
    %v1401 = vunpack.c.l.b16 %v199
    %v1402 = vunpack.c.h.b16 %v199
    %v1403 = vunpack.c.l.b16 %v200
    %v1404 = vunpack.c.h.b16 %v200
    %v1405 = vunpack.c.l.b16 %v201
    %v1406 = vunpack.c.h.b16 %v201
    %v1407 = vunpack.c.l.b16 %v202
    %v1408 = vunpack.c.h.b16 %v202
    %v1409 = vunpack.c.l.b16 %v203
    %v1410 = vunpack.c.h.b16 %v203
    %v1411 = vunpack.c.l.b16 %v204
    %v1412 = vunpack.c.h.b16 %v204
    %v1413 = vunpack.c.l.b16 %v205
    %v1414 = vunpack.c.h.b16 %v205
    %v1415 = vunpack.c.l.b16 %v206
    %v1416 = vunpack.c.h.b16 %v206
    %v1417 = vunpack.c.l.b16 %v207
    %v1418 = vunpack.c.h.b16 %v207
    %v1419 = vunpack.c.l.b16 %v208
    %v1420 = vunpack.c.h.b16 %v208
    %v1421 = vunpack.c.l.b16 %v209
    %v1422 = vunpack.c.h.b16 %v209
    %v1423 = vunpack.c.l.b16 %v210
    %v1424 = vunpack.c.h.b16 %v210
    %v1425 = vunpack.c.l.b16 %v211
    %v1426 = vunpack.c.h.b16 %v211
    %v1427 = vunpack.c.l.b16 %v212
    %v1428 = vunpack.c.h.b16 %v212
    %v1429 = vunpack.c.l.b16 %v213
    %v1430 = vunpack.c.h.b16 %v213
    %v1431 = vunpack.c.l.b16 %v214
    %v1432 = vunpack.c.h.b16 %v214
    %v1433 = vunpack.c.l.b16 %v215
    %v1434 = vunpack.c.h.b16 %v215
    %v1435 = vunpack.c.l.b16 %v216
    %v1436 = vunpack.c.h.b16 %v216
    %v1437 = vunpack.c.l.b16 %v217
    %v1438 = vunpack.c.h.b16 %v217
    %v1439 = vunpack.c.l.b16 %v218
    %v1440 = vunpack.c.h.b16 %v218
    %v1441 = vunpack.c.l.b16 %v219
    %v1442 = vunpack.c.h.b16 %v219
    %v1443 = vunpack.c.l.b16 %v220
    %v1444 = vunpack.c.h.b16 %v220
    %v1445 = vunpack.c.l.b16 %v221
    %v1446 = vunpack.c.h.b16 %v221
    %v1447 = vunpack.c.l.b16 %v222
    %v1448 = vunpack.c.h.b16 %v222
    %v1449 = vunpack.c.l.b16 %v223
    %v1450 = vunpack.c.h.b16 %v223
    %v1451 = vunpack.c.l.b16 %v224
    %v1452 = vunpack.c.h.b16 %v224
    %v1453 = vunpack.c.l.b16 %v225
    %v1454 = vunpack.c.h.b16 %v225
    %v1455 = vunpack.c.l.b16 %v226
    %v1456 = vunpack.c.h.b16 %v226
    %v1457 = vunpack.c.l.b16 %v227
    %v1458 = vunpack.c.h.b16 %v227
    %v1459 = vunpack.c.l.b16 %v228
    %v1460 = vunpack.c.h.b16 %v228
    %v1461 = vunpack.c.l.b16 %v229
    %v1462 = vunpack.c.h.b16 %v229
    %v1463 = vunpack.c.l.b16 %v230
    %v1464 = vunpack.c.h.b16 %v230
    %v1465 = vunpack.c.l.b16 %v231
    %v1466 = vunpack.c.h.b16 %v231
    %v1467 = vunpack.c.l.b16 %v232
    %v1468 = vunpack.c.h.b16 %v232
    %v1469 = vunpack.c.l.b16 %v233
    %v1470 = vunpack.c.h.b16 %v233
    %v1471 = vunpack.c.l.b16 %v234
    %v1472 = vunpack.c.h.b16 %v234
    %v1473 = vunpack.c.l.b16 %v235
    %v1474 = vunpack.c.h.b16 %v235
    %v1475 = vunpack.c.l.b16 %v236
    %v1476 = vunpack.c.h.b16 %v236
    %v1477 = vunpack.c.l.b16 %v237
    %v1478 = vunpack.c.h.b16 %v237
    %v1479 = vunpack.c.l.b16 %v238
    %v1480 = vunpack.c.h.b16 %v238
    %v1481 = vunpack.c.l.b16 %v239
    %v1482 = vunpack.c.h.b16 %v239
    %v1483 = vunpack.c.l.b16 %v240
    %v1484 = vunpack.c.h.b16 %v240
    %v1485 = vunpack.c.l.b16 %v241
    %v1486 = vunpack.c.h.b16 %v241
    %v1487 = vunpack.c.l.b16 %v242
    %v1488 = vunpack.c.h.b16 %v242
    %v1489 = vunpack.c.l.b16 %v243
    %v1490 = vunpack.c.h.b16 %v243
    %v1491 = vunpack.c.l.b16 %v244
    %v1492 = vunpack.c.h.b16 %v244
    %v1493 = vunpack.c.l.b16 %v245
    %v1494 = vunpack.c.h.b16 %v245
    %v1495 = vunpack.c.l.b16 %v246
    %v1496 = vunpack.c.h.b16 %v246
    %v1497 = vunpack.c.l.b16 %v247
    %v1498 = vunpack.c.h.b16 %v247
    %v1499 = vunpack.c.l.b16 %v248
    %v1500 = vunpack.c.h.b16 %v248
    %v1501 = vunpack.c.l.b16 %v249
    %v1502 = vunpack.c.h.b16 %v249
    %v1503 = vunpack.c.l.b16 %v250
    %v1504 = vunpack.c.h.b16 %v250
    %v1505 = vunpack.c.l.b16 %v251
    %v1506 = vunpack.c.h.b16 %v251
    %v1507 = vunpack.c.l.b16 %v252
    %v1508 = vunpack.c.h.b16 %v252
    %v1509 = vunpack.c.l.b16 %v253
    %v1510 = vunpack.c.h.b16 %v253
    %v1511 = vunpack.c.l.b16 %v254
    %v1512 = vunpack.c.h.b16 %v254
    %v1513 = vunpack.c.l.b16 %v255
    %v1514 = vunpack.c.h.b16 %v255
    %v1515 = vunpack.c.l.b16 %v256
    %v1516 = vunpack.c.h.b16 %v256
    %v1517 = vunpack.c.l.b16 %v257
    %v1518 = vunpack.c.h.b16 %v257
    %v1519 = vunpack.c.l.b16 %v258
    %v1520 = vunpack.c.h.b16 %v258
    %v1521 = vunpack.c.l.b16 %v259
    %v1522 = vunpack.c.h.b16 %v259
    %v1523 = vunpack.c.l.b16 %v260
    %v1524 = vunpack.c.h.b16 %v260
    %v1525 = vunpack.c.l.b16 %v261
    %v1526 = vunpack.c.h.b16 %v261
    %v1527 = vunpack.c.l.b16 %v262
    %v1528 = vunpack.c.h.b16 %v262
    %v1529 = vunpack.c.l.b16 %v263
    %v1530 = vunpack.c.h.b16 %v263
    %v1531 = vunpack.c.l.b16 %v264
    %v1532 = vunpack.c.h.b16 %v264
    %v1533 = vunpack.c.l.b16 %v265
    %v1534 = vunpack.c.h.b16 %v265
    %v1535 = vunpack.c.l.b16 %v266
    %v1536 = vunpack.c.h.b16 %v266
    %v1537 = vunpack.c.l.b16 %v267
    %v1538 = vunpack.c.h.b16 %v267
    %v1539 = vunpack.c.l.b16 %v268
    %v1540 = vunpack.c.h.b16 %v268
    %v1541 = vunpack.c.l.b16 %v269
    %v1542 = vunpack.c.h.b16 %v269
    %v1543 = vunpack.c.l.b16 %v270
    %v1544 = vunpack.c.h.b16 %v270
    %v1545 = vunpack.c.l.b16 %v271
    %v1546 = vunpack.c.h.b16 %v271
    %v1547 = vunpack.c.l.b16 %v272
    %v1548 = vunpack.c.h.b16 %v272
    %v1549 = vunpack.c.l.b16 %v273
    %v1550 = vunpack.c.h.b16 %v273
    %v1551 = vunpack.c.l.b16 %v274
    %v1552 = vunpack.c.h.b16 %v274
    %v1553 = vunpack.c.l.b16 %v275
    %v1554 = vunpack.c.h.b16 %v275
    %v1555 = vunpack.c.l.b16 %v276
    %v1556 = vunpack.c.h.b16 %v276
    %v1557 = vunpack.c.l.b16 %v277
    %v1558 = vunpack.c.h.b16 %v277
    %v1559 = vunpack.c.l.b16 %v278
    %v1560 = vunpack.c.h.b16 %v278
    %v1561 = vunpack.c.l.b16 %v279
    %v1562 = vunpack.c.h.b16 %v279
    %v1563 = vunpack.c.l.b16 %v280
    %v1564 = vunpack.c.h.b16 %v280
    %v1565 = vunpack.c.l.b16 %v281
    %v1566 = vunpack.c.h.b16 %v281
    %v1567 = vunpack.c.l.b16 %v282
    %v1568 = vunpack.c.h.b16 %v282
    %v1569 = vunpack.c.l.b16 %v283
    %v1570 = vunpack.c.h.b16 %v283
    %v1571 = vunpack.c.l.b16 %v284
    %v1572 = vunpack.c.h.b16 %v284
    %v1573 = vunpack.c.l.b16 %v285
    %v1574 = vunpack.c.h.b16 %v285
    %v1575 = vunpack.c.l.b16 %v286
    %v1576 = vunpack.c.h.b16 %v286
    %v1577 = vunpack.c.l.b16 %v287
    %v1578 = vunpack.c.h.b16 %v287
    %v1579 = vunpack.c.l.b16 %v288
    %v1580 = vunpack.c.h.b16 %v288
    %v1581 = vunpack.c.l.b16 %v289
    %v1582 = vunpack.c.h.b16 %v289
    %v1583 = vunpack.c.l.b16 %v290
    %v1584 = vunpack.c.h.b16 %v290
    %v1585 = vunpack.c.l.b16 %v291
    %v1586 = vunpack.c.h.b16 %v291
    %v1587 = vunpack.c.l.b16 %v292
    %v1588 = vunpack.c.h.b16 %v292
    %v1589 = vunpack.c.l.b16 %v293
    %v1590 = vunpack.c.h.b16 %v293
    %v1591 = vunpack.c.l.b16 %v294
    %v1592 = vunpack.c.h.b16 %v294
    %v1593 = vunpack.c.l.b16 %v295
    %v1594 = vunpack.c.h.b16 %v295
    %v1595 = vunpack.c.l.b16 %v296
    %v1596 = vunpack.c.h.b16 %v296
    %v1597 = vunpack.c.l.b16 %v297
    %v1598 = vunpack.c.h.b16 %v297
    %v1599 = vunpack.c.l.b16 %v298
    %v1600 = vunpack.c.h.b16 %v298
    %v1601 = vunpack.c.l.b16 %v299
    %v1602 = vunpack.c.h.b16 %v299
    %v1603 = vunpack.c.l.b16 %v300
    %v1604 = vunpack.c.h.b16 %v300
    %v1605 = vunpack.c.l.b16 %v301
    %v1606 = vunpack.c.h.b16 %v301
    %v1607 = vunpack.c.l.b16 %v302
    %v1608 = vunpack.c.h.b16 %v302
    %v1609 = vunpack.c.l.b16 %v303
    %v1610 = vunpack.c.h.b16 %v303
    %v1611 = vunpack.c.l.b16 %v304
    %v1612 = vunpack.c.h.b16 %v304
    %v1613 = vunpack.c.l.b16 %v305
    %v1614 = vunpack.c.h.b16 %v305
    %v1615 = vunpack.c.l.b16 %v306
    %v1616 = vunpack.c.h.b16 %v306
    %v1617 = vunpack.c.l.b16 %v307
    %v1618 = vunpack.c.h.b16 %v307
    %v1619 = vunpack.c.l.b16 %v308
    %v1620 = vunpack.c.h.b16 %v308
    %v1621 = vunpack.c.l.b16 %v309
    %v1622 = vunpack.c.h.b16 %v309
    %v1623 = vunpack.c.l.b16 %v310
    %v1624 = vunpack.c.h.b16 %v310
    %v1625 = vunpack.c.l.b16 %v311
    %v1626 = vunpack.c.h.b16 %v311
    %v1627 = vunpack.c.l.b16 %v312
    %v1628 = vunpack.c.h.b16 %v312
    %v1629 = vunpack.c.l.b16 %v313
    %v1630 = vunpack.c.h.b16 %v313
    %v1631 = vunpack.c.l.b16 %v314
    %v1632 = vunpack.c.h.b16 %v314
    %v1633 = vunpack.c.l.b16 %v315
    %v1634 = vunpack.c.h.b16 %v315
    %v1635 = vunpack.c.l.b16 %v316
    %v1636 = vunpack.c.h.b16 %v316
    %v1637 = vunpack.c.l.b16 %v317
    %v1638 = vunpack.c.h.b16 %v317
    %v1639 = vunpack.c.l.b16 %v318
    %v1640 = vunpack.c.h.b16 %v318
    %v1641 = vunpack.c.l.b16 %v319
    %v1642 = vunpack.c.h.b16 %v319
    %v1643 = vunpack.c.l.b16 %v320
    %v1644 = vunpack.c.h.b16 %v320
    %v1645 = vunpack.c.l.b16 %v321
    %v1646 = vunpack.c.h.b16 %v321
    %v1647 = vunpack.c.l.b16 %v322
    %v1648 = vunpack.c.h.b16 %v322
    %v1649 = vunpack.c.l.b16 %v323
    %v1650 = vunpack.c.h.b16 %v323
    %v1651 = vunpack.c.l.b16 %v324
    %v1652 = vunpack.c.h.b16 %v324
    %v1653 = vunpack.c.l.b16 %v325
    %v1654 = vunpack.c.h.b16 %v325
    %v1655 = vunpack.c.l.b16 %v326
    %v1656 = vunpack.c.h.b16 %v326
    %v1657 = vunpack.c.l.b16 %v327
    %v1658 = vunpack.c.h.b16 %v327
    %v1659 = vunpack.c.l.b16 %v328
    %v1660 = vunpack.c.h.b16 %v328
    %v1661 = vunpack.c.l.b16 %v329
    %v1662 = vunpack.c.h.b16 %v329
    %v1663 = vunpack.c.l.b16 %v330
    %v1664 = vunpack.c.h.b16 %v330
    %v1665 = vunpack.c.l.b16 %v331
    %v1666 = vunpack.c.h.b16 %v331
    %v1667 = vunpack.c.l.b16 %v332
    %v1668 = vunpack.c.h.b16 %v332
    %v1669 = vunpack.c.l.b16 %v333
    %v1670 = vunpack.c.h.b16 %v333
    %v1671 = vunpack.c.l.b16 %v334
    %v1672 = vunpack.c.h.b16 %v334
    %v1673 = vunpack.c.l.b16 %v335
    %v1674 = vunpack.c.h.b16 %v335
    %v1675 = vunpack.c.l.b16 %v336
    %v1676 = vunpack.c.h.b16 %v336
    %v1677 = vunpack.c.l.b16 %v337
    %v1678 = vunpack.c.h.b16 %v337
    %v1679 = vunpack.c.l.b16 %v338
    %v1680 = vunpack.c.h.b16 %v338
    %v1681 = vunpack.c.l.b16 %v339
    %v1682 = vunpack.c.h.b16 %v339
    %v1683 = vunpack.c.l.b16 %v340
    %v1684 = vunpack.c.h.b16 %v340
    %v1685 = vunpack.c.l.b16 %v341
    %v1686 = vunpack.c.h.b16 %v341
    %v1687 = vunpack.c.l.b16 %v342
    %v1688 = vunpack.c.h.b16 %v342
    %v1689 = vunpack.c.l.b16 %v343
    %v1690 = vunpack.c.h.b16 %v343
    %v1691 = vunpack.c.l.b16 %v344
    %v1692 = vunpack.c.h.b16 %v344
    %v1693 = vunpack.c.l.b16 %v345
    %v1694 = vunpack.c.h.b16 %v345
    %v1695 = vunpack.c.l.b16 %v346
    %v1696 = vunpack.c.h.b16 %v346
    %v1697 = vunpack.c.l.b16 %v347
    %v1698 = vunpack.c.h.b16 %v347
    %v1699 = vunpack.c.l.b16 %v348
    %v1700 = vunpack.c.h.b16 %v348
    %v1701 = vunpack.c.l.b16 %v349
    %v1702 = vunpack.c.h.b16 %v349
    %v1703 = vunpack.c.l.b16 %v350
    %v1704 = vunpack.c.h.b16 %v350
    %v1705 = vunpack.c.l.b16 %v351
    %v1706 = vunpack.c.h.b16 %v351
    %v1707 = vunpack.c.l.b16 %v352
    %v1708 = vunpack.c.h.b16 %v352
    %v1709 = vunpack.c.l.b16 %v353
    %v1710 = vunpack.c.h.b16 %v353
    %v1711 = vunpack.c.l.b16 %v354
    %v1712 = vunpack.c.h.b16 %v354
    %v1713 = vunpack.c.l.b16 %v355
    %v1714 = vunpack.c.h.b16 %v355
    %v1715 = vunpack.c.l.b16 %v356
    %v1716 = vunpack.c.h.b16 %v356
    %v1717 = vunpack.c.l.b16 %v357
    %v1718 = vunpack.c.h.b16 %v357
    %v1719 = vunpack.c.l.b16 %v358
    %v1720 = vunpack.c.h.b16 %v358
    %v1721 = vunpack.c.l.b16 %v359
    %v1722 = vunpack.c.h.b16 %v359
    %v1723 = vunpack.c.l.b16 %v360
    %v1724 = vunpack.c.h.b16 %v360
    %v1725 = vunpack.c.l.b16 %v361
    %v1726 = vunpack.c.h.b16 %v361
    %v1727 = vunpack.c.l.b16 %v362
    %v1728 = vunpack.c.h.b16 %v362
    %v1729 = vunpack.c.l.b16 %v363
    %v1730 = vunpack.c.h.b16 %v363
    %v1731 = vunpack.c.l.b16 %v364
    %v1732 = vunpack.c.h.b16 %v364
    %v1733 = vunpack.c.l.b16 %v365
    %v1734 = vunpack.c.h.b16 %v365
    %v1735 = vunpack.c.l.b16 %v366
    %v1736 = vunpack.c.h.b16 %v366
    %v1737 = vunpack.c.l.b16 %v367
    %v1738 = vunpack.c.h.b16 %v367
    %v1739 = vunpack.c.l.b16 %v368
    %v1740 = vunpack.c.h.b16 %v368
    %v1741 = vunpack.c.l.b16 %v369
    %v1742 = vunpack.c.h.b16 %v369
    %v1743 = vunpack.c.l.b16 %v370
    %v1744 = vunpack.c.h.b16 %v370
    %v1745 = vunpack.c.l.b16 %v371
    %v1746 = vunpack.c.h.b16 %v371
    %v1747 = vunpack.c.l.b16 %v372
    %v1748 = vunpack.c.h.b16 %v372
    %v1749 = vunpack.c.l.b16 %v373
    %v1750 = vunpack.c.h.b16 %v373
    %v1751 = vunpack.c.l.b16 %v374
    %v1752 = vunpack.c.h.b16 %v374
    %v1753 = vunpack.c.l.b16 %v375
    %v1754 = vunpack.c.h.b16 %v375
    %v1755 = vunpack.c.l.b16 %v376
    %v1756 = vunpack.c.h.b16 %v376
    %v1757 = vunpack.c.l.b16 %v377
    %v1758 = vunpack.c.h.b16 %v377
    %v1759 = vunpack.c.l.b16 %v378
    %v1760 = vunpack.c.h.b16 %v378
    %v1761 = vunpack.c.l.b16 %v379
    %v1762 = vunpack.c.h.b16 %v379
    %v1763 = vunpack.c.l.b16 %v380
    %v1764 = vunpack.c.h.b16 %v380
    %v1765 = vunpack.c.l.b16 %v381
    %v1766 = vunpack.c.h.b16 %v381
    %v1767 = vunpack.c.l.b16 %v382
    %v1768 = vunpack.c.h.b16 %v382
    %v1769 = vunpack.c.l.b16 %v383
    %v1770 = vunpack.c.h.b16 %v383
    %v1771 = vunpack.c.l.b16 %v384
    %v1772 = vunpack.c.h.b16 %v384
    %v1773 = vunpack.c.l.b16 %v385
    %v1774 = vunpack.c.h.b16 %v385
    %v1775 = vunpack.c.l.b16 %v386
    %v1776 = vunpack.c.h.b16 %v386
    %v1777 = vunpack.c.l.b16 %v387
    %v1778 = vunpack.c.h.b16 %v387
    %v1779 = vunpack.c.l.b16 %v388
    %v1780 = vunpack.c.h.b16 %v388
    %v1781 = vunpack.c.l.b16 %v389
    %v1782 = vunpack.c.h.b16 %v389
    %v1783 = vunpack.c.l.b16 %v390
    %v1784 = vunpack.c.h.b16 %v390
    %v1785 = vunpack.c.l.b16 %v391
    %v1786 = vunpack.c.h.b16 %v391
    %v1787 = vunpack.c.l.b16 %v392
    %v1788 = vunpack.c.h.b16 %v392
    %v1789 = vunpack.c.l.b16 %v393
    %v1790 = vunpack.c.h.b16 %v393
    %v1791 = vunpack.c.l.b16 %v394
    %v1792 = vunpack.c.h.b16 %v394
    %v1793 = vunpack.c.l.b16 %v395
    %v1794 = vunpack.c.h.b16 %v395
    %v1795 = vunpack.c.l.b16 %v396
    %v1796 = vunpack.c.h.b16 %v396
    %v1797 = vunpack.c.l.b16 %v397
    %v1798 = vunpack.c.h.b16 %v397
    %v1799 = vunpack.c.l.b16 %v398
    %v1800 = vunpack.c.h.b16 %v398
    %v1801 = vunpack.c.l.b16 %v399
    %v1802 = vunpack.c.h.b16 %v399
    %v1803 = vunpack.c.l.b16 %v400
    %v1804 = vunpack.c.h.b16 %v400
    %v1805 = vunpack.c.l.b16 %v401
    %v1806 = vunpack.c.h.b16 %v401
    %v1807 = vunpack.c.l.b16 %v402
    %v1808 = vunpack.c.h.b16 %v402
    %v1809 = vunpack.c.l.b16 %v403
    %v1810 = vunpack.c.h.b16 %v403
    %v1811 = vunpack.c.l.b16 %v404
    %v1812 = vunpack.c.h.b16 %v404
    %v1813 = vunpack.c.l.b16 %v405
    %v1814 = vunpack.c.h.b16 %v405
    %v1815 = vunpack.c.l.b16 %v406
    %v1816 = vunpack.c.h.b16 %v406
    %v1817 = vunpack.c.l.b16 %v407
    %v1818 = vunpack.c.h.b16 %v407
    %v1819 = vunpack.c.l.b16 %v408
    %v1820 = vunpack.c.h.b16 %v408
    %v1821 = vunpack.c.l.b16 %v409
    %v1822 = vunpack.c.h.b16 %v409
    %v1823 = vunpack.c.l.b16 %v410
    %v1824 = vunpack.c.h.b16 %v410
    %v1825 = vunpack.c.l.b16 %v411
    %v1826 = vunpack.c.h.b16 %v411
    %v1827 = vunpack.c.l.b16 %v412
    %v1828 = vunpack.c.h.b16 %v412
    %v1829 = vunpack.c.l.b16 %v413
    %v1830 = vunpack.c.h.b16 %v413
    %v1831 = vunpack.c.l.b16 %v414
    %v1832 = vunpack.c.h.b16 %v414
    %v1833 = vunpack.c.l.b16 %v415
    %v1834 = vunpack.c.h.b16 %v415
    %v1835 = vunpack.c.l.b16 %v416
    %v1836 = vunpack.c.h.b16 %v416
    %v1837 = vunpack.c.l.b16 %v417
    %v1838 = vunpack.c.h.b16 %v417
    %v1839 = vunpack.c.l.b16 %v418
    %v1840 = vunpack.c.h.b16 %v418
    %v1841 = vunpack.c.l.b16 %v419
    %v1842 = vunpack.c.h.b16 %v419
    %v1843 = vunpack.c.l.b16 %v420
    %v1844 = vunpack.c.h.b16 %v420
    %v1845 = vunpack.c.l.b16 %v421
    %v1846 = vunpack.c.h.b16 %v421
    %v1847 = vunpack.c.l.b16 %v422
    %v1848 = vunpack.c.h.b16 %v422
    %v1849 = vunpack.c.l.b16 %v423
    %v1850 = vunpack.c.h.b16 %v423
    %v1851 = vunpack.c.l.b16 %v424
    %v1852 = vunpack.c.h.b16 %v424
    %v1853 = vunpack.c.l.b16 %v425
    %v1854 = vunpack.c.h.b16 %v425
    %v1855 = vunpack.c.l.b16 %v426
    %v1856 = vunpack.c.h.b16 %v426
    %v1857 = vunpack.c.l.b16 %v427
    %v1858 = vunpack.c.h.b16 %v427
    %v1859 = vunpack.c.l.b16 %v428
    %v1860 = vunpack.c.h.b16 %v428
    %v1861 = vunpack.c.l.b16 %v429
    %v1862 = vunpack.c.h.b16 %v429
    %v1863 = vunpack.c.l.b16 %v430
    %v1864 = vunpack.c.h.b16 %v430
    %v1865 = vunpack.c.l.b16 %v431
    %v1866 = vunpack.c.h.b16 %v431
    %v1867 = vunpack.c.l.b16 %v432
    %v1868 = vunpack.c.h.b16 %v432
    %v1869 = vunpack.c.l.b16 %v433
    %v1870 = vunpack.c.h.b16 %v433
    %v1871 = vunpack.c.l.b16 %v434
    %v1872 = vunpack.c.h.b16 %v434
    %v1873 = vunpack.c.l.b16 %v435
    %v1874 = vunpack.c.h.b16 %v435
    %v1875 = vunpack.c.l.b16 %v436
    %v1876 = vunpack.c.h.b16 %v436
    %v1877 = vunpack.c.l.b16 %v437
    %v1878 = vunpack.c.h.b16 %v437
    %v1879 = vunpack.c.l.b16 %v438
    %v1880 = vunpack.c.h.b16 %v438
    %v1881 = vunpack.c.l.b16 %v439
    %v1882 = vunpack.c.h.b16 %v439
    %v1883 = vunpack.c.l.b16 %v440
    %v1884 = vunpack.c.h.b16 %v440
    %v1885 = vunpack.c.l.b16 %v441
    %v1886 = vunpack.c.h.b16 %v441
    %v1887 = vunpack.c.l.b16 %v442
    %v1888 = vunpack.c.h.b16 %v442
    %v1889 = vunpack.c.l.b16 %v443
    %v1890 = vunpack.c.h.b16 %v443
    %v1891 = vunpack.c.l.b16 %v444
    %v1892 = vunpack.c.h.b16 %v444
    %v1893 = vunpack.c.l.b16 %v445
    %v1894 = vunpack.c.h.b16 %v445
    %v1895 = vunpack.c.l.b16 %v446
    %v1896 = vunpack.c.h.b16 %v446
    %v1897 = vunpack.c.l.b16 %v447
    %v1898 = vunpack.c.h.b16 %v447
    %v1899 = vunpack.c.l.b16 %v448
    %v1900 = vunpack.c.h.b16 %v448
    %v1901 = vunpack.c.l.b16 %v449
    %v1902 = vunpack.c.h.b16 %v449
    %v1903 = vunpack.c.l.b16 %v450
    %v1904 = vunpack.c.h.b16 %v450
    %v1905 = vunpack.c.l.b16 %v451
    %v1906 = vunpack.c.h.b16 %v451
    %v1907 = vunpack.c.l.b16 %v452
    %v1908 = vunpack.c.h.b16 %v452
    %v1909 = vunpack.c.l.b16 %v453
    %v1910 = vunpack.c.h.b16 %v453
    %v1911 = vunpack.c.l.b16 %v454
    %v1912 = vunpack.c.h.b16 %v454
    %v1913 = vunpack.c.l.b16 %v455
    %v1914 = vunpack.c.h.b16 %v455
    %v1915 = vunpack.c.l.b16 %v456
    %v1916 = vunpack.c.h.b16 %v456
    %v1917 = vunpack.c.l.b16 %v457
    %v1918 = vunpack.c.h.b16 %v457
    %v1919 = vunpack.c.l.b16 %v458
    %v1920 = vunpack.c.h.b16 %v458
    %v1921 = vunpack.c.l.b16 %v459
    %v1922 = vunpack.c.h.b16 %v459
    %v1923 = vunpack.c.l.b16 %v460
    %v1924 = vunpack.c.h.b16 %v460
    %v1925 = vunpack.c.l.b16 %v461
    %v1926 = vunpack.c.h.b16 %v461
    %v1927 = vunpack.c.l.b16 %v462
    %v1928 = vunpack.c.h.b16 %v462
    %v1929 = vunpack.c.l.b16 %v463
    %v1930 = vunpack.c.h.b16 %v463
    %v1931 = vunpack.c.l.b16 %v464
    %v1932 = vunpack.c.h.b16 %v464
    %v1933 = vunpack.c.l.b16 %v465
    %v1934 = vunpack.c.h.b16 %v465
    %v1935 = vunpack.c.l.b16 %v466
    %v1936 = vunpack.c.h.b16 %v466
    %v1937 = vunpack.c.l.b16 %v467
    %v1938 = vunpack.c.h.b16 %v467
    %v1939 = vunpack.c.l.b16 %v468
    %v1940 = vunpack.c.h.b16 %v468
    %v1941 = vunpack.c.l.b16 %v469
    %v1942 = vunpack.c.h.b16 %v469
    %v1943 = vunpack.c.l.b16 %v470
    %v1944 = vunpack.c.h.b16 %v470
    %v1945 = vunpack.c.l.b16 %v471
    %v1946 = vunpack.c.h.b16 %v471
    %v1947 = vunpack.c.l.b16 %v472
    %v1948 = vunpack.c.h.b16 %v472
    %v1949 = vunpack.c.l.b16 %v473
    %v1950 = vunpack.c.h.b16 %v473
    %v1951 = vunpack.c.l.b16 %v474
    %v1952 = vunpack.c.h.b16 %v474
    %v1953 = vunpack.c.l.b16 %v475
    %v1954 = vunpack.c.h.b16 %v475
    %v1955 = vunpack.c.l.b16 %v476
    %v1956 = vunpack.c.h.b16 %v476
    %v1957 = vunpack.c.l.b16 %v477
    %v1958 = vunpack.c.h.b16 %v477
    %v1959 = vunpack.c.l.b16 %v478
    %v1960 = vunpack.c.h.b16 %v478
    %v1961 = vunpack.c.l.b16 %v479
    %v1962 = vunpack.c.h.b16 %v479
    %v1963 = vunpack.c.l.b16 %v480
    %v1964 = vunpack.c.h.b16 %v480
    %v1965 = vunpack.c.l.b16 %v481
    %v1966 = vunpack.c.h.b16 %v481
    %v1967 = vunpack.c.l.b16 %v482
    %v1968 = vunpack.c.h.b16 %v482
    %v1969 = vunpack.c.l.b16 %v483
    %v1970 = vunpack.c.h.b16 %v483
    %v1971 = vunpack.c.l.b16 %v484
    %v1972 = vunpack.c.h.b16 %v484
    %v1973 = vunpack.c.l.b16 %v485
    %v1974 = vunpack.c.h.b16 %v485
    %v1975 = vunpack.c.l.b16 %v486
    %v1976 = vunpack.c.h.b16 %v486
    %v1977 = vunpack.c.l.b16 %v487
    %v1978 = vunpack.c.h.b16 %v487
    %v1979 = vunpack.c.l.b16 %v488
    %v1980 = vunpack.c.h.b16 %v488
    %v1981 = vunpack.c.l.b16 %v489
    %v1982 = vunpack.c.h.b16 %v489
    %v1983 = vunpack.c.l.b16 %v490
    %v1984 = vunpack.c.h.b16 %v490
    %v1985 = vunpack.c.l.b16 %v491
    %v1986 = vunpack.c.h.b16 %v491
    %v1987 = vunpack.c.l.b16 %v492
    %v1988 = vunpack.c.h.b16 %v492
    %v1989 = vunpack.c.l.b16 %v493
    %v1990 = vunpack.c.h.b16 %v493
    %v1991 = vunpack.c.l.b16 %v494
    %v1992 = vunpack.c.h.b16 %v494
    %v1993 = vunpack.c.l.b16 %v495
    %v1994 = vunpack.c.h.b16 %v495
    %v1995 = vunpack.c.l.b16 %v496
    %v1996 = vunpack.c.h.b16 %v496
    %v1997 = vunpack.c.l.b16 %v497
    %v1998 = vunpack.c.h.b16 %v497
    %v1999 = vunpack.c.l.b16 %v498
    %v2000 = vunpack.c.h.b16 %v498
    %v2001 = vunpack.c.l.b16 %v499
    %v2002 = vunpack.c.h.b16 %v499
    %v2003 = vunpack.c.l.b16 %v500
    %v2004 = vunpack.c.h.b16 %v500
    %v2005 = vunpack.c.l.b16 %v501
    %v2006 = vunpack.c.h.b16 %v501
    %v2007 = vunpack.c.l.b16 %v502
    %v2008 = vunpack.c.h.b16 %v502
    %v2009 = vunpack.c.l.b16 %v503
    %v2010 = vunpack.c.h.b16 %v503
    %v2011 = vunpack.c.l.b16 %v504
    %v2012 = vunpack.c.h.b16 %v504
    %v2013 = vunpack.c.l.b16 %v505
    %v2014 = vunpack.c.h.b16 %v505
    %v2015 = vunpack.c.l.b16 %v506
    %v2016 = vunpack.c.h.b16 %v506
    %v2017 = vunpack.c.l.b16 %v507
    %v2018 = vunpack.c.h.b16 %v507
    %v2019 = vunpack.c.l.b16 %v508
    %v2020 = vunpack.c.h.b16 %v508
    %v2021 = vunpack.c.l.b16 %v509
    %v2022 = vunpack.c.h.b16 %v509
    %v2023 = vunpack.c.l.b16 %v510
    %v2024 = vunpack.c.h.b16 %v510
    %v2025 = vunpack.c.l.b16 %v511
    %v2026 = vunpack.c.h.b16 %v511
    %v2027 = vunpack.c.l.b16 %v512
    %v2028 = vunpack.c.h.b16 %v512
    %v2029 = vunpack.c.l.b16 %v513
    %v2030 = vunpack.c.h.b16 %v513
    %v2031 = vunpack.c.l.b16 %v514
    %v2032 = vunpack.c.h.b16 %v514
    %v2033 = vunpack.c.l.b16 %v515
    %v2034 = vunpack.c.h.b16 %v515
    %v2035 = vunpack.c.l.b16 %v516
    %v2036 = vunpack.c.h.b16 %v516
    %v2037 = vunpack.c.l.b16 %v517
    %v2038 = vunpack.c.h.b16 %v517
    %v2039 = vunpack.c.l.b16 %v518
    %v2040 = vunpack.c.h.b16 %v518
    %v2041 = vunpack.c.l.b16 %v519
    %v2042 = vunpack.c.h.b16 %v519
    %v2043 = vunpack.c.l.b16 %v520
    %v2044 = vunpack.c.h.b16 %v520
    %v2045 = vunpack.c.l.b16 %v521
    %v2046 = vunpack.c.h.b16 %v521
    %v2047 = vunpack.c.l.b16 %v522
    %v2048 = vunpack.c.h.b16 %v522
    %v2049 = vunpack.c.l.b16 %v523
    %v2050 = vunpack.c.h.b16 %v523
    %v2051 = vunpack.c.l.b16 %v524
    %v2052 = vunpack.c.h.b16 %v524
    %v2053 = vunpack.c.l.b16 %v525
    %v2054 = vunpack.c.h.b16 %v525
    %v2055 = vunpack.c.l.b16 %v526
    %v2056 = vunpack.c.h.b16 %v526
    %v2057 = vunpack.c.l.b16 %v527
    %v2058 = vunpack.c.h.b16 %v527
    %v2059 = vunpack.c.l.b16 %v528
    %v2060 = vunpack.c.h.b16 %v528
    %v2061 = vunpack.c.l.b16 %v529
    %v2062 = vunpack.c.h.b16 %v529
    %v2063 = vunpack.c.l.b16 %v530
    %v2064 = vunpack.c.h.b16 %v530
    %v2065 = vunpack.c.l.b16 %v531
    %v2066 = vunpack.c.h.b16 %v531
    %v2067 = vunpack.c.l.b16 %v532
    %v2068 = vunpack.c.h.b16 %v532
    %v2069 = vunpack.c.l.b16 %v533
    %v2070 = vunpack.c.h.b16 %v533
    %v2071 = vunpack.c.l.b16 %v534
    %v2072 = vunpack.c.h.b16 %v534
    %v2073 = vunpack.c.l.b16 %v535
    %v2074 = vunpack.c.h.b16 %v535
    %v2075 = vunpack.c.l.b16 %v536
    %v2076 = vunpack.c.h.b16 %v536
    %v2077 = vunpack.c.l.b16 %v537
    %v2078 = vunpack.c.h.b16 %v537
    %v2079 = vunpack.c.l.b16 %v538
    %v2080 = vunpack.c.h.b16 %v538
    %v2081 = vunpack.c.l.b16 %v539
    %v2082 = vunpack.c.h.b16 %v539
    %v2083 = vunpack.c.l.b16 %v540
    %v2084 = vunpack.c.h.b16 %v540
    %v2085 = vunpack.c.l.b16 %v541
    %v2086 = vunpack.c.h.b16 %v541
    %v2087 = vunpack.c.l.b16 %v542
    %v2088 = vunpack.c.h.b16 %v542
    %v2089 = vunpack.c.l.b16 %v543
    %v2090 = vunpack.c.h.b16 %v543
    %v2091 = vunpack.c.l.b16 %v544
    %v2092 = vunpack.c.h.b16 %v544
    %v2093 = vunpack.c.l.b16 %v545
    %v2094 = vunpack.c.h.b16 %v545
    %v2095 = vunpack.c.l.b16 %v546
    %v2096 = vunpack.c.h.b16 %v546
    %v2097 = vunpack.c.l.b16 %v547
    %v2098 = vunpack.c.h.b16 %v547
    %v2099 = vunpack.c.l.b16 %v548
    %v2100 = vunpack.c.h.b16 %v548
    %v2101 = vunpack.c.l.b16 %v549
    %v2102 = vunpack.c.h.b16 %v549
    %v2103 = vunpack.c.l.b16 %v550
    %v2104 = vunpack.c.h.b16 %v550
    %v2105 = vunpack.c.l.b16 %v551
    %v2106 = vunpack.c.h.b16 %v551
    %v2107 = vunpack.c.l.b16 %v552
    %v2108 = vunpack.c.h.b16 %v552
    %v2109 = vunpack.c.l.b16 %v553
    %v2110 = vunpack.c.h.b16 %v553
    %v2111 = vunpack.c.l.b16 %v554
    %v2112 = vunpack.c.h.b16 %v554
    %v2113 = vunpack.c.l.b16 %v555
    %v2114 = vunpack.c.h.b16 %v555
    %v2115 = vunpack.c.l.b16 %v556
    %v2116 = vunpack.c.h.b16 %v556
    %v2117 = vunpack.c.l.b16 %v557
    %v2118 = vunpack.c.h.b16 %v557
    %v2119 = vunpack.c.l.b16 %v558
    %v2120 = vunpack.c.h.b16 %v558
    %v2121 = vunpack.c.l.b16 %v559
    %v2122 = vunpack.c.h.b16 %v559
    %v2123 = vunpack.c.l.b16 %v560
    %v2124 = vunpack.c.h.b16 %v560
    %v2125 = vunpack.c.l.b16 %v561
    %v2126 = vunpack.c.h.b16 %v561
    %v2127 = vunpack.c.l.b16 %v562
    %v2128 = vunpack.c.h.b16 %v562
    %v2129 = vunpack.c.l.b16 %v563
    %v2130 = vunpack.c.h.b16 %v563
    %v2131 = vunpack.c.l.b16 %v564
    %v2132 = vunpack.c.h.b16 %v564
    %v2133 = vunpack.c.l.b16 %v565
    %v2134 = vunpack.c.h.b16 %v565
    %v2135 = vunpack.c.l.b16 %v566
    %v2136 = vunpack.c.h.b16 %v566
    %v2137 = vunpack.c.l.b16 %v567
    %v2138 = vunpack.c.h.b16 %v567
    %v2139 = vunpack.c.l.b16 %v568
    %v2140 = vunpack.c.h.b16 %v568
    %v2141 = vunpack.c.l.b16 %v569
    %v2142 = vunpack.c.h.b16 %v569
    %v2143 = vunpack.c.l.b16 %v570
    %v2144 = vunpack.c.h.b16 %v570
    %v2145 = vunpack.c.l.b16 %v571
    %v2146 = vunpack.c.h.b16 %v571
    %v2147 = vunpack.c.l.b16 %v572
    %v2148 = vunpack.c.h.b16 %v572
    %v2149 = vunpack.c.l.b16 %v573
    %v2150 = vunpack.c.h.b16 %v573
    %v2151 = vunpack.c.l.b16 %v574
    %v2152 = vunpack.c.h.b16 %v574
    %v2153 = vunpack.c.l.b16 %v575
    %v2154 = vunpack.c.h.b16 %v575
    %v2155 = vunpack.c.l.b16 %v576
    %v2156 = vunpack.c.h.b16 %v576
    %v2157 = vunpack.c.l.b16 %v577
    %v2158 = vunpack.c.h.b16 %v577
    %v2159 = vunpack.c.l.b16 %v578
    %v2160 = vunpack.c.h.b16 %v578
    %v2161 = vunpack.c.l.b16 %v579
    %v2162 = vunpack.c.h.b16 %v579
    %v2163 = vunpack.c.l.b16 %v580
    %v2164 = vunpack.c.h.b16 %v580
    %v2165 = vunpack.c.l.b16 %v581
    %v2166 = vunpack.c.h.b16 %v581
    %v2167 = vunpack.c.l.b16 %v582
    %v2168 = vunpack.c.h.b16 %v582
    %v2169 = vunpack.c.l.b16 %v583
    %v2170 = vunpack.c.h.b16 %v583
    %v2171 = vunpack.c.l.b16 %v584
    %v2172 = vunpack.c.h.b16 %v584
    %v2173 = vunpack.c.l.b16 %v585
    %v2174 = vunpack.c.h.b16 %v585
    %v2175 = vunpack.c.l.b16 %v586
    %v2176 = vunpack.c.h.b16 %v586
    %v2177 = vunpack.c.l.b16 %v587
    %v2178 = vunpack.c.h.b16 %v587
    %v2179 = vunpack.c.l.b16 %v588
    %v2180 = vunpack.c.h.b16 %v588
    %v2181 = vunpack.c.l.b16 %v589
    %v2182 = vunpack.c.h.b16 %v589
    %v2183 = vunpack.c.l.b16 %v590
    %v2184 = vunpack.c.h.b16 %v590
    %v2185 = vunpack.c.l.b16 %v591
    %v2186 = vunpack.c.h.b16 %v591
    %v2187 = vunpack.c.l.b16 %v592
    %v2188 = vunpack.c.h.b16 %v592
    %v2189 = vunpack.c.l.b16 %v593
    %v2190 = vunpack.c.h.b16 %v593
    %v2191 = vunpack.c.l.b16 %v594
    %v2192 = vunpack.c.h.b16 %v594
    %v2193 = vunpack.c.l.b16 %v595
    %v2194 = vunpack.c.h.b16 %v595
    %v2195 = vunpack.c.l.b16 %v596
    %v2196 = vunpack.c.h.b16 %v596
    %v2197 = vunpack.c.l.b16 %v597
    %v2198 = vunpack.c.h.b16 %v597
    %v2199 = vunpack.c.l.b16 %v598
    %v2200 = vunpack.c.h.b16 %v598
    %v2201 = vunpack.c.l.b16 %v599
    %v2202 = vunpack.c.h.b16 %v599
    %v2203 = vunpack.c.l.b16 %v600
    %v2204 = vunpack.c.h.b16 %v600
    %v2205 = vunpack.c.l.b16 %v601
    %v2206 = vunpack.c.h.b16 %v601
    %v2207 = vunpack.c.l.b16 %v602
    %v2208 = vunpack.c.h.b16 %v602
    %v2209 = vunpack.c.l.b16 %v603
    %v2210 = vunpack.c.h.b16 %v603
    %v2211 = vunpack.c.l.b16 %v604
    %v2212 = vunpack.c.h.b16 %v604
    %v2213 = vunpack.c.l.b16 %v605
    %v2214 = vunpack.c.h.b16 %v605
    %v2215 = vunpack.c.l.b16 %v606
    %v2216 = vunpack.c.h.b16 %v606
    %v2217 = vunpack.c.l.b16 %v607
    %v2218 = vunpack.c.h.b16 %v607
    %v2219 = vunpack.c.l.b16 %v608
    %v2220 = vunpack.c.h.b16 %v608
    %v2221 = vunpack.c.l.b16 %v609
    %v2222 = vunpack.c.h.b16 %v609
    %v2223 = vunpack.c.l.b16 %v610
    %v2224 = vunpack.c.h.b16 %v610
    %v2225 = vunpack.c.l.b16 %v611
    %v2226 = vunpack.c.h.b16 %v611
    %v2227 = vunpack.c.l.b16 %v612
    %v2228 = vunpack.c.h.b16 %v612
    %v2229 = vunpack.c.l.b16 %v613
    %v2230 = vunpack.c.h.b16 %v613
    %v2231 = vunpack.c.l.b16 %v614
    %v2232 = vunpack.c.h.b16 %v614
    %v2233 = vpack.c.b16 %v1217, %v1209
    %v2234 = vpack.c.b16 %v1218, %v1210
    %v2235 = vpack.c.b16 %v1219, %v1211
    %v2236 = vpack.c.b16 %v1220, %v1212
    %v2237 = vpack.c.b16 %v1221, %v1213
    %v2238 = vpack.c.b16 %v1222, %v1214
    %v2239 = vpack.c.b16 %v1223, %v1215
    %v2240 = vpack.c.b16 %v1224, %v1216
    %v2241 = vpack.c.b16 %v1233, %v1225
    %v2242 = vpack.c.b16 %v1234, %v1226
    %v2243 = vpack.c.b16 %v1235, %v1227
    %v2244 = vpack.c.b16 %v1236, %v1228
    %v2245 = vpack.c.b16 %v1237, %v1229
    %v2246 = vpack.c.b16 %v1238, %v1230
    %v2247 = vpack.c.b16 %v1239, %v1231
    %v2248 = vpack.c.b16 %v1240, %v1232
    %v2249 = vpack.c.b16 %v1249, %v1241
    %v2250 = vpack.c.b16 %v1250, %v1242
    %v2251 = vpack.c.b16 %v1251, %v1243
    %v2252 = vpack.c.b16 %v1252, %v1244
    %v2253 = vpack.c.b16 %v1253, %v1245
    %v2254 = vpack.c.b16 %v1254, %v1246
    %v2255 = vpack.c.b16 %v1255, %v1247
    %v2256 = vpack.c.b16 %v1256, %v1248
    %v2257 = vpack.c.b16 %v1265, %v1257
    %v2258 = vpack.c.b16 %v1266, %v1258
    %v2259 = vpack.c.b16 %v1267, %v1259
    %v2260 = vpack.c.b16 %v1268, %v1260
    %v2261 = vpack.c.b16 %v1269, %v1261
    %v2262 = vpack.c.b16 %v1270, %v1262
    %v2263 = vpack.c.b16 %v1271, %v1263
    %v2264 = vpack.c.b16 %v1272, %v1264
    %v2265 = vpack.c.b16 %v1281, %v1273
    %v2266 = vpack.c.b16 %v1282, %v1274
    %v2267 = vpack.c.b16 %v1283, %v1275
    %v2268 = vpack.c.b16 %v1284, %v1276
    %v2269 = vpack.c.b16 %v1285, %v1277
    %v2270 = vpack.c.b16 %v1286, %v1278
    %v2271 = vpack.c.b16 %v1287, %v1279
    %v2272 = vpack.c.b16 %v1288, %v1280
    %v2273 = vpack.c.b16 %v1297, %v1289
    %v2274 = vpack.c.b16 %v1298, %v1290
    %v2275 = vpack.c.b16 %v1299, %v1291
    %v2276 = vpack.c.b16 %v1300, %v1292
    %v2277 = vpack.c.b16 %v1301, %v1293
    %v2278 = vpack.c.b16 %v1302, %v1294
    %v2279 = vpack.c.b16 %v1303, %v1295
    %v2280 = vpack.c.b16 %v1304, %v1296
    %v2281 = vpack.c.b16 %v1313, %v1305
    %v2282 = vpack.c.b16 %v1314, %v1306
    %v2283 = vpack.c.b16 %v1315, %v1307
    %v2284 = vpack.c.b16 %v1316, %v1308
    %v2285 = vpack.c.b16 %v1317, %v1309
    %v2286 = vpack.c.b16 %v1318, %v1310
    %v2287 = vpack.c.b16 %v1319, %v1311
    %v2288 = vpack.c.b16 %v1320, %v1312
    %v2289 = vpack.c.b16 %v1329, %v1321
    %v2290 = vpack.c.b16 %v1330, %v1322
    %v2291 = vpack.c.b16 %v1331, %v1323
    %v2292 = vpack.c.b16 %v1332, %v1324
    %v2293 = vpack.c.b16 %v1333, %v1325
    %v2294 = vpack.c.b16 %v1334, %v1326
    %v2295 = vpack.c.b16 %v1335, %v1327
    %v2296 = vpack.c.b16 %v1336, %v1328
    %v2297 = vpack.c.b16 %v1345, %v1337
    %v2298 = vpack.c.b16 %v1346, %v1338
    %v2299 = vpack.c.b16 %v1347, %v1339
    %v2300 = vpack.c.b16 %v1348, %v1340
    %v2301 = vpack.c.b16 %v1349, %v1341
    %v2302 = vpack.c.b16 %v1350, %v1342
    %v2303 = vpack.c.b16 %v1351, %v1343
    %v2304 = vpack.c.b16 %v1352, %v1344
    %v2305 = vpack.c.b16 %v1361, %v1353
    %v2306 = vpack.c.b16 %v1362, %v1354
    %v2307 = vpack.c.b16 %v1363, %v1355
    %v2308 = vpack.c.b16 %v1364, %v1356
    %v2309 = vpack.c.b16 %v1365, %v1357
    %v2310 = vpack.c.b16 %v1366, %v1358
    %v2311 = vpack.c.b16 %v1367, %v1359
    %v2312 = vpack.c.b16 %v1368, %v1360
    %v2313 = vpack.c.b16 %v1377, %v1369
    %v2314 = vpack.c.b16 %v1378, %v1370
    %v2315 = vpack.c.b16 %v1379, %v1371
    %v2316 = vpack.c.b16 %v1380, %v1372
    %v2317 = vpack.c.b16 %v1381, %v1373
    %v2318 = vpack.c.b16 %v1382, %v1374
    %v2319 = vpack.c.b16 %v1383, %v1375
    %v2320 = vpack.c.b16 %v1384, %v1376
    %v2321 = vpack.c.b16 %v1393, %v1385
    %v2322 = vpack.c.b16 %v1394, %v1386
    %v2323 = vpack.c.b16 %v1395, %v1387
    %v2324 = vpack.c.b16 %v1396, %v1388
    %v2325 = vpack.c.b16 %v1397, %v1389
    %v2326 = vpack.c.b16 %v1398, %v1390
    %v2327 = vpack.c.b16 %v1399, %v1391
    %v2328 = vpack.c.b16 %v1400, %v1392
    %v2329 = vpack.c.b16 %v1409, %v1401
    %v2330 = vpack.c.b16 %v1410, %v1402
    %v2331 = vpack.c.b16 %v1411, %v1403
    %v2332 = vpack.c.b16 %v1412, %v1404
    %v2333 = vpack.c.b16 %v1413, %v1405
    %v2334 = vpack.c.b16 %v1414, %v1406
    %v2335 = vpack.c.b16 %v1415, %v1407
    %v2336 = vpack.c.b16 %v1416, %v1408
    %v2337 = vpack.c.b16 %v1425, %v1417
    %v2338 = vpack.c.b16 %v1426, %v1418
    %v2339 = vpack.c.b16 %v1427, %v1419
    %v2340 = vpack.c.b16 %v1428, %v1420
    %v2341 = vpack.c.b16 %v1429, %v1421
    %v2342 = vpack.c.b16 %v1430, %v1422
    %v2343 = vpack.c.b16 %v1431, %v1423
    %v2344 = vpack.c.b16 %v1432, %v1424
    %v2345 = vpack.c.b16 %v1441, %v1433
    %v2346 = vpack.c.b16 %v1442, %v1434
    %v2347 = vpack.c.b16 %v1443, %v1435
    %v2348 = vpack.c.b16 %v1444, %v1436
    %v2349 = vpack.c.b16 %v1445, %v1437
    %v2350 = vpack.c.b16 %v1446, %v1438
    %v2351 = vpack.c.b16 %v1447, %v1439
    %v2352 = vpack.c.b16 %v1448, %v1440
    %v2353 = vpack.c.b16 %v1457, %v1449
    %v2354 = vpack.c.b16 %v1458, %v1450
    %v2355 = vpack.c.b16 %v1459, %v1451
    %v2356 = vpack.c.b16 %v1460, %v1452
    %v2357 = vpack.c.b16 %v1461, %v1453
    %v2358 = vpack.c.b16 %v1462, %v1454
    %v2359 = vpack.c.b16 %v1463, %v1455
    %v2360 = vpack.c.b16 %v1464, %v1456
    %v2361 = vpack.c.b16 %v1473, %v1465
    %v2362 = vpack.c.b16 %v1474, %v1466
    %v2363 = vpack.c.b16 %v1475, %v1467
    %v2364 = vpack.c.b16 %v1476, %v1468
    %v2365 = vpack.c.b16 %v1477, %v1469
    %v2366 = vpack.c.b16 %v1478, %v1470
    %v2367 = vpack.c.b16 %v1479, %v1471
    %v2368 = vpack.c.b16 %v1480, %v1472
    %v2369 = vpack.c.b16 %v1489, %v1481
    %v2370 = vpack.c.b16 %v1490, %v1482
    %v2371 = vpack.c.b16 %v1491, %v1483
    %v2372 = vpack.c.b16 %v1492, %v1484
    %v2373 = vpack.c.b16 %v1493, %v1485
    %v2374 = vpack.c.b16 %v1494, %v1486
    %v2375 = vpack.c.b16 %v1495, %v1487
    %v2376 = vpack.c.b16 %v1496, %v1488
    %v2377 = vpack.c.b16 %v1505, %v1497
    %v2378 = vpack.c.b16 %v1506, %v1498
    %v2379 = vpack.c.b16 %v1507, %v1499
    %v2380 = vpack.c.b16 %v1508, %v1500
    %v2381 = vpack.c.b16 %v1509, %v1501
    %v2382 = vpack.c.b16 %v1510, %v1502
    %v2383 = vpack.c.b16 %v1511, %v1503
    %v2384 = vpack.c.b16 %v1512, %v1504
    %v2385 = vpack.c.b16 %v1521, %v1513
    %v2386 = vpack.c.b16 %v1522, %v1514
    %v2387 = vpack.c.b16 %v1523, %v1515
    %v2388 = vpack.c.b16 %v1524, %v1516
    %v2389 = vpack.c.b16 %v1525, %v1517
    %v2390 = vpack.c.b16 %v1526, %v1518
    %v2391 = vpack.c.b16 %v1527, %v1519
    %v2392 = vpack.c.b16 %v1528, %v1520
    %v2393 = vpack.c.b16 %v1537, %v1529
    %v2394 = vpack.c.b16 %v1538, %v1530
    %v2395 = vpack.c.b16 %v1539, %v1531
    %v2396 = vpack.c.b16 %v1540, %v1532
    %v2397 = vpack.c.b16 %v1541, %v1533
    %v2398 = vpack.c.b16 %v1542, %v1534
    %v2399 = vpack.c.b16 %v1543, %v1535
    %v2400 = vpack.c.b16 %v1544, %v1536
    %v2401 = vpack.c.b16 %v1553, %v1545
    %v2402 = vpack.c.b16 %v1554, %v1546
    %v2403 = vpack.c.b16 %v1555, %v1547
    %v2404 = vpack.c.b16 %v1556, %v1548
    %v2405 = vpack.c.b16 %v1557, %v1549
    %v2406 = vpack.c.b16 %v1558, %v1550
    %v2407 = vpack.c.b16 %v1559, %v1551
    %v2408 = vpack.c.b16 %v1560, %v1552
    %v2409 = vpack.c.b16 %v1569, %v1561
    %v2410 = vpack.c.b16 %v1570, %v1562
    %v2411 = vpack.c.b16 %v1571, %v1563
    %v2412 = vpack.c.b16 %v1572, %v1564
    %v2413 = vpack.c.b16 %v1573, %v1565
    %v2414 = vpack.c.b16 %v1574, %v1566
    %v2415 = vpack.c.b16 %v1575, %v1567
    %v2416 = vpack.c.b16 %v1576, %v1568
    %v2417 = vpack.c.b16 %v1585, %v1577
    %v2418 = vpack.c.b16 %v1586, %v1578
    %v2419 = vpack.c.b16 %v1587, %v1579
    %v2420 = vpack.c.b16 %v1588, %v1580
    %v2421 = vpack.c.b16 %v1589, %v1581
    %v2422 = vpack.c.b16 %v1590, %v1582
    %v2423 = vpack.c.b16 %v1591, %v1583
    %v2424 = vpack.c.b16 %v1592, %v1584
    %v2425 = vpack.c.b16 %v1601, %v1593
    %v2426 = vpack.c.b16 %v1602, %v1594
    %v2427 = vpack.c.b16 %v1603, %v1595
    %v2428 = vpack.c.b16 %v1604, %v1596
    %v2429 = vpack.c.b16 %v1605, %v1597
    %v2430 = vpack.c.b16 %v1606, %v1598
    %v2431 = vpack.c.b16 %v1607, %v1599
    %v2432 = vpack.c.b16 %v1608, %v1600
    %v2433 = vpack.c.b16 %v1617, %v1609
    %v2434 = vpack.c.b16 %v1618, %v1610
    %v2435 = vpack.c.b16 %v1619, %v1611
    %v2436 = vpack.c.b16 %v1620, %v1612
    %v2437 = vpack.c.b16 %v1621, %v1613
    %v2438 = vpack.c.b16 %v1622, %v1614
    %v2439 = vpack.c.b16 %v1623, %v1615
    %v2440 = vpack.c.b16 %v1624, %v1616
    %v2441 = vpack.c.b16 %v1633, %v1625
    %v2442 = vpack.c.b16 %v1634, %v1626
    %v2443 = vpack.c.b16 %v1635, %v1627
    %v2444 = vpack.c.b16 %v1636, %v1628
    %v2445 = vpack.c.b16 %v1637, %v1629
    %v2446 = vpack.c.b16 %v1638, %v1630
    %v2447 = vpack.c.b16 %v1639, %v1631
    %v2448 = vpack.c.b16 %v1640, %v1632
    %v2449 = vpack.c.b16 %v1649, %v1641
    %v2450 = vpack.c.b16 %v1650, %v1642
    %v2451 = vpack.c.b16 %v1651, %v1643
    %v2452 = vpack.c.b16 %v1652, %v1644
    %v2453 = vpack.c.b16 %v1653, %v1645
    %v2454 = vpack.c.b16 %v1654, %v1646
    %v2455 = vpack.c.b16 %v1655, %v1647
    %v2456 = vpack.c.b16 %v1656, %v1648
    %v2457 = vpack.c.b16 %v1665, %v1657
    %v2458 = vpack.c.b16 %v1666, %v1658
    %v2459 = vpack.c.b16 %v1667, %v1659
    %v2460 = vpack.c.b16 %v1668, %v1660
    %v2461 = vpack.c.b16 %v1669, %v1661
    %v2462 = vpack.c.b16 %v1670, %v1662
    %v2463 = vpack.c.b16 %v1671, %v1663
    %v2464 = vpack.c.b16 %v1672, %v1664
    %v2465 = vpack.c.b16 %v1681, %v1673
    %v2466 = vpack.c.b16 %v1682, %v1674
    %v2467 = vpack.c.b16 %v1683, %v1675
    %v2468 = vpack.c.b16 %v1684, %v1676
    %v2469 = vpack.c.b16 %v1685, %v1677
    %v2470 = vpack.c.b16 %v1686, %v1678
    %v2471 = vpack.c.b16 %v1687, %v1679
    %v2472 = vpack.c.b16 %v1688, %v1680
    %v2473 = vpack.c.b16 %v1697, %v1689
    %v2474 = vpack.c.b16 %v1698, %v1690
    %v2475 = vpack.c.b16 %v1699, %v1691
    %v2476 = vpack.c.b16 %v1700, %v1692
    %v2477 = vpack.c.b16 %v1701, %v1693
    %v2478 = vpack.c.b16 %v1702, %v1694
    %v2479 = vpack.c.b16 %v1703, %v1695
    %v2480 = vpack.c.b16 %v1704, %v1696
    %v2481 = vpack.c.b16 %v1713, %v1705
    %v2482 = vpack.c.b16 %v1714, %v1706
    %v2483 = vpack.c.b16 %v1715, %v1707
    %v2484 = vpack.c.b16 %v1716, %v1708
    %v2485 = vpack.c.b16 %v1717, %v1709
    %v2486 = vpack.c.b16 %v1718, %v1710
    %v2487 = vpack.c.b16 %v1719, %v1711
    %v2488 = vpack.c.b16 %v1720, %v1712
    %v2489 = vpack.c.b16 %v1729, %v1721
    %v2490 = vpack.c.b16 %v1730, %v1722
    %v2491 = vpack.c.b16 %v1731, %v1723
    %v2492 = vpack.c.b16 %v1732, %v1724
    %v2493 = vpack.c.b16 %v1733, %v1725
    %v2494 = vpack.c.b16 %v1734, %v1726
    %v2495 = vpack.c.b16 %v1735, %v1727
    %v2496 = vpack.c.b16 %v1736, %v1728
    %v2497 = vpack.c.b16 %v1745, %v1737
    %v2498 = vpack.c.b16 %v1746, %v1738
    %v2499 = vpack.c.b16 %v1747, %v1739
    %v2500 = vpack.c.b16 %v1748, %v1740
    %v2501 = vpack.c.b16 %v1749, %v1741
    %v2502 = vpack.c.b16 %v1750, %v1742
    %v2503 = vpack.c.b16 %v1751, %v1743
    %v2504 = vpack.c.b16 %v1752, %v1744
    %v2505 = vpack.c.b16 %v1761, %v1753
    %v2506 = vpack.c.b16 %v1762, %v1754
    %v2507 = vpack.c.b16 %v1763, %v1755
    %v2508 = vpack.c.b16 %v1764, %v1756
    %v2509 = vpack.c.b16 %v1765, %v1757
    %v2510 = vpack.c.b16 %v1766, %v1758
    %v2511 = vpack.c.b16 %v1767, %v1759
    %v2512 = vpack.c.b16 %v1768, %v1760
    %v2513 = vpack.c.b16 %v1777, %v1769
    %v2514 = vpack.c.b16 %v1778, %v1770
    %v2515 = vpack.c.b16 %v1779, %v1771
    %v2516 = vpack.c.b16 %v1780, %v1772
    %v2517 = vpack.c.b16 %v1781, %v1773
    %v2518 = vpack.c.b16 %v1782, %v1774
    %v2519 = vpack.c.b16 %v1783, %v1775
    %v2520 = vpack.c.b16 %v1784, %v1776
    %v2521 = vpack.c.b16 %v1793, %v1785
    %v2522 = vpack.c.b16 %v1794, %v1786
    %v2523 = vpack.c.b16 %v1795, %v1787
    %v2524 = vpack.c.b16 %v1796, %v1788
    %v2525 = vpack.c.b16 %v1797, %v1789
    %v2526 = vpack.c.b16 %v1798, %v1790
    %v2527 = vpack.c.b16 %v1799, %v1791
    %v2528 = vpack.c.b16 %v1800, %v1792
    %v2529 = vpack.c.b16 %v1809, %v1801
    %v2530 = vpack.c.b16 %v1810, %v1802
    %v2531 = vpack.c.b16 %v1811, %v1803
    %v2532 = vpack.c.b16 %v1812, %v1804
    %v2533 = vpack.c.b16 %v1813, %v1805
    %v2534 = vpack.c.b16 %v1814, %v1806
    %v2535 = vpack.c.b16 %v1815, %v1807
    %v2536 = vpack.c.b16 %v1816, %v1808
    %v2537 = vpack.c.b16 %v1825, %v1817
    %v2538 = vpack.c.b16 %v1826, %v1818
    %v2539 = vpack.c.b16 %v1827, %v1819
    %v2540 = vpack.c.b16 %v1828, %v1820
    %v2541 = vpack.c.b16 %v1829, %v1821
    %v2542 = vpack.c.b16 %v1830, %v1822
    %v2543 = vpack.c.b16 %v1831, %v1823
    %v2544 = vpack.c.b16 %v1832, %v1824
    %v2545 = vpack.c.b16 %v1841, %v1833
    %v2546 = vpack.c.b16 %v1842, %v1834
    %v2547 = vpack.c.b16 %v1843, %v1835
    %v2548 = vpack.c.b16 %v1844, %v1836
    %v2549 = vpack.c.b16 %v1845, %v1837
    %v2550 = vpack.c.b16 %v1846, %v1838
    %v2551 = vpack.c.b16 %v1847, %v1839
    %v2552 = vpack.c.b16 %v1848, %v1840
    %v2553 = vpack.c.b16 %v1857, %v1849
    %v2554 = vpack.c.b16 %v1858, %v1850
    %v2555 = vpack.c.b16 %v1859, %v1851
    %v2556 = vpack.c.b16 %v1860, %v1852
    %v2557 = vpack.c.b16 %v1861, %v1853
    %v2558 = vpack.c.b16 %v1862, %v1854
    %v2559 = vpack.c.b16 %v1863, %v1855
    %v2560 = vpack.c.b16 %v1864, %v1856
    %v2561 = vpack.c.b16 %v1873, %v1865
    %v2562 = vpack.c.b16 %v1874, %v1866
    %v2563 = vpack.c.b16 %v1875, %v1867
    %v2564 = vpack.c.b16 %v1876, %v1868
    %v2565 = vpack.c.b16 %v1877, %v1869
    %v2566 = vpack.c.b16 %v1878, %v1870
    %v2567 = vpack.c.b16 %v1879, %v1871
    %v2568 = vpack.c.b16 %v1880, %v1872
    %v2569 = vpack.c.b16 %v1889, %v1881
    %v2570 = vpack.c.b16 %v1890, %v1882
    %v2571 = vpack.c.b16 %v1891, %v1883
    %v2572 = vpack.c.b16 %v1892, %v1884
    %v2573 = vpack.c.b16 %v1893, %v1885
    %v2574 = vpack.c.b16 %v1894, %v1886
    %v2575 = vpack.c.b16 %v1895, %v1887
    %v2576 = vpack.c.b16 %v1896, %v1888
    %v2577 = vpack.c.b16 %v1905, %v1897
    %v2578 = vpack.c.b16 %v1906, %v1898
    %v2579 = vpack.c.b16 %v1907, %v1899
    %v2580 = vpack.c.b16 %v1908, %v1900
    %v2581 = vpack.c.b16 %v1909, %v1901
    %v2582 = vpack.c.b16 %v1910, %v1902
    %v2583 = vpack.c.b16 %v1911, %v1903
    %v2584 = vpack.c.b16 %v1912, %v1904
    %v2585 = vpack.c.b16 %v1921, %v1913
    %v2586 = vpack.c.b16 %v1922, %v1914
    %v2587 = vpack.c.b16 %v1923, %v1915
    %v2588 = vpack.c.b16 %v1924, %v1916
    %v2589 = vpack.c.b16 %v1925, %v1917
    %v2590 = vpack.c.b16 %v1926, %v1918
    %v2591 = vpack.c.b16 %v1927, %v1919
    %v2592 = vpack.c.b16 %v1928, %v1920
    %v2593 = vpack.c.b16 %v1937, %v1929
    %v2594 = vpack.c.b16 %v1938, %v1930
    %v2595 = vpack.c.b16 %v1939, %v1931
    %v2596 = vpack.c.b16 %v1940, %v1932
    %v2597 = vpack.c.b16 %v1941, %v1933
    %v2598 = vpack.c.b16 %v1942, %v1934
    %v2599 = vpack.c.b16 %v1943, %v1935
    %v2600 = vpack.c.b16 %v1944, %v1936
    %v2601 = vpack.c.b16 %v1953, %v1945
    %v2602 = vpack.c.b16 %v1954, %v1946
    %v2603 = vpack.c.b16 %v1955, %v1947
    %v2604 = vpack.c.b16 %v1956, %v1948
    %v2605 = vpack.c.b16 %v1957, %v1949
    %v2606 = vpack.c.b16 %v1958, %v1950
    %v2607 = vpack.c.b16 %v1959, %v1951
    %v2608 = vpack.c.b16 %v1960, %v1952
    %v2609 = vpack.c.b16 %v1969, %v1961
    %v2610 = vpack.c.b16 %v1970, %v1962
    %v2611 = vpack.c.b16 %v1971, %v1963
    %v2612 = vpack.c.b16 %v1972, %v1964
    %v2613 = vpack.c.b16 %v1973, %v1965
    %v2614 = vpack.c.b16 %v1974, %v1966
    %v2615 = vpack.c.b16 %v1975, %v1967
    %v2616 = vpack.c.b16 %v1976, %v1968
    %v2617 = vpack.c.b16 %v1985, %v1977
    %v2618 = vpack.c.b16 %v1986, %v1978
    %v2619 = vpack.c.b16 %v1987, %v1979
    %v2620 = vpack.c.b16 %v1988, %v1980
    %v2621 = vpack.c.b16 %v1989, %v1981
    %v2622 = vpack.c.b16 %v1990, %v1982
    %v2623 = vpack.c.b16 %v1991, %v1983
    %v2624 = vpack.c.b16 %v1992, %v1984
    %v2625 = vpack.c.b16 %v2001, %v1993
    %v2626 = vpack.c.b16 %v2002, %v1994
    %v2627 = vpack.c.b16 %v2003, %v1995
    %v2628 = vpack.c.b16 %v2004, %v1996
    %v2629 = vpack.c.b16 %v2005, %v1997
    %v2630 = vpack.c.b16 %v2006, %v1998
    %v2631 = vpack.c.b16 %v2007, %v1999
    %v2632 = vpack.c.b16 %v2008, %v2000
    %v2633 = vpack.c.b16 %v2017, %v2009
    %v2634 = vpack.c.b16 %v2018, %v2010
    %v2635 = vpack.c.b16 %v2019, %v2011
    %v2636 = vpack.c.b16 %v2020, %v2012
    %v2637 = vpack.c.b16 %v2021, %v2013
    %v2638 = vpack.c.b16 %v2022, %v2014
    %v2639 = vpack.c.b16 %v2023, %v2015
    %v2640 = vpack.c.b16 %v2024, %v2016
    %v2641 = vpack.c.b16 %v2033, %v2025
    %v2642 = vpack.c.b16 %v2034, %v2026
    %v2643 = vpack.c.b16 %v2035, %v2027
    %v2644 = vpack.c.b16 %v2036, %v2028
    %v2645 = vpack.c.b16 %v2037, %v2029
    %v2646 = vpack.c.b16 %v2038, %v2030
    %v2647 = vpack.c.b16 %v2039, %v2031
    %v2648 = vpack.c.b16 %v2040, %v2032
    %v2649 = vpack.c.b16 %v2049, %v2041
    %v2650 = vpack.c.b16 %v2050, %v2042
    %v2651 = vpack.c.b16 %v2051, %v2043
    %v2652 = vpack.c.b16 %v2052, %v2044
    %v2653 = vpack.c.b16 %v2053, %v2045
    %v2654 = vpack.c.b16 %v2054, %v2046
    %v2655 = vpack.c.b16 %v2055, %v2047
    %v2656 = vpack.c.b16 %v2056, %v2048
    %v2657 = vpack.c.b16 %v2065, %v2057
    %v2658 = vpack.c.b16 %v2066, %v2058
    %v2659 = vpack.c.b16 %v2067, %v2059
    %v2660 = vpack.c.b16 %v2068, %v2060
    %v2661 = vpack.c.b16 %v2069, %v2061
    %v2662 = vpack.c.b16 %v2070, %v2062
    %v2663 = vpack.c.b16 %v2071, %v2063
    %v2664 = vpack.c.b16 %v2072, %v2064
    %v2665 = vpack.c.b16 %v2081, %v2073
    %v2666 = vpack.c.b16 %v2082, %v2074
    %v2667 = vpack.c.b16 %v2083, %v2075
    %v2668 = vpack.c.b16 %v2084, %v2076
    %v2669 = vpack.c.b16 %v2085, %v2077
    %v2670 = vpack.c.b16 %v2086, %v2078
    %v2671 = vpack.c.b16 %v2087, %v2079
    %v2672 = vpack.c.b16 %v2088, %v2080
    %v2673 = vpack.c.b16 %v2097, %v2089
    %v2674 = vpack.c.b16 %v2098, %v2090
    %v2675 = vpack.c.b16 %v2099, %v2091
    %v2676 = vpack.c.b16 %v2100, %v2092
    %v2677 = vpack.c.b16 %v2101, %v2093
    %v2678 = vpack.c.b16 %v2102, %v2094
    %v2679 = vpack.c.b16 %v2103, %v2095
    %v2680 = vpack.c.b16 %v2104, %v2096
    %v2681 = vpack.c.b16 %v2113, %v2105
    %v2682 = vpack.c.b16 %v2114, %v2106
    %v2683 = vpack.c.b16 %v2115, %v2107
    %v2684 = vpack.c.b16 %v2116, %v2108
    %v2685 = vpack.c.b16 %v2117, %v2109
    %v2686 = vpack.c.b16 %v2118, %v2110
    %v2687 = vpack.c.b16 %v2119, %v2111
    %v2688 = vpack.c.b16 %v2120, %v2112
    %v2689 = vpack.c.b16 %v2129, %v2121
    %v2690 = vpack.c.b16 %v2130, %v2122
    %v2691 = vpack.c.b16 %v2131, %v2123
    %v2692 = vpack.c.b16 %v2132, %v2124
    %v2693 = vpack.c.b16 %v2133, %v2125
    %v2694 = vpack.c.b16 %v2134, %v2126
    %v2695 = vpack.c.b16 %v2135, %v2127
    %v2696 = vpack.c.b16 %v2136, %v2128
    %v2697 = vpack.c.b16 %v2145, %v2137
    %v2698 = vpack.c.b16 %v2146, %v2138
    %v2699 = vpack.c.b16 %v2147, %v2139
    %v2700 = vpack.c.b16 %v2148, %v2140
    %v2701 = vpack.c.b16 %v2149, %v2141
    %v2702 = vpack.c.b16 %v2150, %v2142
    %v2703 = vpack.c.b16 %v2151, %v2143
    %v2704 = vpack.c.b16 %v2152, %v2144
    %v2705 = vpack.c.b16 %v2161, %v2153
    %v2706 = vpack.c.b16 %v2162, %v2154
    %v2707 = vpack.c.b16 %v2163, %v2155
    %v2708 = vpack.c.b16 %v2164, %v2156
    %v2709 = vpack.c.b16 %v2165, %v2157
    %v2710 = vpack.c.b16 %v2166, %v2158
    %v2711 = vpack.c.b16 %v2167, %v2159
    %v2712 = vpack.c.b16 %v2168, %v2160
    %v2713 = vpack.c.b16 %v2177, %v2169
    %v2714 = vpack.c.b16 %v2178, %v2170
    %v2715 = vpack.c.b16 %v2179, %v2171
    %v2716 = vpack.c.b16 %v2180, %v2172
    %v2717 = vpack.c.b16 %v2181, %v2173
    %v2718 = vpack.c.b16 %v2182, %v2174
    %v2719 = vpack.c.b16 %v2183, %v2175
    %v2720 = vpack.c.b16 %v2184, %v2176
    %v2721 = vpack.c.b16 %v2193, %v2185
    %v2722 = vpack.c.b16 %v2194, %v2186
    %v2723 = vpack.c.b16 %v2195, %v2187
    %v2724 = vpack.c.b16 %v2196, %v2188
    %v2725 = vpack.c.b16 %v2197, %v2189
    %v2726 = vpack.c.b16 %v2198, %v2190
    %v2727 = vpack.c.b16 %v2199, %v2191
    %v2728 = vpack.c.b16 %v2200, %v2192
    %v2729 = vpack.c.b16 %v2209, %v2201
    %v2730 = vpack.c.b16 %v2210, %v2202
    %v2731 = vpack.c.b16 %v2211, %v2203
    %v2732 = vpack.c.b16 %v2212, %v2204
    %v2733 = vpack.c.b16 %v2213, %v2205
    %v2734 = vpack.c.b16 %v2214, %v2206
    %v2735 = vpack.c.b16 %v2215, %v2207
    %v2736 = vpack.c.b16 %v2216, %v2208
    %v2737 = vpack.c.b16 %v2225, %v2217
    %v2738 = vpack.c.b16 %v2226, %v2218
    %v2739 = vpack.c.b16 %v2227, %v2219
    %v2740 = vpack.c.b16 %v2228, %v2220
    %v2741 = vpack.c.b16 %v2229, %v2221
    %v2742 = vpack.c.b16 %v2230, %v2222
    %v2743 = vpack.c.b16 %v2231, %v2223
    %v2744 = vpack.c.b16 %v2232, %v2224
    %3257 = vmatprep.subr.bf16.mxu0 %v2290
    %3258 = vmatpush1.bf16.msra.mxu0 %v2289
    %3259 = vmatprep.subr.bf16.mxu0 %v2282
    %3260 = vmatpush1.bf16.msra.mxu0 %v2281
    %3261 = vmatprep.subr.bf16.mxu0 %v2274
    %3262 = vmatpush1.bf16.msra.mxu0 %v2273
    %3263 = vmatprep.subr.bf16.mxu0 %v2266
    %3264 = vmatpush1.bf16.msra.mxu0 %v2265
    %3265 = vmatprep.subr.bf16.mxu0 %v2258
    %3266 = vmatpush1.bf16.msra.mxu0 %v2257
    %3267 = vmatprep.subr.bf16.mxu0 %v2250
    %3268 = vmatpush1.bf16.msra.mxu0 %v2249
    %3269 = vmatprep.subr.bf16.mxu0 %v2242
    %3270 = vmatpush1.bf16.msra.mxu0 %v2241
    %3271 = vmatprep.subr.bf16.mxu0 %v2234
    %3272 = vmatpush1.bf16.msra.mxu0 %v2233
    %3273 = vmatprep.subr.bf16.mxu0 %v2354
    %3274 = vmatpush2.bf16.msra.mxu0 %v2353
    %3275 = vmatprep.subr.bf16.mxu0 %v2346
    %3276 = vmatpush2.bf16.msra.mxu0 %v2345
    %3277 = vmatprep.subr.bf16.mxu0 %v2338
    %3278 = vmatpush2.bf16.msra.mxu0 %v2337
    %3279 = vmatprep.subr.bf16.mxu0 %v2330
    %3280 = vmatpush2.bf16.msra.mxu0 %v2329
    %3281 = vmatprep.subr.bf16.mxu0 %v2322
    %3282 = vmatpush2.bf16.msra.mxu0 %v2321
    %3283 = vmatprep.subr.bf16.mxu0 %v2314
    %3284 = vmatpush2.bf16.msra.mxu0 %v2313
    %3285 = vmatprep.subr.bf16.mxu0 %v2306
    %3286 = vmatpush2.bf16.msra.mxu0 %v2305
    %3287 = vmatprep.subr.bf16.mxu0 %v2298
    %3288 = vmatpush2.bf16.msra.mxu0 %v2297
    %3289 = vmatprep.mubr.bf16.mxu0 %v682
    %3290 = vmatmul.mubr.bf16.gmra.mxu0 %v681
    %v3291 = vpop.f32.mrf.mxu0
    %v3292 = vadd.f32 %v620, %v3291
    %v3293 = vpop.f32.mrf.mxu0
    %v3294 = vadd.f32 %v624, %v3293
    %v3295 = vpop.f32.mrf.mxu0
    %v3296 = vadd.f32 %v620, %v3295
    %v3297 = vpop.f32.mrf.mxu0
    %v3298 = vadd.f32 %v624, %v3297
    %3299 = vdwg.mxu0
    %3300 = vmatprep.subr.bf16.mxu0 %v2418
    %3301 = vmatpush1.bf16.msra.mxu0 %v2417
    %3302 = vmatprep.subr.bf16.mxu0 %v2410
    %3303 = vmatpush1.bf16.msra.mxu0 %v2409
    %3304 = vmatprep.subr.bf16.mxu0 %v2402
    %3305 = vmatpush1.bf16.msra.mxu0 %v2401
    %3306 = vmatprep.subr.bf16.mxu0 %v2394
    %3307 = vmatpush1.bf16.msra.mxu0 %v2393
    %3308 = vmatprep.subr.bf16.mxu0 %v2386
    %3309 = vmatpush1.bf16.msra.mxu0 %v2385
    %3310 = vmatprep.subr.bf16.mxu0 %v2378
    %3311 = vmatpush1.bf16.msra.mxu0 %v2377
    %3312 = vmatprep.subr.bf16.mxu0 %v2370
    %3313 = vmatpush1.bf16.msra.mxu0 %v2369
    %3314 = vmatprep.subr.bf16.mxu0 %v2362
    %3315 = vmatpush1.bf16.msra.mxu0 %v2361
    %3316 = vmatprep.subr.bf16.mxu0 %v2482
    %3317 = vmatpush2.bf16.msra.mxu0 %v2481
    %3318 = vmatprep.subr.bf16.mxu0 %v2474
    %3319 = vmatpush2.bf16.msra.mxu0 %v2473
    %3320 = vmatprep.subr.bf16.mxu0 %v2466
    %3321 = vmatpush2.bf16.msra.mxu0 %v2465
    %3322 = vmatprep.subr.bf16.mxu0 %v2458
    %3323 = vmatpush2.bf16.msra.mxu0 %v2457
    %3324 = vmatprep.subr.bf16.mxu0 %v2450
    %3325 = vmatpush2.bf16.msra.mxu0 %v2449
    %3326 = vmatprep.subr.bf16.mxu0 %v2442
    %3327 = vmatpush2.bf16.msra.mxu0 %v2441
    %3328 = vmatprep.subr.bf16.mxu0 %v2434
    %3329 = vmatpush2.bf16.msra.mxu0 %v2433
    %3330 = vmatprep.subr.bf16.mxu0 %v2426
    %3331 = vmatpush2.bf16.msra.mxu0 %v2425
    %3332 = vmatprep.mubr.bf16.mxu0 %v684
    %3333 = vmatmul.mubr.bf16.gmra.mxu0 %v683
    %v3334 = vpop.f32.mrf.mxu0
    %v3335 = vadd.f32 %v3292, %v3334
    %v3336 = vpop.f32.mrf.mxu0
    %v3337 = vadd.f32 %v3294, %v3336
    %v3338 = vpop.f32.mrf.mxu0
    %v3339 = vadd.f32 %v3296, %v3338
    %v3340 = vpop.f32.mrf.mxu0
    %v3341 = vadd.f32 %v3298, %v3340
    %3342 = vdwg.mxu0
    %3343 = vmatprep.subr.bf16.mxu0 %v2546
    %3344 = vmatpush1.bf16.msra.mxu0 %v2545
    %3345 = vmatprep.subr.bf16.mxu0 %v2538
    %3346 = vmatpush1.bf16.msra.mxu0 %v2537
    %3347 = vmatprep.subr.bf16.mxu0 %v2530
    %3348 = vmatpush1.bf16.msra.mxu0 %v2529
    %3349 = vmatprep.subr.bf16.mxu0 %v2522
    %3350 = vmatpush1.bf16.msra.mxu0 %v2521
    %3351 = vmatprep.subr.bf16.mxu0 %v2514
    %3352 = vmatpush1.bf16.msra.mxu0 %v2513
    %3353 = vmatprep.subr.bf16.mxu0 %v2506
    %3354 = vmatpush1.bf16.msra.mxu0 %v2505
    %3355 = vmatprep.subr.bf16.mxu0 %v2498
    %3356 = vmatpush1.bf16.msra.mxu0 %v2497
    %3357 = vmatprep.subr.bf16.mxu0 %v2490
    %3358 = vmatpush1.bf16.msra.mxu0 %v2489
    %3359 = vmatprep.subr.bf16.mxu0 %v2610
    %3360 = vmatpush2.bf16.msra.mxu0 %v2609
    %3361 = vmatprep.subr.bf16.mxu0 %v2602
    %3362 = vmatpush2.bf16.msra.mxu0 %v2601
    %3363 = vmatprep.subr.bf16.mxu0 %v2594
    %3364 = vmatpush2.bf16.msra.mxu0 %v2593
    %3365 = vmatprep.subr.bf16.mxu0 %v2586
    %3366 = vmatpush2.bf16.msra.mxu0 %v2585
    %3367 = vmatprep.subr.bf16.mxu0 %v2578
    %3368 = vmatpush2.bf16.msra.mxu0 %v2577
    %3369 = vmatprep.subr.bf16.mxu0 %v2570
    %3370 = vmatpush2.bf16.msra.mxu0 %v2569
    %3371 = vmatprep.subr.bf16.mxu0 %v2562
    %3372 = vmatpush2.bf16.msra.mxu0 %v2561
    %3373 = vmatprep.subr.bf16.mxu0 %v2554
    %3374 = vmatpush2.bf16.msra.mxu0 %v2553
    %3375 = vmatprep.mubr.bf16.mxu0 %v686
    %3376 = vmatmul.mubr.bf16.gmra.mxu0 %v685
    %v3377 = vpop.f32.mrf.mxu0
    %v3378 = vadd.f32 %v3335, %v3377
    %v3379 = vpop.f32.mrf.mxu0
    %v3380 = vadd.f32 %v3337, %v3379
    %v3381 = vpop.f32.mrf.mxu0
    %v3382 = vadd.f32 %v3339, %v3381
    %v3383 = vpop.f32.mrf.mxu0
    %v3384 = vadd.f32 %v3341, %v3383
    %3385 = vdwg.mxu0
    %3386 = vmatprep.subr.bf16.mxu0 %v2674
    %3387 = vmatpush1.bf16.msra.mxu0 %v2673
    %3388 = vmatprep.subr.bf16.mxu0 %v2666
    %3389 = vmatpush1.bf16.msra.mxu0 %v2665
    %3390 = vmatprep.subr.bf16.mxu0 %v2658
    %3391 = vmatpush1.bf16.msra.mxu0 %v2657
    %3392 = vmatprep.subr.bf16.mxu0 %v2650
    %3393 = vmatpush1.bf16.msra.mxu0 %v2649
    %3394 = vmatprep.subr.bf16.mxu0 %v2642
    %3395 = vmatpush1.bf16.msra.mxu0 %v2641
    %3396 = vmatprep.subr.bf16.mxu0 %v2634
    %3397 = vmatpush1.bf16.msra.mxu0 %v2633
    %3398 = vmatprep.subr.bf16.mxu0 %v2626
    %3399 = vmatpush1.bf16.msra.mxu0 %v2625
    %3400 = vmatprep.subr.bf16.mxu0 %v2618
    %3401 = vmatpush1.bf16.msra.mxu0 %v2617
    %3402 = vmatprep.subr.bf16.mxu0 %v2738
    %3403 = vmatpush2.bf16.msra.mxu0 %v2737
    %3404 = vmatprep.subr.bf16.mxu0 %v2730
    %3405 = vmatpush2.bf16.msra.mxu0 %v2729
    %3406 = vmatprep.subr.bf16.mxu0 %v2722
    %3407 = vmatpush2.bf16.msra.mxu0 %v2721
    %3408 = vmatprep.subr.bf16.mxu0 %v2714
    %3409 = vmatpush2.bf16.msra.mxu0 %v2713
    %3410 = vmatprep.subr.bf16.mxu0 %v2706
    %3411 = vmatpush2.bf16.msra.mxu0 %v2705
    %3412 = vmatprep.subr.bf16.mxu0 %v2698
    %3413 = vmatpush2.bf16.msra.mxu0 %v2697
    %3414 = vmatprep.subr.bf16.mxu0 %v2690
    %3415 = vmatpush2.bf16.msra.mxu0 %v2689
    %3416 = vmatprep.subr.bf16.mxu0 %v2682
    %3417 = vmatpush2.bf16.msra.mxu0 %v2681
    %3418 = vmatprep.mubr.bf16.mxu0 %v688
    %3419 = vmatmul.mubr.bf16.gmra.mxu0 %v687
    %v3420 = vpop.f32.mrf.mxu0
    %v3421 = vadd.f32 %v3378, %v3420
    %v3422 = vpop.f32.mrf.mxu0
    %v3423 = vadd.f32 %v3380, %v3422
    %v3424 = vpop.f32.mrf.mxu0
    %v3425 = vadd.f32 %v3382, %v3424
    %v3426 = vpop.f32.mrf.mxu0
    %v3427 = vadd.f32 %v3384, %v3426
    %3428 = vdwg.mxu0
    %3429 = vmatprep.subr.bf16.mxu0 %v2292
    %3430 = vmatpush1.bf16.msra.mxu0 %v2291
    %3431 = vmatprep.subr.bf16.mxu0 %v2284
    %3432 = vmatpush1.bf16.msra.mxu0 %v2283
    %3433 = vmatprep.subr.bf16.mxu0 %v2276
    %3434 = vmatpush1.bf16.msra.mxu0 %v2275
    %3435 = vmatprep.subr.bf16.mxu0 %v2268
    %3436 = vmatpush1.bf16.msra.mxu0 %v2267
    %3437 = vmatprep.subr.bf16.mxu0 %v2260
    %3438 = vmatpush1.bf16.msra.mxu0 %v2259
    %3439 = vmatprep.subr.bf16.mxu0 %v2252
    %3440 = vmatpush1.bf16.msra.mxu0 %v2251
    %3441 = vmatprep.subr.bf16.mxu0 %v2244
    %3442 = vmatpush1.bf16.msra.mxu0 %v2243
    %3443 = vmatprep.subr.bf16.mxu0 %v2236
    %3444 = vmatpush1.bf16.msra.mxu0 %v2235
    %3445 = vmatprep.subr.bf16.mxu0 %v2356
    %3446 = vmatpush2.bf16.msra.mxu0 %v2355
    %3447 = vmatprep.subr.bf16.mxu0 %v2348
    %3448 = vmatpush2.bf16.msra.mxu0 %v2347
    %3449 = vmatprep.subr.bf16.mxu0 %v2340
    %3450 = vmatpush2.bf16.msra.mxu0 %v2339
    %3451 = vmatprep.subr.bf16.mxu0 %v2332
    %3452 = vmatpush2.bf16.msra.mxu0 %v2331
    %3453 = vmatprep.subr.bf16.mxu0 %v2324
    %3454 = vmatpush2.bf16.msra.mxu0 %v2323
    %3455 = vmatprep.subr.bf16.mxu0 %v2316
    %3456 = vmatpush2.bf16.msra.mxu0 %v2315
    %3457 = vmatprep.subr.bf16.mxu0 %v2308
    %3458 = vmatpush2.bf16.msra.mxu0 %v2307
    %3459 = vmatprep.subr.bf16.mxu0 %v2300
    %3460 = vmatpush2.bf16.msra.mxu0 %v2299
    %3461 = vmatprep.mubr.bf16.mxu0 %v682
    %3462 = vmatmul.mubr.bf16.gmra.mxu0 %v681
    %v3463 = vpop.f32.mrf.mxu0
    %v3464 = vadd.f32 %v628, %v3463
    %v3465 = vpop.f32.mrf.mxu0
    %v3466 = vadd.f32 %v632, %v3465
    %v3467 = vpop.f32.mrf.mxu0
    %v3468 = vadd.f32 %v628, %v3467
    %v3469 = vpop.f32.mrf.mxu0
    %v3470 = vadd.f32 %v632, %v3469
    %3471 = vdwg.mxu0
    %3472 = vmatprep.subr.bf16.mxu0 %v2420
    %3473 = vmatpush1.bf16.msra.mxu0 %v2419
    %3474 = vmatprep.subr.bf16.mxu0 %v2412
    %3475 = vmatpush1.bf16.msra.mxu0 %v2411
    %3476 = vmatprep.subr.bf16.mxu0 %v2404
    %3477 = vmatpush1.bf16.msra.mxu0 %v2403
    %3478 = vmatprep.subr.bf16.mxu0 %v2396
    %3479 = vmatpush1.bf16.msra.mxu0 %v2395
    %3480 = vmatprep.subr.bf16.mxu0 %v2388
    %3481 = vmatpush1.bf16.msra.mxu0 %v2387
    %3482 = vmatprep.subr.bf16.mxu0 %v2380
    %3483 = vmatpush1.bf16.msra.mxu0 %v2379
    %3484 = vmatprep.subr.bf16.mxu0 %v2372
    %3485 = vmatpush1.bf16.msra.mxu0 %v2371
    %3486 = vmatprep.subr.bf16.mxu0 %v2364
    %3487 = vmatpush1.bf16.msra.mxu0 %v2363
    %3488 = vmatprep.subr.bf16.mxu0 %v2484
    %3489 = vmatpush2.bf16.msra.mxu0 %v2483
    %3490 = vmatprep.subr.bf16.mxu0 %v2476
    %3491 = vmatpush2.bf16.msra.mxu0 %v2475
    %3492 = vmatprep.subr.bf16.mxu0 %v2468
    %3493 = vmatpush2.bf16.msra.mxu0 %v2467
    %3494 = vmatprep.subr.bf16.mxu0 %v2460
    %3495 = vmatpush2.bf16.msra.mxu0 %v2459
    %3496 = vmatprep.subr.bf16.mxu0 %v2452
    %3497 = vmatpush2.bf16.msra.mxu0 %v2451
    %3498 = vmatprep.subr.bf16.mxu0 %v2444
    %3499 = vmatpush2.bf16.msra.mxu0 %v2443
    %3500 = vmatprep.subr.bf16.mxu0 %v2436
    %3501 = vmatpush2.bf16.msra.mxu0 %v2435
    %3502 = vmatprep.subr.bf16.mxu0 %v2428
    %3503 = vmatpush2.bf16.msra.mxu0 %v2427
    %3504 = vmatprep.mubr.bf16.mxu0 %v684
    %3505 = vmatmul.mubr.bf16.gmra.mxu0 %v683
    %v3506 = vpop.f32.mrf.mxu0
    %v3507 = vadd.f32 %v3464, %v3506
    %v3508 = vpop.f32.mrf.mxu0
    %v3509 = vadd.f32 %v3466, %v3508
    %v3510 = vpop.f32.mrf.mxu0
    %v3511 = vadd.f32 %v3468, %v3510
    %v3512 = vpop.f32.mrf.mxu0
    %v3513 = vadd.f32 %v3470, %v3512
    %3514 = vdwg.mxu0
    %3515 = vmatprep.subr.bf16.mxu0 %v2548
    %3516 = vmatpush1.bf16.msra.mxu0 %v2547
    %3517 = vmatprep.subr.bf16.mxu0 %v2540
    %3518 = vmatpush1.bf16.msra.mxu0 %v2539
    %3519 = vmatprep.subr.bf16.mxu0 %v2532
    %3520 = vmatpush1.bf16.msra.mxu0 %v2531
    %3521 = vmatprep.subr.bf16.mxu0 %v2524
    %3522 = vmatpush1.bf16.msra.mxu0 %v2523
    %3523 = vmatprep.subr.bf16.mxu0 %v2516
    %3524 = vmatpush1.bf16.msra.mxu0 %v2515
    %3525 = vmatprep.subr.bf16.mxu0 %v2508
    %3526 = vmatpush1.bf16.msra.mxu0 %v2507
    %3527 = vmatprep.subr.bf16.mxu0 %v2500
    %3528 = vmatpush1.bf16.msra.mxu0 %v2499
    %3529 = vmatprep.subr.bf16.mxu0 %v2492
    %3530 = vmatpush1.bf16.msra.mxu0 %v2491
    %3531 = vmatprep.subr.bf16.mxu0 %v2612
    %3532 = vmatpush2.bf16.msra.mxu0 %v2611
    %3533 = vmatprep.subr.bf16.mxu0 %v2604
    %3534 = vmatpush2.bf16.msra.mxu0 %v2603
    %3535 = vmatprep.subr.bf16.mxu0 %v2596
    %3536 = vmatpush2.bf16.msra.mxu0 %v2595
    %3537 = vmatprep.subr.bf16.mxu0 %v2588
    %3538 = vmatpush2.bf16.msra.mxu0 %v2587
    %3539 = vmatprep.subr.bf16.mxu0 %v2580
    %3540 = vmatpush2.bf16.msra.mxu0 %v2579
    %3541 = vmatprep.subr.bf16.mxu0 %v2572
    %3542 = vmatpush2.bf16.msra.mxu0 %v2571
    %3543 = vmatprep.subr.bf16.mxu0 %v2564
    %3544 = vmatpush2.bf16.msra.mxu0 %v2563
    %3545 = vmatprep.subr.bf16.mxu0 %v2556
    %3546 = vmatpush2.bf16.msra.mxu0 %v2555
    %3547 = vmatprep.mubr.bf16.mxu0 %v686
    %3548 = vmatmul.mubr.bf16.gmra.mxu0 %v685
    %v3549 = vpop.f32.mrf.mxu0
    %v3550 = vadd.f32 %v3507, %v3549
    %v3551 = vpop.f32.mrf.mxu0
    %v3552 = vadd.f32 %v3509, %v3551
    %v3553 = vpop.f32.mrf.mxu0
    %v3554 = vadd.f32 %v3511, %v3553
    %v3555 = vpop.f32.mrf.mxu0
    %v3556 = vadd.f32 %v3513, %v3555
    %3557 = vdwg.mxu0
    %3558 = vmatprep.subr.bf16.mxu0 %v2676
    %3559 = vmatpush1.bf16.msra.mxu0 %v2675
    %3560 = vmatprep.subr.bf16.mxu0 %v2668
    %3561 = vmatpush1.bf16.msra.mxu0 %v2667
    %3562 = vmatprep.subr.bf16.mxu0 %v2660
    %3563 = vmatpush1.bf16.msra.mxu0 %v2659
    %3564 = vmatprep.subr.bf16.mxu0 %v2652
    %3565 = vmatpush1.bf16.msra.mxu0 %v2651
    %3566 = vmatprep.subr.bf16.mxu0 %v2644
    %3567 = vmatpush1.bf16.msra.mxu0 %v2643
    %3568 = vmatprep.subr.bf16.mxu0 %v2636
    %3569 = vmatpush1.bf16.msra.mxu0 %v2635
    %3570 = vmatprep.subr.bf16.mxu0 %v2628
    %3571 = vmatpush1.bf16.msra.mxu0 %v2627
    %3572 = vmatprep.subr.bf16.mxu0 %v2620
    %3573 = vmatpush1.bf16.msra.mxu0 %v2619
    %3574 = vmatprep.subr.bf16.mxu0 %v2740
    %3575 = vmatpush2.bf16.msra.mxu0 %v2739
    %3576 = vmatprep.subr.bf16.mxu0 %v2732
    %3577 = vmatpush2.bf16.msra.mxu0 %v2731
    %3578 = vmatprep.subr.bf16.mxu0 %v2724
    %3579 = vmatpush2.bf16.msra.mxu0 %v2723
    %3580 = vmatprep.subr.bf16.mxu0 %v2716
    %3581 = vmatpush2.bf16.msra.mxu0 %v2715
    %3582 = vmatprep.subr.bf16.mxu0 %v2708
    %3583 = vmatpush2.bf16.msra.mxu0 %v2707
    %3584 = vmatprep.subr.bf16.mxu0 %v2700
    %3585 = vmatpush2.bf16.msra.mxu0 %v2699
    %3586 = vmatprep.subr.bf16.mxu0 %v2692
    %3587 = vmatpush2.bf16.msra.mxu0 %v2691
    %3588 = vmatprep.subr.bf16.mxu0 %v2684
    %3589 = vmatpush2.bf16.msra.mxu0 %v2683
    %3590 = vmatprep.mubr.bf16.mxu0 %v688
    %3591 = vmatmul.mubr.bf16.gmra.mxu0 %v687
    %v3592 = vpop.f32.mrf.mxu0
    %v3593 = vadd.f32 %v3550, %v3592
    %v3594 = vpop.f32.mrf.mxu0
    %v3595 = vadd.f32 %v3552, %v3594
    %v3596 = vpop.f32.mrf.mxu0
    %v3597 = vadd.f32 %v3554, %v3596
    %v3598 = vpop.f32.mrf.mxu0
    %v3599 = vadd.f32 %v3556, %v3598
    %3600 = vdwg.mxu0
    %3601 = vmatprep.subr.bf16.mxu0 %v2294
    %3602 = vmatpush1.bf16.msra.mxu0 %v2293
    %3603 = vmatprep.subr.bf16.mxu0 %v2286
    %3604 = vmatpush1.bf16.msra.mxu0 %v2285
    %3605 = vmatprep.subr.bf16.mxu0 %v2278
    %3606 = vmatpush1.bf16.msra.mxu0 %v2277
    %3607 = vmatprep.subr.bf16.mxu0 %v2270
    %3608 = vmatpush1.bf16.msra.mxu0 %v2269
    %3609 = vmatprep.subr.bf16.mxu0 %v2262
    %3610 = vmatpush1.bf16.msra.mxu0 %v2261
    %3611 = vmatprep.subr.bf16.mxu0 %v2254
    %3612 = vmatpush1.bf16.msra.mxu0 %v2253
    %3613 = vmatprep.subr.bf16.mxu0 %v2246
    %3614 = vmatpush1.bf16.msra.mxu0 %v2245
    %3615 = vmatprep.subr.bf16.mxu0 %v2238
    %3616 = vmatpush1.bf16.msra.mxu0 %v2237
    %3617 = vmatprep.subr.bf16.mxu0 %v2358
    %3618 = vmatpush2.bf16.msra.mxu0 %v2357
    %3619 = vmatprep.subr.bf16.mxu0 %v2350
    %3620 = vmatpush2.bf16.msra.mxu0 %v2349
    %3621 = vmatprep.subr.bf16.mxu0 %v2342
    %3622 = vmatpush2.bf16.msra.mxu0 %v2341
    %3623 = vmatprep.subr.bf16.mxu0 %v2334
    %3624 = vmatpush2.bf16.msra.mxu0 %v2333
    %3625 = vmatprep.subr.bf16.mxu0 %v2326
    %3626 = vmatpush2.bf16.msra.mxu0 %v2325
    %3627 = vmatprep.subr.bf16.mxu0 %v2318
    %3628 = vmatpush2.bf16.msra.mxu0 %v2317
    %3629 = vmatprep.subr.bf16.mxu0 %v2310
    %3630 = vmatpush2.bf16.msra.mxu0 %v2309
    %3631 = vmatprep.subr.bf16.mxu0 %v2302
    %3632 = vmatpush2.bf16.msra.mxu0 %v2301
    %3633 = vmatprep.mubr.bf16.mxu0 %v682
    %3634 = vmatmul.mubr.bf16.gmra.mxu0 %v681
    %v3635 = vpop.f32.mrf.mxu0
    %v3636 = vadd.f32 %v636, %v3635
    %v3637 = vpop.f32.mrf.mxu0
    %v3638 = vadd.f32 %v640, %v3637
    %v3639 = vpop.f32.mrf.mxu0
    %v3640 = vadd.f32 %v636, %v3639
    %v3641 = vpop.f32.mrf.mxu0
    %v3642 = vadd.f32 %v640, %v3641
    %3643 = vdwg.mxu0
    %3644 = vmatprep.subr.bf16.mxu0 %v2422
    %3645 = vmatpush1.bf16.msra.mxu0 %v2421
    %3646 = vmatprep.subr.bf16.mxu0 %v2414
    %3647 = vmatpush1.bf16.msra.mxu0 %v2413
    %3648 = vmatprep.subr.bf16.mxu0 %v2406
    %3649 = vmatpush1.bf16.msra.mxu0 %v2405
    %3650 = vmatprep.subr.bf16.mxu0 %v2398
    %3651 = vmatpush1.bf16.msra.mxu0 %v2397
    %3652 = vmatprep.subr.bf16.mxu0 %v2390
    %3653 = vmatpush1.bf16.msra.mxu0 %v2389
    %3654 = vmatprep.subr.bf16.mxu0 %v2382
    %3655 = vmatpush1.bf16.msra.mxu0 %v2381
    %3656 = vmatprep.subr.bf16.mxu0 %v2374
    %3657 = vmatpush1.bf16.msra.mxu0 %v2373
    %3658 = vmatprep.subr.bf16.mxu0 %v2366
    %3659 = vmatpush1.bf16.msra.mxu0 %v2365
    %3660 = vmatprep.subr.bf16.mxu0 %v2486
    %3661 = vmatpush2.bf16.msra.mxu0 %v2485
    %3662 = vmatprep.subr.bf16.mxu0 %v2478
    %3663 = vmatpush2.bf16.msra.mxu0 %v2477
    %3664 = vmatprep.subr.bf16.mxu0 %v2470
    %3665 = vmatpush2.bf16.msra.mxu0 %v2469
    %3666 = vmatprep.subr.bf16.mxu0 %v2462
    %3667 = vmatpush2.bf16.msra.mxu0 %v2461
    %3668 = vmatprep.subr.bf16.mxu0 %v2454
    %3669 = vmatpush2.bf16.msra.mxu0 %v2453
    %3670 = vmatprep.subr.bf16.mxu0 %v2446
    %3671 = vmatpush2.bf16.msra.mxu0 %v2445
    %3672 = vmatprep.subr.bf16.mxu0 %v2438
    %3673 = vmatpush2.bf16.msra.mxu0 %v2437
    %3674 = vmatprep.subr.bf16.mxu0 %v2430
    %3675 = vmatpush2.bf16.msra.mxu0 %v2429
    %3676 = vmatprep.mubr.bf16.mxu0 %v684
    %3677 = vmatmul.mubr.bf16.gmra.mxu0 %v683
    %v3678 = vpop.f32.mrf.mxu0
    %v3679 = vadd.f32 %v3636, %v3678
    %v3680 = vpop.f32.mrf.mxu0
    %v3681 = vadd.f32 %v3638, %v3680
    %v3682 = vpop.f32.mrf.mxu0
    %v3683 = vadd.f32 %v3640, %v3682
    %v3684 = vpop.f32.mrf.mxu0
    %v3685 = vadd.f32 %v3642, %v3684
    %3686 = vdwg.mxu0
    %3687 = vmatprep.subr.bf16.mxu0 %v2550
    %3688 = vmatpush1.bf16.msra.mxu0 %v2549
    %3689 = vmatprep.subr.bf16.mxu0 %v2542
    %3690 = vmatpush1.bf16.msra.mxu0 %v2541
    %3691 = vmatprep.subr.bf16.mxu0 %v2534
    %3692 = vmatpush1.bf16.msra.mxu0 %v2533
    %3693 = vmatprep.subr.bf16.mxu0 %v2526
    %3694 = vmatpush1.bf16.msra.mxu0 %v2525
    %3695 = vmatprep.subr.bf16.mxu0 %v2518
    %3696 = vmatpush1.bf16.msra.mxu0 %v2517
    %3697 = vmatprep.subr.bf16.mxu0 %v2510
    %3698 = vmatpush1.bf16.msra.mxu0 %v2509
    %3699 = vmatprep.subr.bf16.mxu0 %v2502
    %3700 = vmatpush1.bf16.msra.mxu0 %v2501
    %3701 = vmatprep.subr.bf16.mxu0 %v2494
    %3702 = vmatpush1.bf16.msra.mxu0 %v2493
    %3703 = vmatprep.subr.bf16.mxu0 %v2614
    %3704 = vmatpush2.bf16.msra.mxu0 %v2613
    %3705 = vmatprep.subr.bf16.mxu0 %v2606
    %3706 = vmatpush2.bf16.msra.mxu0 %v2605
    %3707 = vmatprep.subr.bf16.mxu0 %v2598
    %3708 = vmatpush2.bf16.msra.mxu0 %v2597
    %3709 = vmatprep.subr.bf16.mxu0 %v2590
    %3710 = vmatpush2.bf16.msra.mxu0 %v2589
    %3711 = vmatprep.subr.bf16.mxu0 %v2582
    %3712 = vmatpush2.bf16.msra.mxu0 %v2581
    %3713 = vmatprep.subr.bf16.mxu0 %v2574
    %3714 = vmatpush2.bf16.msra.mxu0 %v2573
    %3715 = vmatprep.subr.bf16.mxu0 %v2566
    %3716 = vmatpush2.bf16.msra.mxu0 %v2565
    %3717 = vmatprep.subr.bf16.mxu0 %v2558
    %3718 = vmatpush2.bf16.msra.mxu0 %v2557
    %3719 = vmatprep.mubr.bf16.mxu0 %v686
    %3720 = vmatmul.mubr.bf16.gmra.mxu0 %v685
    %v3721 = vpop.f32.mrf.mxu0
    %v3722 = vadd.f32 %v3679, %v3721
    %v3723 = vpop.f32.mrf.mxu0
    %v3724 = vadd.f32 %v3681, %v3723
    %v3725 = vpop.f32.mrf.mxu0
    %v3726 = vadd.f32 %v3683, %v3725
    %v3727 = vpop.f32.mrf.mxu0
    %v3728 = vadd.f32 %v3685, %v3727
    %3729 = vdwg.mxu0
    %3730 = vmatprep.subr.bf16.mxu0 %v2678
    %3731 = vmatpush1.bf16.msra.mxu0 %v2677
    %3732 = vmatprep.subr.bf16.mxu0 %v2670
    %3733 = vmatpush1.bf16.msra.mxu0 %v2669
    %3734 = vmatprep.subr.bf16.mxu0 %v2662
    %3735 = vmatpush1.bf16.msra.mxu0 %v2661
    %3736 = vmatprep.subr.bf16.mxu0 %v2654
    %3737 = vmatpush1.bf16.msra.mxu0 %v2653
    %3738 = vmatprep.subr.bf16.mxu0 %v2646
    %3739 = vmatpush1.bf16.msra.mxu0 %v2645
    %3740 = vmatprep.subr.bf16.mxu0 %v2638
    %3741 = vmatpush1.bf16.msra.mxu0 %v2637
    %3742 = vmatprep.subr.bf16.mxu0 %v2630
    %3743 = vmatpush1.bf16.msra.mxu0 %v2629
    %3744 = vmatprep.subr.bf16.mxu0 %v2622
    %3745 = vmatpush1.bf16.msra.mxu0 %v2621
    %3746 = vmatprep.subr.bf16.mxu0 %v2742
    %3747 = vmatpush2.bf16.msra.mxu0 %v2741
    %3748 = vmatprep.subr.bf16.mxu0 %v2734
    %3749 = vmatpush2.bf16.msra.mxu0 %v2733
    %3750 = vmatprep.subr.bf16.mxu0 %v2726
    %3751 = vmatpush2.bf16.msra.mxu0 %v2725
    %3752 = vmatprep.subr.bf16.mxu0 %v2718
    %3753 = vmatpush2.bf16.msra.mxu0 %v2717
    %3754 = vmatprep.subr.bf16.mxu0 %v2710
    %3755 = vmatpush2.bf16.msra.mxu0 %v2709
    %3756 = vmatprep.subr.bf16.mxu0 %v2702
    %3757 = vmatpush2.bf16.msra.mxu0 %v2701
    %3758 = vmatprep.subr.bf16.mxu0 %v2694
    %3759 = vmatpush2.bf16.msra.mxu0 %v2693
    %3760 = vmatprep.subr.bf16.mxu0 %v2686
    %3761 = vmatpush2.bf16.msra.mxu0 %v2685
    %3762 = vmatprep.mubr.bf16.mxu0 %v688
    %3763 = vmatmul.mubr.bf16.gmra.mxu0 %v687
    %v3764 = vpop.f32.mrf.mxu0
    %v3765 = vadd.f32 %v3722, %v3764
    %v3766 = vpop.f32.mrf.mxu0
    %v3767 = vadd.f32 %v3724, %v3766
    %v3768 = vpop.f32.mrf.mxu0
    %v3769 = vadd.f32 %v3726, %v3768
    %v3770 = vpop.f32.mrf.mxu0
    %v3771 = vadd.f32 %v3728, %v3770
    %3772 = vdwg.mxu0
    %3773 = vmatprep.subr.bf16.mxu0 %v2296
    %3774 = vmatpush1.bf16.msra.mxu0 %v2295
    %3775 = vmatprep.subr.bf16.mxu0 %v2288
    %3776 = vmatpush1.bf16.msra.mxu0 %v2287
    %3777 = vmatprep.subr.bf16.mxu0 %v2280
    %3778 = vmatpush1.bf16.msra.mxu0 %v2279
    %3779 = vmatprep.subr.bf16.mxu0 %v2272
    %3780 = vmatpush1.bf16.msra.mxu0 %v2271
    %3781 = vmatprep.subr.bf16.mxu0 %v2264
    %3782 = vmatpush1.bf16.msra.mxu0 %v2263
    %3783 = vmatprep.subr.bf16.mxu0 %v2256
    %3784 = vmatpush1.bf16.msra.mxu0 %v2255
    %3785 = vmatprep.subr.bf16.mxu0 %v2248
    %3786 = vmatpush1.bf16.msra.mxu0 %v2247
    %3787 = vmatprep.subr.bf16.mxu0 %v2240
    %3788 = vmatpush1.bf16.msra.mxu0 %v2239
    %3789 = vmatprep.subr.bf16.mxu0 %v2360
    %3790 = vmatpush2.bf16.msra.mxu0 %v2359
    %3791 = vmatprep.subr.bf16.mxu0 %v2352
    %3792 = vmatpush2.bf16.msra.mxu0 %v2351
    %3793 = vmatprep.subr.bf16.mxu0 %v2344
    %3794 = vmatpush2.bf16.msra.mxu0 %v2343
    %3795 = vmatprep.subr.bf16.mxu0 %v2336
    %3796 = vmatpush2.bf16.msra.mxu0 %v2335
    %3797 = vmatprep.subr.bf16.mxu0 %v2328
    %3798 = vmatpush2.bf16.msra.mxu0 %v2327
    %3799 = vmatprep.subr.bf16.mxu0 %v2320
    %3800 = vmatpush2.bf16.msra.mxu0 %v2319
    %3801 = vmatprep.subr.bf16.mxu0 %v2312
    %3802 = vmatpush2.bf16.msra.mxu0 %v2311
    %3803 = vmatprep.subr.bf16.mxu0 %v2304
    %3804 = vmatpush2.bf16.msra.mxu0 %v2303
    %3805 = vmatprep.mubr.bf16.mxu0 %v682
    %3806 = vmatmul.mubr.bf16.gmra.mxu0 %v681
    %v3807 = vpop.f32.mrf.mxu0
    %v3808 = vadd.f32 %v644, %v3807
    %v3809 = vpop.f32.mrf.mxu0
    %v3810 = vadd.f32 %v648, %v3809
    %v3811 = vpop.f32.mrf.mxu0
    %v3812 = vadd.f32 %v644, %v3811
    %v3813 = vpop.f32.mrf.mxu0
    %v3814 = vadd.f32 %v648, %v3813
    %3815 = vdwg.mxu0
    %3816 = vmatprep.subr.bf16.mxu0 %v2424
    %3817 = vmatpush1.bf16.msra.mxu0 %v2423
    %3818 = vmatprep.subr.bf16.mxu0 %v2416
    %3819 = vmatpush1.bf16.msra.mxu0 %v2415
    %3820 = vmatprep.subr.bf16.mxu0 %v2408
    %3821 = vmatpush1.bf16.msra.mxu0 %v2407
    %3822 = vmatprep.subr.bf16.mxu0 %v2400
    %3823 = vmatpush1.bf16.msra.mxu0 %v2399
    %3824 = vmatprep.subr.bf16.mxu0 %v2392
    %3825 = vmatpush1.bf16.msra.mxu0 %v2391
    %3826 = vmatprep.subr.bf16.mxu0 %v2384
    %3827 = vmatpush1.bf16.msra.mxu0 %v2383
    %3828 = vmatprep.subr.bf16.mxu0 %v2376
    %3829 = vmatpush1.bf16.msra.mxu0 %v2375
    %3830 = vmatprep.subr.bf16.mxu0 %v2368
    %3831 = vmatpush1.bf16.msra.mxu0 %v2367
    %3832 = vmatprep.subr.bf16.mxu0 %v2488
    %3833 = vmatpush2.bf16.msra.mxu0 %v2487
    %3834 = vmatprep.subr.bf16.mxu0 %v2480
    %3835 = vmatpush2.bf16.msra.mxu0 %v2479
    %3836 = vmatprep.subr.bf16.mxu0 %v2472
    %3837 = vmatpush2.bf16.msra.mxu0 %v2471
    %3838 = vmatprep.subr.bf16.mxu0 %v2464
    %3839 = vmatpush2.bf16.msra.mxu0 %v2463
    %3840 = vmatprep.subr.bf16.mxu0 %v2456
    %3841 = vmatpush2.bf16.msra.mxu0 %v2455
    %3842 = vmatprep.subr.bf16.mxu0 %v2448
    %3843 = vmatpush2.bf16.msra.mxu0 %v2447
    %3844 = vmatprep.subr.bf16.mxu0 %v2440
    %3845 = vmatpush2.bf16.msra.mxu0 %v2439
    %3846 = vmatprep.subr.bf16.mxu0 %v2432
    %3847 = vmatpush2.bf16.msra.mxu0 %v2431
    %3848 = vmatprep.mubr.bf16.mxu0 %v684
    %3849 = vmatmul.mubr.bf16.gmra.mxu0 %v683
    %v3850 = vpop.f32.mrf.mxu0
    %v3851 = vadd.f32 %v3808, %v3850
    %v3852 = vpop.f32.mrf.mxu0
    %v3853 = vadd.f32 %v3810, %v3852
    %v3854 = vpop.f32.mrf.mxu0
    %v3855 = vadd.f32 %v3812, %v3854
    %v3856 = vpop.f32.mrf.mxu0
    %v3857 = vadd.f32 %v3814, %v3856
    %3858 = vdwg.mxu0
    %3859 = vmatprep.subr.bf16.mxu0 %v2552
    %3860 = vmatpush1.bf16.msra.mxu0 %v2551
    %3861 = vmatprep.subr.bf16.mxu0 %v2544
    %3862 = vmatpush1.bf16.msra.mxu0 %v2543
    %3863 = vmatprep.subr.bf16.mxu0 %v2536
    %3864 = vmatpush1.bf16.msra.mxu0 %v2535
    %3865 = vmatprep.subr.bf16.mxu0 %v2528
    %3866 = vmatpush1.bf16.msra.mxu0 %v2527
    %3867 = vmatprep.subr.bf16.mxu0 %v2520
    %3868 = vmatpush1.bf16.msra.mxu0 %v2519
    %3869 = vmatprep.subr.bf16.mxu0 %v2512
    %3870 = vmatpush1.bf16.msra.mxu0 %v2511
    %3871 = vmatprep.subr.bf16.mxu0 %v2504
    %3872 = vmatpush1.bf16.msra.mxu0 %v2503
    %3873 = vmatprep.subr.bf16.mxu0 %v2496
    %3874 = vmatpush1.bf16.msra.mxu0 %v2495
    %3875 = vmatprep.subr.bf16.mxu0 %v2616
    %3876 = vmatpush2.bf16.msra.mxu0 %v2615
    %3877 = vmatprep.subr.bf16.mxu0 %v2608
    %3878 = vmatpush2.bf16.msra.mxu0 %v2607
    %3879 = vmatprep.subr.bf16.mxu0 %v2600
    %3880 = vmatpush2.bf16.msra.mxu0 %v2599
    %3881 = vmatprep.subr.bf16.mxu0 %v2592
    %3882 = vmatpush2.bf16.msra.mxu0 %v2591
    %3883 = vmatprep.subr.bf16.mxu0 %v2584
    %3884 = vmatpush2.bf16.msra.mxu0 %v2583
    %3885 = vmatprep.subr.bf16.mxu0 %v2576
    %3886 = vmatpush2.bf16.msra.mxu0 %v2575
    %3887 = vmatprep.subr.bf16.mxu0 %v2568
    %3888 = vmatpush2.bf16.msra.mxu0 %v2567
    %3889 = vmatprep.subr.bf16.mxu0 %v2560
    %3890 = vmatpush2.bf16.msra.mxu0 %v2559
    %3891 = vmatprep.mubr.bf16.mxu0 %v686
    %3892 = vmatmul.mubr.bf16.gmra.mxu0 %v685
    %v3893 = vpop.f32.mrf.mxu0
    %v3894 = vadd.f32 %v3851, %v3893
    %v3895 = vpop.f32.mrf.mxu0
    %v3896 = vadd.f32 %v3853, %v3895
    %v3897 = vpop.f32.mrf.mxu0
    %v3898 = vadd.f32 %v3855, %v3897
    %v3899 = vpop.f32.mrf.mxu0
    %v3900 = vadd.f32 %v3857, %v3899
    %3901 = vdwg.mxu0
    %3902 = vmatprep.subr.bf16.mxu0 %v2680
    %3903 = vmatpush1.bf16.msra.mxu0 %v2679
    %3904 = vmatprep.subr.bf16.mxu0 %v2672
    %3905 = vmatpush1.bf16.msra.mxu0 %v2671
    %3906 = vmatprep.subr.bf16.mxu0 %v2664
    %3907 = vmatpush1.bf16.msra.mxu0 %v2663
    %3908 = vmatprep.subr.bf16.mxu0 %v2656
    %3909 = vmatpush1.bf16.msra.mxu0 %v2655
    %3910 = vmatprep.subr.bf16.mxu0 %v2648
    %3911 = vmatpush1.bf16.msra.mxu0 %v2647
    %3912 = vmatprep.subr.bf16.mxu0 %v2640
    %3913 = vmatpush1.bf16.msra.mxu0 %v2639
    %3914 = vmatprep.subr.bf16.mxu0 %v2632
    %3915 = vmatpush1.bf16.msra.mxu0 %v2631
    %3916 = vmatprep.subr.bf16.mxu0 %v2624
    %3917 = vmatpush1.bf16.msra.mxu0 %v2623
    %3918 = vmatprep.subr.bf16.mxu0 %v2744
    %3919 = vmatpush2.bf16.msra.mxu0 %v2743
    %3920 = vmatprep.subr.bf16.mxu0 %v2736
    %3921 = vmatpush2.bf16.msra.mxu0 %v2735
    %3922 = vmatprep.subr.bf16.mxu0 %v2728
    %3923 = vmatpush2.bf16.msra.mxu0 %v2727
    %3924 = vmatprep.subr.bf16.mxu0 %v2720
    %3925 = vmatpush2.bf16.msra.mxu0 %v2719
    %3926 = vmatprep.subr.bf16.mxu0 %v2712
    %3927 = vmatpush2.bf16.msra.mxu0 %v2711
    %3928 = vmatprep.subr.bf16.mxu0 %v2704
    %3929 = vmatpush2.bf16.msra.mxu0 %v2703
    %3930 = vmatprep.subr.bf16.mxu0 %v2696
    %3931 = vmatpush2.bf16.msra.mxu0 %v2695
    %3932 = vmatprep.subr.bf16.mxu0 %v2688
    %3933 = vmatpush2.bf16.msra.mxu0 %v2687
    %3934 = vmatprep.mubr.bf16.mxu0 %v688
    %3935 = vmatmul.mubr.bf16.gmra.mxu0 %v687
    %v3936 = vpop.f32.mrf.mxu0
    %v3937 = vadd.f32 %v3894, %v3936
    %v3938 = vpop.f32.mrf.mxu0
    %v3939 = vadd.f32 %v3896, %v3938
    %v3940 = vpop.f32.mrf.mxu0
    %v3941 = vadd.f32 %v3898, %v3940
    %v3942 = vpop.f32.mrf.mxu0
    %v3943 = vadd.f32 %v3900, %v3942
    %3944 = vdwg.mxu0
    %vm3945 = vcmp.ge.f32.partialorder %v3421, 0.0
    %vm3946 = vcmp.ge.f32.partialorder %v3423, 0.0
    %vm3947 = vcmp.ge.f32.partialorder %v3593, 0.0
    %vm3948 = vcmp.ge.f32.partialorder %v3595, 0.0
    %vm3949 = vcmp.ge.f32.partialorder %v3765, 0.0
    %vm3950 = vcmp.ge.f32.partialorder %v3767, 0.0
    %vm3951 = vcmp.ge.f32.partialorder %v3937, 0.0
    %vm3952 = vcmp.ge.f32.partialorder %v3939, 0.0
    %vm3953 = vcmp.ge.f32.partialorder %v3425, 0.0
    %vm3954 = vcmp.ge.f32.partialorder %v3427, 0.0
    %vm3955 = vcmp.ge.f32.partialorder %v3597, 0.0
    %vm3956 = vcmp.ge.f32.partialorder %v3599, 0.0
    %vm3957 = vcmp.ge.f32.partialorder %v3769, 0.0
    %vm3958 = vcmp.ge.f32.partialorder %v3771, 0.0
    %vm3959 = vcmp.ge.f32.partialorder %v3941, 0.0
    %vm3960 = vcmp.ge.f32.partialorder %v3943, 0.0
    %v3961 = vmul.f32 %v3421, 0.2
    %v3962 = vmul.f32 %v3423, 0.2
    %v3963 = vmul.f32 %v3593, 0.2
    %v3964 = vmul.f32 %v3595, 0.2
    %v3965 = vmul.f32 %v3765, 0.2
    %v3966 = vmul.f32 %v3767, 0.2
    %v3967 = vmul.f32 %v3937, 0.2
    %v3968 = vmul.f32 %v3939, 0.2
    %v3969 = vmul.f32 %v3425, 0.2
    %v3970 = vmul.f32 %v3427, 0.2
    %v3971 = vmul.f32 %v3597, 0.2
    %v3972 = vmul.f32 %v3599, 0.2
    %v3973 = vmul.f32 %v3769, 0.2
    %v3974 = vmul.f32 %v3771, 0.2
    %v3975 = vmul.f32 %v3941, 0.2
    %v3976 = vmul.f32 %v3943, 0.2
    %v3977 = vsel %vm3945, %v3421, %v3961
    %v3978 = vsel %vm3946, %v3423, %v3962
    %v3979 = vsel %vm3947, %v3593, %v3963
    %v3980 = vsel %vm3948, %v3595, %v3964
    %v3981 = vsel %vm3949, %v3765, %v3965
    %v3982 = vsel %vm3950, %v3767, %v3966
    %v3983 = vsel %vm3951, %v3937, %v3967
    %v3984 = vsel %vm3952, %v3939, %v3968
    %v3985 = vsel %vm3953, %v3425, %v3969
    %v3986 = vsel %vm3954, %v3427, %v3970
    %v3987 = vsel %vm3955, %v3597, %v3971
    %v3988 = vsel %vm3956, %v3599, %v3972
    %v3989 = vsel %vm3957, %v3769, %v3973
    %v3990 = vsel %vm3958, %v3771, %v3974
    %v3991 = vsel %vm3959, %v3941, %v3975
    %v3992 = vsel %vm3960, %v3943, %v3976
    %s3993 = smul.u32 4, 128
    %s3994 = smul.u32 %s3993, 8
    %s3995 = sshll.u32 %s3994, 4
    %3996 = dma.done [#allocation4], %s3995
    %v3997 = vpack.c.bf16 %v3985, %v3977
    %v3998 = vpack.c.bf16 %v3986, %v3978
    %v3999 = vpack.c.bf16 %v3987, %v3979
    %v4000 = vpack.c.bf16 %v3988, %v3980
    %v4001 = vpack.c.bf16 %v3989, %v3981
    %v4002 = vpack.c.bf16 %v3990, %v3982
    %v4003 = vpack.c.bf16 %v3991, %v3983
    %v4004 = vpack.c.bf16 %v3992, %v3984
    %v4005 = vld [vmem:[#allocation2] sm:$0xff]
    %v4006 = vld [vmem:[#allocation2 + $0x8] sm:$0xff]
    %v4007 = vld [vmem:[#allocation2 + $0x10] sm:$0xff]
    %v4008 = vld [vmem:[#allocation2 + $0x18] sm:$0xff]
    %v4009 = vld [vmem:[#allocation2 + $0x20] sm:$0xff]
    %v4010 = vld [vmem:[#allocation2 + $0x28] sm:$0xff]
    %v4011 = vld [vmem:[#allocation2 + $0x30] sm:$0xff]
    %v4012 = vld [vmem:[#allocation2 + $0x38] sm:$0xff]
    %v4013 = vld [vmem:[#allocation2 + $0x40] sm:$0xff]
    %v4014 = vld [vmem:[#allocation2 + $0x48] sm:$0xff]
    %v4015 = vld [vmem:[#allocation2 + $0x50] sm:$0xff]
    %v4016 = vld [vmem:[#allocation2 + $0x58] sm:$0xff]
    %v4017 = vld [vmem:[#allocation2 + $0x60] sm:$0xff]
    %v4018 = vld [vmem:[#allocation2 + $0x68] sm:$0xff]
    %v4019 = vld [vmem:[#allocation2 + $0x70] sm:$0xff]
    %v4020 = vld [vmem:[#allocation2 + $0x78] sm:$0xff]
    %v4021 = vld [vmem:[#allocation2 + $0x80] sm:$0xff]
    %v4022 = vld [vmem:[#allocation2 + $0x88] sm:$0xff]
    %v4023 = vld [vmem:[#allocation2 + $0x90] sm:$0xff]
    %v4024 = vld [vmem:[#allocation2 + $0x98] sm:$0xff]
    %v4025 = vld [vmem:[#allocation2 + $0xa0] sm:$0xff]
    %v4026 = vld [vmem:[#allocation2 + $0xa8] sm:$0xff]
    %v4027 = vld [vmem:[#allocation2 + $0xb0] sm:$0xff]
    %v4028 = vld [vmem:[#allocation2 + $0xb8] sm:$0xff]
    %v4029 = vld [vmem:[#allocation2 + $0xc0] sm:$0xff]
    %v4030 = vld [vmem:[#allocation2 + $0xc8] sm:$0xff]
    %v4031 = vld [vmem:[#allocation2 + $0xd0] sm:$0xff]
    %v4032 = vld [vmem:[#allocation2 + $0xd8] sm:$0xff]
    %v4033 = vld [vmem:[#allocation2 + $0xe0] sm:$0xff]
    %v4034 = vld [vmem:[#allocation2 + $0xe8] sm:$0xff]
    %v4035 = vld [vmem:[#allocation2 + $0xf0] sm:$0xff]
    %v4036 = vld [vmem:[#allocation2 + $0xf8] sm:$0xff]
    %v4037 = vld [vmem:[#allocation2 + $0x100] sm:$0xff]
    %v4038 = vld [vmem:[#allocation2 + $0x108] sm:$0xff]
    %v4039 = vld [vmem:[#allocation2 + $0x110] sm:$0xff]
    %v4040 = vld [vmem:[#allocation2 + $0x118] sm:$0xff]
    %v4041 = vld [vmem:[#allocation2 + $0x120] sm:$0xff]
    %v4042 = vld [vmem:[#allocation2 + $0x128] sm:$0xff]
    %v4043 = vld [vmem:[#allocation2 + $0x130] sm:$0xff]
    %v4044 = vld [vmem:[#allocation2 + $0x138] sm:$0xff]
    %v4045 = vld [vmem:[#allocation2 + $0x140] sm:$0xff]
    %v4046 = vld [vmem:[#allocation2 + $0x148] sm:$0xff]
    %v4047 = vld [vmem:[#allocation2 + $0x150] sm:$0xff]
    %v4048 = vld [vmem:[#allocation2 + $0x158] sm:$0xff]
    %v4049 = vld [vmem:[#allocation2 + $0x160] sm:$0xff]
    %v4050 = vld [vmem:[#allocation2 + $0x168] sm:$0xff]
    %v4051 = vld [vmem:[#allocation2 + $0x170] sm:$0xff]
    %v4052 = vld [vmem:[#allocation2 + $0x178] sm:$0xff]
    %v4053 = vld [vmem:[#allocation2 + $0x180] sm:$0xff]
    %v4054 = vld [vmem:[#allocation2 + $0x188] sm:$0xff]
    %v4055 = vld [vmem:[#allocation2 + $0x190] sm:$0xff]
    %v4056 = vld [vmem:[#allocation2 + $0x198] sm:$0xff]
    %v4057 = vld [vmem:[#allocation2 + $0x1a0] sm:$0xff]
    %v4058 = vld [vmem:[#allocation2 + $0x1a8] sm:$0xff]
    %v4059 = vld [vmem:[#allocation2 + $0x1b0] sm:$0xff]
    %v4060 = vld [vmem:[#allocation2 + $0x1b8] sm:$0xff]
    %v4061 = vld [vmem:[#allocation2 + $0x1c0] sm:$0xff]
    %v4062 = vld [vmem:[#allocation2 + $0x1c8] sm:$0xff]
    %v4063 = vld [vmem:[#allocation2 + $0x1d0] sm:$0xff]
    %v4064 = vld [vmem:[#allocation2 + $0x1d8] sm:$0xff]
    %v4065 = vld [vmem:[#allocation2 + $0x1e0] sm:$0xff]
    %v4066 = vld [vmem:[#allocation2 + $0x1e8] sm:$0xff]
    %v4067 = vld [vmem:[#allocation2 + $0x1f0] sm:$0xff]
    %v4068 = vld [vmem:[#allocation2 + $0x1f8] sm:$0xff]
    %v4069 = vld [vmem:[#allocation2 + $0x200] sm:$0xff]
    %v4070 = vld [vmem:[#allocation2 + $0x208] sm:$0xff]
    %v4071 = vld [vmem:[#allocation2 + $0x210] sm:$0xff]
    %v4072 = vld [vmem:[#allocation2 + $0x218] sm:$0xff]
    %v4073 = vld [vmem:[#allocation2 + $0x220] sm:$0xff]
    %v4074 = vld [vmem:[#allocation2 + $0x228] sm:$0xff]
    %v4075 = vld [vmem:[#allocation2 + $0x230] sm:$0xff]
    %v4076 = vld [vmem:[#allocation2 + $0x238] sm:$0xff]
    %v4077 = vld [vmem:[#allocation2 + $0x240] sm:$0xff]
    %v4078 = vld [vmem:[#allocation2 + $0x248] sm:$0xff]
    %v4079 = vld [vmem:[#allocation2 + $0x250] sm:$0xff]
    %v4080 = vld [vmem:[#allocation2 + $0x258] sm:$0xff]
    %v4081 = vld [vmem:[#allocation2 + $0x260] sm:$0xff]
    %v4082 = vld [vmem:[#allocation2 + $0x268] sm:$0xff]
    %v4083 = vld [vmem:[#allocation2 + $0x270] sm:$0xff]
    %v4084 = vld [vmem:[#allocation2 + $0x278] sm:$0xff]
    %v4085 = vld [vmem:[#allocation2 + $0x280] sm:$0xff]
    %v4086 = vld [vmem:[#allocation2 + $0x288] sm:$0xff]
    %v4087 = vld [vmem:[#allocation2 + $0x290] sm:$0xff]
    %v4088 = vld [vmem:[#allocation2 + $0x298] sm:$0xff]
    %v4089 = vld [vmem:[#allocation2 + $0x2a0] sm:$0xff]
    %v4090 = vld [vmem:[#allocation2 + $0x2a8] sm:$0xff]
    %v4091 = vld [vmem:[#allocation2 + $0x2b0] sm:$0xff]
    %v4092 = vld [vmem:[#allocation2 + $0x2b8] sm:$0xff]
    %v4093 = vld [vmem:[#allocation2 + $0x2c0] sm:$0xff]
    %v4094 = vld [vmem:[#allocation2 + $0x2c8] sm:$0xff]
    %v4095 = vld [vmem:[#allocation2 + $0x2d0] sm:$0xff]
    %v4096 = vld [vmem:[#allocation2 + $0x2d8] sm:$0xff]
    %v4097 = vld [vmem:[#allocation2 + $0x2e0] sm:$0xff]
    %v4098 = vld [vmem:[#allocation2 + $0x2e8] sm:$0xff]
    %v4099 = vld [vmem:[#allocation2 + $0x2f0] sm:$0xff]
    %v4100 = vld [vmem:[#allocation2 + $0x2f8] sm:$0xff]
    %v4101 = vld [vmem:[#allocation2 + $0x300] sm:$0xff]
    %v4102 = vld [vmem:[#allocation2 + $0x308] sm:$0xff]
    %v4103 = vld [vmem:[#allocation2 + $0x310] sm:$0xff]
    %v4104 = vld [vmem:[#allocation2 + $0x318] sm:$0xff]
    %v4105 = vld [vmem:[#allocation2 + $0x320] sm:$0xff]
    %v4106 = vld [vmem:[#allocation2 + $0x328] sm:$0xff]
    %v4107 = vld [vmem:[#allocation2 + $0x330] sm:$0xff]
    %v4108 = vld [vmem:[#allocation2 + $0x338] sm:$0xff]
    %v4109 = vld [vmem:[#allocation2 + $0x340] sm:$0xff]
    %v4110 = vld [vmem:[#allocation2 + $0x348] sm:$0xff]
    %v4111 = vld [vmem:[#allocation2 + $0x350] sm:$0xff]
    %v4112 = vld [vmem:[#allocation2 + $0x358] sm:$0xff]
    %v4113 = vld [vmem:[#allocation2 + $0x360] sm:$0xff]
    %v4114 = vld [vmem:[#allocation2 + $0x368] sm:$0xff]
    %v4115 = vld [vmem:[#allocation2 + $0x370] sm:$0xff]
    %v4116 = vld [vmem:[#allocation2 + $0x378] sm:$0xff]
    %v4117 = vld [vmem:[#allocation2 + $0x380] sm:$0xff]
    %v4118 = vld [vmem:[#allocation2 + $0x388] sm:$0xff]
    %v4119 = vld [vmem:[#allocation2 + $0x390] sm:$0xff]
    %v4120 = vld [vmem:[#allocation2 + $0x398] sm:$0xff]
    %v4121 = vld [vmem:[#allocation2 + $0x3a0] sm:$0xff]
    %v4122 = vld [vmem:[#allocation2 + $0x3a8] sm:$0xff]
    %v4123 = vld [vmem:[#allocation2 + $0x3b0] sm:$0xff]
    %v4124 = vld [vmem:[#allocation2 + $0x3b8] sm:$0xff]
    %v4125 = vld [vmem:[#allocation2 + $0x3c0] sm:$0xff]
    %v4126 = vld [vmem:[#allocation2 + $0x3c8] sm:$0xff]
    %v4127 = vld [vmem:[#allocation2 + $0x3d0] sm:$0xff]
    %v4128 = vld [vmem:[#allocation2 + $0x3d8] sm:$0xff]
    %v4129 = vld [vmem:[#allocation2 + $0x3e0] sm:$0xff]
    %v4130 = vld [vmem:[#allocation2 + $0x3e8] sm:$0xff]
    %v4131 = vld [vmem:[#allocation2 + $0x3f0] sm:$0xff]
    %v4132 = vld [vmem:[#allocation2 + $0x3f8] sm:$0xff]
    %v4133 = vld [vmem:[#allocation2 + $0x400] sm:$0xff]
    %v4134 = vld [vmem:[#allocation2 + $0x408] sm:$0xff]
    %v4135 = vld [vmem:[#allocation2 + $0x410] sm:$0xff]
    %v4136 = vld [vmem:[#allocation2 + $0x418] sm:$0xff]
    %v4137 = vld [vmem:[#allocation2 + $0x420] sm:$0xff]
    %v4138 = vld [vmem:[#allocation2 + $0x428] sm:$0xff]
    %v4139 = vld [vmem:[#allocation2 + $0x430] sm:$0xff]
    %v4140 = vld [vmem:[#allocation2 + $0x438] sm:$0xff]
    %v4141 = vld [vmem:[#allocation2 + $0x440] sm:$0xff]
    %v4142 = vld [vmem:[#allocation2 + $0x448] sm:$0xff]
    %v4143 = vld [vmem:[#allocation2 + $0x450] sm:$0xff]
    %v4144 = vld [vmem:[#allocation2 + $0x458] sm:$0xff]
    %v4145 = vld [vmem:[#allocation2 + $0x460] sm:$0xff]
    %v4146 = vld [vmem:[#allocation2 + $0x468] sm:$0xff]
    %v4147 = vld [vmem:[#allocation2 + $0x470] sm:$0xff]
    %v4148 = vld [vmem:[#allocation2 + $0x478] sm:$0xff]
    %v4149 = vld [vmem:[#allocation2 + $0x480] sm:$0xff]
    %v4150 = vld [vmem:[#allocation2 + $0x488] sm:$0xff]
    %v4151 = vld [vmem:[#allocation2 + $0x490] sm:$0xff]
    %v4152 = vld [vmem:[#allocation2 + $0x498] sm:$0xff]
    %v4153 = vld [vmem:[#allocation2 + $0x4a0] sm:$0xff]
    %v4154 = vld [vmem:[#allocation2 + $0x4a8] sm:$0xff]
    %v4155 = vld [vmem:[#allocation2 + $0x4b0] sm:$0xff]
    %v4156 = vld [vmem:[#allocation2 + $0x4b8] sm:$0xff]
    %v4157 = vld [vmem:[#allocation2 + $0x4c0] sm:$0xff]
    %v4158 = vld [vmem:[#allocation2 + $0x4c8] sm:$0xff]
    %v4159 = vld [vmem:[#allocation2 + $0x4d0] sm:$0xff]
    %v4160 = vld [vmem:[#allocation2 + $0x4d8] sm:$0xff]
    %v4161 = vld [vmem:[#allocation2 + $0x4e0] sm:$0xff]
    %v4162 = vld [vmem:[#allocation2 + $0x4e8] sm:$0xff]
    %v4163 = vld [vmem:[#allocation2 + $0x4f0] sm:$0xff]
    %v4164 = vld [vmem:[#allocation2 + $0x4f8] sm:$0xff]
    %v4165 = vld [vmem:[#allocation2 + $0x500] sm:$0xff]
    %v4166 = vld [vmem:[#allocation2 + $0x508] sm:$0xff]
    %v4167 = vld [vmem:[#allocation2 + $0x510] sm:$0xff]
    %v4168 = vld [vmem:[#allocation2 + $0x518] sm:$0xff]
    %v4169 = vld [vmem:[#allocation2 + $0x520] sm:$0xff]
    %v4170 = vld [vmem:[#allocation2 + $0x528] sm:$0xff]
    %v4171 = vld [vmem:[#allocation2 + $0x530] sm:$0xff]
    %v4172 = vld [vmem:[#allocation2 + $0x538] sm:$0xff]
    %v4173 = vld [vmem:[#allocation2 + $0x540] sm:$0xff]
    %v4174 = vld [vmem:[#allocation2 + $0x548] sm:$0xff]
    %v4175 = vld [vmem:[#allocation2 + $0x550] sm:$0xff]
    %v4176 = vld [vmem:[#allocation2 + $0x558] sm:$0xff]
    %v4177 = vld [vmem:[#allocation2 + $0x560] sm:$0xff]
    %v4178 = vld [vmem:[#allocation2 + $0x568] sm:$0xff]
    %v4179 = vld [vmem:[#allocation2 + $0x570] sm:$0xff]
    %v4180 = vld [vmem:[#allocation2 + $0x578] sm:$0xff]
    %v4181 = vld [vmem:[#allocation2 + $0x580] sm:$0xff]
    %v4182 = vld [vmem:[#allocation2 + $0x588] sm:$0xff]
    %v4183 = vld [vmem:[#allocation2 + $0x590] sm:$0xff]
    %v4184 = vld [vmem:[#allocation2 + $0x598] sm:$0xff]
    %v4185 = vld [vmem:[#allocation2 + $0x5a0] sm:$0xff]
    %v4186 = vld [vmem:[#allocation2 + $0x5a8] sm:$0xff]
    %v4187 = vld [vmem:[#allocation2 + $0x5b0] sm:$0xff]
    %v4188 = vld [vmem:[#allocation2 + $0x5b8] sm:$0xff]
    %v4189 = vld [vmem:[#allocation2 + $0x5c0] sm:$0xff]
    %v4190 = vld [vmem:[#allocation2 + $0x5c8] sm:$0xff]
    %v4191 = vld [vmem:[#allocation2 + $0x5d0] sm:$0xff]
    %v4192 = vld [vmem:[#allocation2 + $0x5d8] sm:$0xff]
    %v4193 = vld [vmem:[#allocation2 + $0x5e0] sm:$0xff]
    %v4194 = vld [vmem:[#allocation2 + $0x5e8] sm:$0xff]
    %v4195 = vld [vmem:[#allocation2 + $0x5f0] sm:$0xff]
    %v4196 = vld [vmem:[#allocation2 + $0x5f8] sm:$0xff]
    %v4197 = vld [vmem:[#allocation2 + $0x600] sm:$0xff]
    %v4198 = vld [vmem:[#allocation2 + $0x608] sm:$0xff]
    %v4199 = vld [vmem:[#allocation2 + $0x610] sm:$0xff]
    %v4200 = vld [vmem:[#allocation2 + $0x618] sm:$0xff]
    %v4201 = vld [vmem:[#allocation2 + $0x620] sm:$0xff]
    %v4202 = vld [vmem:[#allocation2 + $0x628] sm:$0xff]
    %v4203 = vld [vmem:[#allocation2 + $0x630] sm:$0xff]
    %v4204 = vld [vmem:[#allocation2 + $0x638] sm:$0xff]
    %v4205 = vld [vmem:[#allocation2 + $0x640] sm:$0xff]
    %v4206 = vld [vmem:[#allocation2 + $0x648] sm:$0xff]
    %v4207 = vld [vmem:[#allocation2 + $0x650] sm:$0xff]
    %v4208 = vld [vmem:[#allocation2 + $0x658] sm:$0xff]
    %v4209 = vld [vmem:[#allocation2 + $0x660] sm:$0xff]
    %v4210 = vld [vmem:[#allocation2 + $0x668] sm:$0xff]
    %v4211 = vld [vmem:[#allocation2 + $0x670] sm:$0xff]
    %v4212 = vld [vmem:[#allocation2 + $0x678] sm:$0xff]
    %v4213 = vld [vmem:[#allocation2 + $0x680] sm:$0xff]
    %v4214 = vld [vmem:[#allocation2 + $0x688] sm:$0xff]
    %v4215 = vld [vmem:[#allocation2 + $0x690] sm:$0xff]
    %v4216 = vld [vmem:[#allocation2 + $0x698] sm:$0xff]
    %v4217 = vld [vmem:[#allocation2 + $0x6a0] sm:$0xff]
    %v4218 = vld [vmem:[#allocation2 + $0x6a8] sm:$0xff]
    %v4219 = vld [vmem:[#allocation2 + $0x6b0] sm:$0xff]
    %v4220 = vld [vmem:[#allocation2 + $0x6b8] sm:$0xff]
    %v4221 = vld [vmem:[#allocation2 + $0x6c0] sm:$0xff]
    %v4222 = vld [vmem:[#allocation2 + $0x6c8] sm:$0xff]
    %v4223 = vld [vmem:[#allocation2 + $0x6d0] sm:$0xff]
    %v4224 = vld [vmem:[#allocation2 + $0x6d8] sm:$0xff]
    %v4225 = vld [vmem:[#allocation2 + $0x6e0] sm:$0xff]
    %v4226 = vld [vmem:[#allocation2 + $0x6e8] sm:$0xff]
    %v4227 = vld [vmem:[#allocation2 + $0x6f0] sm:$0xff]
    %v4228 = vld [vmem:[#allocation2 + $0x6f8] sm:$0xff]
    %v4229 = vld [vmem:[#allocation2 + $0x700] sm:$0xff]
    %v4230 = vld [vmem:[#allocation2 + $0x708] sm:$0xff]
    %v4231 = vld [vmem:[#allocation2 + $0x710] sm:$0xff]
    %v4232 = vld [vmem:[#allocation2 + $0x718] sm:$0xff]
    %v4233 = vld [vmem:[#allocation2 + $0x720] sm:$0xff]
    %v4234 = vld [vmem:[#allocation2 + $0x728] sm:$0xff]
    %v4235 = vld [vmem:[#allocation2 + $0x730] sm:$0xff]
    %v4236 = vld [vmem:[#allocation2 + $0x738] sm:$0xff]
    %v4237 = vld [vmem:[#allocation2 + $0x740] sm:$0xff]
    %v4238 = vld [vmem:[#allocation2 + $0x748] sm:$0xff]
    %v4239 = vld [vmem:[#allocation2 + $0x750] sm:$0xff]
    %v4240 = vld [vmem:[#allocation2 + $0x758] sm:$0xff]
    %v4241 = vld [vmem:[#allocation2 + $0x760] sm:$0xff]
    %v4242 = vld [vmem:[#allocation2 + $0x768] sm:$0xff]
    %v4243 = vld [vmem:[#allocation2 + $0x770] sm:$0xff]
    %v4244 = vld [vmem:[#allocation2 + $0x778] sm:$0xff]
    %v4245 = vld [vmem:[#allocation2 + $0x780] sm:$0xff]
    %v4246 = vld [vmem:[#allocation2 + $0x788] sm:$0xff]
    %v4247 = vld [vmem:[#allocation2 + $0x790] sm:$0xff]
    %v4248 = vld [vmem:[#allocation2 + $0x798] sm:$0xff]
    %v4249 = vld [vmem:[#allocation2 + $0x7a0] sm:$0xff]
    %v4250 = vld [vmem:[#allocation2 + $0x7a8] sm:$0xff]
    %v4251 = vld [vmem:[#allocation2 + $0x7b0] sm:$0xff]
    %v4252 = vld [vmem:[#allocation2 + $0x7b8] sm:$0xff]
    %v4253 = vld [vmem:[#allocation2 + $0x7c0] sm:$0xff]
    %v4254 = vld [vmem:[#allocation2 + $0x7c8] sm:$0xff]
    %v4255 = vld [vmem:[#allocation2 + $0x7d0] sm:$0xff]
    %v4256 = vld [vmem:[#allocation2 + $0x7d8] sm:$0xff]
    %v4257 = vld [vmem:[#allocation2 + $0x7e0] sm:$0xff]
    %v4258 = vld [vmem:[#allocation2 + $0x7e8] sm:$0xff]
    %v4259 = vld [vmem:[#allocation2 + $0x7f0] sm:$0xff]
    %v4260 = vld [vmem:[#allocation2 + $0x7f8] sm:$0xff]
    %v4261 = vld [vmem:[#allocation2 + $0x800] sm:$0xff]
    %v4262 = vld [vmem:[#allocation2 + $0x808] sm:$0xff]
    %v4263 = vld [vmem:[#allocation2 + $0x810] sm:$0xff]
    %v4264 = vld [vmem:[#allocation2 + $0x818] sm:$0xff]
    %v4265 = vld [vmem:[#allocation2 + $0x820] sm:$0xff]
    %v4266 = vld [vmem:[#allocation2 + $0x828] sm:$0xff]
    %v4267 = vld [vmem:[#allocation2 + $0x830] sm:$0xff]
    %v4268 = vld [vmem:[#allocation2 + $0x838] sm:$0xff]
    %v4269 = vld [vmem:[#allocation2 + $0x840] sm:$0xff]
    %v4270 = vld [vmem:[#allocation2 + $0x848] sm:$0xff]
    %v4271 = vld [vmem:[#allocation2 + $0x850] sm:$0xff]
    %v4272 = vld [vmem:[#allocation2 + $0x858] sm:$0xff]
    %v4273 = vld [vmem:[#allocation2 + $0x860] sm:$0xff]
    %v4274 = vld [vmem:[#allocation2 + $0x868] sm:$0xff]
    %v4275 = vld [vmem:[#allocation2 + $0x870] sm:$0xff]
    %v4276 = vld [vmem:[#allocation2 + $0x878] sm:$0xff]
    %v4277 = vld [vmem:[#allocation2 + $0x880] sm:$0xff]
    %v4278 = vld [vmem:[#allocation2 + $0x888] sm:$0xff]
    %v4279 = vld [vmem:[#allocation2 + $0x890] sm:$0xff]
    %v4280 = vld [vmem:[#allocation2 + $0x898] sm:$0xff]
    %v4281 = vld [vmem:[#allocation2 + $0x8a0] sm:$0xff]
    %v4282 = vld [vmem:[#allocation2 + $0x8a8] sm:$0xff]
    %v4283 = vld [vmem:[#allocation2 + $0x8b0] sm:$0xff]
    %v4284 = vld [vmem:[#allocation2 + $0x8b8] sm:$0xff]
    %v4285 = vld [vmem:[#allocation2 + $0x8c0] sm:$0xff]
    %v4286 = vld [vmem:[#allocation2 + $0x8c8] sm:$0xff]
    %v4287 = vld [vmem:[#allocation2 + $0x8d0] sm:$0xff]
    %v4288 = vld [vmem:[#allocation2 + $0x8d8] sm:$0xff]
    %v4289 = vld [vmem:[#allocation2 + $0x8e0] sm:$0xff]
    %v4290 = vld [vmem:[#allocation2 + $0x8e8] sm:$0xff]
    %v4291 = vld [vmem:[#allocation2 + $0x8f0] sm:$0xff]
    %v4292 = vld [vmem:[#allocation2 + $0x8f8] sm:$0xff]
    %v4293 = vld [vmem:[#allocation2 + $0x900] sm:$0xff]
    %v4294 = vld [vmem:[#allocation2 + $0x908] sm:$0xff]
    %v4295 = vld [vmem:[#allocation2 + $0x910] sm:$0xff]
    %v4296 = vld [vmem:[#allocation2 + $0x918] sm:$0xff]
    %v4297 = vld [vmem:[#allocation2 + $0x920] sm:$0xff]
    %v4298 = vld [vmem:[#allocation2 + $0x928] sm:$0xff]
    %v4299 = vld [vmem:[#allocation2 + $0x930] sm:$0xff]
    %v4300 = vld [vmem:[#allocation2 + $0x938] sm:$0xff]
    %v4301 = vld [vmem:[#allocation2 + $0x940] sm:$0xff]
    %v4302 = vld [vmem:[#allocation2 + $0x948] sm:$0xff]
    %v4303 = vld [vmem:[#allocation2 + $0x950] sm:$0xff]
    %v4304 = vld [vmem:[#allocation2 + $0x958] sm:$0xff]
    %v4305 = vld [vmem:[#allocation2 + $0x960] sm:$0xff]
    %v4306 = vld [vmem:[#allocation2 + $0x968] sm:$0xff]
    %v4307 = vld [vmem:[#allocation2 + $0x970] sm:$0xff]
    %v4308 = vld [vmem:[#allocation2 + $0x978] sm:$0xff]
    %v4309 = vld [vmem:[#allocation2 + $0x980] sm:$0xff]
    %v4310 = vld [vmem:[#allocation2 + $0x988] sm:$0xff]
    %v4311 = vld [vmem:[#allocation2 + $0x990] sm:$0xff]
    %v4312 = vld [vmem:[#allocation2 + $0x998] sm:$0xff]
    %v4313 = vld [vmem:[#allocation2 + $0x9a0] sm:$0xff]
    %v4314 = vld [vmem:[#allocation2 + $0x9a8] sm:$0xff]
    %v4315 = vld [vmem:[#allocation2 + $0x9b0] sm:$0xff]
    %v4316 = vld [vmem:[#allocation2 + $0x9b8] sm:$0xff]
    %v4317 = vld [vmem:[#allocation2 + $0x9c0] sm:$0xff]
    %v4318 = vld [vmem:[#allocation2 + $0x9c8] sm:$0xff]
    %v4319 = vld [vmem:[#allocation2 + $0x9d0] sm:$0xff]
    %v4320 = vld [vmem:[#allocation2 + $0x9d8] sm:$0xff]
    %v4321 = vld [vmem:[#allocation2 + $0x9e0] sm:$0xff]
    %v4322 = vld [vmem:[#allocation2 + $0x9e8] sm:$0xff]
    %v4323 = vld [vmem:[#allocation2 + $0x9f0] sm:$0xff]
    %v4324 = vld [vmem:[#allocation2 + $0x9f8] sm:$0xff]
    %v4325 = vld [vmem:[#allocation2 + $0xa00] sm:$0xff]
    %v4326 = vld [vmem:[#allocation2 + $0xa08] sm:$0xff]
    %v4327 = vld [vmem:[#allocation2 + $0xa10] sm:$0xff]
    %v4328 = vld [vmem:[#allocation2 + $0xa18] sm:$0xff]
    %v4329 = vld [vmem:[#allocation2 + $0xa20] sm:$0xff]
    %v4330 = vld [vmem:[#allocation2 + $0xa28] sm:$0xff]
    %v4331 = vld [vmem:[#allocation2 + $0xa30] sm:$0xff]
    %v4332 = vld [vmem:[#allocation2 + $0xa38] sm:$0xff]
    %v4333 = vld [vmem:[#allocation2 + $0xa40] sm:$0xff]
    %v4334 = vld [vmem:[#allocation2 + $0xa48] sm:$0xff]
    %v4335 = vld [vmem:[#allocation2 + $0xa50] sm:$0xff]
    %v4336 = vld [vmem:[#allocation2 + $0xa58] sm:$0xff]
    %v4337 = vld [vmem:[#allocation2 + $0xa60] sm:$0xff]
    %v4338 = vld [vmem:[#allocation2 + $0xa68] sm:$0xff]
    %v4339 = vld [vmem:[#allocation2 + $0xa70] sm:$0xff]
    %v4340 = vld [vmem:[#allocation2 + $0xa78] sm:$0xff]
    %v4341 = vld [vmem:[#allocation2 + $0xa80] sm:$0xff]
    %v4342 = vld [vmem:[#allocation2 + $0xa88] sm:$0xff]
    %v4343 = vld [vmem:[#allocation2 + $0xa90] sm:$0xff]
    %v4344 = vld [vmem:[#allocation2 + $0xa98] sm:$0xff]
    %v4345 = vld [vmem:[#allocation2 + $0xaa0] sm:$0xff]
    %v4346 = vld [vmem:[#allocation2 + $0xaa8] sm:$0xff]
    %v4347 = vld [vmem:[#allocation2 + $0xab0] sm:$0xff]
    %v4348 = vld [vmem:[#allocation2 + $0xab8] sm:$0xff]
    %v4349 = vld [vmem:[#allocation2 + $0xac0] sm:$0xff]
    %v4350 = vld [vmem:[#allocation2 + $0xac8] sm:$0xff]
    %v4351 = vld [vmem:[#allocation2 + $0xad0] sm:$0xff]
    %v4352 = vld [vmem:[#allocation2 + $0xad8] sm:$0xff]
    %v4353 = vld [vmem:[#allocation2 + $0xae0] sm:$0xff]
    %v4354 = vld [vmem:[#allocation2 + $0xae8] sm:$0xff]
    %v4355 = vld [vmem:[#allocation2 + $0xaf0] sm:$0xff]
    %v4356 = vld [vmem:[#allocation2 + $0xaf8] sm:$0xff]
    %v4357 = vld [vmem:[#allocation2 + $0xb00] sm:$0xff]
    %v4358 = vld [vmem:[#allocation2 + $0xb08] sm:$0xff]
    %v4359 = vld [vmem:[#allocation2 + $0xb10] sm:$0xff]
    %v4360 = vld [vmem:[#allocation2 + $0xb18] sm:$0xff]
    %v4361 = vld [vmem:[#allocation2 + $0xb20] sm:$0xff]
    %v4362 = vld [vmem:[#allocation2 + $0xb28] sm:$0xff]
    %v4363 = vld [vmem:[#allocation2 + $0xb30] sm:$0xff]
    %v4364 = vld [vmem:[#allocation2 + $0xb38] sm:$0xff]
    %v4365 = vld [vmem:[#allocation2 + $0xb40] sm:$0xff]
    %v4366 = vld [vmem:[#allocation2 + $0xb48] sm:$0xff]
    %v4367 = vld [vmem:[#allocation2 + $0xb50] sm:$0xff]
    %v4368 = vld [vmem:[#allocation2 + $0xb58] sm:$0xff]
    %v4369 = vld [vmem:[#allocation2 + $0xb60] sm:$0xff]
    %v4370 = vld [vmem:[#allocation2 + $0xb68] sm:$0xff]
    %v4371 = vld [vmem:[#allocation2 + $0xb70] sm:$0xff]
    %v4372 = vld [vmem:[#allocation2 + $0xb78] sm:$0xff]
    %v4373 = vld [vmem:[#allocation2 + $0xb80] sm:$0xff]
    %v4374 = vld [vmem:[#allocation2 + $0xb88] sm:$0xff]
    %v4375 = vld [vmem:[#allocation2 + $0xb90] sm:$0xff]
    %v4376 = vld [vmem:[#allocation2 + $0xb98] sm:$0xff]
    %v4377 = vld [vmem:[#allocation2 + $0xba0] sm:$0xff]
    %v4378 = vld [vmem:[#allocation2 + $0xba8] sm:$0xff]
    %v4379 = vld [vmem:[#allocation2 + $0xbb0] sm:$0xff]
    %v4380 = vld [vmem:[#allocation2 + $0xbb8] sm:$0xff]
    %v4381 = vld [vmem:[#allocation2 + $0xbc0] sm:$0xff]
    %v4382 = vld [vmem:[#allocation2 + $0xbc8] sm:$0xff]
    %v4383 = vld [vmem:[#allocation2 + $0xbd0] sm:$0xff]
    %v4384 = vld [vmem:[#allocation2 + $0xbd8] sm:$0xff]
    %v4385 = vld [vmem:[#allocation2 + $0xbe0] sm:$0xff]
    %v4386 = vld [vmem:[#allocation2 + $0xbe8] sm:$0xff]
    %v4387 = vld [vmem:[#allocation2 + $0xbf0] sm:$0xff]
    %v4388 = vld [vmem:[#allocation2 + $0xbf8] sm:$0xff]
    %v4389 = vld [vmem:[#allocation2 + $0xc00] sm:$0xff]
    %v4390 = vld [vmem:[#allocation2 + $0xc08] sm:$0xff]
    %v4391 = vld [vmem:[#allocation2 + $0xc10] sm:$0xff]
    %v4392 = vld [vmem:[#allocation2 + $0xc18] sm:$0xff]
    %v4393 = vld [vmem:[#allocation2 + $0xc20] sm:$0xff]
    %v4394 = vld [vmem:[#allocation2 + $0xc28] sm:$0xff]
    %v4395 = vld [vmem:[#allocation2 + $0xc30] sm:$0xff]
    %v4396 = vld [vmem:[#allocation2 + $0xc38] sm:$0xff]
    %v4397 = vld [vmem:[#allocation2 + $0xc40] sm:$0xff]
    %v4398 = vld [vmem:[#allocation2 + $0xc48] sm:$0xff]
    %v4399 = vld [vmem:[#allocation2 + $0xc50] sm:$0xff]
    %v4400 = vld [vmem:[#allocation2 + $0xc58] sm:$0xff]
    %v4401 = vld [vmem:[#allocation2 + $0xc60] sm:$0xff]
    %v4402 = vld [vmem:[#allocation2 + $0xc68] sm:$0xff]
    %v4403 = vld [vmem:[#allocation2 + $0xc70] sm:$0xff]
    %v4404 = vld [vmem:[#allocation2 + $0xc78] sm:$0xff]
    %v4405 = vld [vmem:[#allocation2 + $0xc80] sm:$0xff]
    %v4406 = vld [vmem:[#allocation2 + $0xc88] sm:$0xff]
    %v4407 = vld [vmem:[#allocation2 + $0xc90] sm:$0xff]
    %v4408 = vld [vmem:[#allocation2 + $0xc98] sm:$0xff]
    %v4409 = vld [vmem:[#allocation2 + $0xca0] sm:$0xff]
    %v4410 = vld [vmem:[#allocation2 + $0xca8] sm:$0xff]
    %v4411 = vld [vmem:[#allocation2 + $0xcb0] sm:$0xff]
    %v4412 = vld [vmem:[#allocation2 + $0xcb8] sm:$0xff]
    %v4413 = vld [vmem:[#allocation2 + $0xcc0] sm:$0xff]
    %v4414 = vld [vmem:[#allocation2 + $0xcc8] sm:$0xff]
    %v4415 = vld [vmem:[#allocation2 + $0xcd0] sm:$0xff]
    %v4416 = vld [vmem:[#allocation2 + $0xcd8] sm:$0xff]
    %v4417 = vld [vmem:[#allocation2 + $0xce0] sm:$0xff]
    %v4418 = vld [vmem:[#allocation2 + $0xce8] sm:$0xff]
    %v4419 = vld [vmem:[#allocation2 + $0xcf0] sm:$0xff]
    %v4420 = vld [vmem:[#allocation2 + $0xcf8] sm:$0xff]
    %v4421 = vld [vmem:[#allocation2 + $0xd00] sm:$0xff]
    %v4422 = vld [vmem:[#allocation2 + $0xd08] sm:$0xff]
    %v4423 = vld [vmem:[#allocation2 + $0xd10] sm:$0xff]
    %v4424 = vld [vmem:[#allocation2 + $0xd18] sm:$0xff]
    %v4425 = vld [vmem:[#allocation2 + $0xd20] sm:$0xff]
    %v4426 = vld [vmem:[#allocation2 + $0xd28] sm:$0xff]
    %v4427 = vld [vmem:[#allocation2 + $0xd30] sm:$0xff]
    %v4428 = vld [vmem:[#allocation2 + $0xd38] sm:$0xff]
    %v4429 = vld [vmem:[#allocation2 + $0xd40] sm:$0xff]
    %v4430 = vld [vmem:[#allocation2 + $0xd48] sm:$0xff]
    %v4431 = vld [vmem:[#allocation2 + $0xd50] sm:$0xff]
    %v4432 = vld [vmem:[#allocation2 + $0xd58] sm:$0xff]
    %v4433 = vld [vmem:[#allocation2 + $0xd60] sm:$0xff]
    %v4434 = vld [vmem:[#allocation2 + $0xd68] sm:$0xff]
    %v4435 = vld [vmem:[#allocation2 + $0xd70] sm:$0xff]
    %v4436 = vld [vmem:[#allocation2 + $0xd78] sm:$0xff]
    %v4437 = vld [vmem:[#allocation2 + $0xd80] sm:$0xff]
    %v4438 = vld [vmem:[#allocation2 + $0xd88] sm:$0xff]
    %v4439 = vld [vmem:[#allocation2 + $0xd90] sm:$0xff]
    %v4440 = vld [vmem:[#allocation2 + $0xd98] sm:$0xff]
    %v4441 = vld [vmem:[#allocation2 + $0xda0] sm:$0xff]
    %v4442 = vld [vmem:[#allocation2 + $0xda8] sm:$0xff]
    %v4443 = vld [vmem:[#allocation2 + $0xdb0] sm:$0xff]
    %v4444 = vld [vmem:[#allocation2 + $0xdb8] sm:$0xff]
    %v4445 = vld [vmem:[#allocation2 + $0xdc0] sm:$0xff]
    %v4446 = vld [vmem:[#allocation2 + $0xdc8] sm:$0xff]
    %v4447 = vld [vmem:[#allocation2 + $0xdd0] sm:$0xff]
    %v4448 = vld [vmem:[#allocation2 + $0xdd8] sm:$0xff]
    %v4449 = vld [vmem:[#allocation2 + $0xde0] sm:$0xff]
    %v4450 = vld [vmem:[#allocation2 + $0xde8] sm:$0xff]
    %v4451 = vld [vmem:[#allocation2 + $0xdf0] sm:$0xff]
    %v4452 = vld [vmem:[#allocation2 + $0xdf8] sm:$0xff]
    %v4453 = vld [vmem:[#allocation2 + $0xe00] sm:$0xff]
    %v4454 = vld [vmem:[#allocation2 + $0xe08] sm:$0xff]
    %v4455 = vld [vmem:[#allocation2 + $0xe10] sm:$0xff]
    %v4456 = vld [vmem:[#allocation2 + $0xe18] sm:$0xff]
    %v4457 = vld [vmem:[#allocation2 + $0xe20] sm:$0xff]
    %v4458 = vld [vmem:[#allocation2 + $0xe28] sm:$0xff]
    %v4459 = vld [vmem:[#allocation2 + $0xe30] sm:$0xff]
    %v4460 = vld [vmem:[#allocation2 + $0xe38] sm:$0xff]
    %v4461 = vld [vmem:[#allocation2 + $0xe40] sm:$0xff]
    %v4462 = vld [vmem:[#allocation2 + $0xe48] sm:$0xff]
    %v4463 = vld [vmem:[#allocation2 + $0xe50] sm:$0xff]
    %v4464 = vld [vmem:[#allocation2 + $0xe58] sm:$0xff]
    %v4465 = vld [vmem:[#allocation2 + $0xe60] sm:$0xff]
    %v4466 = vld [vmem:[#allocation2 + $0xe68] sm:$0xff]
    %v4467 = vld [vmem:[#allocation2 + $0xe70] sm:$0xff]
    %v4468 = vld [vmem:[#allocation2 + $0xe78] sm:$0xff]
    %v4469 = vld [vmem:[#allocation2 + $0xe80] sm:$0xff]
    %v4470 = vld [vmem:[#allocation2 + $0xe88] sm:$0xff]
    %v4471 = vld [vmem:[#allocation2 + $0xe90] sm:$0xff]
    %v4472 = vld [vmem:[#allocation2 + $0xe98] sm:$0xff]
    %v4473 = vld [vmem:[#allocation2 + $0xea0] sm:$0xff]
    %v4474 = vld [vmem:[#allocation2 + $0xea8] sm:$0xff]
    %v4475 = vld [vmem:[#allocation2 + $0xeb0] sm:$0xff]
    %v4476 = vld [vmem:[#allocation2 + $0xeb8] sm:$0xff]
    %v4477 = vld [vmem:[#allocation2 + $0xec0] sm:$0xff]
    %v4478 = vld [vmem:[#allocation2 + $0xec8] sm:$0xff]
    %v4479 = vld [vmem:[#allocation2 + $0xed0] sm:$0xff]
    %v4480 = vld [vmem:[#allocation2 + $0xed8] sm:$0xff]
    %v4481 = vld [vmem:[#allocation2 + $0xee0] sm:$0xff]
    %v4482 = vld [vmem:[#allocation2 + $0xee8] sm:$0xff]
    %v4483 = vld [vmem:[#allocation2 + $0xef0] sm:$0xff]
    %v4484 = vld [vmem:[#allocation2 + $0xef8] sm:$0xff]
    %v4485 = vld [vmem:[#allocation2 + $0xf00] sm:$0xff]
    %v4486 = vld [vmem:[#allocation2 + $0xf08] sm:$0xff]
    %v4487 = vld [vmem:[#allocation2 + $0xf10] sm:$0xff]
    %v4488 = vld [vmem:[#allocation2 + $0xf18] sm:$0xff]
    %v4489 = vld [vmem:[#allocation2 + $0xf20] sm:$0xff]
    %v4490 = vld [vmem:[#allocation2 + $0xf28] sm:$0xff]
    %v4491 = vld [vmem:[#allocation2 + $0xf30] sm:$0xff]
    %v4492 = vld [vmem:[#allocation2 + $0xf38] sm:$0xff]
    %v4493 = vld [vmem:[#allocation2 + $0xf40] sm:$0xff]
    %v4494 = vld [vmem:[#allocation2 + $0xf48] sm:$0xff]
    %v4495 = vld [vmem:[#allocation2 + $0xf50] sm:$0xff]
    %v4496 = vld [vmem:[#allocation2 + $0xf58] sm:$0xff]
    %v4497 = vld [vmem:[#allocation2 + $0xf60] sm:$0xff]
    %v4498 = vld [vmem:[#allocation2 + $0xf68] sm:$0xff]
    %v4499 = vld [vmem:[#allocation2 + $0xf70] sm:$0xff]
    %v4500 = vld [vmem:[#allocation2 + $0xf78] sm:$0xff]
    %v4501 = vld [vmem:[#allocation2 + $0xf80] sm:$0xff]
    %v4502 = vld [vmem:[#allocation2 + $0xf88] sm:$0xff]
    %v4503 = vld [vmem:[#allocation2 + $0xf90] sm:$0xff]
    %v4504 = vld [vmem:[#allocation2 + $0xf98] sm:$0xff]
    %v4505 = vld [vmem:[#allocation2 + $0xfa0] sm:$0xff]
    %v4506 = vld [vmem:[#allocation2 + $0xfa8] sm:$0xff]
    %v4507 = vld [vmem:[#allocation2 + $0xfb0] sm:$0xff]
    %v4508 = vld [vmem:[#allocation2 + $0xfb8] sm:$0xff]
    %v4509 = vld [vmem:[#allocation2 + $0xfc0] sm:$0xff]
    %v4510 = vld [vmem:[#allocation2 + $0xfc8] sm:$0xff]
    %v4511 = vld [vmem:[#allocation2 + $0xfd0] sm:$0xff]
    %v4512 = vld [vmem:[#allocation2 + $0xfd8] sm:$0xff]
    %v4513 = vld [vmem:[#allocation2 + $0xfe0] sm:$0xff]
    %v4514 = vld [vmem:[#allocation2 + $0xfe8] sm:$0xff]
    %v4515 = vld [vmem:[#allocation2 + $0xff0] sm:$0xff]
    %v4516 = vld [vmem:[#allocation2 + $0xff8] sm:$0xff]
    %v4517 = vld [vmem:[#allocation9] sm:$0xff]
    %v4519 = vlaneseq
    %v4520 = vshrl.u32 %v4519, 7
    %v4521 = vsub.s32 0, %v4520
    %v4522 = vrot.slane %v4517, %v4521
    %v4523 = vlaneseq
    %v4524 = vshrl.u32 %v4523, 7
    %v4525 = vsub.s32 1, %v4524
    %v4526 = vrot.slane %v4517, %v4525
    %v4527 = vlaneseq
    %v4528 = vshrl.u32 %v4527, 7
    %v4529 = vsub.s32 2, %v4528
    %v4530 = vrot.slane %v4517, %v4529
    %v4531 = vlaneseq
    %v4532 = vshrl.u32 %v4531, 7
    %v4533 = vsub.s32 3, %v4532
    %v4534 = vrot.slane %v4517, %v4533
    %v4535 = vlaneseq
    %v4536 = vshrl.u32 %v4535, 7
    %v4537 = vsub.s32 4, %v4536
    %v4538 = vrot.slane %v4517, %v4537
    %v4539 = vlaneseq
    %v4540 = vshrl.u32 %v4539, 7
    %v4541 = vsub.s32 5, %v4540
    %v4542 = vrot.slane %v4517, %v4541
    %v4543 = vlaneseq
    %v4544 = vshrl.u32 %v4543, 7
    %v4545 = vsub.s32 6, %v4544
    %v4546 = vrot.slane %v4517, %v4545
    %v4547 = vlaneseq
    %v4548 = vshrl.u32 %v4547, 7
    %v4549 = vsub.s32 7, %v4548
    %v4550 = vrot.slane %v4517, %v4549
    %v5071 = vunpack.c.l.b16 %v4005
    %v5072 = vunpack.c.h.b16 %v4005
    %v5073 = vunpack.c.l.b16 %v4006
    %v5074 = vunpack.c.h.b16 %v4006
    %v5075 = vunpack.c.l.b16 %v4007
    %v5076 = vunpack.c.h.b16 %v4007
    %v5077 = vunpack.c.l.b16 %v4008
    %v5078 = vunpack.c.h.b16 %v4008
    %v5079 = vunpack.c.l.b16 %v4009
    %v5080 = vunpack.c.h.b16 %v4009
    %v5081 = vunpack.c.l.b16 %v4010
    %v5082 = vunpack.c.h.b16 %v4010
    %v5083 = vunpack.c.l.b16 %v4011
    %v5084 = vunpack.c.h.b16 %v4011
    %v5085 = vunpack.c.l.b16 %v4012
    %v5086 = vunpack.c.h.b16 %v4012
    %v5087 = vunpack.c.l.b16 %v4013
    %v5088 = vunpack.c.h.b16 %v4013
    %v5089 = vunpack.c.l.b16 %v4014
    %v5090 = vunpack.c.h.b16 %v4014
    %v5091 = vunpack.c.l.b16 %v4015
    %v5092 = vunpack.c.h.b16 %v4015
    %v5093 = vunpack.c.l.b16 %v4016
    %v5094 = vunpack.c.h.b16 %v4016
    %v5095 = vunpack.c.l.b16 %v4017
    %v5096 = vunpack.c.h.b16 %v4017
    %v5097 = vunpack.c.l.b16 %v4018
    %v5098 = vunpack.c.h.b16 %v4018
    %v5099 = vunpack.c.l.b16 %v4019
    %v5100 = vunpack.c.h.b16 %v4019
    %v5101 = vunpack.c.l.b16 %v4020
    %v5102 = vunpack.c.h.b16 %v4020
    %v5103 = vunpack.c.l.b16 %v4021
    %v5104 = vunpack.c.h.b16 %v4021
    %v5105 = vunpack.c.l.b16 %v4022
    %v5106 = vunpack.c.h.b16 %v4022
    %v5107 = vunpack.c.l.b16 %v4023
    %v5108 = vunpack.c.h.b16 %v4023
    %v5109 = vunpack.c.l.b16 %v4024
    %v5110 = vunpack.c.h.b16 %v4024
    %v5111 = vunpack.c.l.b16 %v4025
    %v5112 = vunpack.c.h.b16 %v4025
    %v5113 = vunpack.c.l.b16 %v4026
    %v5114 = vunpack.c.h.b16 %v4026
    %v5115 = vunpack.c.l.b16 %v4027
    %v5116 = vunpack.c.h.b16 %v4027
    %v5117 = vunpack.c.l.b16 %v4028
    %v5118 = vunpack.c.h.b16 %v4028
    %v5119 = vunpack.c.l.b16 %v4029
    %v5120 = vunpack.c.h.b16 %v4029
    %v5121 = vunpack.c.l.b16 %v4030
    %v5122 = vunpack.c.h.b16 %v4030
    %v5123 = vunpack.c.l.b16 %v4031
    %v5124 = vunpack.c.h.b16 %v4031
    %v5125 = vunpack.c.l.b16 %v4032
    %v5126 = vunpack.c.h.b16 %v4032
    %v5127 = vunpack.c.l.b16 %v4033
    %v5128 = vunpack.c.h.b16 %v4033
    %v5129 = vunpack.c.l.b16 %v4034
    %v5130 = vunpack.c.h.b16 %v4034
    %v5131 = vunpack.c.l.b16 %v4035
    %v5132 = vunpack.c.h.b16 %v4035
    %v5133 = vunpack.c.l.b16 %v4036
    %v5134 = vunpack.c.h.b16 %v4036
    %v5135 = vunpack.c.l.b16 %v4037
    %v5136 = vunpack.c.h.b16 %v4037
    %v5137 = vunpack.c.l.b16 %v4038
    %v5138 = vunpack.c.h.b16 %v4038
    %v5139 = vunpack.c.l.b16 %v4039
    %v5140 = vunpack.c.h.b16 %v4039
    %v5141 = vunpack.c.l.b16 %v4040
    %v5142 = vunpack.c.h.b16 %v4040
    %v5143 = vunpack.c.l.b16 %v4041
    %v5144 = vunpack.c.h.b16 %v4041
    %v5145 = vunpack.c.l.b16 %v4042
    %v5146 = vunpack.c.h.b16 %v4042
    %v5147 = vunpack.c.l.b16 %v4043
    %v5148 = vunpack.c.h.b16 %v4043
    %v5149 = vunpack.c.l.b16 %v4044
    %v5150 = vunpack.c.h.b16 %v4044
    %v5151 = vunpack.c.l.b16 %v4045
    %v5152 = vunpack.c.h.b16 %v4045
    %v5153 = vunpack.c.l.b16 %v4046
    %v5154 = vunpack.c.h.b16 %v4046
    %v5155 = vunpack.c.l.b16 %v4047
    %v5156 = vunpack.c.h.b16 %v4047
    %v5157 = vunpack.c.l.b16 %v4048
    %v5158 = vunpack.c.h.b16 %v4048
    %v5159 = vunpack.c.l.b16 %v4049
    %v5160 = vunpack.c.h.b16 %v4049
    %v5161 = vunpack.c.l.b16 %v4050
    %v5162 = vunpack.c.h.b16 %v4050
    %v5163 = vunpack.c.l.b16 %v4051
    %v5164 = vunpack.c.h.b16 %v4051
    %v5165 = vunpack.c.l.b16 %v4052
    %v5166 = vunpack.c.h.b16 %v4052
    %v5167 = vunpack.c.l.b16 %v4053
    %v5168 = vunpack.c.h.b16 %v4053
    %v5169 = vunpack.c.l.b16 %v4054
    %v5170 = vunpack.c.h.b16 %v4054
    %v5171 = vunpack.c.l.b16 %v4055
    %v5172 = vunpack.c.h.b16 %v4055
    %v5173 = vunpack.c.l.b16 %v4056
    %v5174 = vunpack.c.h.b16 %v4056
    %v5175 = vunpack.c.l.b16 %v4057
    %v5176 = vunpack.c.h.b16 %v4057
    %v5177 = vunpack.c.l.b16 %v4058
    %v5178 = vunpack.c.h.b16 %v4058
    %v5179 = vunpack.c.l.b16 %v4059
    %v5180 = vunpack.c.h.b16 %v4059
    %v5181 = vunpack.c.l.b16 %v4060
    %v5182 = vunpack.c.h.b16 %v4060
    %v5183 = vunpack.c.l.b16 %v4061
    %v5184 = vunpack.c.h.b16 %v4061
    %v5185 = vunpack.c.l.b16 %v4062
    %v5186 = vunpack.c.h.b16 %v4062
    %v5187 = vunpack.c.l.b16 %v4063
    %v5188 = vunpack.c.h.b16 %v4063
    %v5189 = vunpack.c.l.b16 %v4064
    %v5190 = vunpack.c.h.b16 %v4064
    %v5191 = vunpack.c.l.b16 %v4065
    %v5192 = vunpack.c.h.b16 %v4065
    %v5193 = vunpack.c.l.b16 %v4066
    %v5194 = vunpack.c.h.b16 %v4066
    %v5195 = vunpack.c.l.b16 %v4067
    %v5196 = vunpack.c.h.b16 %v4067
    %v5197 = vunpack.c.l.b16 %v4068
    %v5198 = vunpack.c.h.b16 %v4068
    %v5199 = vunpack.c.l.b16 %v4069
    %v5200 = vunpack.c.h.b16 %v4069
    %v5201 = vunpack.c.l.b16 %v4070
    %v5202 = vunpack.c.h.b16 %v4070
    %v5203 = vunpack.c.l.b16 %v4071
    %v5204 = vunpack.c.h.b16 %v4071
    %v5205 = vunpack.c.l.b16 %v4072
    %v5206 = vunpack.c.h.b16 %v4072
    %v5207 = vunpack.c.l.b16 %v4073
    %v5208 = vunpack.c.h.b16 %v4073
    %v5209 = vunpack.c.l.b16 %v4074
    %v5210 = vunpack.c.h.b16 %v4074
    %v5211 = vunpack.c.l.b16 %v4075
    %v5212 = vunpack.c.h.b16 %v4075
    %v5213 = vunpack.c.l.b16 %v4076
    %v5214 = vunpack.c.h.b16 %v4076
    %v5215 = vunpack.c.l.b16 %v4077
    %v5216 = vunpack.c.h.b16 %v4077
    %v5217 = vunpack.c.l.b16 %v4078
    %v5218 = vunpack.c.h.b16 %v4078
    %v5219 = vunpack.c.l.b16 %v4079
    %v5220 = vunpack.c.h.b16 %v4079
    %v5221 = vunpack.c.l.b16 %v4080
    %v5222 = vunpack.c.h.b16 %v4080
    %v5223 = vunpack.c.l.b16 %v4081
    %v5224 = vunpack.c.h.b16 %v4081
    %v5225 = vunpack.c.l.b16 %v4082
    %v5226 = vunpack.c.h.b16 %v4082
    %v5227 = vunpack.c.l.b16 %v4083
    %v5228 = vunpack.c.h.b16 %v4083
    %v5229 = vunpack.c.l.b16 %v4084
    %v5230 = vunpack.c.h.b16 %v4084
    %v5231 = vunpack.c.l.b16 %v4085
    %v5232 = vunpack.c.h.b16 %v4085
    %v5233 = vunpack.c.l.b16 %v4086
    %v5234 = vunpack.c.h.b16 %v4086
    %v5235 = vunpack.c.l.b16 %v4087
    %v5236 = vunpack.c.h.b16 %v4087
    %v5237 = vunpack.c.l.b16 %v4088
    %v5238 = vunpack.c.h.b16 %v4088
    %v5239 = vunpack.c.l.b16 %v4089
    %v5240 = vunpack.c.h.b16 %v4089
    %v5241 = vunpack.c.l.b16 %v4090
    %v5242 = vunpack.c.h.b16 %v4090
    %v5243 = vunpack.c.l.b16 %v4091
    %v5244 = vunpack.c.h.b16 %v4091
    %v5245 = vunpack.c.l.b16 %v4092
    %v5246 = vunpack.c.h.b16 %v4092
    %v5247 = vunpack.c.l.b16 %v4093
    %v5248 = vunpack.c.h.b16 %v4093
    %v5249 = vunpack.c.l.b16 %v4094
    %v5250 = vunpack.c.h.b16 %v4094
    %v5251 = vunpack.c.l.b16 %v4095
    %v5252 = vunpack.c.h.b16 %v4095
    %v5253 = vunpack.c.l.b16 %v4096
    %v5254 = vunpack.c.h.b16 %v4096
    %v5255 = vunpack.c.l.b16 %v4097
    %v5256 = vunpack.c.h.b16 %v4097
    %v5257 = vunpack.c.l.b16 %v4098
    %v5258 = vunpack.c.h.b16 %v4098
    %v5259 = vunpack.c.l.b16 %v4099
    %v5260 = vunpack.c.h.b16 %v4099
    %v5261 = vunpack.c.l.b16 %v4100
    %v5262 = vunpack.c.h.b16 %v4100
    %v5263 = vunpack.c.l.b16 %v4101
    %v5264 = vunpack.c.h.b16 %v4101
    %v5265 = vunpack.c.l.b16 %v4102
    %v5266 = vunpack.c.h.b16 %v4102
    %v5267 = vunpack.c.l.b16 %v4103
    %v5268 = vunpack.c.h.b16 %v4103
    %v5269 = vunpack.c.l.b16 %v4104
    %v5270 = vunpack.c.h.b16 %v4104
    %v5271 = vunpack.c.l.b16 %v4105
    %v5272 = vunpack.c.h.b16 %v4105
    %v5273 = vunpack.c.l.b16 %v4106
    %v5274 = vunpack.c.h.b16 %v4106
    %v5275 = vunpack.c.l.b16 %v4107
    %v5276 = vunpack.c.h.b16 %v4107
    %v5277 = vunpack.c.l.b16 %v4108
    %v5278 = vunpack.c.h.b16 %v4108
    %v5279 = vunpack.c.l.b16 %v4109
    %v5280 = vunpack.c.h.b16 %v4109
    %v5281 = vunpack.c.l.b16 %v4110
    %v5282 = vunpack.c.h.b16 %v4110
    %v5283 = vunpack.c.l.b16 %v4111
    %v5284 = vunpack.c.h.b16 %v4111
    %v5285 = vunpack.c.l.b16 %v4112
    %v5286 = vunpack.c.h.b16 %v4112
    %v5287 = vunpack.c.l.b16 %v4113
    %v5288 = vunpack.c.h.b16 %v4113
    %v5289 = vunpack.c.l.b16 %v4114
    %v5290 = vunpack.c.h.b16 %v4114
    %v5291 = vunpack.c.l.b16 %v4115
    %v5292 = vunpack.c.h.b16 %v4115
    %v5293 = vunpack.c.l.b16 %v4116
    %v5294 = vunpack.c.h.b16 %v4116
    %v5295 = vunpack.c.l.b16 %v4117
    %v5296 = vunpack.c.h.b16 %v4117
    %v5297 = vunpack.c.l.b16 %v4118
    %v5298 = vunpack.c.h.b16 %v4118
    %v5299 = vunpack.c.l.b16 %v4119
    %v5300 = vunpack.c.h.b16 %v4119
    %v5301 = vunpack.c.l.b16 %v4120
    %v5302 = vunpack.c.h.b16 %v4120
    %v5303 = vunpack.c.l.b16 %v4121
    %v5304 = vunpack.c.h.b16 %v4121
    %v5305 = vunpack.c.l.b16 %v4122
    %v5306 = vunpack.c.h.b16 %v4122
    %v5307 = vunpack.c.l.b16 %v4123
    %v5308 = vunpack.c.h.b16 %v4123
    %v5309 = vunpack.c.l.b16 %v4124
    %v5310 = vunpack.c.h.b16 %v4124
    %v5311 = vunpack.c.l.b16 %v4125
    %v5312 = vunpack.c.h.b16 %v4125
    %v5313 = vunpack.c.l.b16 %v4126
    %v5314 = vunpack.c.h.b16 %v4126
    %v5315 = vunpack.c.l.b16 %v4127
    %v5316 = vunpack.c.h.b16 %v4127
    %v5317 = vunpack.c.l.b16 %v4128
    %v5318 = vunpack.c.h.b16 %v4128
    %v5319 = vunpack.c.l.b16 %v4129
    %v5320 = vunpack.c.h.b16 %v4129
    %v5321 = vunpack.c.l.b16 %v4130
    %v5322 = vunpack.c.h.b16 %v4130
    %v5323 = vunpack.c.l.b16 %v4131
    %v5324 = vunpack.c.h.b16 %v4131
    %v5325 = vunpack.c.l.b16 %v4132
    %v5326 = vunpack.c.h.b16 %v4132
    %v5327 = vunpack.c.l.b16 %v4133
    %v5328 = vunpack.c.h.b16 %v4133
    %v5329 = vunpack.c.l.b16 %v4134
    %v5330 = vunpack.c.h.b16 %v4134
    %v5331 = vunpack.c.l.b16 %v4135
    %v5332 = vunpack.c.h.b16 %v4135
    %v5333 = vunpack.c.l.b16 %v4136
    %v5334 = vunpack.c.h.b16 %v4136
    %v5335 = vunpack.c.l.b16 %v4137
    %v5336 = vunpack.c.h.b16 %v4137
    %v5337 = vunpack.c.l.b16 %v4138
    %v5338 = vunpack.c.h.b16 %v4138
    %v5339 = vunpack.c.l.b16 %v4139
    %v5340 = vunpack.c.h.b16 %v4139
    %v5341 = vunpack.c.l.b16 %v4140
    %v5342 = vunpack.c.h.b16 %v4140
    %v5343 = vunpack.c.l.b16 %v4141
    %v5344 = vunpack.c.h.b16 %v4141
    %v5345 = vunpack.c.l.b16 %v4142
    %v5346 = vunpack.c.h.b16 %v4142
    %v5347 = vunpack.c.l.b16 %v4143
    %v5348 = vunpack.c.h.b16 %v4143
    %v5349 = vunpack.c.l.b16 %v4144
    %v5350 = vunpack.c.h.b16 %v4144
    %v5351 = vunpack.c.l.b16 %v4145
    %v5352 = vunpack.c.h.b16 %v4145
    %v5353 = vunpack.c.l.b16 %v4146
    %v5354 = vunpack.c.h.b16 %v4146
    %v5355 = vunpack.c.l.b16 %v4147
    %v5356 = vunpack.c.h.b16 %v4147
    %v5357 = vunpack.c.l.b16 %v4148
    %v5358 = vunpack.c.h.b16 %v4148
    %v5359 = vunpack.c.l.b16 %v4149
    %v5360 = vunpack.c.h.b16 %v4149
    %v5361 = vunpack.c.l.b16 %v4150
    %v5362 = vunpack.c.h.b16 %v4150
    %v5363 = vunpack.c.l.b16 %v4151
    %v5364 = vunpack.c.h.b16 %v4151
    %v5365 = vunpack.c.l.b16 %v4152
    %v5366 = vunpack.c.h.b16 %v4152
    %v5367 = vunpack.c.l.b16 %v4153
    %v5368 = vunpack.c.h.b16 %v4153
    %v5369 = vunpack.c.l.b16 %v4154
    %v5370 = vunpack.c.h.b16 %v4154
    %v5371 = vunpack.c.l.b16 %v4155
    %v5372 = vunpack.c.h.b16 %v4155
    %v5373 = vunpack.c.l.b16 %v4156
    %v5374 = vunpack.c.h.b16 %v4156
    %v5375 = vunpack.c.l.b16 %v4157
    %v5376 = vunpack.c.h.b16 %v4157
    %v5377 = vunpack.c.l.b16 %v4158
    %v5378 = vunpack.c.h.b16 %v4158
    %v5379 = vunpack.c.l.b16 %v4159
    %v5380 = vunpack.c.h.b16 %v4159
    %v5381 = vunpack.c.l.b16 %v4160
    %v5382 = vunpack.c.h.b16 %v4160
    %v5383 = vunpack.c.l.b16 %v4161
    %v5384 = vunpack.c.h.b16 %v4161
    %v5385 = vunpack.c.l.b16 %v4162
    %v5386 = vunpack.c.h.b16 %v4162
    %v5387 = vunpack.c.l.b16 %v4163
    %v5388 = vunpack.c.h.b16 %v4163
    %v5389 = vunpack.c.l.b16 %v4164
    %v5390 = vunpack.c.h.b16 %v4164
    %v5391 = vunpack.c.l.b16 %v4165
    %v5392 = vunpack.c.h.b16 %v4165
    %v5393 = vunpack.c.l.b16 %v4166
    %v5394 = vunpack.c.h.b16 %v4166
    %v5395 = vunpack.c.l.b16 %v4167
    %v5396 = vunpack.c.h.b16 %v4167
    %v5397 = vunpack.c.l.b16 %v4168
    %v5398 = vunpack.c.h.b16 %v4168
    %v5399 = vunpack.c.l.b16 %v4169
    %v5400 = vunpack.c.h.b16 %v4169
    %v5401 = vunpack.c.l.b16 %v4170
    %v5402 = vunpack.c.h.b16 %v4170
    %v5403 = vunpack.c.l.b16 %v4171
    %v5404 = vunpack.c.h.b16 %v4171
    %v5405 = vunpack.c.l.b16 %v4172
    %v5406 = vunpack.c.h.b16 %v4172
    %v5407 = vunpack.c.l.b16 %v4173
    %v5408 = vunpack.c.h.b16 %v4173
    %v5409 = vunpack.c.l.b16 %v4174
    %v5410 = vunpack.c.h.b16 %v4174
    %v5411 = vunpack.c.l.b16 %v4175
    %v5412 = vunpack.c.h.b16 %v4175
    %v5413 = vunpack.c.l.b16 %v4176
    %v5414 = vunpack.c.h.b16 %v4176
    %v5415 = vunpack.c.l.b16 %v4177
    %v5416 = vunpack.c.h.b16 %v4177
    %v5417 = vunpack.c.l.b16 %v4178
    %v5418 = vunpack.c.h.b16 %v4178
    %v5419 = vunpack.c.l.b16 %v4179
    %v5420 = vunpack.c.h.b16 %v4179
    %v5421 = vunpack.c.l.b16 %v4180
    %v5422 = vunpack.c.h.b16 %v4180
    %v5423 = vunpack.c.l.b16 %v4181
    %v5424 = vunpack.c.h.b16 %v4181
    %v5425 = vunpack.c.l.b16 %v4182
    %v5426 = vunpack.c.h.b16 %v4182
    %v5427 = vunpack.c.l.b16 %v4183
    %v5428 = vunpack.c.h.b16 %v4183
    %v5429 = vunpack.c.l.b16 %v4184
    %v5430 = vunpack.c.h.b16 %v4184
    %v5431 = vunpack.c.l.b16 %v4185
    %v5432 = vunpack.c.h.b16 %v4185
    %v5433 = vunpack.c.l.b16 %v4186
    %v5434 = vunpack.c.h.b16 %v4186
    %v5435 = vunpack.c.l.b16 %v4187
    %v5436 = vunpack.c.h.b16 %v4187
    %v5437 = vunpack.c.l.b16 %v4188
    %v5438 = vunpack.c.h.b16 %v4188
    %v5439 = vunpack.c.l.b16 %v4189
    %v5440 = vunpack.c.h.b16 %v4189
    %v5441 = vunpack.c.l.b16 %v4190
    %v5442 = vunpack.c.h.b16 %v4190
    %v5443 = vunpack.c.l.b16 %v4191
    %v5444 = vunpack.c.h.b16 %v4191
    %v5445 = vunpack.c.l.b16 %v4192
    %v5446 = vunpack.c.h.b16 %v4192
    %v5447 = vunpack.c.l.b16 %v4193
    %v5448 = vunpack.c.h.b16 %v4193
    %v5449 = vunpack.c.l.b16 %v4194
    %v5450 = vunpack.c.h.b16 %v4194
    %v5451 = vunpack.c.l.b16 %v4195
    %v5452 = vunpack.c.h.b16 %v4195
    %v5453 = vunpack.c.l.b16 %v4196
    %v5454 = vunpack.c.h.b16 %v4196
    %v5455 = vunpack.c.l.b16 %v4197
    %v5456 = vunpack.c.h.b16 %v4197
    %v5457 = vunpack.c.l.b16 %v4198
    %v5458 = vunpack.c.h.b16 %v4198
    %v5459 = vunpack.c.l.b16 %v4199
    %v5460 = vunpack.c.h.b16 %v4199
    %v5461 = vunpack.c.l.b16 %v4200
    %v5462 = vunpack.c.h.b16 %v4200
    %v5463 = vunpack.c.l.b16 %v4201
    %v5464 = vunpack.c.h.b16 %v4201
    %v5465 = vunpack.c.l.b16 %v4202
    %v5466 = vunpack.c.h.b16 %v4202
    %v5467 = vunpack.c.l.b16 %v4203
    %v5468 = vunpack.c.h.b16 %v4203
    %v5469 = vunpack.c.l.b16 %v4204
    %v5470 = vunpack.c.h.b16 %v4204
    %v5471 = vunpack.c.l.b16 %v4205
    %v5472 = vunpack.c.h.b16 %v4205
    %v5473 = vunpack.c.l.b16 %v4206
    %v5474 = vunpack.c.h.b16 %v4206
    %v5475 = vunpack.c.l.b16 %v4207
    %v5476 = vunpack.c.h.b16 %v4207
    %v5477 = vunpack.c.l.b16 %v4208
    %v5478 = vunpack.c.h.b16 %v4208
    %v5479 = vunpack.c.l.b16 %v4209
    %v5480 = vunpack.c.h.b16 %v4209
    %v5481 = vunpack.c.l.b16 %v4210
    %v5482 = vunpack.c.h.b16 %v4210
    %v5483 = vunpack.c.l.b16 %v4211
    %v5484 = vunpack.c.h.b16 %v4211
    %v5485 = vunpack.c.l.b16 %v4212
    %v5486 = vunpack.c.h.b16 %v4212
    %v5487 = vunpack.c.l.b16 %v4213
    %v5488 = vunpack.c.h.b16 %v4213
    %v5489 = vunpack.c.l.b16 %v4214
    %v5490 = vunpack.c.h.b16 %v4214
    %v5491 = vunpack.c.l.b16 %v4215
    %v5492 = vunpack.c.h.b16 %v4215
    %v5493 = vunpack.c.l.b16 %v4216
    %v5494 = vunpack.c.h.b16 %v4216
    %v5495 = vunpack.c.l.b16 %v4217
    %v5496 = vunpack.c.h.b16 %v4217
    %v5497 = vunpack.c.l.b16 %v4218
    %v5498 = vunpack.c.h.b16 %v4218
    %v5499 = vunpack.c.l.b16 %v4219
    %v5500 = vunpack.c.h.b16 %v4219
    %v5501 = vunpack.c.l.b16 %v4220
    %v5502 = vunpack.c.h.b16 %v4220
    %v5503 = vunpack.c.l.b16 %v4221
    %v5504 = vunpack.c.h.b16 %v4221
    %v5505 = vunpack.c.l.b16 %v4222
    %v5506 = vunpack.c.h.b16 %v4222
    %v5507 = vunpack.c.l.b16 %v4223
    %v5508 = vunpack.c.h.b16 %v4223
    %v5509 = vunpack.c.l.b16 %v4224
    %v5510 = vunpack.c.h.b16 %v4224
    %v5511 = vunpack.c.l.b16 %v4225
    %v5512 = vunpack.c.h.b16 %v4225
    %v5513 = vunpack.c.l.b16 %v4226
    %v5514 = vunpack.c.h.b16 %v4226
    %v5515 = vunpack.c.l.b16 %v4227
    %v5516 = vunpack.c.h.b16 %v4227
    %v5517 = vunpack.c.l.b16 %v4228
    %v5518 = vunpack.c.h.b16 %v4228
    %v5519 = vunpack.c.l.b16 %v4229
    %v5520 = vunpack.c.h.b16 %v4229
    %v5521 = vunpack.c.l.b16 %v4230
    %v5522 = vunpack.c.h.b16 %v4230
    %v5523 = vunpack.c.l.b16 %v4231
    %v5524 = vunpack.c.h.b16 %v4231
    %v5525 = vunpack.c.l.b16 %v4232
    %v5526 = vunpack.c.h.b16 %v4232
    %v5527 = vunpack.c.l.b16 %v4233
    %v5528 = vunpack.c.h.b16 %v4233
    %v5529 = vunpack.c.l.b16 %v4234
    %v5530 = vunpack.c.h.b16 %v4234
    %v5531 = vunpack.c.l.b16 %v4235
    %v5532 = vunpack.c.h.b16 %v4235
    %v5533 = vunpack.c.l.b16 %v4236
    %v5534 = vunpack.c.h.b16 %v4236
    %v5535 = vunpack.c.l.b16 %v4237
    %v5536 = vunpack.c.h.b16 %v4237
    %v5537 = vunpack.c.l.b16 %v4238
    %v5538 = vunpack.c.h.b16 %v4238
    %v5539 = vunpack.c.l.b16 %v4239
    %v5540 = vunpack.c.h.b16 %v4239
    %v5541 = vunpack.c.l.b16 %v4240
    %v5542 = vunpack.c.h.b16 %v4240
    %v5543 = vunpack.c.l.b16 %v4241
    %v5544 = vunpack.c.h.b16 %v4241
    %v5545 = vunpack.c.l.b16 %v4242
    %v5546 = vunpack.c.h.b16 %v4242
    %v5547 = vunpack.c.l.b16 %v4243
    %v5548 = vunpack.c.h.b16 %v4243
    %v5549 = vunpack.c.l.b16 %v4244
    %v5550 = vunpack.c.h.b16 %v4244
    %v5551 = vunpack.c.l.b16 %v4245
    %v5552 = vunpack.c.h.b16 %v4245
    %v5553 = vunpack.c.l.b16 %v4246
    %v5554 = vunpack.c.h.b16 %v4246
    %v5555 = vunpack.c.l.b16 %v4247
    %v5556 = vunpack.c.h.b16 %v4247
    %v5557 = vunpack.c.l.b16 %v4248
    %v5558 = vunpack.c.h.b16 %v4248
    %v5559 = vunpack.c.l.b16 %v4249
    %v5560 = vunpack.c.h.b16 %v4249
    %v5561 = vunpack.c.l.b16 %v4250
    %v5562 = vunpack.c.h.b16 %v4250
    %v5563 = vunpack.c.l.b16 %v4251
    %v5564 = vunpack.c.h.b16 %v4251
    %v5565 = vunpack.c.l.b16 %v4252
    %v5566 = vunpack.c.h.b16 %v4252
    %v5567 = vunpack.c.l.b16 %v4253
    %v5568 = vunpack.c.h.b16 %v4253
    %v5569 = vunpack.c.l.b16 %v4254
    %v5570 = vunpack.c.h.b16 %v4254
    %v5571 = vunpack.c.l.b16 %v4255
    %v5572 = vunpack.c.h.b16 %v4255
    %v5573 = vunpack.c.l.b16 %v4256
    %v5574 = vunpack.c.h.b16 %v4256
    %v5575 = vunpack.c.l.b16 %v4257
    %v5576 = vunpack.c.h.b16 %v4257
    %v5577 = vunpack.c.l.b16 %v4258
    %v5578 = vunpack.c.h.b16 %v4258
    %v5579 = vunpack.c.l.b16 %v4259
    %v5580 = vunpack.c.h.b16 %v4259
    %v5581 = vunpack.c.l.b16 %v4260
    %v5582 = vunpack.c.h.b16 %v4260
    %v5583 = vunpack.c.l.b16 %v4261
    %v5584 = vunpack.c.h.b16 %v4261
    %v5585 = vunpack.c.l.b16 %v4262
    %v5586 = vunpack.c.h.b16 %v4262
    %v5587 = vunpack.c.l.b16 %v4263
    %v5588 = vunpack.c.h.b16 %v4263
    %v5589 = vunpack.c.l.b16 %v4264
    %v5590 = vunpack.c.h.b16 %v4264
    %v5591 = vunpack.c.l.b16 %v4265
    %v5592 = vunpack.c.h.b16 %v4265
    %v5593 = vunpack.c.l.b16 %v4266
    %v5594 = vunpack.c.h.b16 %v4266
    %v5595 = vunpack.c.l.b16 %v4267
    %v5596 = vunpack.c.h.b16 %v4267
    %v5597 = vunpack.c.l.b16 %v4268
    %v5598 = vunpack.c.h.b16 %v4268
    %v5599 = vunpack.c.l.b16 %v4269
    %v5600 = vunpack.c.h.b16 %v4269
    %v5601 = vunpack.c.l.b16 %v4270
    %v5602 = vunpack.c.h.b16 %v4270
    %v5603 = vunpack.c.l.b16 %v4271
    %v5604 = vunpack.c.h.b16 %v4271
    %v5605 = vunpack.c.l.b16 %v4272
    %v5606 = vunpack.c.h.b16 %v4272
    %v5607 = vunpack.c.l.b16 %v4273
    %v5608 = vunpack.c.h.b16 %v4273
    %v5609 = vunpack.c.l.b16 %v4274
    %v5610 = vunpack.c.h.b16 %v4274
    %v5611 = vunpack.c.l.b16 %v4275
    %v5612 = vunpack.c.h.b16 %v4275
    %v5613 = vunpack.c.l.b16 %v4276
    %v5614 = vunpack.c.h.b16 %v4276
    %v5615 = vunpack.c.l.b16 %v4277
    %v5616 = vunpack.c.h.b16 %v4277
    %v5617 = vunpack.c.l.b16 %v4278
    %v5618 = vunpack.c.h.b16 %v4278
    %v5619 = vunpack.c.l.b16 %v4279
    %v5620 = vunpack.c.h.b16 %v4279
    %v5621 = vunpack.c.l.b16 %v4280
    %v5622 = vunpack.c.h.b16 %v4280
    %v5623 = vunpack.c.l.b16 %v4281
    %v5624 = vunpack.c.h.b16 %v4281
    %v5625 = vunpack.c.l.b16 %v4282
    %v5626 = vunpack.c.h.b16 %v4282
    %v5627 = vunpack.c.l.b16 %v4283
    %v5628 = vunpack.c.h.b16 %v4283
    %v5629 = vunpack.c.l.b16 %v4284
    %v5630 = vunpack.c.h.b16 %v4284
    %v5631 = vunpack.c.l.b16 %v4285
    %v5632 = vunpack.c.h.b16 %v4285
    %v5633 = vunpack.c.l.b16 %v4286
    %v5634 = vunpack.c.h.b16 %v4286
    %v5635 = vunpack.c.l.b16 %v4287
    %v5636 = vunpack.c.h.b16 %v4287
    %v5637 = vunpack.c.l.b16 %v4288
    %v5638 = vunpack.c.h.b16 %v4288
    %v5639 = vunpack.c.l.b16 %v4289
    %v5640 = vunpack.c.h.b16 %v4289
    %v5641 = vunpack.c.l.b16 %v4290
    %v5642 = vunpack.c.h.b16 %v4290
    %v5643 = vunpack.c.l.b16 %v4291
    %v5644 = vunpack.c.h.b16 %v4291
    %v5645 = vunpack.c.l.b16 %v4292
    %v5646 = vunpack.c.h.b16 %v4292
    %v5647 = vunpack.c.l.b16 %v4293
    %v5648 = vunpack.c.h.b16 %v4293
    %v5649 = vunpack.c.l.b16 %v4294
    %v5650 = vunpack.c.h.b16 %v4294
    %v5651 = vunpack.c.l.b16 %v4295
    %v5652 = vunpack.c.h.b16 %v4295
    %v5653 = vunpack.c.l.b16 %v4296
    %v5654 = vunpack.c.h.b16 %v4296
    %v5655 = vunpack.c.l.b16 %v4297
    %v5656 = vunpack.c.h.b16 %v4297
    %v5657 = vunpack.c.l.b16 %v4298
    %v5658 = vunpack.c.h.b16 %v4298
    %v5659 = vunpack.c.l.b16 %v4299
    %v5660 = vunpack.c.h.b16 %v4299
    %v5661 = vunpack.c.l.b16 %v4300
    %v5662 = vunpack.c.h.b16 %v4300
    %v5663 = vunpack.c.l.b16 %v4301
    %v5664 = vunpack.c.h.b16 %v4301
    %v5665 = vunpack.c.l.b16 %v4302
    %v5666 = vunpack.c.h.b16 %v4302
    %v5667 = vunpack.c.l.b16 %v4303
    %v5668 = vunpack.c.h.b16 %v4303
    %v5669 = vunpack.c.l.b16 %v4304
    %v5670 = vunpack.c.h.b16 %v4304
    %v5671 = vunpack.c.l.b16 %v4305
    %v5672 = vunpack.c.h.b16 %v4305
    %v5673 = vunpack.c.l.b16 %v4306
    %v5674 = vunpack.c.h.b16 %v4306
    %v5675 = vunpack.c.l.b16 %v4307
    %v5676 = vunpack.c.h.b16 %v4307
    %v5677 = vunpack.c.l.b16 %v4308
    %v5678 = vunpack.c.h.b16 %v4308
    %v5679 = vunpack.c.l.b16 %v4309
    %v5680 = vunpack.c.h.b16 %v4309
    %v5681 = vunpack.c.l.b16 %v4310
    %v5682 = vunpack.c.h.b16 %v4310
    %v5683 = vunpack.c.l.b16 %v4311
    %v5684 = vunpack.c.h.b16 %v4311
    %v5685 = vunpack.c.l.b16 %v4312
    %v5686 = vunpack.c.h.b16 %v4312
    %v5687 = vunpack.c.l.b16 %v4313
    %v5688 = vunpack.c.h.b16 %v4313
    %v5689 = vunpack.c.l.b16 %v4314
    %v5690 = vunpack.c.h.b16 %v4314
    %v5691 = vunpack.c.l.b16 %v4315
    %v5692 = vunpack.c.h.b16 %v4315
    %v5693 = vunpack.c.l.b16 %v4316
    %v5694 = vunpack.c.h.b16 %v4316
    %v5695 = vunpack.c.l.b16 %v4317
    %v5696 = vunpack.c.h.b16 %v4317
    %v5697 = vunpack.c.l.b16 %v4318
    %v5698 = vunpack.c.h.b16 %v4318
    %v5699 = vunpack.c.l.b16 %v4319
    %v5700 = vunpack.c.h.b16 %v4319
    %v5701 = vunpack.c.l.b16 %v4320
    %v5702 = vunpack.c.h.b16 %v4320
    %v5703 = vunpack.c.l.b16 %v4321
    %v5704 = vunpack.c.h.b16 %v4321
    %v5705 = vunpack.c.l.b16 %v4322
    %v5706 = vunpack.c.h.b16 %v4322
    %v5707 = vunpack.c.l.b16 %v4323
    %v5708 = vunpack.c.h.b16 %v4323
    %v5709 = vunpack.c.l.b16 %v4324
    %v5710 = vunpack.c.h.b16 %v4324
    %v5711 = vunpack.c.l.b16 %v4325
    %v5712 = vunpack.c.h.b16 %v4325
    %v5713 = vunpack.c.l.b16 %v4326
    %v5714 = vunpack.c.h.b16 %v4326
    %v5715 = vunpack.c.l.b16 %v4327
    %v5716 = vunpack.c.h.b16 %v4327
    %v5717 = vunpack.c.l.b16 %v4328
    %v5718 = vunpack.c.h.b16 %v4328
    %v5719 = vunpack.c.l.b16 %v4329
    %v5720 = vunpack.c.h.b16 %v4329
    %v5721 = vunpack.c.l.b16 %v4330
    %v5722 = vunpack.c.h.b16 %v4330
    %v5723 = vunpack.c.l.b16 %v4331
    %v5724 = vunpack.c.h.b16 %v4331
    %v5725 = vunpack.c.l.b16 %v4332
    %v5726 = vunpack.c.h.b16 %v4332
    %v5727 = vunpack.c.l.b16 %v4333
    %v5728 = vunpack.c.h.b16 %v4333
    %v5729 = vunpack.c.l.b16 %v4334
    %v5730 = vunpack.c.h.b16 %v4334
    %v5731 = vunpack.c.l.b16 %v4335
    %v5732 = vunpack.c.h.b16 %v4335
    %v5733 = vunpack.c.l.b16 %v4336
    %v5734 = vunpack.c.h.b16 %v4336
    %v5735 = vunpack.c.l.b16 %v4337
    %v5736 = vunpack.c.h.b16 %v4337
    %v5737 = vunpack.c.l.b16 %v4338
    %v5738 = vunpack.c.h.b16 %v4338
    %v5739 = vunpack.c.l.b16 %v4339
    %v5740 = vunpack.c.h.b16 %v4339
    %v5741 = vunpack.c.l.b16 %v4340
    %v5742 = vunpack.c.h.b16 %v4340
    %v5743 = vunpack.c.l.b16 %v4341
    %v5744 = vunpack.c.h.b16 %v4341
    %v5745 = vunpack.c.l.b16 %v4342
    %v5746 = vunpack.c.h.b16 %v4342
    %v5747 = vunpack.c.l.b16 %v4343
    %v5748 = vunpack.c.h.b16 %v4343
    %v5749 = vunpack.c.l.b16 %v4344
    %v5750 = vunpack.c.h.b16 %v4344
    %v5751 = vunpack.c.l.b16 %v4345
    %v5752 = vunpack.c.h.b16 %v4345
    %v5753 = vunpack.c.l.b16 %v4346
    %v5754 = vunpack.c.h.b16 %v4346
    %v5755 = vunpack.c.l.b16 %v4347
    %v5756 = vunpack.c.h.b16 %v4347
    %v5757 = vunpack.c.l.b16 %v4348
    %v5758 = vunpack.c.h.b16 %v4348
    %v5759 = vunpack.c.l.b16 %v4349
    %v5760 = vunpack.c.h.b16 %v4349
    %v5761 = vunpack.c.l.b16 %v4350
    %v5762 = vunpack.c.h.b16 %v4350
    %v5763 = vunpack.c.l.b16 %v4351
    %v5764 = vunpack.c.h.b16 %v4351
    %v5765 = vunpack.c.l.b16 %v4352
    %v5766 = vunpack.c.h.b16 %v4352
    %v5767 = vunpack.c.l.b16 %v4353
    %v5768 = vunpack.c.h.b16 %v4353
    %v5769 = vunpack.c.l.b16 %v4354
    %v5770 = vunpack.c.h.b16 %v4354
    %v5771 = vunpack.c.l.b16 %v4355
    %v5772 = vunpack.c.h.b16 %v4355
    %v5773 = vunpack.c.l.b16 %v4356
    %v5774 = vunpack.c.h.b16 %v4356
    %v5775 = vunpack.c.l.b16 %v4357
    %v5776 = vunpack.c.h.b16 %v4357
    %v5777 = vunpack.c.l.b16 %v4358
    %v5778 = vunpack.c.h.b16 %v4358
    %v5779 = vunpack.c.l.b16 %v4359
    %v5780 = vunpack.c.h.b16 %v4359
    %v5781 = vunpack.c.l.b16 %v4360
    %v5782 = vunpack.c.h.b16 %v4360
    %v5783 = vunpack.c.l.b16 %v4361
    %v5784 = vunpack.c.h.b16 %v4361
    %v5785 = vunpack.c.l.b16 %v4362
    %v5786 = vunpack.c.h.b16 %v4362
    %v5787 = vunpack.c.l.b16 %v4363
    %v5788 = vunpack.c.h.b16 %v4363
    %v5789 = vunpack.c.l.b16 %v4364
    %v5790 = vunpack.c.h.b16 %v4364
    %v5791 = vunpack.c.l.b16 %v4365
    %v5792 = vunpack.c.h.b16 %v4365
    %v5793 = vunpack.c.l.b16 %v4366
    %v5794 = vunpack.c.h.b16 %v4366
    %v5795 = vunpack.c.l.b16 %v4367
    %v5796 = vunpack.c.h.b16 %v4367
    %v5797 = vunpack.c.l.b16 %v4368
    %v5798 = vunpack.c.h.b16 %v4368
    %v5799 = vunpack.c.l.b16 %v4369
    %v5800 = vunpack.c.h.b16 %v4369
    %v5801 = vunpack.c.l.b16 %v4370
    %v5802 = vunpack.c.h.b16 %v4370
    %v5803 = vunpack.c.l.b16 %v4371
    %v5804 = vunpack.c.h.b16 %v4371
    %v5805 = vunpack.c.l.b16 %v4372
    %v5806 = vunpack.c.h.b16 %v4372
    %v5807 = vunpack.c.l.b16 %v4373
    %v5808 = vunpack.c.h.b16 %v4373
    %v5809 = vunpack.c.l.b16 %v4374
    %v5810 = vunpack.c.h.b16 %v4374
    %v5811 = vunpack.c.l.b16 %v4375
    %v5812 = vunpack.c.h.b16 %v4375
    %v5813 = vunpack.c.l.b16 %v4376
    %v5814 = vunpack.c.h.b16 %v4376
    %v5815 = vunpack.c.l.b16 %v4377
    %v5816 = vunpack.c.h.b16 %v4377
    %v5817 = vunpack.c.l.b16 %v4378
    %v5818 = vunpack.c.h.b16 %v4378
    %v5819 = vunpack.c.l.b16 %v4379
    %v5820 = vunpack.c.h.b16 %v4379
    %v5821 = vunpack.c.l.b16 %v4380
    %v5822 = vunpack.c.h.b16 %v4380
    %v5823 = vunpack.c.l.b16 %v4381
    %v5824 = vunpack.c.h.b16 %v4381
    %v5825 = vunpack.c.l.b16 %v4382
    %v5826 = vunpack.c.h.b16 %v4382
    %v5827 = vunpack.c.l.b16 %v4383
    %v5828 = vunpack.c.h.b16 %v4383
    %v5829 = vunpack.c.l.b16 %v4384
    %v5830 = vunpack.c.h.b16 %v4384
    %v5831 = vunpack.c.l.b16 %v4385
    %v5832 = vunpack.c.h.b16 %v4385
    %v5833 = vunpack.c.l.b16 %v4386
    %v5834 = vunpack.c.h.b16 %v4386
    %v5835 = vunpack.c.l.b16 %v4387
    %v5836 = vunpack.c.h.b16 %v4387
    %v5837 = vunpack.c.l.b16 %v4388
    %v5838 = vunpack.c.h.b16 %v4388
    %v5839 = vunpack.c.l.b16 %v4389
    %v5840 = vunpack.c.h.b16 %v4389
    %v5841 = vunpack.c.l.b16 %v4390
    %v5842 = vunpack.c.h.b16 %v4390
    %v5843 = vunpack.c.l.b16 %v4391
    %v5844 = vunpack.c.h.b16 %v4391
    %v5845 = vunpack.c.l.b16 %v4392
    %v5846 = vunpack.c.h.b16 %v4392
    %v5847 = vunpack.c.l.b16 %v4393
    %v5848 = vunpack.c.h.b16 %v4393
    %v5849 = vunpack.c.l.b16 %v4394
    %v5850 = vunpack.c.h.b16 %v4394
    %v5851 = vunpack.c.l.b16 %v4395
    %v5852 = vunpack.c.h.b16 %v4395
    %v5853 = vunpack.c.l.b16 %v4396
    %v5854 = vunpack.c.h.b16 %v4396
    %v5855 = vunpack.c.l.b16 %v4397
    %v5856 = vunpack.c.h.b16 %v4397
    %v5857 = vunpack.c.l.b16 %v4398
    %v5858 = vunpack.c.h.b16 %v4398
    %v5859 = vunpack.c.l.b16 %v4399
    %v5860 = vunpack.c.h.b16 %v4399
    %v5861 = vunpack.c.l.b16 %v4400
    %v5862 = vunpack.c.h.b16 %v4400
    %v5863 = vunpack.c.l.b16 %v4401
    %v5864 = vunpack.c.h.b16 %v4401
    %v5865 = vunpack.c.l.b16 %v4402
    %v5866 = vunpack.c.h.b16 %v4402
    %v5867 = vunpack.c.l.b16 %v4403
    %v5868 = vunpack.c.h.b16 %v4403
    %v5869 = vunpack.c.l.b16 %v4404
    %v5870 = vunpack.c.h.b16 %v4404
    %v5871 = vunpack.c.l.b16 %v4405
    %v5872 = vunpack.c.h.b16 %v4405
    %v5873 = vunpack.c.l.b16 %v4406
    %v5874 = vunpack.c.h.b16 %v4406
    %v5875 = vunpack.c.l.b16 %v4407
    %v5876 = vunpack.c.h.b16 %v4407
    %v5877 = vunpack.c.l.b16 %v4408
    %v5878 = vunpack.c.h.b16 %v4408
    %v5879 = vunpack.c.l.b16 %v4409
    %v5880 = vunpack.c.h.b16 %v4409
    %v5881 = vunpack.c.l.b16 %v4410
    %v5882 = vunpack.c.h.b16 %v4410
    %v5883 = vunpack.c.l.b16 %v4411
    %v5884 = vunpack.c.h.b16 %v4411
    %v5885 = vunpack.c.l.b16 %v4412
    %v5886 = vunpack.c.h.b16 %v4412
    %v5887 = vunpack.c.l.b16 %v4413
    %v5888 = vunpack.c.h.b16 %v4413
    %v5889 = vunpack.c.l.b16 %v4414
    %v5890 = vunpack.c.h.b16 %v4414
    %v5891 = vunpack.c.l.b16 %v4415
    %v5892 = vunpack.c.h.b16 %v4415
    %v5893 = vunpack.c.l.b16 %v4416
    %v5894 = vunpack.c.h.b16 %v4416
    %v5895 = vunpack.c.l.b16 %v4417
    %v5896 = vunpack.c.h.b16 %v4417
    %v5897 = vunpack.c.l.b16 %v4418
    %v5898 = vunpack.c.h.b16 %v4418
    %v5899 = vunpack.c.l.b16 %v4419
    %v5900 = vunpack.c.h.b16 %v4419
    %v5901 = vunpack.c.l.b16 %v4420
    %v5902 = vunpack.c.h.b16 %v4420
    %v5903 = vunpack.c.l.b16 %v4421
    %v5904 = vunpack.c.h.b16 %v4421
    %v5905 = vunpack.c.l.b16 %v4422
    %v5906 = vunpack.c.h.b16 %v4422
    %v5907 = vunpack.c.l.b16 %v4423
    %v5908 = vunpack.c.h.b16 %v4423
    %v5909 = vunpack.c.l.b16 %v4424
    %v5910 = vunpack.c.h.b16 %v4424
    %v5911 = vunpack.c.l.b16 %v4425
    %v5912 = vunpack.c.h.b16 %v4425
    %v5913 = vunpack.c.l.b16 %v4426
    %v5914 = vunpack.c.h.b16 %v4426
    %v5915 = vunpack.c.l.b16 %v4427
    %v5916 = vunpack.c.h.b16 %v4427
    %v5917 = vunpack.c.l.b16 %v4428
    %v5918 = vunpack.c.h.b16 %v4428
    %v5919 = vunpack.c.l.b16 %v4429
    %v5920 = vunpack.c.h.b16 %v4429
    %v5921 = vunpack.c.l.b16 %v4430
    %v5922 = vunpack.c.h.b16 %v4430
    %v5923 = vunpack.c.l.b16 %v4431
    %v5924 = vunpack.c.h.b16 %v4431
    %v5925 = vunpack.c.l.b16 %v4432
    %v5926 = vunpack.c.h.b16 %v4432
    %v5927 = vunpack.c.l.b16 %v4433
    %v5928 = vunpack.c.h.b16 %v4433
    %v5929 = vunpack.c.l.b16 %v4434
    %v5930 = vunpack.c.h.b16 %v4434
    %v5931 = vunpack.c.l.b16 %v4435
    %v5932 = vunpack.c.h.b16 %v4435
    %v5933 = vunpack.c.l.b16 %v4436
    %v5934 = vunpack.c.h.b16 %v4436
    %v5935 = vunpack.c.l.b16 %v4437
    %v5936 = vunpack.c.h.b16 %v4437
    %v5937 = vunpack.c.l.b16 %v4438
    %v5938 = vunpack.c.h.b16 %v4438
    %v5939 = vunpack.c.l.b16 %v4439
    %v5940 = vunpack.c.h.b16 %v4439
    %v5941 = vunpack.c.l.b16 %v4440
    %v5942 = vunpack.c.h.b16 %v4440
    %v5943 = vunpack.c.l.b16 %v4441
    %v5944 = vunpack.c.h.b16 %v4441
    %v5945 = vunpack.c.l.b16 %v4442
    %v5946 = vunpack.c.h.b16 %v4442
    %v5947 = vunpack.c.l.b16 %v4443
    %v5948 = vunpack.c.h.b16 %v4443
    %v5949 = vunpack.c.l.b16 %v4444
    %v5950 = vunpack.c.h.b16 %v4444
    %v5951 = vunpack.c.l.b16 %v4445
    %v5952 = vunpack.c.h.b16 %v4445
    %v5953 = vunpack.c.l.b16 %v4446
    %v5954 = vunpack.c.h.b16 %v4446
    %v5955 = vunpack.c.l.b16 %v4447
    %v5956 = vunpack.c.h.b16 %v4447
    %v5957 = vunpack.c.l.b16 %v4448
    %v5958 = vunpack.c.h.b16 %v4448
    %v5959 = vunpack.c.l.b16 %v4449
    %v5960 = vunpack.c.h.b16 %v4449
    %v5961 = vunpack.c.l.b16 %v4450
    %v5962 = vunpack.c.h.b16 %v4450
    %v5963 = vunpack.c.l.b16 %v4451
    %v5964 = vunpack.c.h.b16 %v4451
    %v5965 = vunpack.c.l.b16 %v4452
    %v5966 = vunpack.c.h.b16 %v4452
    %v5967 = vunpack.c.l.b16 %v4453
    %v5968 = vunpack.c.h.b16 %v4453
    %v5969 = vunpack.c.l.b16 %v4454
    %v5970 = vunpack.c.h.b16 %v4454
    %v5971 = vunpack.c.l.b16 %v4455
    %v5972 = vunpack.c.h.b16 %v4455
    %v5973 = vunpack.c.l.b16 %v4456
    %v5974 = vunpack.c.h.b16 %v4456
    %v5975 = vunpack.c.l.b16 %v4457
    %v5976 = vunpack.c.h.b16 %v4457
    %v5977 = vunpack.c.l.b16 %v4458
    %v5978 = vunpack.c.h.b16 %v4458
    %v5979 = vunpack.c.l.b16 %v4459
    %v5980 = vunpack.c.h.b16 %v4459
    %v5981 = vunpack.c.l.b16 %v4460
    %v5982 = vunpack.c.h.b16 %v4460
    %v5983 = vunpack.c.l.b16 %v4461
    %v5984 = vunpack.c.h.b16 %v4461
    %v5985 = vunpack.c.l.b16 %v4462
    %v5986 = vunpack.c.h.b16 %v4462
    %v5987 = vunpack.c.l.b16 %v4463
    %v5988 = vunpack.c.h.b16 %v4463
    %v5989 = vunpack.c.l.b16 %v4464
    %v5990 = vunpack.c.h.b16 %v4464
    %v5991 = vunpack.c.l.b16 %v4465
    %v5992 = vunpack.c.h.b16 %v4465
    %v5993 = vunpack.c.l.b16 %v4466
    %v5994 = vunpack.c.h.b16 %v4466
    %v5995 = vunpack.c.l.b16 %v4467
    %v5996 = vunpack.c.h.b16 %v4467
    %v5997 = vunpack.c.l.b16 %v4468
    %v5998 = vunpack.c.h.b16 %v4468
    %v5999 = vunpack.c.l.b16 %v4469
    %v6000 = vunpack.c.h.b16 %v4469
    %v6001 = vunpack.c.l.b16 %v4470
    %v6002 = vunpack.c.h.b16 %v4470
    %v6003 = vunpack.c.l.b16 %v4471
    %v6004 = vunpack.c.h.b16 %v4471
    %v6005 = vunpack.c.l.b16 %v4472
    %v6006 = vunpack.c.h.b16 %v4472
    %v6007 = vunpack.c.l.b16 %v4473
    %v6008 = vunpack.c.h.b16 %v4473
    %v6009 = vunpack.c.l.b16 %v4474
    %v6010 = vunpack.c.h.b16 %v4474
    %v6011 = vunpack.c.l.b16 %v4475
    %v6012 = vunpack.c.h.b16 %v4475
    %v6013 = vunpack.c.l.b16 %v4476
    %v6014 = vunpack.c.h.b16 %v4476
    %v6015 = vunpack.c.l.b16 %v4477
    %v6016 = vunpack.c.h.b16 %v4477
    %v6017 = vunpack.c.l.b16 %v4478
    %v6018 = vunpack.c.h.b16 %v4478
    %v6019 = vunpack.c.l.b16 %v4479
    %v6020 = vunpack.c.h.b16 %v4479
    %v6021 = vunpack.c.l.b16 %v4480
    %v6022 = vunpack.c.h.b16 %v4480
    %v6023 = vunpack.c.l.b16 %v4481
    %v6024 = vunpack.c.h.b16 %v4481
    %v6025 = vunpack.c.l.b16 %v4482
    %v6026 = vunpack.c.h.b16 %v4482
    %v6027 = vunpack.c.l.b16 %v4483
    %v6028 = vunpack.c.h.b16 %v4483
    %v6029 = vunpack.c.l.b16 %v4484
    %v6030 = vunpack.c.h.b16 %v4484
    %v6031 = vunpack.c.l.b16 %v4485
    %v6032 = vunpack.c.h.b16 %v4485
    %v6033 = vunpack.c.l.b16 %v4486
    %v6034 = vunpack.c.h.b16 %v4486
    %v6035 = vunpack.c.l.b16 %v4487
    %v6036 = vunpack.c.h.b16 %v4487
    %v6037 = vunpack.c.l.b16 %v4488
    %v6038 = vunpack.c.h.b16 %v4488
    %v6039 = vunpack.c.l.b16 %v4489
    %v6040 = vunpack.c.h.b16 %v4489
    %v6041 = vunpack.c.l.b16 %v4490
    %v6042 = vunpack.c.h.b16 %v4490
    %v6043 = vunpack.c.l.b16 %v4491
    %v6044 = vunpack.c.h.b16 %v4491
    %v6045 = vunpack.c.l.b16 %v4492
    %v6046 = vunpack.c.h.b16 %v4492
    %v6047 = vunpack.c.l.b16 %v4493
    %v6048 = vunpack.c.h.b16 %v4493
    %v6049 = vunpack.c.l.b16 %v4494
    %v6050 = vunpack.c.h.b16 %v4494
    %v6051 = vunpack.c.l.b16 %v4495
    %v6052 = vunpack.c.h.b16 %v4495
    %v6053 = vunpack.c.l.b16 %v4496
    %v6054 = vunpack.c.h.b16 %v4496
    %v6055 = vunpack.c.l.b16 %v4497
    %v6056 = vunpack.c.h.b16 %v4497
    %v6057 = vunpack.c.l.b16 %v4498
    %v6058 = vunpack.c.h.b16 %v4498
    %v6059 = vunpack.c.l.b16 %v4499
    %v6060 = vunpack.c.h.b16 %v4499
    %v6061 = vunpack.c.l.b16 %v4500
    %v6062 = vunpack.c.h.b16 %v4500
    %v6063 = vunpack.c.l.b16 %v4501
    %v6064 = vunpack.c.h.b16 %v4501
    %v6065 = vunpack.c.l.b16 %v4502
    %v6066 = vunpack.c.h.b16 %v4502
    %v6067 = vunpack.c.l.b16 %v4503
    %v6068 = vunpack.c.h.b16 %v4503
    %v6069 = vunpack.c.l.b16 %v4504
    %v6070 = vunpack.c.h.b16 %v4504
    %v6071 = vunpack.c.l.b16 %v4505
    %v6072 = vunpack.c.h.b16 %v4505
    %v6073 = vunpack.c.l.b16 %v4506
    %v6074 = vunpack.c.h.b16 %v4506
    %v6075 = vunpack.c.l.b16 %v4507
    %v6076 = vunpack.c.h.b16 %v4507
    %v6077 = vunpack.c.l.b16 %v4508
    %v6078 = vunpack.c.h.b16 %v4508
    %v6079 = vunpack.c.l.b16 %v4509
    %v6080 = vunpack.c.h.b16 %v4509
    %v6081 = vunpack.c.l.b16 %v4510
    %v6082 = vunpack.c.h.b16 %v4510
    %v6083 = vunpack.c.l.b16 %v4511
    %v6084 = vunpack.c.h.b16 %v4511
    %v6085 = vunpack.c.l.b16 %v4512
    %v6086 = vunpack.c.h.b16 %v4512
    %v6087 = vunpack.c.l.b16 %v4513
    %v6088 = vunpack.c.h.b16 %v4513
    %v6089 = vunpack.c.l.b16 %v4514
    %v6090 = vunpack.c.h.b16 %v4514
    %v6091 = vunpack.c.l.b16 %v4515
    %v6092 = vunpack.c.h.b16 %v4515
    %v6093 = vunpack.c.l.b16 %v4516
    %v6094 = vunpack.c.h.b16 %v4516
    %v6095 = vpack.c.b16 %v5079, %v5071
    %v6096 = vpack.c.b16 %v5080, %v5072
    %v6097 = vpack.c.b16 %v5081, %v5073
    %v6098 = vpack.c.b16 %v5082, %v5074
    %v6099 = vpack.c.b16 %v5083, %v5075
    %v6100 = vpack.c.b16 %v5084, %v5076
    %v6101 = vpack.c.b16 %v5085, %v5077
    %v6102 = vpack.c.b16 %v5086, %v5078
    %v6103 = vpack.c.b16 %v5095, %v5087
    %v6104 = vpack.c.b16 %v5096, %v5088
    %v6105 = vpack.c.b16 %v5097, %v5089
    %v6106 = vpack.c.b16 %v5098, %v5090
    %v6107 = vpack.c.b16 %v5099, %v5091
    %v6108 = vpack.c.b16 %v5100, %v5092
    %v6109 = vpack.c.b16 %v5101, %v5093
    %v6110 = vpack.c.b16 %v5102, %v5094
    %v6111 = vpack.c.b16 %v5111, %v5103
    %v6112 = vpack.c.b16 %v5112, %v5104
    %v6113 = vpack.c.b16 %v5113, %v5105
    %v6114 = vpack.c.b16 %v5114, %v5106
    %v6115 = vpack.c.b16 %v5115, %v5107
    %v6116 = vpack.c.b16 %v5116, %v5108
    %v6117 = vpack.c.b16 %v5117, %v5109
    %v6118 = vpack.c.b16 %v5118, %v5110
    %v6119 = vpack.c.b16 %v5127, %v5119
    %v6120 = vpack.c.b16 %v5128, %v5120
    %v6121 = vpack.c.b16 %v5129, %v5121
    %v6122 = vpack.c.b16 %v5130, %v5122
    %v6123 = vpack.c.b16 %v5131, %v5123
    %v6124 = vpack.c.b16 %v5132, %v5124
    %v6125 = vpack.c.b16 %v5133, %v5125
    %v6126 = vpack.c.b16 %v5134, %v5126
    %v6127 = vpack.c.b16 %v5143, %v5135
    %v6128 = vpack.c.b16 %v5144, %v5136
    %v6129 = vpack.c.b16 %v5145, %v5137
    %v6130 = vpack.c.b16 %v5146, %v5138
    %v6131 = vpack.c.b16 %v5147, %v5139
    %v6132 = vpack.c.b16 %v5148, %v5140
    %v6133 = vpack.c.b16 %v5149, %v5141
    %v6134 = vpack.c.b16 %v5150, %v5142
    %v6135 = vpack.c.b16 %v5159, %v5151
    %v6136 = vpack.c.b16 %v5160, %v5152
    %v6137 = vpack.c.b16 %v5161, %v5153
    %v6138 = vpack.c.b16 %v5162, %v5154
    %v6139 = vpack.c.b16 %v5163, %v5155
    %v6140 = vpack.c.b16 %v5164, %v5156
    %v6141 = vpack.c.b16 %v5165, %v5157
    %v6142 = vpack.c.b16 %v5166, %v5158
    %v6143 = vpack.c.b16 %v5175, %v5167
    %v6144 = vpack.c.b16 %v5176, %v5168
    %v6145 = vpack.c.b16 %v5177, %v5169
    %v6146 = vpack.c.b16 %v5178, %v5170
    %v6147 = vpack.c.b16 %v5179, %v5171
    %v6148 = vpack.c.b16 %v5180, %v5172
    %v6149 = vpack.c.b16 %v5181, %v5173
    %v6150 = vpack.c.b16 %v5182, %v5174
    %v6151 = vpack.c.b16 %v5191, %v5183
    %v6152 = vpack.c.b16 %v5192, %v5184
    %v6153 = vpack.c.b16 %v5193, %v5185
    %v6154 = vpack.c.b16 %v5194, %v5186
    %v6155 = vpack.c.b16 %v5195, %v5187
    %v6156 = vpack.c.b16 %v5196, %v5188
    %v6157 = vpack.c.b16 %v5197, %v5189
    %v6158 = vpack.c.b16 %v5198, %v5190
    %v6159 = vpack.c.b16 %v5207, %v5199
    %v6160 = vpack.c.b16 %v5208, %v5200
    %v6161 = vpack.c.b16 %v5209, %v5201
    %v6162 = vpack.c.b16 %v5210, %v5202
    %v6163 = vpack.c.b16 %v5211, %v5203
    %v6164 = vpack.c.b16 %v5212, %v5204
    %v6165 = vpack.c.b16 %v5213, %v5205
    %v6166 = vpack.c.b16 %v5214, %v5206
    %v6167 = vpack.c.b16 %v5223, %v5215
    %v6168 = vpack.c.b16 %v5224, %v5216
    %v6169 = vpack.c.b16 %v5225, %v5217
    %v6170 = vpack.c.b16 %v5226, %v5218
    %v6171 = vpack.c.b16 %v5227, %v5219
    %v6172 = vpack.c.b16 %v5228, %v5220
    %v6173 = vpack.c.b16 %v5229, %v5221
    %v6174 = vpack.c.b16 %v5230, %v5222
    %v6175 = vpack.c.b16 %v5239, %v5231
    %v6176 = vpack.c.b16 %v5240, %v5232
    %v6177 = vpack.c.b16 %v5241, %v5233
    %v6178 = vpack.c.b16 %v5242, %v5234
    %v6179 = vpack.c.b16 %v5243, %v5235
    %v6180 = vpack.c.b16 %v5244, %v5236
    %v6181 = vpack.c.b16 %v5245, %v5237
    %v6182 = vpack.c.b16 %v5246, %v5238
    %v6183 = vpack.c.b16 %v5255, %v5247
    %v6184 = vpack.c.b16 %v5256, %v5248
    %v6185 = vpack.c.b16 %v5257, %v5249
    %v6186 = vpack.c.b16 %v5258, %v5250
    %v6187 = vpack.c.b16 %v5259, %v5251
    %v6188 = vpack.c.b16 %v5260, %v5252
    %v6189 = vpack.c.b16 %v5261, %v5253
    %v6190 = vpack.c.b16 %v5262, %v5254
    %v6191 = vpack.c.b16 %v5271, %v5263
    %v6192 = vpack.c.b16 %v5272, %v5264
    %v6193 = vpack.c.b16 %v5273, %v5265
    %v6194 = vpack.c.b16 %v5274, %v5266
    %v6195 = vpack.c.b16 %v5275, %v5267
    %v6196 = vpack.c.b16 %v5276, %v5268
    %v6197 = vpack.c.b16 %v5277, %v5269
    %v6198 = vpack.c.b16 %v5278, %v5270
    %v6199 = vpack.c.b16 %v5287, %v5279
    %v6200 = vpack.c.b16 %v5288, %v5280
    %v6201 = vpack.c.b16 %v5289, %v5281
    %v6202 = vpack.c.b16 %v5290, %v5282
    %v6203 = vpack.c.b16 %v5291, %v5283
    %v6204 = vpack.c.b16 %v5292, %v5284
    %v6205 = vpack.c.b16 %v5293, %v5285
    %v6206 = vpack.c.b16 %v5294, %v5286
    %v6207 = vpack.c.b16 %v5303, %v5295
    %v6208 = vpack.c.b16 %v5304, %v5296
    %v6209 = vpack.c.b16 %v5305, %v5297
    %v6210 = vpack.c.b16 %v5306, %v5298
    %v6211 = vpack.c.b16 %v5307, %v5299
    %v6212 = vpack.c.b16 %v5308, %v5300
    %v6213 = vpack.c.b16 %v5309, %v5301
    %v6214 = vpack.c.b16 %v5310, %v5302
    %v6215 = vpack.c.b16 %v5319, %v5311
    %v6216 = vpack.c.b16 %v5320, %v5312
    %v6217 = vpack.c.b16 %v5321, %v5313
    %v6218 = vpack.c.b16 %v5322, %v5314
    %v6219 = vpack.c.b16 %v5323, %v5315
    %v6220 = vpack.c.b16 %v5324, %v5316
    %v6221 = vpack.c.b16 %v5325, %v5317
    %v6222 = vpack.c.b16 %v5326, %v5318
    %v6223 = vpack.c.b16 %v5335, %v5327
    %v6224 = vpack.c.b16 %v5336, %v5328
    %v6225 = vpack.c.b16 %v5337, %v5329
    %v6226 = vpack.c.b16 %v5338, %v5330
    %v6227 = vpack.c.b16 %v5339, %v5331
    %v6228 = vpack.c.b16 %v5340, %v5332
    %v6229 = vpack.c.b16 %v5341, %v5333
    %v6230 = vpack.c.b16 %v5342, %v5334
    %v6231 = vpack.c.b16 %v5351, %v5343
    %v6232 = vpack.c.b16 %v5352, %v5344
    %v6233 = vpack.c.b16 %v5353, %v5345
    %v6234 = vpack.c.b16 %v5354, %v5346
    %v6235 = vpack.c.b16 %v5355, %v5347
    %v6236 = vpack.c.b16 %v5356, %v5348
    %v6237 = vpack.c.b16 %v5357, %v5349
    %v6238 = vpack.c.b16 %v5358, %v5350
    %v6239 = vpack.c.b16 %v5367, %v5359
    %v6240 = vpack.c.b16 %v5368, %v5360
    %v6241 = vpack.c.b16 %v5369, %v5361
    %v6242 = vpack.c.b16 %v5370, %v5362
    %v6243 = vpack.c.b16 %v5371, %v5363
    %v6244 = vpack.c.b16 %v5372, %v5364
    %v6245 = vpack.c.b16 %v5373, %v5365
    %v6246 = vpack.c.b16 %v5374, %v5366
    %v6247 = vpack.c.b16 %v5383, %v5375
    %v6248 = vpack.c.b16 %v5384, %v5376
    %v6249 = vpack.c.b16 %v5385, %v5377
    %v6250 = vpack.c.b16 %v5386, %v5378
    %v6251 = vpack.c.b16 %v5387, %v5379
    %v6252 = vpack.c.b16 %v5388, %v5380
    %v6253 = vpack.c.b16 %v5389, %v5381
    %v6254 = vpack.c.b16 %v5390, %v5382
    %v6255 = vpack.c.b16 %v5399, %v5391
    %v6256 = vpack.c.b16 %v5400, %v5392
    %v6257 = vpack.c.b16 %v5401, %v5393
    %v6258 = vpack.c.b16 %v5402, %v5394
    %v6259 = vpack.c.b16 %v5403, %v5395
    %v6260 = vpack.c.b16 %v5404, %v5396
    %v6261 = vpack.c.b16 %v5405, %v5397
    %v6262 = vpack.c.b16 %v5406, %v5398
    %v6263 = vpack.c.b16 %v5415, %v5407
    %v6264 = vpack.c.b16 %v5416, %v5408
    %v6265 = vpack.c.b16 %v5417, %v5409
    %v6266 = vpack.c.b16 %v5418, %v5410
    %v6267 = vpack.c.b16 %v5419, %v5411
    %v6268 = vpack.c.b16 %v5420, %v5412
    %v6269 = vpack.c.b16 %v5421, %v5413
    %v6270 = vpack.c.b16 %v5422, %v5414
    %v6271 = vpack.c.b16 %v5431, %v5423
    %v6272 = vpack.c.b16 %v5432, %v5424
    %v6273 = vpack.c.b16 %v5433, %v5425
    %v6274 = vpack.c.b16 %v5434, %v5426
    %v6275 = vpack.c.b16 %v5435, %v5427
    %v6276 = vpack.c.b16 %v5436, %v5428
    %v6277 = vpack.c.b16 %v5437, %v5429
    %v6278 = vpack.c.b16 %v5438, %v5430
    %v6279 = vpack.c.b16 %v5447, %v5439
    %v6280 = vpack.c.b16 %v5448, %v5440
    %v6281 = vpack.c.b16 %v5449, %v5441
    %v6282 = vpack.c.b16 %v5450, %v5442
    %v6283 = vpack.c.b16 %v5451, %v5443
    %v6284 = vpack.c.b16 %v5452, %v5444
    %v6285 = vpack.c.b16 %v5453, %v5445
    %v6286 = vpack.c.b16 %v5454, %v5446
    %v6287 = vpack.c.b16 %v5463, %v5455
    %v6288 = vpack.c.b16 %v5464, %v5456
    %v6289 = vpack.c.b16 %v5465, %v5457
    %v6290 = vpack.c.b16 %v5466, %v5458
    %v6291 = vpack.c.b16 %v5467, %v5459
    %v6292 = vpack.c.b16 %v5468, %v5460
    %v6293 = vpack.c.b16 %v5469, %v5461
    %v6294 = vpack.c.b16 %v5470, %v5462
    %v6295 = vpack.c.b16 %v5479, %v5471
    %v6296 = vpack.c.b16 %v5480, %v5472
    %v6297 = vpack.c.b16 %v5481, %v5473
    %v6298 = vpack.c.b16 %v5482, %v5474
    %v6299 = vpack.c.b16 %v5483, %v5475
    %v6300 = vpack.c.b16 %v5484, %v5476
    %v6301 = vpack.c.b16 %v5485, %v5477
    %v6302 = vpack.c.b16 %v5486, %v5478
    %v6303 = vpack.c.b16 %v5495, %v5487
    %v6304 = vpack.c.b16 %v5496, %v5488
    %v6305 = vpack.c.b16 %v5497, %v5489
    %v6306 = vpack.c.b16 %v5498, %v5490
    %v6307 = vpack.c.b16 %v5499, %v5491
    %v6308 = vpack.c.b16 %v5500, %v5492
    %v6309 = vpack.c.b16 %v5501, %v5493
    %v6310 = vpack.c.b16 %v5502, %v5494
    %v6311 = vpack.c.b16 %v5511, %v5503
    %v6312 = vpack.c.b16 %v5512, %v5504
    %v6313 = vpack.c.b16 %v5513, %v5505
    %v6314 = vpack.c.b16 %v5514, %v5506
    %v6315 = vpack.c.b16 %v5515, %v5507
    %v6316 = vpack.c.b16 %v5516, %v5508
    %v6317 = vpack.c.b16 %v5517, %v5509
    %v6318 = vpack.c.b16 %v5518, %v5510
    %v6319 = vpack.c.b16 %v5527, %v5519
    %v6320 = vpack.c.b16 %v5528, %v5520
    %v6321 = vpack.c.b16 %v5529, %v5521
    %v6322 = vpack.c.b16 %v5530, %v5522
    %v6323 = vpack.c.b16 %v5531, %v5523
    %v6324 = vpack.c.b16 %v5532, %v5524
    %v6325 = vpack.c.b16 %v5533, %v5525
    %v6326 = vpack.c.b16 %v5534, %v5526
    %v6327 = vpack.c.b16 %v5543, %v5535
    %v6328 = vpack.c.b16 %v5544, %v5536
    %v6329 = vpack.c.b16 %v5545, %v5537
    %v6330 = vpack.c.b16 %v5546, %v5538
    %v6331 = vpack.c.b16 %v5547, %v5539
    %v6332 = vpack.c.b16 %v5548, %v5540
    %v6333 = vpack.c.b16 %v5549, %v5541
    %v6334 = vpack.c.b16 %v5550, %v5542
    %v6335 = vpack.c.b16 %v5559, %v5551
    %v6336 = vpack.c.b16 %v5560, %v5552
    %v6337 = vpack.c.b16 %v5561, %v5553
    %v6338 = vpack.c.b16 %v5562, %v5554
    %v6339 = vpack.c.b16 %v5563, %v5555
    %v6340 = vpack.c.b16 %v5564, %v5556
    %v6341 = vpack.c.b16 %v5565, %v5557
    %v6342 = vpack.c.b16 %v5566, %v5558
    %v6343 = vpack.c.b16 %v5575, %v5567
    %v6344 = vpack.c.b16 %v5576, %v5568
    %v6345 = vpack.c.b16 %v5577, %v5569
    %v6346 = vpack.c.b16 %v5578, %v5570
    %v6347 = vpack.c.b16 %v5579, %v5571
    %v6348 = vpack.c.b16 %v5580, %v5572
    %v6349 = vpack.c.b16 %v5581, %v5573
    %v6350 = vpack.c.b16 %v5582, %v5574
    %v6351 = vpack.c.b16 %v5591, %v5583
    %v6352 = vpack.c.b16 %v5592, %v5584
    %v6353 = vpack.c.b16 %v5593, %v5585
    %v6354 = vpack.c.b16 %v5594, %v5586
    %v6355 = vpack.c.b16 %v5595, %v5587
    %v6356 = vpack.c.b16 %v5596, %v5588
    %v6357 = vpack.c.b16 %v5597, %v5589
    %v6358 = vpack.c.b16 %v5598, %v5590
    %v6359 = vpack.c.b16 %v5607, %v5599
    %v6360 = vpack.c.b16 %v5608, %v5600
    %v6361 = vpack.c.b16 %v5609, %v5601
    %v6362 = vpack.c.b16 %v5610, %v5602
    %v6363 = vpack.c.b16 %v5611, %v5603
    %v6364 = vpack.c.b16 %v5612, %v5604
    %v6365 = vpack.c.b16 %v5613, %v5605
    %v6366 = vpack.c.b16 %v5614, %v5606
    %v6367 = vpack.c.b16 %v5623, %v5615
    %v6368 = vpack.c.b16 %v5624, %v5616
    %v6369 = vpack.c.b16 %v5625, %v5617
    %v6370 = vpack.c.b16 %v5626, %v5618
    %v6371 = vpack.c.b16 %v5627, %v5619
    %v6372 = vpack.c.b16 %v5628, %v5620
    %v6373 = vpack.c.b16 %v5629, %v5621
    %v6374 = vpack.c.b16 %v5630, %v5622
    %v6375 = vpack.c.b16 %v5639, %v5631
    %v6376 = vpack.c.b16 %v5640, %v5632
    %v6377 = vpack.c.b16 %v5641, %v5633
    %v6378 = vpack.c.b16 %v5642, %v5634
    %v6379 = vpack.c.b16 %v5643, %v5635
    %v6380 = vpack.c.b16 %v5644, %v5636
    %v6381 = vpack.c.b16 %v5645, %v5637
    %v6382 = vpack.c.b16 %v5646, %v5638
    %v6383 = vpack.c.b16 %v5655, %v5647
    %v6384 = vpack.c.b16 %v5656, %v5648
    %v6385 = vpack.c.b16 %v5657, %v5649
    %v6386 = vpack.c.b16 %v5658, %v5650
    %v6387 = vpack.c.b16 %v5659, %v5651
    %v6388 = vpack.c.b16 %v5660, %v5652
    %v6389 = vpack.c.b16 %v5661, %v5653
    %v6390 = vpack.c.b16 %v5662, %v5654
    %v6391 = vpack.c.b16 %v5671, %v5663
    %v6392 = vpack.c.b16 %v5672, %v5664
    %v6393 = vpack.c.b16 %v5673, %v5665
    %v6394 = vpack.c.b16 %v5674, %v5666
    %v6395 = vpack.c.b16 %v5675, %v5667
    %v6396 = vpack.c.b16 %v5676, %v5668
    %v6397 = vpack.c.b16 %v5677, %v5669
    %v6398 = vpack.c.b16 %v5678, %v5670
    %v6399 = vpack.c.b16 %v5687, %v5679
    %v6400 = vpack.c.b16 %v5688, %v5680
    %v6401 = vpack.c.b16 %v5689, %v5681
    %v6402 = vpack.c.b16 %v5690, %v5682
    %v6403 = vpack.c.b16 %v5691, %v5683
    %v6404 = vpack.c.b16 %v5692, %v5684
    %v6405 = vpack.c.b16 %v5693, %v5685
    %v6406 = vpack.c.b16 %v5694, %v5686
    %v6407 = vpack.c.b16 %v5703, %v5695
    %v6408 = vpack.c.b16 %v5704, %v5696
    %v6409 = vpack.c.b16 %v5705, %v5697
    %v6410 = vpack.c.b16 %v5706, %v5698
    %v6411 = vpack.c.b16 %v5707, %v5699
    %v6412 = vpack.c.b16 %v5708, %v5700
    %v6413 = vpack.c.b16 %v5709, %v5701
    %v6414 = vpack.c.b16 %v5710, %v5702
    %v6415 = vpack.c.b16 %v5719, %v5711
    %v6416 = vpack.c.b16 %v5720, %v5712
    %v6417 = vpack.c.b16 %v5721, %v5713
    %v6418 = vpack.c.b16 %v5722, %v5714
    %v6419 = vpack.c.b16 %v5723, %v5715
    %v6420 = vpack.c.b16 %v5724, %v5716
    %v6421 = vpack.c.b16 %v5725, %v5717
    %v6422 = vpack.c.b16 %v5726, %v5718
    %v6423 = vpack.c.b16 %v5735, %v5727
    %v6424 = vpack.c.b16 %v5736, %v5728
    %v6425 = vpack.c.b16 %v5737, %v5729
    %v6426 = vpack.c.b16 %v5738, %v5730
    %v6427 = vpack.c.b16 %v5739, %v5731
    %v6428 = vpack.c.b16 %v5740, %v5732
    %v6429 = vpack.c.b16 %v5741, %v5733
    %v6430 = vpack.c.b16 %v5742, %v5734
    %v6431 = vpack.c.b16 %v5751, %v5743
    %v6432 = vpack.c.b16 %v5752, %v5744
    %v6433 = vpack.c.b16 %v5753, %v5745
    %v6434 = vpack.c.b16 %v5754, %v5746
    %v6435 = vpack.c.b16 %v5755, %v5747
    %v6436 = vpack.c.b16 %v5756, %v5748
    %v6437 = vpack.c.b16 %v5757, %v5749
    %v6438 = vpack.c.b16 %v5758, %v5750
    %v6439 = vpack.c.b16 %v5767, %v5759
    %v6440 = vpack.c.b16 %v5768, %v5760
    %v6441 = vpack.c.b16 %v5769, %v5761
    %v6442 = vpack.c.b16 %v5770, %v5762
    %v6443 = vpack.c.b16 %v5771, %v5763
    %v6444 = vpack.c.b16 %v5772, %v5764
    %v6445 = vpack.c.b16 %v5773, %v5765
    %v6446 = vpack.c.b16 %v5774, %v5766
    %v6447 = vpack.c.b16 %v5783, %v5775
    %v6448 = vpack.c.b16 %v5784, %v5776
    %v6449 = vpack.c.b16 %v5785, %v5777
    %v6450 = vpack.c.b16 %v5786, %v5778
    %v6451 = vpack.c.b16 %v5787, %v5779
    %v6452 = vpack.c.b16 %v5788, %v5780
    %v6453 = vpack.c.b16 %v5789, %v5781
    %v6454 = vpack.c.b16 %v5790, %v5782
    %v6455 = vpack.c.b16 %v5799, %v5791
    %v6456 = vpack.c.b16 %v5800, %v5792
    %v6457 = vpack.c.b16 %v5801, %v5793
    %v6458 = vpack.c.b16 %v5802, %v5794
    %v6459 = vpack.c.b16 %v5803, %v5795
    %v6460 = vpack.c.b16 %v5804, %v5796
    %v6461 = vpack.c.b16 %v5805, %v5797
    %v6462 = vpack.c.b16 %v5806, %v5798
    %v6463 = vpack.c.b16 %v5815, %v5807
    %v6464 = vpack.c.b16 %v5816, %v5808
    %v6465 = vpack.c.b16 %v5817, %v5809
    %v6466 = vpack.c.b16 %v5818, %v5810
    %v6467 = vpack.c.b16 %v5819, %v5811
    %v6468 = vpack.c.b16 %v5820, %v5812
    %v6469 = vpack.c.b16 %v5821, %v5813
    %v6470 = vpack.c.b16 %v5822, %v5814
    %v6471 = vpack.c.b16 %v5831, %v5823
    %v6472 = vpack.c.b16 %v5832, %v5824
    %v6473 = vpack.c.b16 %v5833, %v5825
    %v6474 = vpack.c.b16 %v5834, %v5826
    %v6475 = vpack.c.b16 %v5835, %v5827
    %v6476 = vpack.c.b16 %v5836, %v5828
    %v6477 = vpack.c.b16 %v5837, %v5829
    %v6478 = vpack.c.b16 %v5838, %v5830
    %v6479 = vpack.c.b16 %v5847, %v5839
    %v6480 = vpack.c.b16 %v5848, %v5840
    %v6481 = vpack.c.b16 %v5849, %v5841
    %v6482 = vpack.c.b16 %v5850, %v5842
    %v6483 = vpack.c.b16 %v5851, %v5843
    %v6484 = vpack.c.b16 %v5852, %v5844
    %v6485 = vpack.c.b16 %v5853, %v5845
    %v6486 = vpack.c.b16 %v5854, %v5846
    %v6487 = vpack.c.b16 %v5863, %v5855
    %v6488 = vpack.c.b16 %v5864, %v5856
    %v6489 = vpack.c.b16 %v5865, %v5857
    %v6490 = vpack.c.b16 %v5866, %v5858
    %v6491 = vpack.c.b16 %v5867, %v5859
    %v6492 = vpack.c.b16 %v5868, %v5860
    %v6493 = vpack.c.b16 %v5869, %v5861
    %v6494 = vpack.c.b16 %v5870, %v5862
    %v6495 = vpack.c.b16 %v5879, %v5871
    %v6496 = vpack.c.b16 %v5880, %v5872
    %v6497 = vpack.c.b16 %v5881, %v5873
    %v6498 = vpack.c.b16 %v5882, %v5874
    %v6499 = vpack.c.b16 %v5883, %v5875
    %v6500 = vpack.c.b16 %v5884, %v5876
    %v6501 = vpack.c.b16 %v5885, %v5877
    %v6502 = vpack.c.b16 %v5886, %v5878
    %v6503 = vpack.c.b16 %v5895, %v5887
    %v6504 = vpack.c.b16 %v5896, %v5888
    %v6505 = vpack.c.b16 %v5897, %v5889
    %v6506 = vpack.c.b16 %v5898, %v5890
    %v6507 = vpack.c.b16 %v5899, %v5891
    %v6508 = vpack.c.b16 %v5900, %v5892
    %v6509 = vpack.c.b16 %v5901, %v5893
    %v6510 = vpack.c.b16 %v5902, %v5894
    %v6511 = vpack.c.b16 %v5911, %v5903
    %v6512 = vpack.c.b16 %v5912, %v5904
    %v6513 = vpack.c.b16 %v5913, %v5905
    %v6514 = vpack.c.b16 %v5914, %v5906
    %v6515 = vpack.c.b16 %v5915, %v5907
    %v6516 = vpack.c.b16 %v5916, %v5908
    %v6517 = vpack.c.b16 %v5917, %v5909
    %v6518 = vpack.c.b16 %v5918, %v5910
    %v6519 = vpack.c.b16 %v5927, %v5919
    %v6520 = vpack.c.b16 %v5928, %v5920
    %v6521 = vpack.c.b16 %v5929, %v5921
    %v6522 = vpack.c.b16 %v5930, %v5922
    %v6523 = vpack.c.b16 %v5931, %v5923
    %v6524 = vpack.c.b16 %v5932, %v5924
    %v6525 = vpack.c.b16 %v5933, %v5925
    %v6526 = vpack.c.b16 %v5934, %v5926
    %v6527 = vpack.c.b16 %v5943, %v5935
    %v6528 = vpack.c.b16 %v5944, %v5936
    %v6529 = vpack.c.b16 %v5945, %v5937
    %v6530 = vpack.c.b16 %v5946, %v5938
    %v6531 = vpack.c.b16 %v5947, %v5939
    %v6532 = vpack.c.b16 %v5948, %v5940
    %v6533 = vpack.c.b16 %v5949, %v5941
    %v6534 = vpack.c.b16 %v5950, %v5942
    %v6535 = vpack.c.b16 %v5959, %v5951
    %v6536 = vpack.c.b16 %v5960, %v5952
    %v6537 = vpack.c.b16 %v5961, %v5953
    %v6538 = vpack.c.b16 %v5962, %v5954
    %v6539 = vpack.c.b16 %v5963, %v5955
    %v6540 = vpack.c.b16 %v5964, %v5956
    %v6541 = vpack.c.b16 %v5965, %v5957
    %v6542 = vpack.c.b16 %v5966, %v5958
    %v6543 = vpack.c.b16 %v5975, %v5967
    %v6544 = vpack.c.b16 %v5976, %v5968
    %v6545 = vpack.c.b16 %v5977, %v5969
    %v6546 = vpack.c.b16 %v5978, %v5970
    %v6547 = vpack.c.b16 %v5979, %v5971
    %v6548 = vpack.c.b16 %v5980, %v5972
    %v6549 = vpack.c.b16 %v5981, %v5973
    %v6550 = vpack.c.b16 %v5982, %v5974
    %v6551 = vpack.c.b16 %v5991, %v5983
    %v6552 = vpack.c.b16 %v5992, %v5984
    %v6553 = vpack.c.b16 %v5993, %v5985
    %v6554 = vpack.c.b16 %v5994, %v5986
    %v6555 = vpack.c.b16 %v5995, %v5987
    %v6556 = vpack.c.b16 %v5996, %v5988
    %v6557 = vpack.c.b16 %v5997, %v5989
    %v6558 = vpack.c.b16 %v5998, %v5990
    %v6559 = vpack.c.b16 %v6007, %v5999
    %v6560 = vpack.c.b16 %v6008, %v6000
    %v6561 = vpack.c.b16 %v6009, %v6001
    %v6562 = vpack.c.b16 %v6010, %v6002
    %v6563 = vpack.c.b16 %v6011, %v6003
    %v6564 = vpack.c.b16 %v6012, %v6004
    %v6565 = vpack.c.b16 %v6013, %v6005
    %v6566 = vpack.c.b16 %v6014, %v6006
    %v6567 = vpack.c.b16 %v6023, %v6015
    %v6568 = vpack.c.b16 %v6024, %v6016
    %v6569 = vpack.c.b16 %v6025, %v6017
    %v6570 = vpack.c.b16 %v6026, %v6018
    %v6571 = vpack.c.b16 %v6027, %v6019
    %v6572 = vpack.c.b16 %v6028, %v6020
    %v6573 = vpack.c.b16 %v6029, %v6021
    %v6574 = vpack.c.b16 %v6030, %v6022
    %v6575 = vpack.c.b16 %v6039, %v6031
    %v6576 = vpack.c.b16 %v6040, %v6032
    %v6577 = vpack.c.b16 %v6041, %v6033
    %v6578 = vpack.c.b16 %v6042, %v6034
    %v6579 = vpack.c.b16 %v6043, %v6035
    %v6580 = vpack.c.b16 %v6044, %v6036
    %v6581 = vpack.c.b16 %v6045, %v6037
    %v6582 = vpack.c.b16 %v6046, %v6038
    %v6583 = vpack.c.b16 %v6055, %v6047
    %v6584 = vpack.c.b16 %v6056, %v6048
    %v6585 = vpack.c.b16 %v6057, %v6049
    %v6586 = vpack.c.b16 %v6058, %v6050
    %v6587 = vpack.c.b16 %v6059, %v6051
    %v6588 = vpack.c.b16 %v6060, %v6052
    %v6589 = vpack.c.b16 %v6061, %v6053
    %v6590 = vpack.c.b16 %v6062, %v6054
    %v6591 = vpack.c.b16 %v6071, %v6063
    %v6592 = vpack.c.b16 %v6072, %v6064
    %v6593 = vpack.c.b16 %v6073, %v6065
    %v6594 = vpack.c.b16 %v6074, %v6066
    %v6595 = vpack.c.b16 %v6075, %v6067
    %v6596 = vpack.c.b16 %v6076, %v6068
    %v6597 = vpack.c.b16 %v6077, %v6069
    %v6598 = vpack.c.b16 %v6078, %v6070
    %v6599 = vpack.c.b16 %v6087, %v6079
    %v6600 = vpack.c.b16 %v6088, %v6080
    %v6601 = vpack.c.b16 %v6089, %v6081
    %v6602 = vpack.c.b16 %v6090, %v6082
    %v6603 = vpack.c.b16 %v6091, %v6083
    %v6604 = vpack.c.b16 %v6092, %v6084
    %v6605 = vpack.c.b16 %v6093, %v6085
    %v6606 = vpack.c.b16 %v6094, %v6086
    %7119 = vmatprep.subr.bf16.mxu0 %v6152
    %7120 = vmatpush1.bf16.msra.mxu0 %v6151
    %7121 = vmatprep.subr.bf16.mxu0 %v6144
    %7122 = vmatpush1.bf16.msra.mxu0 %v6143
    %7123 = vmatprep.subr.bf16.mxu0 %v6136
    %7124 = vmatpush1.bf16.msra.mxu0 %v6135
    %7125 = vmatprep.subr.bf16.mxu0 %v6128
    %7126 = vmatpush1.bf16.msra.mxu0 %v6127
    %7127 = vmatprep.subr.bf16.mxu0 %v6120
    %7128 = vmatpush1.bf16.msra.mxu0 %v6119
    %7129 = vmatprep.subr.bf16.mxu0 %v6112
    %7130 = vmatpush1.bf16.msra.mxu0 %v6111
    %7131 = vmatprep.subr.bf16.mxu0 %v6104
    %7132 = vmatpush1.bf16.msra.mxu0 %v6103
    %7133 = vmatprep.subr.bf16.mxu0 %v6096
    %7134 = vmatpush1.bf16.msra.mxu0 %v6095
    %7135 = vmatprep.subr.bf16.mxu0 %v6216
    %7136 = vmatpush2.bf16.msra.mxu0 %v6215
    %7137 = vmatprep.subr.bf16.mxu0 %v6208
    %7138 = vmatpush2.bf16.msra.mxu0 %v6207
    %7139 = vmatprep.subr.bf16.mxu0 %v6200
    %7140 = vmatpush2.bf16.msra.mxu0 %v6199
    %7141 = vmatprep.subr.bf16.mxu0 %v6192
    %7142 = vmatpush2.bf16.msra.mxu0 %v6191
    %7143 = vmatprep.subr.bf16.mxu0 %v6184
    %7144 = vmatpush2.bf16.msra.mxu0 %v6183
    %7145 = vmatprep.subr.bf16.mxu0 %v6176
    %7146 = vmatpush2.bf16.msra.mxu0 %v6175
    %7147 = vmatprep.subr.bf16.mxu0 %v6168
    %7148 = vmatpush2.bf16.msra.mxu0 %v6167
    %7149 = vmatprep.subr.bf16.mxu0 %v6160
    %7150 = vmatpush2.bf16.msra.mxu0 %v6159
    %7151 = vmatprep.mubr.bf16.mxu0 %v3998
    %7152 = vmatmul.mubr.bf16.gmra.mxu0 %v3997
    %v7153 = vpop.f32.mrf.mxu0
    %v7154 = vadd.f32 %v4522, %v7153
    %v7155 = vpop.f32.mrf.mxu0
    %v7156 = vadd.f32 %v4526, %v7155
    %v7157 = vpop.f32.mrf.mxu0
    %v7158 = vadd.f32 %v4522, %v7157
    %v7159 = vpop.f32.mrf.mxu0
    %v7160 = vadd.f32 %v4526, %v7159
    %7161 = vdwg.mxu0
    %7162 = vmatprep.subr.bf16.mxu0 %v6280
    %7163 = vmatpush1.bf16.msra.mxu0 %v6279
    %7164 = vmatprep.subr.bf16.mxu0 %v6272
    %7165 = vmatpush1.bf16.msra.mxu0 %v6271
    %7166 = vmatprep.subr.bf16.mxu0 %v6264
    %7167 = vmatpush1.bf16.msra.mxu0 %v6263
    %7168 = vmatprep.subr.bf16.mxu0 %v6256
    %7169 = vmatpush1.bf16.msra.mxu0 %v6255
    %7170 = vmatprep.subr.bf16.mxu0 %v6248
    %7171 = vmatpush1.bf16.msra.mxu0 %v6247
    %7172 = vmatprep.subr.bf16.mxu0 %v6240
    %7173 = vmatpush1.bf16.msra.mxu0 %v6239
    %7174 = vmatprep.subr.bf16.mxu0 %v6232
    %7175 = vmatpush1.bf16.msra.mxu0 %v6231
    %7176 = vmatprep.subr.bf16.mxu0 %v6224
    %7177 = vmatpush1.bf16.msra.mxu0 %v6223
    %7178 = vmatprep.subr.bf16.mxu0 %v6344
    %7179 = vmatpush2.bf16.msra.mxu0 %v6343
    %7180 = vmatprep.subr.bf16.mxu0 %v6336
    %7181 = vmatpush2.bf16.msra.mxu0 %v6335
    %7182 = vmatprep.subr.bf16.mxu0 %v6328
    %7183 = vmatpush2.bf16.msra.mxu0 %v6327
    %7184 = vmatprep.subr.bf16.mxu0 %v6320
    %7185 = vmatpush2.bf16.msra.mxu0 %v6319
    %7186 = vmatprep.subr.bf16.mxu0 %v6312
    %7187 = vmatpush2.bf16.msra.mxu0 %v6311
    %7188 = vmatprep.subr.bf16.mxu0 %v6304
    %7189 = vmatpush2.bf16.msra.mxu0 %v6303
    %7190 = vmatprep.subr.bf16.mxu0 %v6296
    %7191 = vmatpush2.bf16.msra.mxu0 %v6295
    %7192 = vmatprep.subr.bf16.mxu0 %v6288
    %7193 = vmatpush2.bf16.msra.mxu0 %v6287
    %7194 = vmatprep.mubr.bf16.mxu0 %v4000
    %7195 = vmatmul.mubr.bf16.gmra.mxu0 %v3999
    %v7196 = vpop.f32.mrf.mxu0
    %v7197 = vadd.f32 %v7154, %v7196
    %v7198 = vpop.f32.mrf.mxu0
    %v7199 = vadd.f32 %v7156, %v7198
    %v7200 = vpop.f32.mrf.mxu0
    %v7201 = vadd.f32 %v7158, %v7200
    %v7202 = vpop.f32.mrf.mxu0
    %v7203 = vadd.f32 %v7160, %v7202
    %7204 = vdwg.mxu0
    %7205 = vmatprep.subr.bf16.mxu0 %v6408
    %7206 = vmatpush1.bf16.msra.mxu0 %v6407
    %7207 = vmatprep.subr.bf16.mxu0 %v6400
    %7208 = vmatpush1.bf16.msra.mxu0 %v6399
    %7209 = vmatprep.subr.bf16.mxu0 %v6392
    %7210 = vmatpush1.bf16.msra.mxu0 %v6391
    %7211 = vmatprep.subr.bf16.mxu0 %v6384
    %7212 = vmatpush1.bf16.msra.mxu0 %v6383
    %7213 = vmatprep.subr.bf16.mxu0 %v6376
    %7214 = vmatpush1.bf16.msra.mxu0 %v6375
    %7215 = vmatprep.subr.bf16.mxu0 %v6368
    %7216 = vmatpush1.bf16.msra.mxu0 %v6367
    %7217 = vmatprep.subr.bf16.mxu0 %v6360
    %7218 = vmatpush1.bf16.msra.mxu0 %v6359
    %7219 = vmatprep.subr.bf16.mxu0 %v6352
    %7220 = vmatpush1.bf16.msra.mxu0 %v6351
    %7221 = vmatprep.subr.bf16.mxu0 %v6472
    %7222 = vmatpush2.bf16.msra.mxu0 %v6471
    %7223 = vmatprep.subr.bf16.mxu0 %v6464
    %7224 = vmatpush2.bf16.msra.mxu0 %v6463
    %7225 = vmatprep.subr.bf16.mxu0 %v6456
    %7226 = vmatpush2.bf16.msra.mxu0 %v6455
    %7227 = vmatprep.subr.bf16.mxu0 %v6448
    %7228 = vmatpush2.bf16.msra.mxu0 %v6447
    %7229 = vmatprep.subr.bf16.mxu0 %v6440
    %7230 = vmatpush2.bf16.msra.mxu0 %v6439
    %7231 = vmatprep.subr.bf16.mxu0 %v6432
    %7232 = vmatpush2.bf16.msra.mxu0 %v6431
    %7233 = vmatprep.subr.bf16.mxu0 %v6424
    %7234 = vmatpush2.bf16.msra.mxu0 %v6423
    %7235 = vmatprep.subr.bf16.mxu0 %v6416
    %7236 = vmatpush2.bf16.msra.mxu0 %v6415
    %7237 = vmatprep.mubr.bf16.mxu0 %v4002
    %7238 = vmatmul.mubr.bf16.gmra.mxu0 %v4001
    %v7239 = vpop.f32.mrf.mxu0
    %v7240 = vadd.f32 %v7197, %v7239
    %v7241 = vpop.f32.mrf.mxu0
    %v7242 = vadd.f32 %v7199, %v7241
    %v7243 = vpop.f32.mrf.mxu0
    %v7244 = vadd.f32 %v7201, %v7243
    %v7245 = vpop.f32.mrf.mxu0
    %v7246 = vadd.f32 %v7203, %v7245
    %7247 = vdwg.mxu0
    %7248 = vmatprep.subr.bf16.mxu0 %v6536
    %7249 = vmatpush1.bf16.msra.mxu0 %v6535
    %7250 = vmatprep.subr.bf16.mxu0 %v6528
    %7251 = vmatpush1.bf16.msra.mxu0 %v6527
    %7252 = vmatprep.subr.bf16.mxu0 %v6520
    %7253 = vmatpush1.bf16.msra.mxu0 %v6519
    %7254 = vmatprep.subr.bf16.mxu0 %v6512
    %7255 = vmatpush1.bf16.msra.mxu0 %v6511
    %7256 = vmatprep.subr.bf16.mxu0 %v6504
    %7257 = vmatpush1.bf16.msra.mxu0 %v6503
    %7258 = vmatprep.subr.bf16.mxu0 %v6496
    %7259 = vmatpush1.bf16.msra.mxu0 %v6495
    %7260 = vmatprep.subr.bf16.mxu0 %v6488
    %7261 = vmatpush1.bf16.msra.mxu0 %v6487
    %7262 = vmatprep.subr.bf16.mxu0 %v6480
    %7263 = vmatpush1.bf16.msra.mxu0 %v6479
    %7264 = vmatprep.subr.bf16.mxu0 %v6600
    %7265 = vmatpush2.bf16.msra.mxu0 %v6599
    %7266 = vmatprep.subr.bf16.mxu0 %v6592
    %7267 = vmatpush2.bf16.msra.mxu0 %v6591
    %7268 = vmatprep.subr.bf16.mxu0 %v6584
    %7269 = vmatpush2.bf16.msra.mxu0 %v6583
    %7270 = vmatprep.subr.bf16.mxu0 %v6576
    %7271 = vmatpush2.bf16.msra.mxu0 %v6575
    %7272 = vmatprep.subr.bf16.mxu0 %v6568
    %7273 = vmatpush2.bf16.msra.mxu0 %v6567
    %7274 = vmatprep.subr.bf16.mxu0 %v6560
    %7275 = vmatpush2.bf16.msra.mxu0 %v6559
    %7276 = vmatprep.subr.bf16.mxu0 %v6552
    %7277 = vmatpush2.bf16.msra.mxu0 %v6551
    %7278 = vmatprep.subr.bf16.mxu0 %v6544
    %7279 = vmatpush2.bf16.msra.mxu0 %v6543
    %7280 = vmatprep.mubr.bf16.mxu0 %v4004
    %7281 = vmatmul.mubr.bf16.gmra.mxu0 %v4003
    %v7282 = vpop.f32.mrf.mxu0
    %v7283 = vadd.f32 %v7240, %v7282
    %v7284 = vpop.f32.mrf.mxu0
    %v7285 = vadd.f32 %v7242, %v7284
    %v7286 = vpop.f32.mrf.mxu0
    %v7287 = vadd.f32 %v7244, %v7286
    %v7288 = vpop.f32.mrf.mxu0
    %v7289 = vadd.f32 %v7246, %v7288
    %7290 = vdwg.mxu0
    %7291 = vmatprep.subr.bf16.mxu0 %v6154
    %7292 = vmatpush1.bf16.msra.mxu0 %v6153
    %7293 = vmatprep.subr.bf16.mxu0 %v6146
    %7294 = vmatpush1.bf16.msra.mxu0 %v6145
    %7295 = vmatprep.subr.bf16.mxu0 %v6138
    %7296 = vmatpush1.bf16.msra.mxu0 %v6137
    %7297 = vmatprep.subr.bf16.mxu0 %v6130
    %7298 = vmatpush1.bf16.msra.mxu0 %v6129
    %7299 = vmatprep.subr.bf16.mxu0 %v6122
    %7300 = vmatpush1.bf16.msra.mxu0 %v6121
    %7301 = vmatprep.subr.bf16.mxu0 %v6114
    %7302 = vmatpush1.bf16.msra.mxu0 %v6113
    %7303 = vmatprep.subr.bf16.mxu0 %v6106
    %7304 = vmatpush1.bf16.msra.mxu0 %v6105
    %7305 = vmatprep.subr.bf16.mxu0 %v6098
    %7306 = vmatpush1.bf16.msra.mxu0 %v6097
    %7307 = vmatprep.subr.bf16.mxu0 %v6218
    %7308 = vmatpush2.bf16.msra.mxu0 %v6217
    %7309 = vmatprep.subr.bf16.mxu0 %v6210
    %7310 = vmatpush2.bf16.msra.mxu0 %v6209
    %7311 = vmatprep.subr.bf16.mxu0 %v6202
    %7312 = vmatpush2.bf16.msra.mxu0 %v6201
    %7313 = vmatprep.subr.bf16.mxu0 %v6194
    %7314 = vmatpush2.bf16.msra.mxu0 %v6193
    %7315 = vmatprep.subr.bf16.mxu0 %v6186
    %7316 = vmatpush2.bf16.msra.mxu0 %v6185
    %7317 = vmatprep.subr.bf16.mxu0 %v6178
    %7318 = vmatpush2.bf16.msra.mxu0 %v6177
    %7319 = vmatprep.subr.bf16.mxu0 %v6170
    %7320 = vmatpush2.bf16.msra.mxu0 %v6169
    %7321 = vmatprep.subr.bf16.mxu0 %v6162
    %7322 = vmatpush2.bf16.msra.mxu0 %v6161
    %7323 = vmatprep.mubr.bf16.mxu0 %v3998
    %7324 = vmatmul.mubr.bf16.gmra.mxu0 %v3997
    %v7325 = vpop.f32.mrf.mxu0
    %v7326 = vadd.f32 %v4530, %v7325
    %v7327 = vpop.f32.mrf.mxu0
    %v7328 = vadd.f32 %v4534, %v7327
    %v7329 = vpop.f32.mrf.mxu0
    %v7330 = vadd.f32 %v4530, %v7329
    %v7331 = vpop.f32.mrf.mxu0
    %v7332 = vadd.f32 %v4534, %v7331
    %7333 = vdwg.mxu0
    %7334 = vmatprep.subr.bf16.mxu0 %v6282
    %7335 = vmatpush1.bf16.msra.mxu0 %v6281
    %7336 = vmatprep.subr.bf16.mxu0 %v6274
    %7337 = vmatpush1.bf16.msra.mxu0 %v6273
    %7338 = vmatprep.subr.bf16.mxu0 %v6266
    %7339 = vmatpush1.bf16.msra.mxu0 %v6265
    %7340 = vmatprep.subr.bf16.mxu0 %v6258
    %7341 = vmatpush1.bf16.msra.mxu0 %v6257
    %7342 = vmatprep.subr.bf16.mxu0 %v6250
    %7343 = vmatpush1.bf16.msra.mxu0 %v6249
    %7344 = vmatprep.subr.bf16.mxu0 %v6242
    %7345 = vmatpush1.bf16.msra.mxu0 %v6241
    %7346 = vmatprep.subr.bf16.mxu0 %v6234
    %7347 = vmatpush1.bf16.msra.mxu0 %v6233
    %7348 = vmatprep.subr.bf16.mxu0 %v6226
    %7349 = vmatpush1.bf16.msra.mxu0 %v6225
    %7350 = vmatprep.subr.bf16.mxu0 %v6346
    %7351 = vmatpush2.bf16.msra.mxu0 %v6345
    %7352 = vmatprep.subr.bf16.mxu0 %v6338
    %7353 = vmatpush2.bf16.msra.mxu0 %v6337
    %7354 = vmatprep.subr.bf16.mxu0 %v6330
    %7355 = vmatpush2.bf16.msra.mxu0 %v6329
    %7356 = vmatprep.subr.bf16.mxu0 %v6322
    %7357 = vmatpush2.bf16.msra.mxu0 %v6321
    %7358 = vmatprep.subr.bf16.mxu0 %v6314
    %7359 = vmatpush2.bf16.msra.mxu0 %v6313
    %7360 = vmatprep.subr.bf16.mxu0 %v6306
    %7361 = vmatpush2.bf16.msra.mxu0 %v6305
    %7362 = vmatprep.subr.bf16.mxu0 %v6298
    %7363 = vmatpush2.bf16.msra.mxu0 %v6297
    %7364 = vmatprep.subr.bf16.mxu0 %v6290
    %7365 = vmatpush2.bf16.msra.mxu0 %v6289
    %7366 = vmatprep.mubr.bf16.mxu0 %v4000
    %7367 = vmatmul.mubr.bf16.gmra.mxu0 %v3999
    %v7368 = vpop.f32.mrf.mxu0
    %v7369 = vadd.f32 %v7326, %v7368
    %v7370 = vpop.f32.mrf.mxu0
    %v7371 = vadd.f32 %v7328, %v7370
    %v7372 = vpop.f32.mrf.mxu0
    %v7373 = vadd.f32 %v7330, %v7372
    %v7374 = vpop.f32.mrf.mxu0
    %v7375 = vadd.f32 %v7332, %v7374
    %7376 = vdwg.mxu0
    %7377 = vmatprep.subr.bf16.mxu0 %v6410
    %7378 = vmatpush1.bf16.msra.mxu0 %v6409
    %7379 = vmatprep.subr.bf16.mxu0 %v6402
    %7380 = vmatpush1.bf16.msra.mxu0 %v6401
    %7381 = vmatprep.subr.bf16.mxu0 %v6394
    %7382 = vmatpush1.bf16.msra.mxu0 %v6393
    %7383 = vmatprep.subr.bf16.mxu0 %v6386
    %7384 = vmatpush1.bf16.msra.mxu0 %v6385
    %7385 = vmatprep.subr.bf16.mxu0 %v6378
    %7386 = vmatpush1.bf16.msra.mxu0 %v6377
    %7387 = vmatprep.subr.bf16.mxu0 %v6370
    %7388 = vmatpush1.bf16.msra.mxu0 %v6369
    %7389 = vmatprep.subr.bf16.mxu0 %v6362
    %7390 = vmatpush1.bf16.msra.mxu0 %v6361
    %7391 = vmatprep.subr.bf16.mxu0 %v6354
    %7392 = vmatpush1.bf16.msra.mxu0 %v6353
    %7393 = vmatprep.subr.bf16.mxu0 %v6474
    %7394 = vmatpush2.bf16.msra.mxu0 %v6473
    %7395 = vmatprep.subr.bf16.mxu0 %v6466
    %7396 = vmatpush2.bf16.msra.mxu0 %v6465
    %7397 = vmatprep.subr.bf16.mxu0 %v6458
    %7398 = vmatpush2.bf16.msra.mxu0 %v6457
    %7399 = vmatprep.subr.bf16.mxu0 %v6450
    %7400 = vmatpush2.bf16.msra.mxu0 %v6449
    %7401 = vmatprep.subr.bf16.mxu0 %v6442
    %7402 = vmatpush2.bf16.msra.mxu0 %v6441
    %7403 = vmatprep.subr.bf16.mxu0 %v6434
    %7404 = vmatpush2.bf16.msra.mxu0 %v6433
    %7405 = vmatprep.subr.bf16.mxu0 %v6426
    %7406 = vmatpush2.bf16.msra.mxu0 %v6425
    %7407 = vmatprep.subr.bf16.mxu0 %v6418
    %7408 = vmatpush2.bf16.msra.mxu0 %v6417
    %7409 = vmatprep.mubr.bf16.mxu0 %v4002
    %7410 = vmatmul.mubr.bf16.gmra.mxu0 %v4001
    %v7411 = vpop.f32.mrf.mxu0
    %v7412 = vadd.f32 %v7369, %v7411
    %v7413 = vpop.f32.mrf.mxu0
    %v7414 = vadd.f32 %v7371, %v7413
    %v7415 = vpop.f32.mrf.mxu0
    %v7416 = vadd.f32 %v7373, %v7415
    %v7417 = vpop.f32.mrf.mxu0
    %v7418 = vadd.f32 %v7375, %v7417
    %7419 = vdwg.mxu0
    %7420 = vmatprep.subr.bf16.mxu0 %v6538
    %7421 = vmatpush1.bf16.msra.mxu0 %v6537
    %7422 = vmatprep.subr.bf16.mxu0 %v6530
    %7423 = vmatpush1.bf16.msra.mxu0 %v6529
    %7424 = vmatprep.subr.bf16.mxu0 %v6522
    %7425 = vmatpush1.bf16.msra.mxu0 %v6521
    %7426 = vmatprep.subr.bf16.mxu0 %v6514
    %7427 = vmatpush1.bf16.msra.mxu0 %v6513
    %7428 = vmatprep.subr.bf16.mxu0 %v6506
    %7429 = vmatpush1.bf16.msra.mxu0 %v6505
    %7430 = vmatprep.subr.bf16.mxu0 %v6498
    %7431 = vmatpush1.bf16.msra.mxu0 %v6497
    %7432 = vmatprep.subr.bf16.mxu0 %v6490
    %7433 = vmatpush1.bf16.msra.mxu0 %v6489
    %7434 = vmatprep.subr.bf16.mxu0 %v6482
    %7435 = vmatpush1.bf16.msra.mxu0 %v6481
    %7436 = vmatprep.subr.bf16.mxu0 %v6602
    %7437 = vmatpush2.bf16.msra.mxu0 %v6601
    %7438 = vmatprep.subr.bf16.mxu0 %v6594
    %7439 = vmatpush2.bf16.msra.mxu0 %v6593
    %7440 = vmatprep.subr.bf16.mxu0 %v6586
    %7441 = vmatpush2.bf16.msra.mxu0 %v6585
    %7442 = vmatprep.subr.bf16.mxu0 %v6578
    %7443 = vmatpush2.bf16.msra.mxu0 %v6577
    %7444 = vmatprep.subr.bf16.mxu0 %v6570
    %7445 = vmatpush2.bf16.msra.mxu0 %v6569
    %7446 = vmatprep.subr.bf16.mxu0 %v6562
    %7447 = vmatpush2.bf16.msra.mxu0 %v6561
    %7448 = vmatprep.subr.bf16.mxu0 %v6554
    %7449 = vmatpush2.bf16.msra.mxu0 %v6553
    %7450 = vmatprep.subr.bf16.mxu0 %v6546
    %7451 = vmatpush2.bf16.msra.mxu0 %v6545
    %7452 = vmatprep.mubr.bf16.mxu0 %v4004
    %7453 = vmatmul.mubr.bf16.gmra.mxu0 %v4003
    %v7454 = vpop.f32.mrf.mxu0
    %v7455 = vadd.f32 %v7412, %v7454
    %v7456 = vpop.f32.mrf.mxu0
    %v7457 = vadd.f32 %v7414, %v7456
    %v7458 = vpop.f32.mrf.mxu0
    %v7459 = vadd.f32 %v7416, %v7458
    %v7460 = vpop.f32.mrf.mxu0
    %v7461 = vadd.f32 %v7418, %v7460
    %7462 = vdwg.mxu0
    %7463 = vmatprep.subr.bf16.mxu0 %v6156
    %7464 = vmatpush1.bf16.msra.mxu0 %v6155
    %7465 = vmatprep.subr.bf16.mxu0 %v6148
    %7466 = vmatpush1.bf16.msra.mxu0 %v6147
    %7467 = vmatprep.subr.bf16.mxu0 %v6140
    %7468 = vmatpush1.bf16.msra.mxu0 %v6139
    %7469 = vmatprep.subr.bf16.mxu0 %v6132
    %7470 = vmatpush1.bf16.msra.mxu0 %v6131
    %7471 = vmatprep.subr.bf16.mxu0 %v6124
    %7472 = vmatpush1.bf16.msra.mxu0 %v6123
    %7473 = vmatprep.subr.bf16.mxu0 %v6116
    %7474 = vmatpush1.bf16.msra.mxu0 %v6115
    %7475 = vmatprep.subr.bf16.mxu0 %v6108
    %7476 = vmatpush1.bf16.msra.mxu0 %v6107
    %7477 = vmatprep.subr.bf16.mxu0 %v6100
    %7478 = vmatpush1.bf16.msra.mxu0 %v6099
    %7479 = vmatprep.subr.bf16.mxu0 %v6220
    %7480 = vmatpush2.bf16.msra.mxu0 %v6219
    %7481 = vmatprep.subr.bf16.mxu0 %v6212
    %7482 = vmatpush2.bf16.msra.mxu0 %v6211
    %7483 = vmatprep.subr.bf16.mxu0 %v6204
    %7484 = vmatpush2.bf16.msra.mxu0 %v6203
    %7485 = vmatprep.subr.bf16.mxu0 %v6196
    %7486 = vmatpush2.bf16.msra.mxu0 %v6195
    %7487 = vmatprep.subr.bf16.mxu0 %v6188
    %7488 = vmatpush2.bf16.msra.mxu0 %v6187
    %7489 = vmatprep.subr.bf16.mxu0 %v6180
    %7490 = vmatpush2.bf16.msra.mxu0 %v6179
    %7491 = vmatprep.subr.bf16.mxu0 %v6172
    %7492 = vmatpush2.bf16.msra.mxu0 %v6171
    %7493 = vmatprep.subr.bf16.mxu0 %v6164
    %7494 = vmatpush2.bf16.msra.mxu0 %v6163
    %7495 = vmatprep.mubr.bf16.mxu0 %v3998
    %7496 = vmatmul.mubr.bf16.gmra.mxu0 %v3997
    %v7497 = vpop.f32.mrf.mxu0
    %v7498 = vadd.f32 %v4538, %v7497
    %v7499 = vpop.f32.mrf.mxu0
    %v7500 = vadd.f32 %v4542, %v7499
    %v7501 = vpop.f32.mrf.mxu0
    %v7502 = vadd.f32 %v4538, %v7501
    %v7503 = vpop.f32.mrf.mxu0
    %v7504 = vadd.f32 %v4542, %v7503
    %7505 = vdwg.mxu0
    %7506 = vmatprep.subr.bf16.mxu0 %v6284
    %7507 = vmatpush1.bf16.msra.mxu0 %v6283
    %7508 = vmatprep.subr.bf16.mxu0 %v6276
    %7509 = vmatpush1.bf16.msra.mxu0 %v6275
    %7510 = vmatprep.subr.bf16.mxu0 %v6268
    %7511 = vmatpush1.bf16.msra.mxu0 %v6267
    %7512 = vmatprep.subr.bf16.mxu0 %v6260
    %7513 = vmatpush1.bf16.msra.mxu0 %v6259
    %7514 = vmatprep.subr.bf16.mxu0 %v6252
    %7515 = vmatpush1.bf16.msra.mxu0 %v6251
    %7516 = vmatprep.subr.bf16.mxu0 %v6244
    %7517 = vmatpush1.bf16.msra.mxu0 %v6243
    %7518 = vmatprep.subr.bf16.mxu0 %v6236
    %7519 = vmatpush1.bf16.msra.mxu0 %v6235
    %7520 = vmatprep.subr.bf16.mxu0 %v6228
    %7521 = vmatpush1.bf16.msra.mxu0 %v6227
    %7522 = vmatprep.subr.bf16.mxu0 %v6348
    %7523 = vmatpush2.bf16.msra.mxu0 %v6347
    %7524 = vmatprep.subr.bf16.mxu0 %v6340
    %7525 = vmatpush2.bf16.msra.mxu0 %v6339
    %7526 = vmatprep.subr.bf16.mxu0 %v6332
    %7527 = vmatpush2.bf16.msra.mxu0 %v6331
    %7528 = vmatprep.subr.bf16.mxu0 %v6324
    %7529 = vmatpush2.bf16.msra.mxu0 %v6323
    %7530 = vmatprep.subr.bf16.mxu0 %v6316
    %7531 = vmatpush2.bf16.msra.mxu0 %v6315
    %7532 = vmatprep.subr.bf16.mxu0 %v6308
    %7533 = vmatpush2.bf16.msra.mxu0 %v6307
    %7534 = vmatprep.subr.bf16.mxu0 %v6300
    %7535 = vmatpush2.bf16.msra.mxu0 %v6299
    %7536 = vmatprep.subr.bf16.mxu0 %v6292
    %7537 = vmatpush2.bf16.msra.mxu0 %v6291
    %7538 = vmatprep.mubr.bf16.mxu0 %v4000
    %7539 = vmatmul.mubr.bf16.gmra.mxu0 %v3999
    %v7540 = vpop.f32.mrf.mxu0
    %v7541 = vadd.f32 %v7498, %v7540
    %v7542 = vpop.f32.mrf.mxu0
    %v7543 = vadd.f32 %v7500, %v7542
    %v7544 = vpop.f32.mrf.mxu0
    %v7545 = vadd.f32 %v7502, %v7544
    %v7546 = vpop.f32.mrf.mxu0
    %v7547 = vadd.f32 %v7504, %v7546
    %7548 = vdwg.mxu0
    %7549 = vmatprep.subr.bf16.mxu0 %v6412
    %7550 = vmatpush1.bf16.msra.mxu0 %v6411
    %7551 = vmatprep.subr.bf16.mxu0 %v6404
    %7552 = vmatpush1.bf16.msra.mxu0 %v6403
    %7553 = vmatprep.subr.bf16.mxu0 %v6396
    %7554 = vmatpush1.bf16.msra.mxu0 %v6395
    %7555 = vmatprep.subr.bf16.mxu0 %v6388
    %7556 = vmatpush1.bf16.msra.mxu0 %v6387
    %7557 = vmatprep.subr.bf16.mxu0 %v6380
    %7558 = vmatpush1.bf16.msra.mxu0 %v6379
    %7559 = vmatprep.subr.bf16.mxu0 %v6372
    %7560 = vmatpush1.bf16.msra.mxu0 %v6371
    %7561 = vmatprep.subr.bf16.mxu0 %v6364
    %7562 = vmatpush1.bf16.msra.mxu0 %v6363
    %7563 = vmatprep.subr.bf16.mxu0 %v6356
    %7564 = vmatpush1.bf16.msra.mxu0 %v6355
    %7565 = vmatprep.subr.bf16.mxu0 %v6476
    %7566 = vmatpush2.bf16.msra.mxu0 %v6475
    %7567 = vmatprep.subr.bf16.mxu0 %v6468
    %7568 = vmatpush2.bf16.msra.mxu0 %v6467
    %7569 = vmatprep.subr.bf16.mxu0 %v6460
    %7570 = vmatpush2.bf16.msra.mxu0 %v6459
    %7571 = vmatprep.subr.bf16.mxu0 %v6452
    %7572 = vmatpush2.bf16.msra.mxu0 %v6451
    %7573 = vmatprep.subr.bf16.mxu0 %v6444
    %7574 = vmatpush2.bf16.msra.mxu0 %v6443
    %7575 = vmatprep.subr.bf16.mxu0 %v6436
    %7576 = vmatpush2.bf16.msra.mxu0 %v6435
    %7577 = vmatprep.subr.bf16.mxu0 %v6428
    %7578 = vmatpush2.bf16.msra.mxu0 %v6427
    %7579 = vmatprep.subr.bf16.mxu0 %v6420
    %7580 = vmatpush2.bf16.msra.mxu0 %v6419
    %7581 = vmatprep.mubr.bf16.mxu0 %v4002
    %7582 = vmatmul.mubr.bf16.gmra.mxu0 %v4001
    %v7583 = vpop.f32.mrf.mxu0
    %v7584 = vadd.f32 %v7541, %v7583
    %v7585 = vpop.f32.mrf.mxu0
    %v7586 = vadd.f32 %v7543, %v7585
    %v7587 = vpop.f32.mrf.mxu0
    %v7588 = vadd.f32 %v7545, %v7587
    %v7589 = vpop.f32.mrf.mxu0
    %v7590 = vadd.f32 %v7547, %v7589
    %7591 = vdwg.mxu0
    %7592 = vmatprep.subr.bf16.mxu0 %v6540
    %7593 = vmatpush1.bf16.msra.mxu0 %v6539
    %7594 = vmatprep.subr.bf16.mxu0 %v6532
    %7595 = vmatpush1.bf16.msra.mxu0 %v6531
    %7596 = vmatprep.subr.bf16.mxu0 %v6524
    %7597 = vmatpush1.bf16.msra.mxu0 %v6523
    %7598 = vmatprep.subr.bf16.mxu0 %v6516
    %7599 = vmatpush1.bf16.msra.mxu0 %v6515
    %7600 = vmatprep.subr.bf16.mxu0 %v6508
    %7601 = vmatpush1.bf16.msra.mxu0 %v6507
    %7602 = vmatprep.subr.bf16.mxu0 %v6500
    %7603 = vmatpush1.bf16.msra.mxu0 %v6499
    %7604 = vmatprep.subr.bf16.mxu0 %v6492
    %7605 = vmatpush1.bf16.msra.mxu0 %v6491
    %7606 = vmatprep.subr.bf16.mxu0 %v6484
    %7607 = vmatpush1.bf16.msra.mxu0 %v6483
    %7608 = vmatprep.subr.bf16.mxu0 %v6604
    %7609 = vmatpush2.bf16.msra.mxu0 %v6603
    %7610 = vmatprep.subr.bf16.mxu0 %v6596
    %7611 = vmatpush2.bf16.msra.mxu0 %v6595
    %7612 = vmatprep.subr.bf16.mxu0 %v6588
    %7613 = vmatpush2.bf16.msra.mxu0 %v6587
    %7614 = vmatprep.subr.bf16.mxu0 %v6580
    %7615 = vmatpush2.bf16.msra.mxu0 %v6579
    %7616 = vmatprep.subr.bf16.mxu0 %v6572
    %7617 = vmatpush2.bf16.msra.mxu0 %v6571
    %7618 = vmatprep.subr.bf16.mxu0 %v6564
    %7619 = vmatpush2.bf16.msra.mxu0 %v6563
    %7620 = vmatprep.subr.bf16.mxu0 %v6556
    %7621 = vmatpush2.bf16.msra.mxu0 %v6555
    %7622 = vmatprep.subr.bf16.mxu0 %v6548
    %7623 = vmatpush2.bf16.msra.mxu0 %v6547
    %7624 = vmatprep.mubr.bf16.mxu0 %v4004
    %7625 = vmatmul.mubr.bf16.gmra.mxu0 %v4003
    %v7626 = vpop.f32.mrf.mxu0
    %v7627 = vadd.f32 %v7584, %v7626
    %v7628 = vpop.f32.mrf.mxu0
    %v7629 = vadd.f32 %v7586, %v7628
    %v7630 = vpop.f32.mrf.mxu0
    %v7631 = vadd.f32 %v7588, %v7630
    %v7632 = vpop.f32.mrf.mxu0
    %v7633 = vadd.f32 %v7590, %v7632
    %7634 = vdwg.mxu0
    %7635 = vmatprep.subr.bf16.mxu0 %v6158
    %7636 = vmatpush1.bf16.msra.mxu0 %v6157
    %7637 = vmatprep.subr.bf16.mxu0 %v6150
    %7638 = vmatpush1.bf16.msra.mxu0 %v6149
    %7639 = vmatprep.subr.bf16.mxu0 %v6142
    %7640 = vmatpush1.bf16.msra.mxu0 %v6141
    %7641 = vmatprep.subr.bf16.mxu0 %v6134
    %7642 = vmatpush1.bf16.msra.mxu0 %v6133
    %7643 = vmatprep.subr.bf16.mxu0 %v6126
    %7644 = vmatpush1.bf16.msra.mxu0 %v6125
    %7645 = vmatprep.subr.bf16.mxu0 %v6118
    %7646 = vmatpush1.bf16.msra.mxu0 %v6117
    %7647 = vmatprep.subr.bf16.mxu0 %v6110
    %7648 = vmatpush1.bf16.msra.mxu0 %v6109
    %7649 = vmatprep.subr.bf16.mxu0 %v6102
    %7650 = vmatpush1.bf16.msra.mxu0 %v6101
    %7651 = vmatprep.subr.bf16.mxu0 %v6222
    %7652 = vmatpush2.bf16.msra.mxu0 %v6221
    %7653 = vmatprep.subr.bf16.mxu0 %v6214
    %7654 = vmatpush2.bf16.msra.mxu0 %v6213
    %7655 = vmatprep.subr.bf16.mxu0 %v6206
    %7656 = vmatpush2.bf16.msra.mxu0 %v6205
    %7657 = vmatprep.subr.bf16.mxu0 %v6198
    %7658 = vmatpush2.bf16.msra.mxu0 %v6197
    %7659 = vmatprep.subr.bf16.mxu0 %v6190
    %7660 = vmatpush2.bf16.msra.mxu0 %v6189
    %7661 = vmatprep.subr.bf16.mxu0 %v6182
    %7662 = vmatpush2.bf16.msra.mxu0 %v6181
    %7663 = vmatprep.subr.bf16.mxu0 %v6174
    %7664 = vmatpush2.bf16.msra.mxu0 %v6173
    %7665 = vmatprep.subr.bf16.mxu0 %v6166
    %7666 = vmatpush2.bf16.msra.mxu0 %v6165
    %7667 = vmatprep.mubr.bf16.mxu0 %v3998
    %7668 = vmatmul.mubr.bf16.gmra.mxu0 %v3997
    %v7669 = vpop.f32.mrf.mxu0
    %v7670 = vadd.f32 %v4546, %v7669
    %v7671 = vpop.f32.mrf.mxu0
    %v7672 = vadd.f32 %v4550, %v7671
    %v7673 = vpop.f32.mrf.mxu0
    %v7674 = vadd.f32 %v4546, %v7673
    %v7675 = vpop.f32.mrf.mxu0
    %v7676 = vadd.f32 %v4550, %v7675
    %7677 = vdwg.mxu0
    %7678 = vmatprep.subr.bf16.mxu0 %v6286
    %7679 = vmatpush1.bf16.msra.mxu0 %v6285
    %7680 = vmatprep.subr.bf16.mxu0 %v6278
    %7681 = vmatpush1.bf16.msra.mxu0 %v6277
    %7682 = vmatprep.subr.bf16.mxu0 %v6270
    %7683 = vmatpush1.bf16.msra.mxu0 %v6269
    %7684 = vmatprep.subr.bf16.mxu0 %v6262
    %7685 = vmatpush1.bf16.msra.mxu0 %v6261
    %7686 = vmatprep.subr.bf16.mxu0 %v6254
    %7687 = vmatpush1.bf16.msra.mxu0 %v6253
    %7688 = vmatprep.subr.bf16.mxu0 %v6246
    %7689 = vmatpush1.bf16.msra.mxu0 %v6245
    %7690 = vmatprep.subr.bf16.mxu0 %v6238
    %7691 = vmatpush1.bf16.msra.mxu0 %v6237
    %7692 = vmatprep.subr.bf16.mxu0 %v6230
    %7693 = vmatpush1.bf16.msra.mxu0 %v6229
    %7694 = vmatprep.subr.bf16.mxu0 %v6350
    %7695 = vmatpush2.bf16.msra.mxu0 %v6349
    %7696 = vmatprep.subr.bf16.mxu0 %v6342
    %7697 = vmatpush2.bf16.msra.mxu0 %v6341
    %7698 = vmatprep.subr.bf16.mxu0 %v6334
    %7699 = vmatpush2.bf16.msra.mxu0 %v6333
    %7700 = vmatprep.subr.bf16.mxu0 %v6326
    %7701 = vmatpush2.bf16.msra.mxu0 %v6325
    %7702 = vmatprep.subr.bf16.mxu0 %v6318
    %7703 = vmatpush2.bf16.msra.mxu0 %v6317
    %7704 = vmatprep.subr.bf16.mxu0 %v6310
    %7705 = vmatpush2.bf16.msra.mxu0 %v6309
    %7706 = vmatprep.subr.bf16.mxu0 %v6302
    %7707 = vmatpush2.bf16.msra.mxu0 %v6301
    %7708 = vmatprep.subr.bf16.mxu0 %v6294
    %7709 = vmatpush2.bf16.msra.mxu0 %v6293
    %7710 = vmatprep.mubr.bf16.mxu0 %v4000
    %7711 = vmatmul.mubr.bf16.gmra.mxu0 %v3999
    %v7712 = vpop.f32.mrf.mxu0
    %v7713 = vadd.f32 %v7670, %v7712
    %v7714 = vpop.f32.mrf.mxu0
    %v7715 = vadd.f32 %v7672, %v7714
    %v7716 = vpop.f32.mrf.mxu0
    %v7717 = vadd.f32 %v7674, %v7716
    %v7718 = vpop.f32.mrf.mxu0
    %v7719 = vadd.f32 %v7676, %v7718
    %7720 = vdwg.mxu0
    %7721 = vmatprep.subr.bf16.mxu0 %v6414
    %7722 = vmatpush1.bf16.msra.mxu0 %v6413
    %7723 = vmatprep.subr.bf16.mxu0 %v6406
    %7724 = vmatpush1.bf16.msra.mxu0 %v6405
    %7725 = vmatprep.subr.bf16.mxu0 %v6398
    %7726 = vmatpush1.bf16.msra.mxu0 %v6397
    %7727 = vmatprep.subr.bf16.mxu0 %v6390
    %7728 = vmatpush1.bf16.msra.mxu0 %v6389
    %7729 = vmatprep.subr.bf16.mxu0 %v6382
    %7730 = vmatpush1.bf16.msra.mxu0 %v6381
    %7731 = vmatprep.subr.bf16.mxu0 %v6374
    %7732 = vmatpush1.bf16.msra.mxu0 %v6373
    %7733 = vmatprep.subr.bf16.mxu0 %v6366
    %7734 = vmatpush1.bf16.msra.mxu0 %v6365
    %7735 = vmatprep.subr.bf16.mxu0 %v6358
    %7736 = vmatpush1.bf16.msra.mxu0 %v6357
    %7737 = vmatprep.subr.bf16.mxu0 %v6478
    %7738 = vmatpush2.bf16.msra.mxu0 %v6477
    %7739 = vmatprep.subr.bf16.mxu0 %v6470
    %7740 = vmatpush2.bf16.msra.mxu0 %v6469
    %7741 = vmatprep.subr.bf16.mxu0 %v6462
    %7742 = vmatpush2.bf16.msra.mxu0 %v6461
    %7743 = vmatprep.subr.bf16.mxu0 %v6454
    %7744 = vmatpush2.bf16.msra.mxu0 %v6453
    %7745 = vmatprep.subr.bf16.mxu0 %v6446
    %7746 = vmatpush2.bf16.msra.mxu0 %v6445
    %7747 = vmatprep.subr.bf16.mxu0 %v6438
    %7748 = vmatpush2.bf16.msra.mxu0 %v6437
    %7749 = vmatprep.subr.bf16.mxu0 %v6430
    %7750 = vmatpush2.bf16.msra.mxu0 %v6429
    %7751 = vmatprep.subr.bf16.mxu0 %v6422
    %7752 = vmatpush2.bf16.msra.mxu0 %v6421
    %7753 = vmatprep.mubr.bf16.mxu0 %v4002
    %7754 = vmatmul.mubr.bf16.gmra.mxu0 %v4001
    %v7755 = vpop.f32.mrf.mxu0
    %v7756 = vadd.f32 %v7713, %v7755
    %v7757 = vpop.f32.mrf.mxu0
    %v7758 = vadd.f32 %v7715, %v7757
    %v7759 = vpop.f32.mrf.mxu0
    %v7760 = vadd.f32 %v7717, %v7759
    %v7761 = vpop.f32.mrf.mxu0
    %v7762 = vadd.f32 %v7719, %v7761
    %7763 = vdwg.mxu0
    %7764 = vmatprep.subr.bf16.mxu0 %v6542
    %7765 = vmatpush1.bf16.msra.mxu0 %v6541
    %7766 = vmatprep.subr.bf16.mxu0 %v6534
    %7767 = vmatpush1.bf16.msra.mxu0 %v6533
    %7768 = vmatprep.subr.bf16.mxu0 %v6526
    %7769 = vmatpush1.bf16.msra.mxu0 %v6525
    %7770 = vmatprep.subr.bf16.mxu0 %v6518
    %7771 = vmatpush1.bf16.msra.mxu0 %v6517
    %7772 = vmatprep.subr.bf16.mxu0 %v6510
    %7773 = vmatpush1.bf16.msra.mxu0 %v6509
    %7774 = vmatprep.subr.bf16.mxu0 %v6502
    %7775 = vmatpush1.bf16.msra.mxu0 %v6501
    %7776 = vmatprep.subr.bf16.mxu0 %v6494
    %7777 = vmatpush1.bf16.msra.mxu0 %v6493
    %7778 = vmatprep.subr.bf16.mxu0 %v6486
    %7779 = vmatpush1.bf16.msra.mxu0 %v6485
    %7780 = vmatprep.subr.bf16.mxu0 %v6606
    %7781 = vmatpush2.bf16.msra.mxu0 %v6605
    %7782 = vmatprep.subr.bf16.mxu0 %v6598
    %7783 = vmatpush2.bf16.msra.mxu0 %v6597
    %7784 = vmatprep.subr.bf16.mxu0 %v6590
    %7785 = vmatpush2.bf16.msra.mxu0 %v6589
    %7786 = vmatprep.subr.bf16.mxu0 %v6582
    %7787 = vmatpush2.bf16.msra.mxu0 %v6581
    %7788 = vmatprep.subr.bf16.mxu0 %v6574
    %7789 = vmatpush2.bf16.msra.mxu0 %v6573
    %7790 = vmatprep.subr.bf16.mxu0 %v6566
    %7791 = vmatpush2.bf16.msra.mxu0 %v6565
    %7792 = vmatprep.subr.bf16.mxu0 %v6558
    %7793 = vmatpush2.bf16.msra.mxu0 %v6557
    %7794 = vmatprep.subr.bf16.mxu0 %v6550
    %7795 = vmatpush2.bf16.msra.mxu0 %v6549
    %7796 = vmatprep.mubr.bf16.mxu0 %v4004
    %7797 = vmatmul.mubr.bf16.gmra.mxu0 %v4003
    %v7798 = vpop.f32.mrf.mxu0
    %v7799 = vadd.f32 %v7756, %v7798
    %v7800 = vpop.f32.mrf.mxu0
    %v7801 = vadd.f32 %v7758, %v7800
    %v7802 = vpop.f32.mrf.mxu0
    %v7803 = vadd.f32 %v7760, %v7802
    %v7804 = vpop.f32.mrf.mxu0
    %v7805 = vadd.f32 %v7762, %v7804
    %7806 = vdwg.mxu0
    %vm7807 = vcmp.ge.f32.partialorder %v7283, 0.0
    %vm7808 = vcmp.ge.f32.partialorder %v7285, 0.0
    %vm7809 = vcmp.ge.f32.partialorder %v7455, 0.0
    %vm7810 = vcmp.ge.f32.partialorder %v7457, 0.0
    %vm7811 = vcmp.ge.f32.partialorder %v7627, 0.0
    %vm7812 = vcmp.ge.f32.partialorder %v7629, 0.0
    %vm7813 = vcmp.ge.f32.partialorder %v7799, 0.0
    %vm7814 = vcmp.ge.f32.partialorder %v7801, 0.0
    %vm7815 = vcmp.ge.f32.partialorder %v7287, 0.0
    %vm7816 = vcmp.ge.f32.partialorder %v7289, 0.0
    %vm7817 = vcmp.ge.f32.partialorder %v7459, 0.0
    %vm7818 = vcmp.ge.f32.partialorder %v7461, 0.0
    %vm7819 = vcmp.ge.f32.partialorder %v7631, 0.0
    %vm7820 = vcmp.ge.f32.partialorder %v7633, 0.0
    %vm7821 = vcmp.ge.f32.partialorder %v7803, 0.0
    %vm7822 = vcmp.ge.f32.partialorder %v7805, 0.0
    %v7823 = vmul.f32 %v7283, 0.2
    %v7824 = vmul.f32 %v7285, 0.2
    %v7825 = vmul.f32 %v7455, 0.2
    %v7826 = vmul.f32 %v7457, 0.2
    %v7827 = vmul.f32 %v7627, 0.2
    %v7828 = vmul.f32 %v7629, 0.2
    %v7829 = vmul.f32 %v7799, 0.2
    %v7830 = vmul.f32 %v7801, 0.2
    %v7831 = vmul.f32 %v7287, 0.2
    %v7832 = vmul.f32 %v7289, 0.2
    %v7833 = vmul.f32 %v7459, 0.2
    %v7834 = vmul.f32 %v7461, 0.2
    %v7835 = vmul.f32 %v7631, 0.2
    %v7836 = vmul.f32 %v7633, 0.2
    %v7837 = vmul.f32 %v7803, 0.2
    %v7838 = vmul.f32 %v7805, 0.2
    %v7839 = vsel %vm7807, %v7283, %v7823
    %v7840 = vsel %vm7808, %v7285, %v7824
    %v7841 = vsel %vm7809, %v7455, %v7825
    %v7842 = vsel %vm7810, %v7457, %v7826
    %v7843 = vsel %vm7811, %v7627, %v7827
    %v7844 = vsel %vm7812, %v7629, %v7828
    %v7845 = vsel %vm7813, %v7799, %v7829
    %v7846 = vsel %vm7814, %v7801, %v7830
    %v7847 = vsel %vm7815, %v7287, %v7831
    %v7848 = vsel %vm7816, %v7289, %v7832
    %v7849 = vsel %vm7817, %v7459, %v7833
    %v7850 = vsel %vm7818, %v7461, %v7834
    %v7851 = vsel %vm7819, %v7631, %v7835
    %v7852 = vsel %vm7820, %v7633, %v7836
    %v7853 = vsel %vm7821, %v7803, %v7837
    %v7854 = vsel %vm7822, %v7805, %v7838
    %s7855 = smul.u32 %s3993, 1
    %s7856 = sshll.u32 %s7855, 4
    %7857 = dma.done %s83, %s7856
    %v7858 = vpack.c.bf16 %v7847, %v7839
    %v7859 = vpack.c.bf16 %v7848, %v7840
    %v7860 = vpack.c.bf16 %v7849, %v7841
    %v7861 = vpack.c.bf16 %v7850, %v7842
    %v7862 = vpack.c.bf16 %v7851, %v7843
    %v7863 = vpack.c.bf16 %v7852, %v7844
    %v7864 = vpack.c.bf16 %v7853, %v7845
    %v7865 = vpack.c.bf16 %v7854, %v7846
    %v7866 = vld [vmem:[#allocation3] sm:$0xf]
    %v7867 = vld [vmem:[#allocation3 + $0x4] sm:$0xf]
    %v7868 = vld [vmem:[#allocation3 + $0x8] sm:$0xf]
    %v7869 = vld [vmem:[#allocation3 + $0xc] sm:$0xf]
    %v7870 = vld [vmem:[#allocation3 + $0x10] sm:$0xf]
    %v7871 = vld [vmem:[#allocation3 + $0x14] sm:$0xf]
    %v7872 = vld [vmem:[#allocation3 + $0x18] sm:$0xf]
    %v7873 = vld [vmem:[#allocation3 + $0x1c] sm:$0xf]
    %v7874 = vld [vmem:[#allocation3 + $0x20] sm:$0xf]
    %v7875 = vld [vmem:[#allocation3 + $0x24] sm:$0xf]
    %v7876 = vld [vmem:[#allocation3 + $0x28] sm:$0xf]
    %v7877 = vld [vmem:[#allocation3 + $0x2c] sm:$0xf]
    %v7878 = vld [vmem:[#allocation3 + $0x30] sm:$0xf]
    %v7879 = vld [vmem:[#allocation3 + $0x34] sm:$0xf]
    %v7880 = vld [vmem:[#allocation3 + $0x38] sm:$0xf]
    %v7881 = vld [vmem:[#allocation3 + $0x3c] sm:$0xf]
    %v7882 = vld [vmem:[#allocation3 + $0x40] sm:$0xf]
    %v7883 = vld [vmem:[#allocation3 + $0x44] sm:$0xf]
    %v7884 = vld [vmem:[#allocation3 + $0x48] sm:$0xf]
    %v7885 = vld [vmem:[#allocation3 + $0x4c] sm:$0xf]
    %v7886 = vld [vmem:[#allocation3 + $0x50] sm:$0xf]
    %v7887 = vld [vmem:[#allocation3 + $0x54] sm:$0xf]
    %v7888 = vld [vmem:[#allocation3 + $0x58] sm:$0xf]
    %v7889 = vld [vmem:[#allocation3 + $0x5c] sm:$0xf]
    %v7890 = vld [vmem:[#allocation3 + $0x60] sm:$0xf]
    %v7891 = vld [vmem:[#allocation3 + $0x64] sm:$0xf]
    %v7892 = vld [vmem:[#allocation3 + $0x68] sm:$0xf]
    %v7893 = vld [vmem:[#allocation3 + $0x6c] sm:$0xf]
    %v7894 = vld [vmem:[#allocation3 + $0x70] sm:$0xf]
    %v7895 = vld [vmem:[#allocation3 + $0x74] sm:$0xf]
    %v7896 = vld [vmem:[#allocation3 + $0x78] sm:$0xf]
    %v7897 = vld [vmem:[#allocation3 + $0x7c] sm:$0xf]
    %v7898 = vld [vmem:[#allocation3 + $0x80] sm:$0xf]
    %v7899 = vld [vmem:[#allocation3 + $0x84] sm:$0xf]
    %v7900 = vld [vmem:[#allocation3 + $0x88] sm:$0xf]
    %v7901 = vld [vmem:[#allocation3 + $0x8c] sm:$0xf]
    %v7902 = vld [vmem:[#allocation3 + $0x90] sm:$0xf]
    %v7903 = vld [vmem:[#allocation3 + $0x94] sm:$0xf]
    %v7904 = vld [vmem:[#allocation3 + $0x98] sm:$0xf]
    %v7905 = vld [vmem:[#allocation3 + $0x9c] sm:$0xf]
    %v7906 = vld [vmem:[#allocation3 + $0xa0] sm:$0xf]
    %v7907 = vld [vmem:[#allocation3 + $0xa4] sm:$0xf]
    %v7908 = vld [vmem:[#allocation3 + $0xa8] sm:$0xf]
    %v7909 = vld [vmem:[#allocation3 + $0xac] sm:$0xf]
    %v7910 = vld [vmem:[#allocation3 + $0xb0] sm:$0xf]
    %v7911 = vld [vmem:[#allocation3 + $0xb4] sm:$0xf]
    %v7912 = vld [vmem:[#allocation3 + $0xb8] sm:$0xf]
    %v7913 = vld [vmem:[#allocation3 + $0xbc] sm:$0xf]
    %v7914 = vld [vmem:[#allocation3 + $0xc0] sm:$0xf]
    %v7915 = vld [vmem:[#allocation3 + $0xc4] sm:$0xf]
    %v7916 = vld [vmem:[#allocation3 + $0xc8] sm:$0xf]
    %v7917 = vld [vmem:[#allocation3 + $0xcc] sm:$0xf]
    %v7918 = vld [vmem:[#allocation3 + $0xd0] sm:$0xf]
    %v7919 = vld [vmem:[#allocation3 + $0xd4] sm:$0xf]
    %v7920 = vld [vmem:[#allocation3 + $0xd8] sm:$0xf]
    %v7921 = vld [vmem:[#allocation3 + $0xdc] sm:$0xf]
    %v7922 = vld [vmem:[#allocation3 + $0xe0] sm:$0xf]
    %v7923 = vld [vmem:[#allocation3 + $0xe4] sm:$0xf]
    %v7924 = vld [vmem:[#allocation3 + $0xe8] sm:$0xf]
    %v7925 = vld [vmem:[#allocation3 + $0xec] sm:$0xf]
    %v7926 = vld [vmem:[#allocation3 + $0xf0] sm:$0xf]
    %v7927 = vld [vmem:[#allocation3 + $0xf4] sm:$0xf]
    %v7928 = vld [vmem:[#allocation3 + $0xf8] sm:$0xf]
    %v7929 = vld [vmem:[#allocation3 + $0xfc] sm:$0xf]
    %v7930 = vld [vmem:[#allocation3 + $0x100] sm:$0xf]
    %v7931 = vld [vmem:[#allocation3 + $0x104] sm:$0xf]
    %v7932 = vld [vmem:[#allocation3 + $0x108] sm:$0xf]
    %v7933 = vld [vmem:[#allocation3 + $0x10c] sm:$0xf]
    %v7934 = vld [vmem:[#allocation3 + $0x110] sm:$0xf]
    %v7935 = vld [vmem:[#allocation3 + $0x114] sm:$0xf]
    %v7936 = vld [vmem:[#allocation3 + $0x118] sm:$0xf]
    %v7937 = vld [vmem:[#allocation3 + $0x11c] sm:$0xf]
    %v7938 = vld [vmem:[#allocation3 + $0x120] sm:$0xf]
    %v7939 = vld [vmem:[#allocation3 + $0x124] sm:$0xf]
    %v7940 = vld [vmem:[#allocation3 + $0x128] sm:$0xf]
    %v7941 = vld [vmem:[#allocation3 + $0x12c] sm:$0xf]
    %v7942 = vld [vmem:[#allocation3 + $0x130] sm:$0xf]
    %v7943 = vld [vmem:[#allocation3 + $0x134] sm:$0xf]
    %v7944 = vld [vmem:[#allocation3 + $0x138] sm:$0xf]
    %v7945 = vld [vmem:[#allocation3 + $0x13c] sm:$0xf]
    %v7946 = vld [vmem:[#allocation3 + $0x140] sm:$0xf]
    %v7947 = vld [vmem:[#allocation3 + $0x144] sm:$0xf]
    %v7948 = vld [vmem:[#allocation3 + $0x148] sm:$0xf]
    %v7949 = vld [vmem:[#allocation3 + $0x14c] sm:$0xf]
    %v7950 = vld [vmem:[#allocation3 + $0x150] sm:$0xf]
    %v7951 = vld [vmem:[#allocation3 + $0x154] sm:$0xf]
    %v7952 = vld [vmem:[#allocation3 + $0x158] sm:$0xf]
    %v7953 = vld [vmem:[#allocation3 + $0x15c] sm:$0xf]
    %v7954 = vld [vmem:[#allocation3 + $0x160] sm:$0xf]
    %v7955 = vld [vmem:[#allocation3 + $0x164] sm:$0xf]
    %v7956 = vld [vmem:[#allocation3 + $0x168] sm:$0xf]
    %v7957 = vld [vmem:[#allocation3 + $0x16c] sm:$0xf]
    %v7958 = vld [vmem:[#allocation3 + $0x170] sm:$0xf]
    %v7959 = vld [vmem:[#allocation3 + $0x174] sm:$0xf]
    %v7960 = vld [vmem:[#allocation3 + $0x178] sm:$0xf]
    %v7961 = vld [vmem:[#allocation3 + $0x17c] sm:$0xf]
    %v7962 = vld [vmem:[#allocation3 + $0x180] sm:$0xf]
    %v7963 = vld [vmem:[#allocation3 + $0x184] sm:$0xf]
    %v7964 = vld [vmem:[#allocation3 + $0x188] sm:$0xf]
    %v7965 = vld [vmem:[#allocation3 + $0x18c] sm:$0xf]
    %v7966 = vld [vmem:[#allocation3 + $0x190] sm:$0xf]
    %v7967 = vld [vmem:[#allocation3 + $0x194] sm:$0xf]
    %v7968 = vld [vmem:[#allocation3 + $0x198] sm:$0xf]
    %v7969 = vld [vmem:[#allocation3 + $0x19c] sm:$0xf]
    %v7970 = vld [vmem:[#allocation3 + $0x1a0] sm:$0xf]
    %v7971 = vld [vmem:[#allocation3 + $0x1a4] sm:$0xf]
    %v7972 = vld [vmem:[#allocation3 + $0x1a8] sm:$0xf]
    %v7973 = vld [vmem:[#allocation3 + $0x1ac] sm:$0xf]
    %v7974 = vld [vmem:[#allocation3 + $0x1b0] sm:$0xf]
    %v7975 = vld [vmem:[#allocation3 + $0x1b4] sm:$0xf]
    %v7976 = vld [vmem:[#allocation3 + $0x1b8] sm:$0xf]
    %v7977 = vld [vmem:[#allocation3 + $0x1bc] sm:$0xf]
    %v7978 = vld [vmem:[#allocation3 + $0x1c0] sm:$0xf]
    %v7979 = vld [vmem:[#allocation3 + $0x1c4] sm:$0xf]
    %v7980 = vld [vmem:[#allocation3 + $0x1c8] sm:$0xf]
    %v7981 = vld [vmem:[#allocation3 + $0x1cc] sm:$0xf]
    %v7982 = vld [vmem:[#allocation3 + $0x1d0] sm:$0xf]
    %v7983 = vld [vmem:[#allocation3 + $0x1d4] sm:$0xf]
    %v7984 = vld [vmem:[#allocation3 + $0x1d8] sm:$0xf]
    %v7985 = vld [vmem:[#allocation3 + $0x1dc] sm:$0xf]
    %v7986 = vld [vmem:[#allocation3 + $0x1e0] sm:$0xf]
    %v7987 = vld [vmem:[#allocation3 + $0x1e4] sm:$0xf]
    %v7988 = vld [vmem:[#allocation3 + $0x1e8] sm:$0xf]
    %v7989 = vld [vmem:[#allocation3 + $0x1ec] sm:$0xf]
    %v7990 = vld [vmem:[#allocation3 + $0x1f0] sm:$0xf]
    %v7991 = vld [vmem:[#allocation3 + $0x1f4] sm:$0xf]
    %v7992 = vld [vmem:[#allocation3 + $0x1f8] sm:$0xf]
    %v7993 = vld [vmem:[#allocation3 + $0x1fc] sm:$0xf]
    %v7994 = vld [vmem:[#allocation10] sm:$0x1]
    %v7996 = vlaneseq
    %v7997 = vshrl.u32 %v7996, 7
    %v7998 = vsub.s32 0, %v7997
    %v7999 = vrot.slane %v7994, %v7998
    %v8129 = vunpack.c.l.b16 %v7866
    %v8130 = vunpack.c.l.b16 %v7867
    %v8131 = vunpack.c.l.b16 %v7868
    %v8132 = vunpack.c.l.b16 %v7869
    %v8133 = vunpack.c.l.b16 %v7870
    %v8134 = vunpack.c.l.b16 %v7871
    %v8135 = vunpack.c.l.b16 %v7872
    %v8136 = vunpack.c.l.b16 %v7873
    %v8137 = vunpack.c.l.b16 %v7874
    %v8138 = vunpack.c.l.b16 %v7875
    %v8139 = vunpack.c.l.b16 %v7876
    %v8140 = vunpack.c.l.b16 %v7877
    %v8141 = vunpack.c.l.b16 %v7878
    %v8142 = vunpack.c.l.b16 %v7879
    %v8143 = vunpack.c.l.b16 %v7880
    %v8144 = vunpack.c.l.b16 %v7881
    %v8145 = vunpack.c.l.b16 %v7882
    %v8146 = vunpack.c.l.b16 %v7883
    %v8147 = vunpack.c.l.b16 %v7884
    %v8148 = vunpack.c.l.b16 %v7885
    %v8149 = vunpack.c.l.b16 %v7886
    %v8150 = vunpack.c.l.b16 %v7887
    %v8151 = vunpack.c.l.b16 %v7888
    %v8152 = vunpack.c.l.b16 %v7889
    %v8153 = vunpack.c.l.b16 %v7890
    %v8154 = vunpack.c.l.b16 %v7891
    %v8155 = vunpack.c.l.b16 %v7892
    %v8156 = vunpack.c.l.b16 %v7893
    %v8157 = vunpack.c.l.b16 %v7894
    %v8158 = vunpack.c.l.b16 %v7895
    %v8159 = vunpack.c.l.b16 %v7896
    %v8160 = vunpack.c.l.b16 %v7897
    %v8161 = vunpack.c.l.b16 %v7898
    %v8162 = vunpack.c.l.b16 %v7899
    %v8163 = vunpack.c.l.b16 %v7900
    %v8164 = vunpack.c.l.b16 %v7901
    %v8165 = vunpack.c.l.b16 %v7902
    %v8166 = vunpack.c.l.b16 %v7903
    %v8167 = vunpack.c.l.b16 %v7904
    %v8168 = vunpack.c.l.b16 %v7905
    %v8169 = vunpack.c.l.b16 %v7906
    %v8170 = vunpack.c.l.b16 %v7907
    %v8171 = vunpack.c.l.b16 %v7908
    %v8172 = vunpack.c.l.b16 %v7909
    %v8173 = vunpack.c.l.b16 %v7910
    %v8174 = vunpack.c.l.b16 %v7911
    %v8175 = vunpack.c.l.b16 %v7912
    %v8176 = vunpack.c.l.b16 %v7913
    %v8177 = vunpack.c.l.b16 %v7914
    %v8178 = vunpack.c.l.b16 %v7915
    %v8179 = vunpack.c.l.b16 %v7916
    %v8180 = vunpack.c.l.b16 %v7917
    %v8181 = vunpack.c.l.b16 %v7918
    %v8182 = vunpack.c.l.b16 %v7919
    %v8183 = vunpack.c.l.b16 %v7920
    %v8184 = vunpack.c.l.b16 %v7921
    %v8185 = vunpack.c.l.b16 %v7922
    %v8186 = vunpack.c.l.b16 %v7923
    %v8187 = vunpack.c.l.b16 %v7924
    %v8188 = vunpack.c.l.b16 %v7925
    %v8189 = vunpack.c.l.b16 %v7926
    %v8190 = vunpack.c.l.b16 %v7927
    %v8191 = vunpack.c.l.b16 %v7928
    %v8192 = vunpack.c.l.b16 %v7929
    %v8193 = vunpack.c.l.b16 %v7930
    %v8194 = vunpack.c.l.b16 %v7931
    %v8195 = vunpack.c.l.b16 %v7932
    %v8196 = vunpack.c.l.b16 %v7933
    %v8197 = vunpack.c.l.b16 %v7934
    %v8198 = vunpack.c.l.b16 %v7935
    %v8199 = vunpack.c.l.b16 %v7936
    %v8200 = vunpack.c.l.b16 %v7937
    %v8201 = vunpack.c.l.b16 %v7938
    %v8202 = vunpack.c.l.b16 %v7939
    %v8203 = vunpack.c.l.b16 %v7940
    %v8204 = vunpack.c.l.b16 %v7941
    %v8205 = vunpack.c.l.b16 %v7942
    %v8206 = vunpack.c.l.b16 %v7943
    %v8207 = vunpack.c.l.b16 %v7944
    %v8208 = vunpack.c.l.b16 %v7945
    %v8209 = vunpack.c.l.b16 %v7946
    %v8210 = vunpack.c.l.b16 %v7947
    %v8211 = vunpack.c.l.b16 %v7948
    %v8212 = vunpack.c.l.b16 %v7949
    %v8213 = vunpack.c.l.b16 %v7950
    %v8214 = vunpack.c.l.b16 %v7951
    %v8215 = vunpack.c.l.b16 %v7952
    %v8216 = vunpack.c.l.b16 %v7953
    %v8217 = vunpack.c.l.b16 %v7954
    %v8218 = vunpack.c.l.b16 %v7955
    %v8219 = vunpack.c.l.b16 %v7956
    %v8220 = vunpack.c.l.b16 %v7957
    %v8221 = vunpack.c.l.b16 %v7958
    %v8222 = vunpack.c.l.b16 %v7959
    %v8223 = vunpack.c.l.b16 %v7960
    %v8224 = vunpack.c.l.b16 %v7961
    %v8225 = vunpack.c.l.b16 %v7962
    %v8226 = vunpack.c.l.b16 %v7963
    %v8227 = vunpack.c.l.b16 %v7964
    %v8228 = vunpack.c.l.b16 %v7965
    %v8229 = vunpack.c.l.b16 %v7966
    %v8230 = vunpack.c.l.b16 %v7967
    %v8231 = vunpack.c.l.b16 %v7968
    %v8232 = vunpack.c.l.b16 %v7969
    %v8233 = vunpack.c.l.b16 %v7970
    %v8234 = vunpack.c.l.b16 %v7971
    %v8235 = vunpack.c.l.b16 %v7972
    %v8236 = vunpack.c.l.b16 %v7973
    %v8237 = vunpack.c.l.b16 %v7974
    %v8238 = vunpack.c.l.b16 %v7975
    %v8239 = vunpack.c.l.b16 %v7976
    %v8240 = vunpack.c.l.b16 %v7977
    %v8241 = vunpack.c.l.b16 %v7978
    %v8242 = vunpack.c.l.b16 %v7979
    %v8243 = vunpack.c.l.b16 %v7980
    %v8244 = vunpack.c.l.b16 %v7981
    %v8245 = vunpack.c.l.b16 %v7982
    %v8246 = vunpack.c.l.b16 %v7983
    %v8247 = vunpack.c.l.b16 %v7984
    %v8248 = vunpack.c.l.b16 %v7985
    %v8249 = vunpack.c.l.b16 %v7986
    %v8250 = vunpack.c.l.b16 %v7987
    %v8251 = vunpack.c.l.b16 %v7988
    %v8252 = vunpack.c.l.b16 %v7989
    %v8253 = vunpack.c.l.b16 %v7990
    %v8254 = vunpack.c.l.b16 %v7991
    %v8255 = vunpack.c.l.b16 %v7992
    %v8256 = vunpack.c.l.b16 %v7993
    %v8257 = vpack.c.b16 %v8130, %v8129
    %v8258 = vpack.c.b16 %v8132, %v8131
    %v8259 = vpack.c.b16 %v8134, %v8133
    %v8260 = vpack.c.b16 %v8136, %v8135
    %v8261 = vpack.c.b16 %v8138, %v8137
    %v8262 = vpack.c.b16 %v8140, %v8139
    %v8263 = vpack.c.b16 %v8142, %v8141
    %v8264 = vpack.c.b16 %v8144, %v8143
    %v8265 = vpack.c.b16 %v8146, %v8145
    %v8266 = vpack.c.b16 %v8148, %v8147
    %v8267 = vpack.c.b16 %v8150, %v8149
    %v8268 = vpack.c.b16 %v8152, %v8151
    %v8269 = vpack.c.b16 %v8154, %v8153
    %v8270 = vpack.c.b16 %v8156, %v8155
    %v8271 = vpack.c.b16 %v8158, %v8157
    %v8272 = vpack.c.b16 %v8160, %v8159
    %v8273 = vpack.c.b16 %v8162, %v8161
    %v8274 = vpack.c.b16 %v8164, %v8163
    %v8275 = vpack.c.b16 %v8166, %v8165
    %v8276 = vpack.c.b16 %v8168, %v8167
    %v8277 = vpack.c.b16 %v8170, %v8169
    %v8278 = vpack.c.b16 %v8172, %v8171
    %v8279 = vpack.c.b16 %v8174, %v8173
    %v8280 = vpack.c.b16 %v8176, %v8175
    %v8281 = vpack.c.b16 %v8178, %v8177
    %v8282 = vpack.c.b16 %v8180, %v8179
    %v8283 = vpack.c.b16 %v8182, %v8181
    %v8284 = vpack.c.b16 %v8184, %v8183
    %v8285 = vpack.c.b16 %v8186, %v8185
    %v8286 = vpack.c.b16 %v8188, %v8187
    %v8287 = vpack.c.b16 %v8190, %v8189
    %v8288 = vpack.c.b16 %v8192, %v8191
    %v8289 = vpack.c.b16 %v8194, %v8193
    %v8290 = vpack.c.b16 %v8196, %v8195
    %v8291 = vpack.c.b16 %v8198, %v8197
    %v8292 = vpack.c.b16 %v8200, %v8199
    %v8293 = vpack.c.b16 %v8202, %v8201
    %v8294 = vpack.c.b16 %v8204, %v8203
    %v8295 = vpack.c.b16 %v8206, %v8205
    %v8296 = vpack.c.b16 %v8208, %v8207
    %v8297 = vpack.c.b16 %v8210, %v8209
    %v8298 = vpack.c.b16 %v8212, %v8211
    %v8299 = vpack.c.b16 %v8214, %v8213
    %v8300 = vpack.c.b16 %v8216, %v8215
    %v8301 = vpack.c.b16 %v8218, %v8217
    %v8302 = vpack.c.b16 %v8220, %v8219
    %v8303 = vpack.c.b16 %v8222, %v8221
    %v8304 = vpack.c.b16 %v8224, %v8223
    %v8305 = vpack.c.b16 %v8226, %v8225
    %v8306 = vpack.c.b16 %v8228, %v8227
    %v8307 = vpack.c.b16 %v8230, %v8229
    %v8308 = vpack.c.b16 %v8232, %v8231
    %v8309 = vpack.c.b16 %v8234, %v8233
    %v8310 = vpack.c.b16 %v8236, %v8235
    %v8311 = vpack.c.b16 %v8238, %v8237
    %v8312 = vpack.c.b16 %v8240, %v8239
    %v8313 = vpack.c.b16 %v8242, %v8241
    %v8314 = vpack.c.b16 %v8244, %v8243
    %v8315 = vpack.c.b16 %v8246, %v8245
    %v8316 = vpack.c.b16 %v8248, %v8247
    %v8317 = vpack.c.b16 %v8250, %v8249
    %v8318 = vpack.c.b16 %v8252, %v8251
    %v8319 = vpack.c.b16 %v8254, %v8253
    %v8320 = vpack.c.b16 %v8256, %v8255
    %8385 = vmatprep.subr.bf16.mxu0 0
    %8386 = vmatpush1.bf16.msra.mxu0 %v8264
    %8387 = vmatprep.subr.bf16.mxu0 0
    %8388 = vmatpush1.bf16.msra.mxu0 %v8263
    %8389 = vmatprep.subr.bf16.mxu0 0
    %8390 = vmatpush1.bf16.msra.mxu0 %v8262
    %8391 = vmatprep.subr.bf16.mxu0 0
    %8392 = vmatpush1.bf16.msra.mxu0 %v8261
    %8393 = vmatprep.subr.bf16.mxu0 0
    %8394 = vmatpush1.bf16.msra.mxu0 %v8260
    %8395 = vmatprep.subr.bf16.mxu0 0
    %8396 = vmatpush1.bf16.msra.mxu0 %v8259
    %8397 = vmatprep.subr.bf16.mxu0 0
    %8398 = vmatpush1.bf16.msra.mxu0 %v8258
    %8399 = vmatprep.subr.bf16.mxu0 0
    %8400 = vmatpush1.bf16.msra.mxu0 %v8257
    %8401 = vmatprep.subr.bf16.mxu0 0
    %8402 = vmatpush2.bf16.msra.mxu0 %v8272
    %8403 = vmatprep.subr.bf16.mxu0 0
    %8404 = vmatpush2.bf16.msra.mxu0 %v8271
    %8405 = vmatprep.subr.bf16.mxu0 0
    %8406 = vmatpush2.bf16.msra.mxu0 %v8270
    %8407 = vmatprep.subr.bf16.mxu0 0
    %8408 = vmatpush2.bf16.msra.mxu0 %v8269
    %8409 = vmatprep.subr.bf16.mxu0 0
    %8410 = vmatpush2.bf16.msra.mxu0 %v8268
    %8411 = vmatprep.subr.bf16.mxu0 0
    %8412 = vmatpush2.bf16.msra.mxu0 %v8267
    %8413 = vmatprep.subr.bf16.mxu0 0
    %8414 = vmatpush2.bf16.msra.mxu0 %v8266
    %8415 = vmatprep.subr.bf16.mxu0 0
    %8416 = vmatpush2.bf16.msra.mxu0 %v8265
    %8417 = vmatprep.mubr.bf16.mxu0 %v7859
    %8418 = vmatmul.mubr.bf16.gmra.mxu0 %v7858
    %v8419 = vpop.f32.mrf.mxu0
    %v8420 = vadd.f32 %v7999, %v8419
    %v8421 = vpop.f32.mrf.mxu0
    %v8422 = vpop.f32.mrf.mxu0
    %v8423 = vadd.f32 %v7999, %v8422
    %v8424 = vpop.f32.mrf.mxu0
    %8425 = vdwg.mxu0
    %8426 = vmatprep.subr.bf16.mxu0 0
    %8427 = vmatpush1.bf16.msra.mxu0 %v8280
    %8428 = vmatprep.subr.bf16.mxu0 0
    %8429 = vmatpush1.bf16.msra.mxu0 %v8279
    %8430 = vmatprep.subr.bf16.mxu0 0
    %8431 = vmatpush1.bf16.msra.mxu0 %v8278
    %8432 = vmatprep.subr.bf16.mxu0 0
    %8433 = vmatpush1.bf16.msra.mxu0 %v8277
    %8434 = vmatprep.subr.bf16.mxu0 0
    %8435 = vmatpush1.bf16.msra.mxu0 %v8276
    %8436 = vmatprep.subr.bf16.mxu0 0
    %8437 = vmatpush1.bf16.msra.mxu0 %v8275
    %8438 = vmatprep.subr.bf16.mxu0 0
    %8439 = vmatpush1.bf16.msra.mxu0 %v8274
    %8440 = vmatprep.subr.bf16.mxu0 0
    %8441 = vmatpush1.bf16.msra.mxu0 %v8273
    %8442 = vmatprep.subr.bf16.mxu0 0
    %8443 = vmatpush2.bf16.msra.mxu0 %v8288
    %8444 = vmatprep.subr.bf16.mxu0 0
    %8445 = vmatpush2.bf16.msra.mxu0 %v8287
    %8446 = vmatprep.subr.bf16.mxu0 0
    %8447 = vmatpush2.bf16.msra.mxu0 %v8286
    %8448 = vmatprep.subr.bf16.mxu0 0
    %8449 = vmatpush2.bf16.msra.mxu0 %v8285
    %8450 = vmatprep.subr.bf16.mxu0 0
    %8451 = vmatpush2.bf16.msra.mxu0 %v8284
    %8452 = vmatprep.subr.bf16.mxu0 0
    %8453 = vmatpush2.bf16.msra.mxu0 %v8283
    %8454 = vmatprep.subr.bf16.mxu0 0
    %8455 = vmatpush2.bf16.msra.mxu0 %v8282
    %8456 = vmatprep.subr.bf16.mxu0 0
    %8457 = vmatpush2.bf16.msra.mxu0 %v8281
    %8458 = vmatprep.mubr.bf16.mxu0 %v7861
    %8459 = vmatmul.mubr.bf16.gmra.mxu0 %v7860
    %v8460 = vpop.f32.mrf.mxu0
    %v8461 = vadd.f32 %v8420, %v8460
    %v8462 = vpop.f32.mrf.mxu0
    %v8463 = vpop.f32.mrf.mxu0
    %v8464 = vadd.f32 %v8423, %v8463
    %v8465 = vpop.f32.mrf.mxu0
    %8466 = vdwg.mxu0
    %8467 = vmatprep.subr.bf16.mxu0 0
    %8468 = vmatpush1.bf16.msra.mxu0 %v8296
    %8469 = vmatprep.subr.bf16.mxu0 0
    %8470 = vmatpush1.bf16.msra.mxu0 %v8295
    %8471 = vmatprep.subr.bf16.mxu0 0
    %8472 = vmatpush1.bf16.msra.mxu0 %v8294
    %8473 = vmatprep.subr.bf16.mxu0 0
    %8474 = vmatpush1.bf16.msra.mxu0 %v8293
    %8475 = vmatprep.subr.bf16.mxu0 0
    %8476 = vmatpush1.bf16.msra.mxu0 %v8292
    %8477 = vmatprep.subr.bf16.mxu0 0
    %8478 = vmatpush1.bf16.msra.mxu0 %v8291
    %8479 = vmatprep.subr.bf16.mxu0 0
    %8480 = vmatpush1.bf16.msra.mxu0 %v8290
    %8481 = vmatprep.subr.bf16.mxu0 0
    %8482 = vmatpush1.bf16.msra.mxu0 %v8289
    %8483 = vmatprep.subr.bf16.mxu0 0
    %8484 = vmatpush2.bf16.msra.mxu0 %v8304
    %8485 = vmatprep.subr.bf16.mxu0 0
    %8486 = vmatpush2.bf16.msra.mxu0 %v8303
    %8487 = vmatprep.subr.bf16.mxu0 0
    %8488 = vmatpush2.bf16.msra.mxu0 %v8302
    %8489 = vmatprep.subr.bf16.mxu0 0
    %8490 = vmatpush2.bf16.msra.mxu0 %v8301
    %8491 = vmatprep.subr.bf16.mxu0 0
    %8492 = vmatpush2.bf16.msra.mxu0 %v8300
    %8493 = vmatprep.subr.bf16.mxu0 0
    %8494 = vmatpush2.bf16.msra.mxu0 %v8299
    %8495 = vmatprep.subr.bf16.mxu0 0
    %8496 = vmatpush2.bf16.msra.mxu0 %v8298
    %8497 = vmatprep.subr.bf16.mxu0 0
    %8498 = vmatpush2.bf16.msra.mxu0 %v8297
    %8499 = vmatprep.mubr.bf16.mxu0 %v7863
    %8500 = vmatmul.mubr.bf16.gmra.mxu0 %v7862
    %v8501 = vpop.f32.mrf.mxu0
    %v8502 = vadd.f32 %v8461, %v8501
    %v8503 = vpop.f32.mrf.mxu0
    %v8504 = vpop.f32.mrf.mxu0
    %v8505 = vadd.f32 %v8464, %v8504
    %v8506 = vpop.f32.mrf.mxu0
    %8507 = vdwg.mxu0
    %8508 = vmatprep.subr.bf16.mxu0 0
    %8509 = vmatpush1.bf16.msra.mxu0 %v8312
    %8510 = vmatprep.subr.bf16.mxu0 0
    %8511 = vmatpush1.bf16.msra.mxu0 %v8311
    %8512 = vmatprep.subr.bf16.mxu0 0
    %8513 = vmatpush1.bf16.msra.mxu0 %v8310
    %8514 = vmatprep.subr.bf16.mxu0 0
    %8515 = vmatpush1.bf16.msra.mxu0 %v8309
    %8516 = vmatprep.subr.bf16.mxu0 0
    %8517 = vmatpush1.bf16.msra.mxu0 %v8308
    %8518 = vmatprep.subr.bf16.mxu0 0
    %8519 = vmatpush1.bf16.msra.mxu0 %v8307
    %8520 = vmatprep.subr.bf16.mxu0 0
    %8521 = vmatpush1.bf16.msra.mxu0 %v8306
    %8522 = vmatprep.subr.bf16.mxu0 0
    %8523 = vmatpush1.bf16.msra.mxu0 %v8305
    %8524 = vmatprep.subr.bf16.mxu0 0
    %8525 = vmatpush2.bf16.msra.mxu0 %v8320
    %8526 = vmatprep.subr.bf16.mxu0 0
    %8527 = vmatpush2.bf16.msra.mxu0 %v8319
    %8528 = vmatprep.subr.bf16.mxu0 0
    %8529 = vmatpush2.bf16.msra.mxu0 %v8318
    %8530 = vmatprep.subr.bf16.mxu0 0
    %8531 = vmatpush2.bf16.msra.mxu0 %v8317
    %8532 = vmatprep.subr.bf16.mxu0 0
    %8533 = vmatpush2.bf16.msra.mxu0 %v8316
    %8534 = vmatprep.subr.bf16.mxu0 0
    %8535 = vmatpush2.bf16.msra.mxu0 %v8315
    %8536 = vmatprep.subr.bf16.mxu0 0
    %8537 = vmatpush2.bf16.msra.mxu0 %v8314
    %8538 = vmatprep.subr.bf16.mxu0 0
    %8539 = vmatpush2.bf16.msra.mxu0 %v8313
    %8540 = vmatprep.mubr.bf16.mxu0 %v7865
    %8541 = vmatmul.mubr.bf16.gmra.mxu0 %v7864
    %v8542 = vpop.f32.mrf.mxu0
    %v8543 = vadd.f32 %v8502, %v8542
    %v8544 = vpop.f32.mrf.mxu0
    %v8545 = vpop.f32.mrf.mxu0
    %v8546 = vadd.f32 %v8505, %v8545
    %v8547 = vpop.f32.mrf.mxu0
    %8548 = vdwg.mxu0
    %8549 = vst [vmem:[%s7] sm:$0xff] %v8543
    %8550 = vst [vmem:[%s7 + $0x8] sm:$0xff] %v8546
    // Predicated region
    $region46: #{_fwd.1} parent=1 // pred_check
      _
    $region47: #{_fwd.1} parent=1 // pred_check_branch
      %8552 = sbr.rel (0) target = $region49
    $region48: #{_fwd.1} parent=1 // pred_region
      _
    $region49: #{_fwd.1} parent=1 // pred_fallthru
      _
    // Predicated region
    $region50: #{_fwd.1} parent=1 // pred_check
      _
    $region51: #{_fwd.1} parent=1 // pred_check_branch
      %8554 = sbr.rel (0) target = $region53
    $region52: #{_fwd.1} parent=1 // pred_region
      _
    $region53: #{_fwd.1} parent=1 // pred_fallthru
      _
    %8555 = vsyncpa [#allocation6], 1
    %8556 = vsyncpa [#allocation8], 1
    %8557 = vsyncpa [#allocation11], 1
  %8558 = vsyncmov [#allocation4]
  %s8559 = vpop.sfrf %8558
  %p8560 = scmp.eq.s32.totalorder %s8559, 0
  %p8561 = pneg %p8560
  %8563 = shalt.err (%p8561)
  %s8564 = scalar_lea.sflag [#allocation4], 1
  %8565 = vsyncmov %s8564
  %s8566 = vpop.sfrf %8565
  %p8567 = scmp.eq.s32.totalorder %s8566, 0
  %p8568 = pneg %p8567
  %8570 = shalt.err (%p8568)

</llo_original>
